<compile_context>
chip_gen: v5e
topology: v5e:2x2
jax: 0.10.0
libtpu: 0.0.40
codegen_flags: <defaults>
</compile_context>

<pallas_src>
import functools

import jax
import jax.numpy as jnp
from jax import lax
from jax.experimental import pallas as pl
from jax.experimental.pallas import tpu as pltpu


# ----------------------------------------------------------------------------
# helpers
# ----------------------------------------------------------------------------

# 48 MiB: leaves headroom on v7x (64 MiB physical VMEM / TC); comfortable on
# v5e/v6e (128 MiB).
_VMEM_LIMIT = 48 * 1024 * 1024


def _round_up(x, m):
    return (x + m - 1) // m * m


def _pad_to(a, shape):
    pads = [(0, s - d) for d, s in zip(a.shape, shape)]
    if all(p == (0, 0) for p in pads):
        return a
    return jnp.pad(a, pads)


def _pick_tile(total, max_tile, quantum):
    """Largest multiple of `quantum` that divides `total` and is <= max_tile."""
    t = max(quantum, (min(max_tile, total) // quantum) * quantum)
    while total % t:
        t -= quantum
    return t


def _fold_shared_expert(cfg):
    """Shared expert can be folded as an extra expert slot iff padded I match."""
    im = cfg["moe_intermediate_size"]
    return _round_up(im * cfg["n_shared_experts"], 128) == _round_up(im, 128)


# ----------------------------------------------------------------------------
# Tiled matmul (bf16 in, f32 accumulate, bf16 out)
# ----------------------------------------------------------------------------

def _matmul_kernel(x_ref, w_ref, o_ref, acc_ref):
    @pl.when(pl.program_id(2) == 0)
    def _():
        acc_ref[...] = jnp.zeros_like(acc_ref)

    acc_ref[...] += jnp.dot(x_ref[...], w_ref[...],
                            preferred_element_type=jnp.float32)

    @pl.when(pl.program_id(2) == pl.num_programs(2) - 1)
    def _():
        o_ref[...] = acc_ref[...].astype(o_ref.dtype)


def pallas_matmul(x, w, *, tm=256, tn=512, tk=512):
    """y = x @ w, x:[M,K], w:[K,N] (kernel-layout, i.e. [in, out])."""
    M, K = x.shape
    K2, N = w.shape
    assert K == K2
    tm = min(tm, _round_up(M, 8))
    tn = min(tn, _round_up(N, 128))
    tk = min(tk, _round_up(K, 128))
    Mp, Kp, Np = _round_up(M, tm), _round_up(K, tk), _round_up(N, tn)
    xp = _pad_to(x, (Mp, Kp))
    wp = _pad_to(w, (Kp, Np))
    out = pl.pallas_call(
        _matmul_kernel,
        out_shape=jax.ShapeDtypeStruct((Mp, Np), x.dtype),
        grid=(Mp // tm, Np // tn, Kp // tk),
        in_specs=[
            pl.BlockSpec((tm, tk), lambda i, j, k: (i, k)),
            pl.BlockSpec((tk, tn), lambda i, j, k: (k, j)),
        ],
        out_specs=pl.BlockSpec((tm, tn), lambda i, j, k: (i, j)),
        scratch_shapes=[pltpu.VMEM((tm, tn), jnp.float32)],
        compiler_params=pltpu.CompilerParams(
            dimension_semantics=("parallel", "parallel", "arbitrary"),
            vmem_limit_bytes=_VMEM_LIMIT),
    )(xp, wp)
    if (Mp, Np) != (M, N):
        out = out[:M, :N]
    return out


# ----------------------------------------------------------------------------
# RMSNorm (tiled over tokens)
# ----------------------------------------------------------------------------

def pallas_add_rmsnorm(x, residual, weight, eps, *, tt=512):
    """Fused residual-add + RMSNorm (sglang RMSNorm.forward(x, residual))."""
    T, H = x.shape
    tt = min(tt, _round_up(T, 8))
    Tp = _round_up(T, tt)
    xp = _pad_to(x, (Tp, H))
    rp = _pad_to(residual, (Tp, H))
    w2 = weight.reshape(1, H)

    def kernel(x_ref, r_ref, w_ref, y_ref, s_ref):
        s = x_ref[...].astype(jnp.float32) + r_ref[...].astype(jnp.float32)
        s_ref[...] = s.astype(s_ref.dtype)
        var = jnp.mean(s * s, axis=-1, keepdims=True)
        y = s * lax.rsqrt(var + eps) * w_ref[...].astype(jnp.float32)
        y_ref[...] = y.astype(y_ref.dtype)

    y, new_res = pl.pallas_call(
        kernel,
        out_shape=(jax.ShapeDtypeStruct((Tp, H), x.dtype),
                   jax.ShapeDtypeStruct((Tp, H), x.dtype)),
        grid=(Tp // tt,),
        in_specs=[
            pl.BlockSpec((tt, H), lambda i: (i, 0)),
            pl.BlockSpec((tt, H), lambda i: (i, 0)),
            pl.BlockSpec((1, H), lambda i: (0, 0)),
        ],
        out_specs=(pl.BlockSpec((tt, H), lambda i: (i, 0)),
                   pl.BlockSpec((tt, H), lambda i: (i, 0))),
        compiler_params=pltpu.CompilerParams(
            dimension_semantics=("parallel",),
            vmem_limit_bytes=_VMEM_LIMIT),
    )(xp, rp, w2)
    if Tp != T:
        y, new_res = y[:T], new_res[:T]
    return y, new_res


def pallas_rmsnorm(x, weight, eps, *, tt=512):
    T, H = x.shape
    tt = min(tt, _round_up(T, 8))
    Tp = _round_up(T, tt)
    xp = _pad_to(x, (Tp, H))
    w2 = weight.reshape(1, H)

    def kernel(x_ref, w_ref, y_ref):
        s = x_ref[...].astype(jnp.float32)
        var = jnp.mean(s * s, axis=-1, keepdims=True)
        y_ref[...] = (s * lax.rsqrt(var + eps)
                      * w_ref[...].astype(jnp.float32)).astype(y_ref.dtype)

    y = pl.pallas_call(
        kernel,
        out_shape=jax.ShapeDtypeStruct((Tp, H), x.dtype),
        grid=(Tp // tt,),
        in_specs=[pl.BlockSpec((tt, H), lambda i: (i, 0)),
                  pl.BlockSpec((1, H), lambda i: (0, 0))],
        out_specs=pl.BlockSpec((tt, H), lambda i: (i, 0)),
        compiler_params=pltpu.CompilerParams(
            dimension_semantics=("parallel",),
            vmem_limit_bytes=_VMEM_LIMIT),
    )(xp, w2)
    return y[:T] if Tp != T else y


# ----------------------------------------------------------------------------
# Fused neox RoPE + head-major split of the QKV projection output
# ----------------------------------------------------------------------------

def pallas_qkv_rope_split(qkv, positions, nh, nkv, dh, theta, *, Tp, tt):
    """qkv:[T, q+2kv] -> q:[nh,Tp,dh], k:[nkv,Tp,dh], v:[nkv,Tp,dh] (rotated)."""
    T, Q = qkv.shape
    q_size, kv_size = nh * dh, nkv * dh
    half = dh // 2

    qkv_p = _pad_to(qkv, (Tp, Q))
    pos_p = _pad_to(positions.astype(jnp.float32), (Tp,))
    inv_freq = 1.0 / (theta ** (jnp.arange(half, dtype=jnp.float32) / half))
    ang = pos_p[:, None] * inv_freq[None, :]
    cos = jnp.cos(ang)                                    # [Tp, half] f32
    sin = jnp.sin(ang)

    def kernel(qkv_ref, cos_ref, sin_ref, q_ref, k_ref, v_ref):
        c = cos_ref[...]
        s = sin_ref[...]

        def rot(x):
            xf = x.astype(jnp.float32)
            x1, x2 = xf[:, :half], xf[:, half:]
            return jnp.concatenate([x1 * c - x2 * s, x2 * c + x1 * s], axis=-1)

        for h in range(nh):
            q_ref[h] = rot(qkv_ref[:, h * dh:(h + 1) * dh]).astype(q_ref.dtype)
        for h in range(nkv):
            off = q_size + h * dh
            k_ref[h] = rot(qkv_ref[:, off:off + dh]).astype(k_ref.dtype)
        for h in range(nkv):
            off = q_size + kv_size + h * dh
            v_ref[h] = qkv_ref[:, off:off + dh].astype(v_ref.dtype)

    return pl.pallas_call(
        kernel,
        out_shape=(jax.ShapeDtypeStruct((nh, Tp, dh), qkv.dtype),
                   jax.ShapeDtypeStruct((nkv, Tp, dh), qkv.dtype),
                   jax.ShapeDtypeStruct((nkv, Tp, dh), qkv.dtype)),
        grid=(Tp // tt,),
        in_specs=[pl.BlockSpec((tt, Q), lambda i: (i, 0)),
                  pl.BlockSpec((tt, half), lambda i: (i, 0)),
                  pl.BlockSpec((tt, half), lambda i: (i, 0))],
        out_specs=(pl.BlockSpec((nh, tt, dh), lambda i: (0, i, 0)),
                   pl.BlockSpec((nkv, tt, dh), lambda i: (0, i, 0)),
                   pl.BlockSpec((nkv, tt, dh), lambda i: (0, i, 0))),
        compiler_params=pltpu.CompilerParams(
            dimension_semantics=("parallel",),
            vmem_limit_bytes=_VMEM_LIMIT),
    )(qkv_p, cos, sin)


# ----------------------------------------------------------------------------
# Flash-style causal GQA attention (one KV group per grid step)
# ----------------------------------------------------------------------------

def pallas_flash_mha(q, k, v, scale, *, t_real, ts):
    """q: [nh, Tp, dh], k/v: [nkv, Tp, dh] (Tp % ts == 0) -> [nh, Tp, dh]."""
    nh, Tp, dh = q.shape
    nkv = k.shape[0]
    G = nh // nkv
    nt = Tp // ts

    def kernel(q_ref, k_ref, v_ref, o_ref, m_sc, l_sc, acc_sc):
        qi = pl.program_id(1)
        ki = pl.program_id(2)

        @pl.when(ki == 0)
        def _():
            m_sc[...] = jnp.full_like(m_sc, -1e30)
            l_sc[...] = jnp.zeros_like(l_sc)
            acc_sc[...] = jnp.zeros_like(acc_sc)

        # Skip KV tiles entirely in the causal future of this Q tile.
        @pl.when(ki <= qi)
        def _():
            qf = q_ref[...].reshape(G * ts, dh)           # all heads of the group
            kk = k_ref[0]
            vv = v_ref[0]
            s = lax.dot_general(qf, kk, (((1,), (1,)), ((), ())),
                                preferred_element_type=jnp.float32) * scale
            # single (ts, ts) mask broadcast over the GQA group
            row = lax.broadcasted_iota(jnp.int32, (ts, ts), 0)
            col = lax.broadcasted_iota(jnp.int32, (ts, ts), 1)
            mask2d = jnp.logical_and(ki * ts + col <= qi * ts + row,
                                     ki * ts + col < t_real)
            s = jnp.where(mask2d[None, :, :], s.reshape(G, ts, ts),
                          -1e30).reshape(G * ts, ts)
            m_prev = m_sc[...]
            m_new = jnp.maximum(m_prev, jnp.max(s, axis=-1, keepdims=True))
            alpha = jnp.exp(m_prev - m_new)
            p = jnp.exp(s - m_new)
            l_sc[...] = alpha * l_sc[...] + jnp.sum(p, axis=-1, keepdims=True)
            acc_sc[...] = alpha * acc_sc[...] + jnp.dot(
                p.astype(vv.dtype), vv, preferred_element_type=jnp.float32)
            m_sc[...] = m_new

        @pl.when(ki == pl.num_programs(2) - 1)
        def _():
            o = acc_sc[...] * pl.reciprocal(l_sc[...], approx=True)
            o_ref[...] = o.reshape(G, ts, dh).astype(o_ref.dtype)

    # TODO(synk): pack heads into the lane dim / pad dh to 128 for better MXU
    # fill when head_dim < 128 (v6e/v7x 256-wide MXU under-utilised otherwise).
    out = pl.pallas_call(
        kernel,
        out_shape=jax.ShapeDtypeStruct((nh, Tp, dh), q.dtype),
        grid=(nkv, nt, nt),
        in_specs=[
            pl.BlockSpec((G, ts, dh), lambda h, i, j: (h, i, 0)),
            # Clamp KV tile index: causally-skipped tiles repeat the previous
            # block index, so their HBM DMAs are elided.
            pl.BlockSpec((1, ts, dh), lambda h, i, j: (h, jnp.minimum(i, j), 0)),
            pl.BlockSpec((1, ts, dh), lambda h, i, j: (h, jnp.minimum(i, j), 0)),
        ],
        out_specs=pl.BlockSpec((G, ts, dh), lambda h, i, j: (h, i, 0)),
        scratch_shapes=[
            pltpu.VMEM((G * ts, 1), jnp.float32),
            pltpu.VMEM((G * ts, 1), jnp.float32),
            pltpu.VMEM((G * ts, dh), jnp.float32),
        ],
        compiler_params=pltpu.CompilerParams(
            dimension_semantics=("parallel", "parallel", "arbitrary"),
            vmem_limit_bytes=_VMEM_LIMIT),
    )(q, k, v)
    return out


# ----------------------------------------------------------------------------
# Shared-expert SwiGLU MLP (fallback only, when it cannot be folded into MoE)
# ----------------------------------------------------------------------------

def _swiglu_kernel(x_ref, wg_ref, wu_ref, wd_ref, o_ref, acc_ref):
    j = pl.program_id(1)

    @pl.when(j == 0)
    def _():
        acc_ref[...] = jnp.zeros_like(acc_ref)

    x = x_ref[...]
    g = jnp.dot(x, wg_ref[...], preferred_element_type=jnp.float32)
    u = jnp.dot(x, wu_ref[...], preferred_element_type=jnp.float32)
    h = (g * jax.nn.sigmoid(g) * u).astype(x.dtype)       # SiluAndMul
    acc_ref[...] += jnp.dot(h, wd_ref[...], preferred_element_type=jnp.float32)

    @pl.when(j == pl.num_programs(1) - 1)
    def _():
        o_ref[...] = acc_ref[...].astype(o_ref.dtype)


def pallas_shared_mlp(x, wg, wu, wd, *, tm=256, ti=512):
    """down( silu(x@wg) * (x@wu) );  wg/wu:[H,I], wd:[I,H] (I lane-padded)."""
    T, H = x.shape
    I = wg.shape[1]
    tm = min(tm, _round_up(T, 8))
    Tp = _round_up(T, tm)
    ti = _pick_tile(I, ti, 128)
    xp = _pad_to(x, (Tp, H))
    out = pl.pallas_call(
        _swiglu_kernel,
        out_shape=jax.ShapeDtypeStruct((Tp, H), x.dtype),
        grid=(Tp // tm, I // ti),
        in_specs=[
            pl.BlockSpec((tm, H), lambda i, j: (i, 0)),
            pl.BlockSpec((H, ti), lambda i, j: (0, j)),
            pl.BlockSpec((H, ti), lambda i, j: (0, j)),
            pl.BlockSpec((ti, H), lambda i, j: (j, 0)),
        ],
        out_specs=pl.BlockSpec((tm, H), lambda i, j: (i, 0)),
        scratch_shapes=[pltpu.VMEM((tm, H), jnp.float32)],
        compiler_params=pltpu.CompilerParams(
            dimension_semantics=("parallel", "arbitrary"),
            vmem_limit_bytes=_VMEM_LIMIT),
    )(xp, wg, wu, wd)
    return out[:T] if Tp != T else out


# ----------------------------------------------------------------------------
# Token-gather grouped-expert MoE
# ----------------------------------------------------------------------------

def moe_grouped_experts(hs, topk_idx, topk_w, wg, wu, wd, *, tm_max=256, ti=512):
    """sum over (token, expert-slot) of cw * swiglu_expert(token).

    hs:[T,H]; topk_idx:[T,Kx] int32 (may include the folded shared slot);
    topk_w:[T,Kx] f32 (routed_scaling_factor already folded in);
    wg/wu:[E_tot,H,I]; wd:[E_tot,I,H]. Tokens are expanded, sorted by expert
    and padded per expert to a token-tile multiple; a scalar-prefetched
    tile->expert schedule drives the expert-weight index maps so each expert
    only sees its own routed token tiles.
    """
    T, H = hs.shape
    E_tot, _, I = wg.shape
    Kx = topk_idx.shape[1]
    R = T * Kx
    tm = max(8, min(tm_max, _round_up(pl.cdiv(R, E_tot), 8)))
    NT = pl.cdiv(R, tm) + E_tot                       # static tile upper bound
    R_pad = NT * tm
    ti = _pick_tile(I, ti, 128)

    # ---- routing schedule (XLA glue, small 1-D tensors) --------------------
    expert_flat = topk_idx.reshape(R).astype(jnp.int32)
    token_flat = jnp.repeat(jnp.arange(T, dtype=jnp.int32), Kx)
    weight_flat = topk_w.reshape(R).astype(jnp.float32)

    order = jnp.argsort(expert_flat)
    expert_sorted = expert_flat[order]
    token_sorted = token_flat[order]
    weight_sorted = weight_flat[order]

    counts = jnp.zeros((E_tot,), jnp.int32).at[expert_flat].add(1)
    tiles_per_e = (counts + tm - 1) // tm
    pad_counts = tiles_per_e * tm
    sorted_start = jnp.cumsum(counts) - counts            # exclusive
    pad_start = jnp.cumsum(pad_counts) - pad_counts       # exclusive
    r = jnp.arange(R, dtype=jnp.int32)
    dest = pad_start[expert_sorted] + (r - sorted_start[expert_sorted])

    # padded row -> source token (default 0) / combine weight (default 0)
    gather_src = jnp.zeros((R_pad,), jnp.int32).at[dest].set(token_sorted)
    gather_w = jnp.zeros((R_pad,), jnp.float32).at[dest].set(weight_sorted)

    tile_cum = jnp.cumsum(tiles_per_e)
    n_used = tile_cum[-1].astype(jnp.int32)
    raw = jnp.searchsorted(tile_cum, jnp.arange(NT, dtype=jnp.int32),
                           side="right").astype(jnp.int32)
    raw = jnp.minimum(raw, E_tot - 1)
    last_used = jnp.minimum(raw[jnp.maximum(n_used - 1, 0)], E_tot - 1)
    # unused trailing tiles repeat the last expert id -> their weight DMAs are
    # elided, and compute is skipped via n_used below.
    tile_expert = jnp.where(jnp.arange(NT) < n_used, raw,
                            last_used).astype(jnp.int32)

    x_exp = jnp.take(hs, gather_src, axis=0)               # [R_pad, H]
    cw = gather_w.reshape(R_pad, 1)

    def kernel(te_ref, nu_ref, x_ref, cw_ref, wg_ref, wu_ref, wd_ref,
               o_ref, acc_ref):
        t = pl.program_id(0)
        j = pl.program_id(1)

        @pl.when(j == 0)
        def _():
            acc_ref[...] = jnp.zeros_like(acc_ref)

        @pl.when(t < nu_ref[0])
        def _():
            x = x_ref[...]
            g = jnp.dot(x, wg_ref[0], preferred_element_type=jnp.float32)
            u = jnp.dot(x, wu_ref[0], preferred_element_type=jnp.float32)
            h = (g * jax.nn.sigmoid(g) * u).astype(x.dtype)
            acc_ref[...] += jnp.dot(h, wd_ref[0],
                                    preferred_element_type=jnp.float32)

        @pl.when(j == pl.num_programs(1) - 1)
        def _():
            o_ref[...] = (acc_ref[...] * cw_ref[...]).astype(o_ref.dtype)

    gs = pltpu.PrefetchScalarGridSpec(
        num_scalar_prefetch=2,
        grid=(NT, I // ti),
        in_specs=[
            pl.BlockSpec((tm, H), lambda t, j, te, nu: (t, 0)),
            pl.BlockSpec((tm, 1), lambda t, j, te, nu: (t, 0)),
            pl.BlockSpec((1, H, ti), lambda t, j, te, nu: (te[t], 0, j)),
            pl.BlockSpec((1, H, ti), lambda t, j, te, nu: (te[t], 0, j)),
            pl.BlockSpec((1, ti, H), lambda t, j, te, nu: (te[t], j, 0)),
        ],
        out_specs=pl.BlockSpec((tm, H), lambda t, j, te, nu: (t, 0)),
        scratch_shapes=[pltpu.VMEM((tm, H), jnp.float32)],
    )
    y = pl.pallas_call(
        kernel,
        out_shape=jax.ShapeDtypeStruct((R_pad, H), hs.dtype),
        grid_spec=gs,
        compiler_params=pltpu.CompilerParams(
            dimension_semantics=("parallel", "arbitrary"),
            vmem_limit_bytes=_VMEM_LIMIT),
    )(tile_expert, n_used.reshape(1), x_exp, cw, wg, wu, wd)

    # scatter-add the per-(token, expert-slot) contributions back (f32 accum);
    # padded rows carry zero weight so they contribute nothing.
    out = jnp.zeros((T, H), jnp.float32).at[gather_src].add(
        y.astype(jnp.float32))
    return out.astype(hs.dtype)


# ----------------------------------------------------------------------------
# Glue: grouped top-k routing, attention & layer orchestration
# ----------------------------------------------------------------------------

def grouped_topk(router_logits, top_k, n_group, topk_group, renormalize):
    """DeepSeek-style grouped top-k routing -> (weights, ids) [T, top_k]."""
    T, E = router_logits.shape
    scores = jax.nn.softmax(router_logits.astype(jnp.float32), axis=-1)
    group_scores = scores.reshape(T, n_group, E // n_group).max(axis=-1)
    _, group_idx = lax.top_k(group_scores, topk_group)
    group_mask = jnp.zeros((T, n_group), jnp.float32).at[
        jnp.arange(T)[:, None], group_idx].set(1.0)
    score_mask = jnp.repeat(group_mask, E // n_group, axis=1)
    masked_scores = jnp.where(score_mask > 0, scores, 0.0)
    topk_w, topk_idx = lax.top_k(masked_scores, top_k)
    if renormalize:
        topk_w = topk_w / jnp.maximum(
            jnp.sum(topk_w, axis=-1, keepdims=True), 1e-20)
    return topk_w, topk_idx.astype(jnp.int32)


def self_attention(positions, hs, params, cfg):
    T, H = hs.shape
    nh, nkv, dh = cfg["num_heads"], cfg["num_kv_heads"], cfg["head_dim"]
    q_size = nh * dh

    qkv = pallas_matmul(hs, params["wqkv"])                  # [T, q + 2*kv]

    ts = min(256, _round_up(T, 8))
    Tp = _round_up(T, ts)
    q, k, v = pallas_qkv_rope_split(qkv, positions, nh, nkv, dh,
                                    cfg["rope_theta"], Tp=Tp, tt=ts)
    o = pallas_flash_mha(q, k, v, scale=dh ** -0.5, t_real=T, ts=ts)
    # TODO(synk): fuse this head-major -> token-major transpose into the
    # attention epilogue to save one XLA HBM pass over the attention output.
    o = jnp.transpose(o[:, :T], (1, 0, 2)).reshape(T, q_size)
    return pallas_matmul(o, params["wo"])


def megrez_moe(hs, pre_gate_hs, params, cfg):
    """MegrezMoeMoE.forward_normal (tp_size == 1)."""
    T, H = hs.shape
    E = cfg["n_routed_experts"]
    K = cfg["num_experts_per_tok"]
    scaling = float(cfg["routed_scaling_factor"])
    fold = _fold_shared_expert(cfg)

    router_logits = pallas_matmul(pre_gate_hs, params["gate_w"])[:, :E]
    topk_w, topk_idx = grouped_topk(
        router_logits, K, cfg["n_group"], cfg["topk_group"],
        cfg["norm_topk_prob"])                               # [T, K]

    if fold:
        # shared expert = always-active slot E with weight 1; routed scaling
        # folded into the routed combine weights, so the final scatter-sum is
        # exactly scaling * routed + shared.
        topk_idx = jnp.concatenate(
            [topk_idx, jnp.full((T, 1), E, jnp.int32)], axis=1)
        topk_w = jnp.concatenate(
            [topk_w * scaling, jnp.ones((T, 1), jnp.float32)], axis=1)
        shared_out = None
    else:
        topk_w = topk_w * scaling
        shared_out = pallas_shared_mlp(
            hs, params["shared_wg"], params["shared_wu"], params["shared_wd"])

    out = moe_grouped_experts(hs, topk_idx, topk_w, params["exp_wg"],
                              params["exp_wu"], params["exp_wd"])
    if shared_out is not None:
        out = out + shared_out.astype(out.dtype)
    return out


def decoder_layer_forward(positions, hidden_states, residual, params, cfg):
    """MegrezMoeDecoderLayer.forward_ffn_with_full_input (tp=1, dp=1)."""
    # pre_gate split (layer_id >= first_k_dense_replace and pre_gate=True)
    T = hidden_states.shape[0] // 2
    pre_gate_hs = hidden_states[:T]
    hs = hidden_states[T:]
    eps = cfg["rms_norm_eps"]

    # input_layernorm
    if residual is None:
        residual = hs
        hs = pallas_rmsnorm(hs, params["input_ln_w"], eps)
    else:
        hs, residual = pallas_add_rmsnorm(hs, residual, params["input_ln_w"], eps)

    # self attention
    # TODO(synk): forward_batch KV-cache / paged attention is replaced by a
    # plain causal prefill over the given sequence (no cache).
    hs = self_attention(positions, hs, params, cfg)

    # post_attention_layernorm (fused add)
    hs, residual = pallas_add_rmsnorm(hs, residual, params["post_ln_w"], eps)
    post_attention_layernorm_hidden_states = hs

    # sparse MLP (MoE)
    hs = megrez_moe(hs, pre_gate_hs, params, cfg)

    # pre_gate concat (layer_id < num_hidden_layers - 1)
    hs = jnp.concatenate([post_attention_layernorm_hidden_states, hs], axis=0)
    return hs, residual


# ----------------------------------------------------------------------------
# Parameters: init in PyTorch convention ([out, in], f32), convert once to
# kernel layout ([in, out], gate/up split, lane-padded, bf16) in prepare_params.
# ----------------------------------------------------------------------------

def init_params(key, cfg):
    H = cfg["hidden_size"]
    nh, nkv, dh = cfg["num_heads"], cfg["num_kv_heads"], cfg["head_dim"]
    E = cfg["n_routed_experts"]
    Im = cfg["moe_intermediate_size"]
    shared_I = Im * cfg["n_shared_experts"]
    q_size, kv_size = nh * dh, nkv * dh

    ks = jax.random.split(key, 9)
    s = 0.05
    return {
        "input_ln_w": 1.0 + 0.01 * jax.random.normal(ks[0], (H,), jnp.float32),
        "post_ln_w": 1.0 + 0.01 * jax.random.normal(ks[1], (H,), jnp.float32),
        "wqkv": s * jax.random.normal(ks[2], (q_size + 2 * kv_size, H), jnp.float32),
        "wo": s * jax.random.normal(ks[3], (H, q_size), jnp.float32),
        "gate_w": s * jax.random.normal(ks[4], (E, H), jnp.float32),
        "shared_wgu": s * jax.random.normal(ks[5], (2 * shared_I, H), jnp.float32),
        "shared_wd": s * jax.random.normal(ks[6], (H, shared_I), jnp.float32),
        "exp_w1": s * jax.random.normal(ks[7], (E, 2 * Im, H), jnp.float32),
        "exp_w2": s * jax.random.normal(ks[8], (E, H, Im), jnp.float32),
    }


def prepare_params(raw, cfg):
    """One-time conversion to kernel layout + bf16 (load time, not per call)."""
    E = cfg["n_routed_experts"]
    Im = cfg["moe_intermediate_size"]
    Ipad = _round_up(Im, 128)
    shared_I = Im * cfg["n_shared_experts"]
    shared_Ipad = _round_up(shared_I, 128)
    fold = _fold_shared_expert(cfg)
    bf = jnp.bfloat16

    def pad_axis(a, axis, size):
        shape = list(a.shape)
        shape[axis] = size
        return _pad_to(a, tuple(shape))

    exp_wg = pad_axis(jnp.transpose(raw["exp_w1"][:, :Im, :], (0, 2, 1)), 2, Ipad)
    exp_wu = pad_axis(jnp.transpose(raw["exp_w1"][:, Im:, :], (0, 2, 1)), 2, Ipad)
    exp_wd = pad_axis(jnp.transpose(raw["exp_w2"], (0, 2, 1)), 1, Ipad)
    sh_wg = pad_axis(raw["shared_wgu"][:shared_I].T, 1, shared_Ipad)
    sh_wu = pad_axis(raw["shared_wgu"][shared_I:].T, 1, shared_Ipad)
    sh_wd = pad_axis(raw["shared_wd"].T, 0, shared_Ipad)

    params = {
        "input_ln_w": raw["input_ln_w"].astype(bf),
        "post_ln_w": raw["post_ln_w"].astype(bf),
        "wqkv": raw["wqkv"].T.astype(bf),                           # [H, q+2kv]
        "wo": raw["wo"].T.astype(bf),                               # [q, H]
        "gate_w": pad_axis(raw["gate_w"].T, 1, _round_up(E, 128)).astype(bf),
    }
    if fold:
        # shared expert appended as an always-active expert slot (index E)
        params["exp_wg"] = jnp.concatenate([exp_wg, sh_wg[None]], axis=0).astype(bf)
        params["exp_wu"] = jnp.concatenate([exp_wu, sh_wu[None]], axis=0).astype(bf)
        params["exp_wd"] = jnp.concatenate([exp_wd, sh_wd[None]], axis=0).astype(bf)
    else:
        params["exp_wg"] = exp_wg.astype(bf)
        params["exp_wu"] = exp_wu.astype(bf)
        params["exp_wd"] = exp_wd.astype(bf)
        params["shared_wg"] = sh_wg.astype(bf)
        params["shared_wu"] = sh_wu.astype(bf)
        params["shared_wd"] = sh_wd.astype(bf)
    return params


if __name__ == "__main__":
    cfg = dict(
        hidden_size=128,
        num_heads=4,
        num_kv_heads=2,
        head_dim=32,
        rope_theta=10000.0,
        rms_norm_eps=1e-6,
        n_routed_experts=8,
        num_experts_per_tok=2,
        n_group=2,
        topk_group=1,
        norm_topk_prob=True,
        moe_intermediate_size=64,
        n_shared_experts=1,
        routed_scaling_factor=2.0,
        # layer_id=2, first_k_dense_replace=1, moe_layer_freq=1,
        # num_hidden_layers=4, pre_gate=True  -> sparse layer, split+concat active
    )

    key = jax.random.PRNGKey(0)
    k_h, k_r, k_p = jax.random.split(key, 3)

    T = 8
    hidden_states = jax.random.normal(
        k_h, (2 * T, cfg["hidden_size"]), jnp.float32).astype(jnp.bfloat16)
    residual = jax.random.normal(
        k_r, (T, cfg["hidden_size"]), jnp.float32).astype(jnp.bfloat16)
    positions = jnp.arange(T, dtype=jnp.int32)

    params = prepare_params(init_params(k_p, cfg), cfg)

    fwd = jax.jit(functools.partial(decoder_layer_forward, cfg=cfg))
    out, new_residual = fwd(positions, hidden_states, residual, params)
    jax.block_until_ready((out, new_residual))
    assert out.shape == (2 * T, cfg["hidden_size"])
    assert new_residual.shape == (T, cfg["hidden_size"])
    print("KERNEL_OK")
</pallas_src>

<mosaic_0001>
module attributes {stable_mosaic.version = 11 : i64} {
  func.func @_matmul_kernel(%arg0: i32, %arg1: i32, %arg2: i32, %arg3: memref<8x128xbf16, #tpu.memory_space<vmem>>, %arg4: memref<128x256xbf16, #tpu.memory_space<vmem>>, %arg5: memref<8x256xbf16, #tpu.memory_space<vmem>>, %arg6: memref<8x256xf32, #tpu.memory_space<vmem>>) attributes {dimension_semantics = [#tpu.dimension_semantics<parallel>, #tpu.dimension_semantics<parallel>, #tpu.dimension_semantics<arbitrary>], iteration_bounds = array<i64: 1, 1, 1>, scalar_prefetch = 0 : i64, scratch_operands = 1 : i64, tpu.core_type = #tpu.core_type<tc>, window_params = [{transform_indices = @transform_0, window_bounds = array<i64: 8, 128>}, {transform_indices = @transform_1, window_bounds = array<i64: 128, 256>}, {transform_indices = @transform_2, window_bounds = array<i64: 8, 256>}]} {
    %c0_i32 = arith.constant 0 : i32
    %0 = arith.cmpi eq, %arg2, %c0_i32 : i32
    %1 = arith.extui %0 : i1 to i32
    %c0_i32_0 = arith.constant 0 : i32
    %2 = arith.cmpi ne, %1, %c0_i32_0 : i32
    scf.if %2 {
      %cst_10 = arith.constant 0.000000e+00 : f32
      %12 = vector.broadcast %cst_10 : f32 to vector<8x256xf32>
      %c0_11 = arith.constant 0 : index
      %c0_12 = arith.constant 0 : index
      %13 = vector.load %arg6[%c0_11, %c0_12] : memref<8x256xf32, #tpu.memory_space<vmem>>, vector<8x256xf32>
      tpu.vector_store %arg6[%c0_11, %c0_12], %12 {strides = array<i32>} : memref<8x256xf32, #tpu.memory_space<vmem>>, vector<8x256xf32>,
    } else {
    }
    %c0 = arith.constant 0 : index
    %c0_1 = arith.constant 0 : index
    %3 = vector.load %arg6[%c0, %c0_1] : memref<8x256xf32, #tpu.memory_space<vmem>>, vector<8x256xf32>
    %c0_2 = arith.constant 0 : index
    %c0_3 = arith.constant 0 : index
    %4 = vector.load %arg3[%c0_2, %c0_3] : memref<8x128xbf16, #tpu.memory_space<vmem>>, vector<8x128xbf16>
    %c0_4 = arith.constant 0 : index
    %c0_5 = arith.constant 0 : index
    %5 = vector.load %arg4[%c0_4, %c0_5] : memref<128x256xbf16, #tpu.memory_space<vmem>>, vector<128x256xbf16>
    %cst = arith.constant dense<0.000000e+00> : vector<8x256xf32>
    %6 = tpu.matmul %4, %5, %cst {dimension_numbers = #tpu.dot_dimension_numbers<[1], [0], [0], [1], [0, 0, 1, 1], [], []>} : vector<8x128xbf16>, vector<128x256xbf16>, vector<8x256xf32> -> vector<8x256xf32>
    %7 = arith.addf %3, %6 : vector<8x256xf32>
    %c0_6 = arith.constant 0 : index
    %c0_7 = arith.constant 0 : index
    %8 = vector.load %arg6[%c0_6, %c0_7] : memref<8x256xf32, #tpu.memory_space<vmem>>, vector<8x256xf32>
    tpu.vector_store %arg6[%c0_6, %c0_7], %7 {strides = array<i32>} : memref<8x256xf32, #tpu.memory_space<vmem>>, vector<8x256xf32>,
    %c0_i32_8 = arith.constant 0 : i32
    %9 = arith.cmpi eq, %arg2, %c0_i32_8 : i32
    %10 = arith.extui %9 : i1 to i32
    %c0_i32_9 = arith.constant 0 : i32
    %11 = arith.cmpi ne, %10, %c0_i32_9 : i32
    scf.if %11 {
      %c0_10 = arith.constant 0 : index
      %c0_11 = arith.constant 0 : index
      %12 = vector.load %arg6[%c0_10, %c0_11] : memref<8x256xf32, #tpu.memory_space<vmem>>, vector<8x256xf32>
      %13 = arith.truncf %12 : vector<8x256xf32> to vector<8x256xbf16>
      %c0_12 = arith.constant 0 : index
      %c0_13 = arith.constant 0 : index
      %14 = vector.load %arg5[%c0_12, %c0_13] : memref<8x256xbf16, #tpu.memory_space<vmem>>, vector<8x256xbf16>
      tpu.vector_store %arg5[%c0_12, %c0_13], %13 {strides = array<i32>} : memref<8x256xbf16, #tpu.memory_space<vmem>>, vector<8x256xbf16>,
    } else {
    }
    return
  }
  func.func @transform_0(%arg0: i32, %arg1: i32, %arg2: i32) -> (i32, i32) {
    %c0_i32 = arith.constant 0 : i32
    return %arg0, %arg2 : i32, i32
  }
  func.func @transform_1(%arg0: i32, %arg1: i32, %arg2: i32) -> (i32, i32) {
    %c0_i32 = arith.constant 0 : i32
    return %arg2, %arg1 : i32, i32
  }
  func.func @transform_2(%arg0: i32, %arg1: i32, %arg2: i32) -> (i32, i32) {
    %c0_i32 = arith.constant 0 : i32
    return %arg0, %arg1 : i32, i32
  }
}

module attributes {stable_mosaic.version = 11 : i64} {
  func.func @_matmul_kernel(%arg0: i32, %arg1: i32, %arg2: i32, %arg3: memref<8x128xbf16, #tpu.memory_space<vmem>>, %arg4: memref<128x128xbf16, #tpu.memory_space<vmem>>, %arg5: memref<8x128xbf16, #tpu.memory_space<vmem>>, %arg6: memref<8x128xf32, #tpu.memory_space<vmem>>) attributes {dimension_semantics = [#tpu.dimension_semantics<parallel>, #tpu.dimension_semantics<parallel>, #tpu.dimension_semantics<arbitrary>], iteration_bounds = array<i64: 1, 1, 1>, scalar_prefetch = 0 : i64, scratch_operands = 1 : i64, tpu.core_type = #tpu.core_type<tc>, window_params = [{transform_indices = @transform_0, window_bounds = array<i64: 8, 128>}, {transform_indices = @transform_1, window_bounds = array<i64: 128, 128>}, {transform_indices = @transform_2, window_bounds = array<i64: 8, 128>}]} {
    %c0_i32 = arith.constant 0 : i32
    %0 = arith.cmpi eq, %arg2, %c0_i32 : i32
    %1 = arith.extui %0 : i1 to i32
    %c0_i32_0 = arith.constant 0 : i32
    %2 = arith.cmpi ne, %1, %c0_i32_0 : i32
    scf.if %2 {
      %cst_10 = arith.constant 0.000000e+00 : f32
      %12 = vector.broadcast %cst_10 : f32 to vector<8x128xf32>
      %c0_11 = arith.constant 0 : index
      %c0_12 = arith.constant 0 : index
      %13 = vector.load %arg6[%c0_11, %c0_12] : memref<8x128xf32, #tpu.memory_space<vmem>>, vector<8x128xf32>
      tpu.vector_store %arg6[%c0_11, %c0_12], %12 {strides = array<i32>} : memref<8x128xf32, #tpu.memory_space<vmem>>, vector<8x128xf32>,
    } else {
    }
    %c0 = arith.constant 0 : index
    %c0_1 = arith.constant 0 : index
    %3 = vector.load %arg6[%c0, %c0_1] : memref<8x128xf32, #tpu.memory_space<vmem>>, vector<8x128xf32>
    %c0_2 = arith.constant 0 : index
    %c0_3 = arith.constant 0 : index
    %4 = vector.load %arg3[%c0_2, %c0_3] : memref<8x128xbf16, #tpu.memory_space<vmem>>, vector<8x128xbf16>
    %c0_4 = arith.constant 0 : index
    %c0_5 = arith.constant 0 : index
    %5 = vector.load %arg4[%c0_4, %c0_5] : memref<128x128xbf16, #tpu.memory_space<vmem>>, vector<128x128xbf16>
    %cst = arith.constant dense<0.000000e+00> : vector<8x128xf32>
    %6 = tpu.matmul %4, %5, %cst {dimension_numbers = #tpu.dot_dimension_numbers<[1], [0], [0], [1], [0, 0, 1, 1], [], []>} : vector<8x128xbf16>, vector<128x128xbf16>, vector<8x128xf32> -> vector<8x128xf32>
    %7 = arith.addf %3, %6 : vector<8x128xf32>
    %c0_6 = arith.constant 0 : index
    %c0_7 = arith.constant 0 : index
    %8 = vector.load %arg6[%c0_6, %c0_7] : memref<8x128xf32, #tpu.memory_space<vmem>>, vector<8x128xf32>
    tpu.vector_store %arg6[%c0_6, %c0_7], %7 {strides = array<i32>} : memref<8x128xf32, #tpu.memory_space<vmem>>, vector<8x128xf32>,
    %c0_i32_8 = arith.constant 0 : i32
    %9 = arith.cmpi eq, %arg2, %c0_i32_8 : i32
    %10 = arith.extui %9 : i1 to i32
    %c0_i32_9 = arith.constant 0 : i32
    %11 = arith.cmpi ne, %10, %c0_i32_9 : i32
    scf.if %11 {
      %c0_10 = arith.constant 0 : index
      %c0_11 = arith.constant 0 : index
      %12 = vector.load %arg6[%c0_10, %c0_11] : memref<8x128xf32, #tpu.memory_space<vmem>>, vector<8x128xf32>
      %13 = arith.truncf %12 : vector<8x128xf32> to vector<8x128xbf16>
      %c0_12 = arith.constant 0 : index
      %c0_13 = arith.constant 0 : index
      %14 = vector.load %arg5[%c0_12, %c0_13] : memref<8x128xbf16, #tpu.memory_space<vmem>>, vector<8x128xbf16>
      tpu.vector_store %arg5[%c0_12, %c0_13], %13 {strides = array<i32>} : memref<8x128xbf16, #tpu.memory_space<vmem>>, vector<8x128xbf16>,
    } else {
    }
    return
  }
  func.func @transform_0(%arg0: i32, %arg1: i32, %arg2: i32) -> (i32, i32) {
    %c0_i32 = arith.constant 0 : i32
    return %arg0, %arg2 : i32, i32
  }
  func.func @transform_1(%arg0: i32, %arg1: i32, %arg2: i32) -> (i32, i32) {
    %c0_i32 = arith.constant 0 : i32
    return %arg2, %arg1 : i32, i32
  }
  func.func @transform_2(%arg0: i32, %arg1: i32, %arg2: i32) -> (i32, i32) {
    %c0_i32 = arith.constant 0 : i32
    return %arg0, %arg1 : i32, i32
  }
}

module attributes {stable_mosaic.version = 11 : i64} {
  func.func @kernel(%arg0: i32, %arg1: memref<8x128xbf16, #tpu.memory_space<vmem>>, %arg2: memref<8x128xbf16, #tpu.memory_space<vmem>>, %arg3: memref<1x128xbf16, #tpu.memory_space<vmem>>, %arg4: memref<8x128xbf16, #tpu.memory_space<vmem>>, %arg5: memref<8x128xbf16, #tpu.memory_space<vmem>>) attributes {dimension_semantics = [#tpu.dimension_semantics<parallel>], iteration_bounds = array<i64: 1>, scalar_prefetch = 0 : i64, scratch_operands = 0 : i64, tpu.core_type = #tpu.core_type<tc>, window_params = [{transform_indices = @transform_0, window_bounds = array<i64: 8, 128>}, {transform_indices = @transform_1, window_bounds = array<i64: 8, 128>}, {pipeline_mode = #tpu.pipeline_mode<synchronous>, transform_indices = @transform_2, window_bounds = array<i64: 1, 128>}, {transform_indices = @transform_3, window_bounds = array<i64: 8, 128>}, {transform_indices = @transform_4, window_bounds = array<i64: 8, 128>}]} {
    %c0 = arith.constant 0 : index
    %c0_0 = arith.constant 0 : index
    %0 = vector.load %arg1[%c0, %c0_0] : memref<8x128xbf16, #tpu.memory_space<vmem>>, vector<8x128xbf16>
    %1 = arith.extf %0 : vector<8x128xbf16> to vector<8x128xf32>
    %c0_1 = arith.constant 0 : index
    %c0_2 = arith.constant 0 : index
    %2 = vector.load %arg2[%c0_1, %c0_2] : memref<8x128xbf16, #tpu.memory_space<vmem>>, vector<8x128xbf16>
    %3 = arith.extf %2 : vector<8x128xbf16> to vector<8x128xf32>
    %4 = arith.addf %1, %3 : vector<8x128xf32>
    %5 = arith.truncf %4 : vector<8x128xf32> to vector<8x128xbf16>
    %c0_3 = arith.constant 0 : index
    %c0_4 = arith.constant 0 : index
    %6 = vector.load %arg5[%c0_3, %c0_4] : memref<8x128xbf16, #tpu.memory_space<vmem>>, vector<8x128xbf16>
    tpu.vector_store %arg5[%c0_3, %c0_4], %5 {strides = array<i32>} : memref<8x128xbf16, #tpu.memory_space<vmem>>, vector<8x128xbf16>,
    %7 = arith.mulf %4, %4 : vector<8x128xf32>
    %cst = arith.constant dense<0.000000e+00> : vector<8xf32>
    %8 = vector.multi_reduction <add>, %7, %cst [1] : vector<8x128xf32> to vector<8xf32>
    %9 = vector.shape_cast %8 : vector<8xf32> to vector<8x1xf32>
    %cst_5 = arith.constant 1.280000e+02 : f32
    %10 = vector.broadcast %cst_5 : f32 to vector<8x1xf32>
    %11 = arith.divf %9, %10 : vector<8x1xf32>
    %cst_6 = arith.constant 9.99999997E-7 : f32
    %12 = vector.broadcast %cst_6 : f32 to vector<8x1xf32>
    %13 = arith.addf %11, %12 : vector<8x1xf32>
    %14 = math.rsqrt %13 : vector<8x1xf32>
    %15 = vector.broadcast %14 : vector<8x1xf32> to vector<8x128xf32>
    %16 = arith.mulf %4, %15 : vector<8x128xf32>
    %c0_7 = arith.constant 0 : index
    %c0_8 = arith.constant 0 : index
    %17 = vector.load %arg3[%c0_7, %c0_8] : memref<1x128xbf16, #tpu.memory_space<vmem>>, vector<1x128xbf16>
    %18 = arith.extf %17 : vector<1x128xbf16> to vector<1x128xf32>
    %19 = vector.broadcast %18 : vector<1x128xf32> to vector<8x128xf32>
    %20 = arith.mulf %16, %19 : vector<8x128xf32>
    %21 = arith.truncf %20 : vector<8x128xf32> to vector<8x128xbf16>
    %c0_9 = arith.constant 0 : index
    %c0_10 = arith.constant 0 : index
    %22 = vector.load %arg4[%c0_9, %c0_10] : memref<8x128xbf16, #tpu.memory_space<vmem>>, vector<8x128xbf16>
    tpu.vector_store %arg4[%c0_9, %c0_10], %21 {strides = array<i32>} : memref<8x128xbf16, #tpu.memory_space<vmem>>, vector<8x128xbf16>,
    return
  }
  func.func @transform_0(%arg0: i32) -> (i32, i32) {
    %c0_i32 = arith.constant 0 : i32
    %c0_i32_0 = arith.constant 0 : i32
    return %arg0, %c0_i32 : i32, i32
  }
  func.func @transform_1(%arg0: i32) -> (i32, i32) {
    %c0_i32 = arith.constant 0 : i32
    %c0_i32_0 = arith.constant 0 : i32
    return %arg0, %c0_i32 : i32, i32
  }
  func.func @transform_2(%arg0: i32) -> (i32, i32) {
    %c0_i32 = arith.constant 0 : i32
    %c0_i32_0 = arith.constant 0 : i32
    %c0_i32_1 = arith.constant 0 : i32
    return %c0_i32, %c0_i32_0 : i32, i32
  }
  func.func @transform_3(%arg0: i32) -> (i32, i32) {
    %c0_i32 = arith.constant 0 : i32
    %c0_i32_0 = arith.constant 0 : i32
    return %arg0, %c0_i32 : i32, i32
  }
  func.func @transform_4(%arg0: i32) -> (i32, i32) {
    %c0_i32 = arith.constant 0 : i32
    %c0_i32_0 = arith.constant 0 : i32
    return %arg0, %c0_i32 : i32, i32
  }
}

module attributes {stable_mosaic.version = 11 : i64} {
  func.func @kernel(%arg0: i32, %arg1: memref<8x256xbf16, #tpu.memory_space<vmem>>, %arg2: memref<8x16xf32, #tpu.memory_space<vmem>>, %arg3: memref<8x16xf32, #tpu.memory_space<vmem>>, %arg4: memref<4x8x32xbf16, #tpu.memory_space<vmem>>, %arg5: memref<2x8x32xbf16, #tpu.memory_space<vmem>>, %arg6: memref<2x8x32xbf16, #tpu.memory_space<vmem>>) attributes {dimension_semantics = [#tpu.dimension_semantics<parallel>], iteration_bounds = array<i64: 1>, scalar_prefetch = 0 : i64, scratch_operands = 0 : i64, tpu.core_type = #tpu.core_type<tc>, window_params = [{transform_indices = @transform_0, window_bounds = array<i64: 8, 256>}, {transform_indices = @transform_1, window_bounds = array<i64: 8, 16>}, {transform_indices = @transform_2, window_bounds = array<i64: 8, 16>}, {transform_indices = @transform_3, window_bounds = array<i64: 4, 8, 32>}, {transform_indices = @transform_4, window_bounds = array<i64: 2, 8, 32>}, {transform_indices = @transform_5, window_bounds = array<i64: 2, 8, 32>}]} {
    %c0 = arith.constant 0 : index
    %c0_0 = arith.constant 0 : index
    %0 = vector.load %arg2[%c0, %c0_0] : memref<8x16xf32, #tpu.memory_space<vmem>>, vector<8x16xf32>
    %c0_1 = arith.constant 0 : index
    %c0_2 = arith.constant 0 : index
    %1 = vector.load %arg3[%c0_1, %c0_2] : memref<8x16xf32, #tpu.memory_space<vmem>>, vector<8x16xf32>
    %c0_3 = arith.constant 0 : index
    %c0_4 = arith.constant 0 : index
    %2 = vector.load %arg1[%c0_3, %c0_4] : memref<8x256xbf16, #tpu.memory_space<vmem>>, vector<8x32xbf16>
    %3 = arith.extf %2 : vector<8x32xbf16> to vector<8x32xf32>
    %4 = vector.extract_strided_slice %3 {offsets = [0, 0], sizes = [8, 16], strides = [1, 1]} : vector<8x32xf32> to vector<8x16xf32>
    %5 = vector.extract_strided_slice %3 {offsets = [0, 16], sizes = [8, 16], strides = [1, 1]} : vector<8x32xf32> to vector<8x16xf32>
    %6 = arith.mulf %4, %0 : vector<8x16xf32>
    %7 = arith.mulf %5, %1 : vector<8x16xf32>
    %8 = arith.subf %6, %7 : vector<8x16xf32>
    %9 = arith.mulf %5, %0 : vector<8x16xf32>
    %10 = arith.mulf %4, %1 : vector<8x16xf32>
    %11 = arith.addf %9, %10 : vector<8x16xf32>
    %12 = tpu.concatenate %8, %11 in 1 : vector<8x16xf32>, vector<8x16xf32> -> vector<8x32xf32>
    %13 = arith.truncf %12 : vector<8x32xf32> to vector<8x32xbf16>
    %c0_5 = arith.constant 0 : index
    %c0_6 = arith.constant 0 : index
    %c0_7 = arith.constant 0 : index
    %14 = vector.load %arg4[%c0_5, %c0_6, %c0_7] : memref<4x8x32xbf16, #tpu.memory_space<vmem>>, vector<1x8x32xbf16>
    %15 = vector.shape_cast %14 : vector<1x8x32xbf16> to vector<8x32xbf16>
    %16 = vector.shape_cast %13 : vector<8x32xbf16> to vector<1x8x32xbf16>
    tpu.vector_store %arg4[%c0_5, %c0_6, %c0_7], %16 {strides = array<i32>} : memref<4x8x32xbf16, #tpu.memory_space<vmem>>, vector<1x8x32xbf16>,
    %c0_8 = arith.constant 0 : index
    %c32 = arith.constant 32 : index
    %17 = vector.load %arg1[%c0_8, %c32] : memref<8x256xbf16, #tpu.memory_space<vmem>>, vector<8x32xbf16>
    %18 = arith.extf %17 : vector<8x32xbf16> to vector<8x32xf32>
    %19 = vector.extract_strided_slice %18 {offsets = [0, 0], sizes = [8, 16], strides = [1, 1]} : vector<8x32xf32> to vector<8x16xf32>
    %20 = vector.extract_strided_slice %18 {offsets = [0, 16], sizes = [8, 16], strides = [1, 1]} : vector<8x32xf32> to vector<8x16xf32>
    %21 = arith.mulf %19, %0 : vector<8x16xf32>
    %22 = arith.mulf %20, %1 : vector<8x16xf32>
    %23 = arith.subf %21, %22 : vector<8x16xf32>
    %24 = arith.mulf %20, %0 : vector<8x16xf32>
    %25 = arith.mulf %19, %1 : vector<8x16xf32>
    %26 = arith.addf %24, %25 : vector<8x16xf32>
    %27 = tpu.concatenate %23, %26 in 1 : vector<8x16xf32>, vector<8x16xf32> -> vector<8x32xf32>
    %28 = arith.truncf %27 : vector<8x32xf32> to vector<8x32xbf16>
    %c1 = arith.constant 1 : index
    %c0_9 = arith.constant 0 : index
    %c0_10 = arith.constant 0 : index
    %29 = vector.load %arg4[%c1, %c0_9, %c0_10] : memref<4x8x32xbf16, #tpu.memory_space<vmem>>, vector<1x8x32xbf16>
    %30 = vector.shape_cast %29 : vector<1x8x32xbf16> to vector<8x32xbf16>
    %31 = vector.shape_cast %28 : vector<8x32xbf16> to vector<1x8x32xbf16>
    tpu.vector_store %arg4[%c1, %c0_9, %c0_10], %31 {strides = array<i32>} : memref<4x8x32xbf16, #tpu.memory_space<vmem>>, vector<1x8x32xbf16>,
    %c0_11 = arith.constant 0 : index
    %c64 = arith.constant 64 : index
    %32 = vector.load %arg1[%c0_11, %c64] : memref<8x256xbf16, #tpu.memory_space<vmem>>, vector<8x32xbf16>
    %33 = arith.extf %32 : vector<8x32xbf16> to vector<8x32xf32>
    %34 = vector.extract_strided_slice %33 {offsets = [0, 0], sizes = [8, 16], strides = [1, 1]} : vector<8x32xf32> to vector<8x16xf32>
    %35 = vector.extract_strided_slice %33 {offsets = [0, 16], sizes = [8, 16], strides = [1, 1]} : vector<8x32xf32> to vector<8x16xf32>
    %36 = arith.mulf %34, %0 : vector<8x16xf32>
    %37 = arith.mulf %35, %1 : vector<8x16xf32>
    %38 = arith.subf %36, %37 : vector<8x16xf32>
    %39 = arith.mulf %35, %0 : vector<8x16xf32>
    %40 = arith.mulf %34, %1 : vector<8x16xf32>
    %41 = arith.addf %39, %40 : vector<8x16xf32>
    %42 = tpu.concatenate %38, %41 in 1 : vector<8x16xf32>, vector<8x16xf32> -> vector<8x32xf32>
    %43 = arith.truncf %42 : vector<8x32xf32> to vector<8x32xbf16>
    %c2 = arith.constant 2 : index
    %c0_12 = arith.constant 0 : index
    %c0_13 = arith.constant 0 : index
    %44 = vector.load %arg4[%c2, %c0_12, %c0_13] : memref<4x8x32xbf16, #tpu.memory_space<vmem>>, vector<1x8x32xbf16>
    %45 = vector.shape_cast %44 : vector<1x8x32xbf16> to vector<8x32xbf16>
    %46 = vector.shape_cast %43 : vector<8x32xbf16> to vector<1x8x32xbf16>
    tpu.vector_store %arg4[%c2, %c0_12, %c0_13], %46 {strides = array<i32>} : memref<4x8x32xbf16, #tpu.memory_space<vmem>>, vector<1x8x32xbf16>,
    %c0_14 = arith.constant 0 : index
    %c96 = arith.constant 96 : index
    %47 = vector.load %arg1[%c0_14, %c96] : memref<8x256xbf16, #tpu.memory_space<vmem>>, vector<8x32xbf16>
    %48 = arith.extf %47 : vector<8x32xbf16> to vector<8x32xf32>
    %49 = vector.extract_strided_slice %48 {offsets = [0, 0], sizes = [8, 16], strides = [1, 1]} : vector<8x32xf32> to vector<8x16xf32>
    %50 = vector.extract_strided_slice %48 {offsets = [0, 16], sizes = [8, 16], strides = [1, 1]} : vector<8x32xf32> to vector<8x16xf32>
    %51 = arith.mulf %49, %0 : vector<8x16xf32>
    %52 = arith.mulf %50, %1 : vector<8x16xf32>
    %53 = arith.subf %51, %52 : vector<8x16xf32>
    %54 = arith.mulf %50, %0 : vector<8x16xf32>
    %55 = arith.mulf %49, %1 : vector<8x16xf32>
    %56 = arith.addf %54, %55 : vector<8x16xf32>
    %57 = tpu.concatenate %53, %56 in 1 : vector<8x16xf32>, vector<8x16xf32> -> vector<8x32xf32>
    %58 = arith.truncf %57 : vector<8x32xf32> to vector<8x32xbf16>
    %c3 = arith.constant 3 : index
    %c0_15 = arith.constant 0 : index
    %c0_16 = arith.constant 0 : index
    %59 = vector.load %arg4[%c3, %c0_15, %c0_16] : memref<4x8x32xbf16, #tpu.memory_space<vmem>>, vector<1x8x32xbf16>
    %60 = vector.shape_cast %59 : vector<1x8x32xbf16> to vector<8x32xbf16>
    %61 = vector.shape_cast %58 : vector<8x32xbf16> to vector<1x8x32xbf16>
    tpu.vector_store %arg4[%c3, %c0_15, %c0_16], %61 {strides = array<i32>} : memref<4x8x32xbf16, #tpu.memory_space<vmem>>, vector<1x8x32xbf16>,
    %c0_17 = arith.constant 0 : index
    %c128 = arith.constant 128 : index
    %62 = vector.load %arg1[%c0_17, %c128] : memref<8x256xbf16, #tpu.memory_space<vmem>>, vector<8x32xbf16>
    %63 = arith.extf %62 : vector<8x32xbf16> to vector<8x32xf32>
    %64 = vector.extract_strided_slice %63 {offsets = [0, 0], sizes = [8, 16], strides = [1, 1]} : vector<8x32xf32> to vector<8x16xf32>
    %65 = vector.extract_strided_slice %63 {offsets = [0, 16], sizes = [8, 16], strides = [1, 1]} : vector<8x32xf32> to vector<8x16xf32>
    %66 = arith.mulf %64, %0 : vector<8x16xf32>
    %67 = arith.mulf %65, %1 : vector<8x16xf32>
    %68 = arith.subf %66, %67 : vector<8x16xf32>
    %69 = arith.mulf %65, %0 : vector<8x16xf32>
    %70 = arith.mulf %64, %1 : vector<8x16xf32>
    %71 = arith.addf %69, %70 : vector<8x16xf32>
    %72 = tpu.concatenate %68, %71 in 1 : vector<8x16xf32>, vector<8x16xf32> -> vector<8x32xf32>
    %73 = arith.truncf %72 : vector<8x32xf32> to vector<8x32xbf16>
    %c0_18 = arith.constant 0 : index
    %c0_19 = arith.constant 0 : index
    %c0_20 = arith.constant 0 : index
    %74 = vector.load %arg5[%c0_18, %c0_19, %c0_20] : memref<2x8x32xbf16, #tpu.memory_space<vmem>>, vector<1x8x32xbf16>
    %75 = vector.shape_cast %74 : vector<1x8x32xbf16> to vector<8x32xbf16>
    %76 = vector.shape_cast %73 : vector<8x32xbf16> to vector<1x8x32xbf16>
    tpu.vector_store %arg5[%c0_18, %c0_19, %c0_20], %76 {strides = array<i32>} : memref<2x8x32xbf16, #tpu.memory_space<vmem>>, vector<1x8x32xbf16>,
    %c0_21 = arith.constant 0 : index
    %c160 = arith.constant 160 : index
    %77 = vector.load %arg1[%c0_21, %c160] : memref<8x256xbf16, #tpu.memory_space<vmem>>, vector<8x32xbf16>
    %78 = arith.extf %77 : vector<8x32xbf16> to vector<8x32xf32>
    %79 = vector.extract_strided_slice %78 {offsets = [0, 0], sizes = [8, 16], strides = [1, 1]} : vector<8x32xf32> to vector<8x16xf32>
    %80 = vector.extract_strided_slice %78 {offsets = [0, 16], sizes = [8, 16], strides = [1, 1]} : vector<8x32xf32> to vector<8x16xf32>
    %81 = arith.mulf %79, %0 : vector<8x16xf32>
    %82 = arith.mulf %80, %1 : vector<8x16xf32>
    %83 = arith.subf %81, %82 : vector<8x16xf32>
    %84 = arith.mulf %80, %0 : vector<8x16xf32>
    %85 = arith.mulf %79, %1 : vector<8x16xf32>
    %86 = arith.addf %84, %85 : vector<8x16xf32>
    %87 = tpu.concatenate %83, %86 in 1 : vector<8x16xf32>, vector<8x16xf32> -> vector<8x32xf32>
    %88 = arith.truncf %87 : vector<8x32xf32> to vector<8x32xbf16>
    %c1_22 = arith.constant 1 : index
    %c0_23 = arith.constant 0 : index
    %c0_24 = arith.constant 0 : index
    %89 = vector.load %arg5[%c1_22, %c0_23, %c0_24] : memref<2x8x32xbf16, #tpu.memory_space<vmem>>, vector<1x8x32xbf16>
    %90 = vector.shape_cast %89 : vector<1x8x32xbf16> to vector<8x32xbf16>
    %91 = vector.shape_cast %88 : vector<8x32xbf16> to vector<1x8x32xbf16>
    tpu.vector_store %arg5[%c1_22, %c0_23, %c0_24], %91 {strides = array<i32>} : memref<2x8x32xbf16, #tpu.memory_space<vmem>>, vector<1x8x32xbf16>,
    %c0_25 = arith.constant 0 : index
    %c192 = arith.constant 192 : index
    %92 = vector.load %arg1[%c0_25, %c192] : memref<8x256xbf16, #tpu.memory_space<vmem>>, vector<8x32xbf16>
    %c0_26 = arith.constant 0 : index
    %c0_27 = arith.constant 0 : index
    %c0_28 = arith.constant 0 : index
    %93 = vector.load %arg6[%c0_26, %c0_27, %c0_28] : memref<2x8x32xbf16, #tpu.memory_space<vmem>>, vector<1x8x32xbf16>
    %94 = vector.shape_cast %93 : vector<1x8x32xbf16> to vector<8x32xbf16>
    %95 = vector.shape_cast %92 : vector<8x32xbf16> to vector<1x8x32xbf16>
    tpu.vector_store %arg6[%c0_26, %c0_27, %c0_28], %95 {strides = array<i32>} : memref<2x8x32xbf16, #tpu.memory_space<vmem>>, vector<1x8x32xbf16>,
    %c0_29 = arith.constant 0 : index
    %c224 = arith.constant 224 : index
    %96 = vector.load %arg1[%c0_29, %c224] : memref<8x256xbf16, #tpu.memory_space<vmem>>, vector<8x32xbf16>
    %c1_30 = arith.constant 1 : index
    %c0_31 = arith.constant 0 : index
    %c0_32 = arith.constant 0 : index
    %97 = vector.load %arg6[%c1_30, %c0_31, %c0_32] : memref<2x8x32xbf16, #tpu.memory_space<vmem>>, vector<1x8x32xbf16>
    %98 = vector.shape_cast %97 : vector<1x8x32xbf16> to vector<8x32xbf16>
    %99 = vector.shape_cast %96 : vector<8x32xbf16> to vector<1x8x32xbf16>
    tpu.vector_store %arg6[%c1_30, %c0_31, %c0_32], %99 {strides = array<i32>} : memref<2x8x32xbf16, #tpu.memory_space<vmem>>, vector<1x8x32xbf16>,
    return
  }
  func.func @transform_0(%arg0: i32) -> (i32, i32) {
    %c0_i32 = arith.constant 0 : i32
    %c0_i32_0 = arith.constant 0 : i32
    return %arg0, %c0_i32 : i32, i32
  }
  func.func @transform_1(%arg0: i32) -> (i32, i32) {
    %c0_i32 = arith.constant 0 : i32
    %c0_i32_0 = arith.constant 0 : i32
    return %arg0, %c0_i32 : i32, i32
  }
  func.func @transform_2(%arg0: i32) -> (i32, i32) {
    %c0_i32 = arith.constant 0 : i32
    %c0_i32_0 = arith.constant 0 : i32
    return %arg0, %c0_i32 : i32, i32
  }
  func.func @transform_3(%arg0: i32) -> (i32, i32, i32) {
    %c0_i32 = arith.constant 0 : i32
    %c0_i32_0 = arith.constant 0 : i32
    %c0_i32_1 = arith.constant 0 : i32
    return %c0_i32, %arg0, %c0_i32_0 : i32, i32, i32
  }
  func.func @transform_4(%arg0: i32) -> (i32, i32, i32) {
    %c0_i32 = arith.constant 0 : i32
    %c0_i32_0 = arith.constant 0 : i32
    %c0_i32_1 = arith.constant 0 : i32
    return %c0_i32, %arg0, %c0_i32_0 : i32, i32, i32
  }
  func.func @transform_5(%arg0: i32) -> (i32, i32, i32) {
    %c0_i32 = arith.constant 0 : i32
    %c0_i32_0 = arith.constant 0 : i32
    %c0_i32_1 = arith.constant 0 : i32
    return %c0_i32, %arg0, %c0_i32_0 : i32, i32, i32
  }
}

module attributes {stable_mosaic.version = 11 : i64} {
  func.func @kernel(%arg0: i32, %arg1: i32, %arg2: i32, %arg3: memref<2x8x32xbf16, #tpu.memory_space<vmem>>, %arg4: memref<1x8x32xbf16, #tpu.memory_space<vmem>>, %arg5: memref<1x8x32xbf16, #tpu.memory_space<vmem>>, %arg6: memref<2x8x32xbf16, #tpu.memory_space<vmem>>, %arg7: memref<16x1xf32, #tpu.memory_space<vmem>>, %arg8: memref<16x1xf32, #tpu.memory_space<vmem>>, %arg9: memref<16x32xf32, #tpu.memory_space<vmem>>) attributes {dimension_semantics = [#tpu.dimension_semantics<parallel>, #tpu.dimension_semantics<parallel>, #tpu.dimension_semantics<arbitrary>], iteration_bounds = array<i64: 2, 1, 1>, scalar_prefetch = 0 : i64, scratch_operands = 3 : i64, tpu.core_type = #tpu.core_type<tc>, window_params = [{transform_indices = @transform_0, window_bounds = array<i64: 2, 8, 32>}, {transform_indices = @transform_1, window_bounds = array<i64: 1, 8, 32>}, {transform_indices = @transform_2, window_bounds = array<i64: 1, 8, 32>}, {transform_indices = @transform_3, window_bounds = array<i64: 2, 8, 32>}]} {
    %c0_i32 = arith.constant 0 : i32
    %0 = arith.cmpi eq, %arg2, %c0_i32 : i32
    %1 = arith.extui %0 : i1 to i32
    %c0_i32_0 = arith.constant 0 : i32
    %2 = arith.cmpi ne, %1, %c0_i32_0 : i32
    scf.if %2 {
      %cst = arith.constant -1.000000e+30 : f32
      %9 = vector.broadcast %cst : f32 to vector<16x1xf32>
      %c0 = arith.constant 0 : index
      %c0_4 = arith.constant 0 : index
      %10 = vector.load %arg7[%c0, %c0_4] : memref<16x1xf32, #tpu.memory_space<vmem>>, vector<16x1xf32>
      tpu.vector_store %arg7[%c0, %c0_4], %9 {strides = array<i32>} : memref<16x1xf32, #tpu.memory_space<vmem>>, vector<16x1xf32>,
      %cst_5 = arith.constant 0.000000e+00 : f32
      %11 = vector.broadcast %cst_5 : f32 to vector<16x1xf32>
      %c0_6 = arith.constant 0 : index
      %c0_7 = arith.constant 0 : index
      %12 = vector.load %arg8[%c0_6, %c0_7] : memref<16x1xf32, #tpu.memory_space<vmem>>, vector<16x1xf32>
      tpu.vector_store %arg8[%c0_6, %c0_7], %11 {strides = array<i32>} : memref<16x1xf32, #tpu.memory_space<vmem>>, vector<16x1xf32>,
      %cst_8 = arith.constant 0.000000e+00 : f32
      %13 = vector.broadcast %cst_8 : f32 to vector<16x32xf32>
      %c0_9 = arith.constant 0 : index
      %c0_10 = arith.constant 0 : index
      %14 = vector.load %arg9[%c0_9, %c0_10] : memref<16x32xf32, #tpu.memory_space<vmem>>, vector<16x32xf32>
      tpu.vector_store %arg9[%c0_9, %c0_10], %13 {strides = array<i32>} : memref<16x32xf32, #tpu.memory_space<vmem>>, vector<16x32xf32>,
    } else {
    }
    %3 = arith.cmpi sle, %arg2, %arg1 : i32
    %4 = arith.extui %3 : i1 to i32
    %c0_i32_1 = arith.constant 0 : i32
    %5 = arith.cmpi ne, %4, %c0_i32_1 : i32
    scf.if %5 {
      %c0 = arith.constant 0 : index
      %c0_4 = arith.constant 0 : index
      %c0_5 = arith.constant 0 : index
      %9 = vector.load %arg3[%c0, %c0_4, %c0_5] : memref<2x8x32xbf16, #tpu.memory_space<vmem>>, vector<2x8x32xbf16>
      %10 = vector.shape_cast %9 : vector<2x8x32xbf16> to vector<16x32xbf16>
      %c0_6 = arith.constant 0 : index
      %c0_7 = arith.constant 0 : index
      %c0_8 = arith.constant 0 : index
      %11 = vector.load %arg4[%c0_6, %c0_7, %c0_8] : memref<1x8x32xbf16, #tpu.memory_space<vmem>>, vector<1x8x32xbf16>
      %12 = vector.shape_cast %11 : vector<1x8x32xbf16> to vector<8x32xbf16>
      %c0_9 = arith.constant 0 : index
      %c0_10 = arith.constant 0 : index
      %c0_11 = arith.constant 0 : index
      %13 = vector.load %arg5[%c0_9, %c0_10, %c0_11] : memref<1x8x32xbf16, #tpu.memory_space<vmem>>, vector<1x8x32xbf16>
      %14 = vector.shape_cast %13 : vector<1x8x32xbf16> to vector<8x32xbf16>
      %cst = arith.constant dense<0.000000e+00> : vector<16x8xf32>
      %15 = tpu.matmul %10, %12, %cst {dimension_numbers = #tpu.dot_dimension_numbers<[1], [1], [0], [0], [0, 0, 1, 0], [], []>} : vector<16x32xbf16>, vector<8x32xbf16>, vector<16x8xf32> -> vector<16x8xf32>
      %cst_12 = arith.constant 0.176776692 : f32
      %16 = vector.broadcast %cst_12 : f32 to vector<16x8xf32>
      %17 = arith.mulf %15, %16 : vector<16x8xf32>
      %18 = tpu.iota {dimensions = array<i32: 0>} : vector<8x8xi32>
      %19 = tpu.iota {dimensions = array<i32: 1>} : vector<8x8xi32>
      %c8_i32 = arith.constant 8 : i32
      %20 = arith.muli %arg2, %c8_i32 : i32
      %21 = vector.broadcast %20 : i32 to vector<8x8xi32>
      %22 = arith.addi %21, %19 : vector<8x8xi32>
      %c8_i32_13 = arith.constant 8 : i32
      %23 = arith.muli %arg1, %c8_i32_13 : i32
      %24 = vector.broadcast %23 : i32 to vector<8x8xi32>
      %25 = arith.addi %24, %18 : vector<8x8xi32>
      %26 = arith.cmpi sle, %22, %25 : vector<8x8xi32>
      %c8_i32_14 = arith.constant 8 : i32
      %27 = arith.muli %arg2, %c8_i32_14 : i32
      %28 = vector.broadcast %27 : i32 to vector<8x8xi32>
      %29 = arith.addi %28, %19 : vector<8x8xi32>
      %c8_i32_15 = arith.constant 8 : i32
      %30 = vector.broadcast %c8_i32_15 : i32 to vector<8x8xi32>
      %31 = arith.cmpi slt, %29, %30 : vector<8x8xi32>
      %32 = arith.andi %26, %31 : vector<8x8xi1>
      %33 = vector.shape_cast %32 : vector<8x8xi1> to vector<1x8x8xi1>
      %34 = vector.shape_cast %17 : vector<16x8xf32> to vector<2x8x8xf32>
      %cst_16 = arith.constant -1.000000e+30 : f32
      %35 = vector.shape_cast %33 : vector<1x8x8xi1> to vector<1x8x8xi1>
      %36 = vector.broadcast %35 : vector<1x8x8xi1> to vector<2x8x8xi1>
      %37 = vector.broadcast %cst_16 : f32 to vector<2x8x8xf32>
      %38 = arith.select %36, %34, %37 : vector<2x8x8xi1>, vector<2x8x8xf32>
      %39 = vector.shape_cast %38 : vector<2x8x8xf32> to vector<16x8xf32>
      %c0_17 = arith.constant 0 : index
      %c0_18 = arith.constant 0 : index
      %40 = vector.load %arg7[%c0_17, %c0_18] : memref<16x1xf32, #tpu.memory_space<vmem>>, vector<16x1xf32>
      %cst_19 = arith.constant dense<0xFF800000> : vector<16xf32>
      %41 = vector.multi_reduction <maximumf>, %39, %cst_19 [1] : vector<16x8xf32> to vector<16xf32>
      %42 = vector.shape_cast %41 : vector<16xf32> to vector<16x1xf32>
      %43 = arith.maximumf %40, %42 : vector<16x1xf32>
      %44 = arith.subf %40, %43 : vector<16x1xf32>
      %45 = math.exp %44 : vector<16x1xf32>
      %46 = vector.broadcast %43 : vector<16x1xf32> to vector<16x8xf32>
      %47 = arith.subf %39, %46 : vector<16x8xf32>
      %48 = math.exp %47 : vector<16x8xf32>
      %c0_20 = arith.constant 0 : index
      %c0_21 = arith.constant 0 : index
      %49 = vector.load %arg8[%c0_20, %c0_21] : memref<16x1xf32, #tpu.memory_space<vmem>>, vector<16x1xf32>
      %50 = arith.mulf %45, %49 : vector<16x1xf32>
      %cst_22 = arith.constant dense<0.000000e+00> : vector<16xf32>
      %51 = vector.multi_reduction <add>, %48, %cst_22 [1] : vector<16x8xf32> to vector<16xf32>
      %52 = vector.shape_cast %51 : vector<16xf32> to vector<16x1xf32>
      %53 = arith.addf %50, %52 : vector<16x1xf32>
      %c0_23 = arith.constant 0 : index
      %c0_24 = arith.constant 0 : index
      %54 = vector.load %arg8[%c0_23, %c0_24] : memref<16x1xf32, #tpu.memory_space<vmem>>, vector<16x1xf32>
      tpu.vector_store %arg8[%c0_23, %c0_24], %53 {strides = array<i32>} : memref<16x1xf32, #tpu.memory_space<vmem>>, vector<16x1xf32>,
      %c0_25 = arith.constant 0 : index
      %c0_26 = arith.constant 0 : index
      %55 = vector.load %arg9[%c0_25, %c0_26] : memref<16x32xf32, #tpu.memory_space<vmem>>, vector<16x32xf32>
      %56 = vector.broadcast %45 : vector<16x1xf32> to vector<16x32xf32>
      %57 = arith.mulf %56, %55 : vector<16x32xf32>
      %58 = arith.truncf %48 : vector<16x8xf32> to vector<16x8xbf16>
      %cst_27 = arith.constant dense<0.000000e+00> : vector<16x32xf32>
      %59 = tpu.matmul %58, %14, %cst_27 {dimension_numbers = #tpu.dot_dimension_numbers<[1], [0], [0], [1], [0, 0, 1, 1], [], []>} : vector<16x8xbf16>, vector<8x32xbf16>, vector<16x32xf32> -> vector<16x32xf32>
      %60 = arith.addf %57, %59 : vector<16x32xf32>
      %c0_28 = arith.constant 0 : index
      %c0_29 = arith.constant 0 : index
      %61 = vector.load %arg9[%c0_28, %c0_29] : memref<16x32xf32, #tpu.memory_space<vmem>>, vector<16x32xf32>
      tpu.vector_store %arg9[%c0_28, %c0_29], %60 {strides = array<i32>} : memref<16x32xf32, #tpu.memory_space<vmem>>, vector<16x32xf32>,
      %c0_30 = arith.constant 0 : index
      %c0_31 = arith.constant 0 : index
      %62 = vector.load %arg7[%c0_30, %c0_31] : memref<16x1xf32, #tpu.memory_space<vmem>>, vector<16x1xf32>
      tpu.vector_store %arg7[%c0_30, %c0_31], %43 {strides = array<i32>} : memref<16x1xf32, #tpu.memory_space<vmem>>, vector<16x1xf32>,
    } else {
    }
    %c0_i32_2 = arith.constant 0 : i32
    %6 = arith.cmpi eq, %arg2, %c0_i32_2 : i32
    %7 = arith.extui %6 : i1 to i32
    %c0_i32_3 = arith.constant 0 : i32
    %8 = arith.cmpi ne, %7, %c0_i32_3 : i32
    scf.if %8 {
      %c0 = arith.constant 0 : index
      %c0_4 = arith.constant 0 : index
      %9 = vector.load %arg9[%c0, %c0_4] : memref<16x32xf32, #tpu.memory_space<vmem>>, vector<16x32xf32>
      %c0_5 = arith.constant 0 : index
      %c0_6 = arith.constant 0 : index
      %10 = vector.load %arg8[%c0_5, %c0_6] : memref<16x1xf32, #tpu.memory_space<vmem>>, vector<16x1xf32>
      %11 = tpu.reciprocal %10 {approx = true} : vector<16x1xf32> -> vector<16x1xf32>
      %12 = vector.broadcast %11 : vector<16x1xf32> to vector<16x32xf32>
      %13 = arith.mulf %9, %12 : vector<16x32xf32>
      %14 = vector.shape_cast %13 : vector<16x32xf32> to vector<2x8x32xf32>
      %15 = arith.truncf %14 : vector<2x8x32xf32> to vector<2x8x32xbf16>
      %c0_7 = arith.constant 0 : index
      %c0_8 = arith.constant 0 : index
      %c0_9 = arith.constant 0 : index
      %16 = vector.load %arg6[%c0_7, %c0_8, %c0_9] : memref<2x8x32xbf16, #tpu.memory_space<vmem>>, vector<2x8x32xbf16>
      tpu.vector_store %arg6[%c0_7, %c0_8, %c0_9], %15 {strides = array<i32>} : memref<2x8x32xbf16, #tpu.memory_space<vmem>>, vector<2x8x32xbf16>,
    } else {
    }
    return
  }
  func.func @transform_0(%arg0: i32, %arg1: i32, %arg2: i32) -> (i32, i32, i32) {
    %c0_i32 = arith.constant 0 : i32
    %c0_i32_0 = arith.constant 0 : i32
    return %arg0, %arg1, %c0_i32 : i32, i32, i32
  }
  func.func @transform_1(%arg0: i32, %arg1: i32, %arg2: i32) -> (i32, i32, i32) {
    %0 = arith.minsi %arg1, %arg2 : i32
    %c0_i32 = arith.constant 0 : i32
    %c0_i32_0 = arith.constant 0 : i32
    return %arg0, %0, %c0_i32 : i32, i32, i32
  }
  func.func @transform_2(%arg0: i32, %arg1: i32, %arg2: i32) -> (i32, i32, i32) {
    %0 = arith.minsi %arg1, %arg2 : i32
    %c0_i32 = arith.constant 0 : i32
    %c0_i32_0 = arith.constant 0 : i32
    return %arg0, %0, %c0_i32 : i32, i32, i32
  }
  func.func @transform_3(%arg0: i32, %arg1: i32, %arg2: i32) -> (i32, i32, i32) {
    %c0_i32 = arith.constant 0 : i32
    %c0_i32_0 = arith.constant 0 : i32
    return %arg0, %arg1, %c0_i32 : i32, i32, i32
  }
}

module attributes {stable_mosaic.version = 11 : i64} {
  func.func @_matmul_kernel(%arg0: i32, %arg1: i32, %arg2: i32, %arg3: memref<8x128xbf16, #tpu.memory_space<vmem>>, %arg4: memref<128x128xbf16, #tpu.memory_space<vmem>>, %arg5: memref<8x128xbf16, #tpu.memory_space<vmem>>, %arg6: memref<8x128xf32, #tpu.memory_space<vmem>>) attributes {dimension_semantics = [#tpu.dimension_semantics<parallel>, #tpu.dimension_semantics<parallel>, #tpu.dimension_semantics<arbitrary>], iteration_bounds = array<i64: 1, 1, 1>, scalar_prefetch = 0 : i64, scratch_operands = 1 : i64, tpu.core_type = #tpu.core_type<tc>, window_params = [{transform_indices = @transform_0, window_bounds = array<i64: 8, 128>}, {transform_indices = @transform_1, window_bounds = array<i64: 128, 128>}, {transform_indices = @transform_2, window_bounds = array<i64: 8, 128>}]} {
    %c0_i32 = arith.constant 0 : i32
    %0 = arith.cmpi eq, %arg2, %c0_i32 : i32
    %1 = arith.extui %0 : i1 to i32
    %c0_i32_0 = arith.constant 0 : i32
    %2 = arith.cmpi ne, %1, %c0_i32_0 : i32
    scf.if %2 {
      %cst_10 = arith.constant 0.000000e+00 : f32
      %12 = vector.broadcast %cst_10 : f32 to vector<8x128xf32>
      %c0_11 = arith.constant 0 : index
      %c0_12 = arith.constant 0 : index
      %13 = vector.load %arg6[%c0_11, %c0_12] : memref<8x128xf32, #tpu.memory_space<vmem>>, vector<8x128xf32>
      tpu.vector_store %arg6[%c0_11, %c0_12], %12 {strides = array<i32>} : memref<8x128xf32, #tpu.memory_space<vmem>>, vector<8x128xf32>,
    } else {
    }
    %c0 = arith.constant 0 : index
    %c0_1 = arith.constant 0 : index
    %3 = vector.load %arg6[%c0, %c0_1] : memref<8x128xf32, #tpu.memory_space<vmem>>, vector<8x128xf32>
    %c0_2 = arith.constant 0 : index
    %c0_3 = arith.constant 0 : index
    %4 = vector.load %arg3[%c0_2, %c0_3] : memref<8x128xbf16, #tpu.memory_space<vmem>>, vector<8x128xbf16>
    %c0_4 = arith.constant 0 : index
    %c0_5 = arith.constant 0 : index
    %5 = vector.load %arg4[%c0_4, %c0_5] : memref<128x128xbf16, #tpu.memory_space<vmem>>, vector<128x128xbf16>
    %cst = arith.constant dense<0.000000e+00> : vector<8x128xf32>
    %6 = tpu.matmul %4, %5, %cst {dimension_numbers = #tpu.dot_dimension_numbers<[1], [0], [0], [1], [0, 0, 1, 1], [], []>} : vector<8x128xbf16>, vector<128x128xbf16>, vector<8x128xf32> -> vector<8x128xf32>
    %7 = arith.addf %3, %6 : vector<8x128xf32>
    %c0_6 = arith.constant 0 : index
    %c0_7 = arith.constant 0 : index
    %8 = vector.load %arg6[%c0_6, %c0_7] : memref<8x128xf32, #tpu.memory_space<vmem>>, vector<8x128xf32>
    tpu.vector_store %arg6[%c0_6, %c0_7], %7 {strides = array<i32>} : memref<8x128xf32, #tpu.memory_space<vmem>>, vector<8x128xf32>,
    %c0_i32_8 = arith.constant 0 : i32
    %9 = arith.cmpi eq, %arg2, %c0_i32_8 : i32
    %10 = arith.extui %9 : i1 to i32
    %c0_i32_9 = arith.constant 0 : i32
    %11 = arith.cmpi ne, %10, %c0_i32_9 : i32
    scf.if %11 {
      %c0_10 = arith.constant 0 : index
      %c0_11 = arith.constant 0 : index
      %12 = vector.load %arg6[%c0_10, %c0_11] : memref<8x128xf32, #tpu.memory_space<vmem>>, vector<8x128xf32>
      %13 = arith.truncf %12 : vector<8x128xf32> to vector<8x128xbf16>
      %c0_12 = arith.constant 0 : index
      %c0_13 = arith.constant 0 : index
      %14 = vector.load %arg5[%c0_12, %c0_13] : memref<8x128xbf16, #tpu.memory_space<vmem>>, vector<8x128xbf16>
      tpu.vector_store %arg5[%c0_12, %c0_13], %13 {strides = array<i32>} : memref<8x128xbf16, #tpu.memory_space<vmem>>, vector<8x128xbf16>,
    } else {
    }
    return
  }
  func.func @transform_0(%arg0: i32, %arg1: i32, %arg2: i32) -> (i32, i32) {
    %c0_i32 = arith.constant 0 : i32
    return %arg0, %arg2 : i32, i32
  }
  func.func @transform_1(%arg0: i32, %arg1: i32, %arg2: i32) -> (i32, i32) {
    %c0_i32 = arith.constant 0 : i32
    return %arg2, %arg1 : i32, i32
  }
  func.func @transform_2(%arg0: i32, %arg1: i32, %arg2: i32) -> (i32, i32) {
    %c0_i32 = arith.constant 0 : i32
    return %arg0, %arg1 : i32, i32
  }
}

module attributes {stable_mosaic.version = 11 : i64} {
  func.func @kernel(%arg0: i32, %arg1: memref<8x128xbf16, #tpu.memory_space<vmem>>, %arg2: memref<8x128xbf16, #tpu.memory_space<vmem>>, %arg3: memref<1x128xbf16, #tpu.memory_space<vmem>>, %arg4: memref<8x128xbf16, #tpu.memory_space<vmem>>, %arg5: memref<8x128xbf16, #tpu.memory_space<vmem>>) attributes {dimension_semantics = [#tpu.dimension_semantics<parallel>], iteration_bounds = array<i64: 1>, scalar_prefetch = 0 : i64, scratch_operands = 0 : i64, tpu.core_type = #tpu.core_type<tc>, window_params = [{transform_indices = @transform_0, window_bounds = array<i64: 8, 128>}, {transform_indices = @transform_1, window_bounds = array<i64: 8, 128>}, {pipeline_mode = #tpu.pipeline_mode<synchronous>, transform_indices = @transform_2, window_bounds = array<i64: 1, 128>}, {transform_indices = @transform_3, window_bounds = array<i64: 8, 128>}, {transform_indices = @transform_4, window_bounds = array<i64: 8, 128>}]} {
    %c0 = arith.constant 0 : index
    %c0_0 = arith.constant 0 : index
    %0 = vector.load %arg1[%c0, %c0_0] : memref<8x128xbf16, #tpu.memory_space<vmem>>, vector<8x128xbf16>
    %1 = arith.extf %0 : vector<8x128xbf16> to vector<8x128xf32>
    %c0_1 = arith.constant 0 : index
    %c0_2 = arith.constant 0 : index
    %2 = vector.load %arg2[%c0_1, %c0_2] : memref<8x128xbf16, #tpu.memory_space<vmem>>, vector<8x128xbf16>
    %3 = arith.extf %2 : vector<8x128xbf16> to vector<8x128xf32>
    %4 = arith.addf %1, %3 : vector<8x128xf32>
    %5 = arith.truncf %4 : vector<8x128xf32> to vector<8x128xbf16>
    %c0_3 = arith.constant 0 : index
    %c0_4 = arith.constant 0 : index
    %6 = vector.load %arg5[%c0_3, %c0_4] : memref<8x128xbf16, #tpu.memory_space<vmem>>, vector<8x128xbf16>
    tpu.vector_store %arg5[%c0_3, %c0_4], %5 {strides = array<i32>} : memref<8x128xbf16, #tpu.memory_space<vmem>>, vector<8x128xbf16>,
    %7 = arith.mulf %4, %4 : vector<8x128xf32>
    %cst = arith.constant dense<0.000000e+00> : vector<8xf32>
    %8 = vector.multi_reduction <add>, %7, %cst [1] : vector<8x128xf32> to vector<8xf32>
    %9 = vector.shape_cast %8 : vector<8xf32> to vector<8x1xf32>
    %cst_5 = arith.constant 1.280000e+02 : f32
    %10 = vector.broadcast %cst_5 : f32 to vector<8x1xf32>
    %11 = arith.divf %9, %10 : vector<8x1xf32>
    %cst_6 = arith.constant 9.99999997E-7 : f32
    %12 = vector.broadcast %cst_6 : f32 to vector<8x1xf32>
    %13 = arith.addf %11, %12 : vector<8x1xf32>
    %14 = math.rsqrt %13 : vector<8x1xf32>
    %15 = vector.broadcast %14 : vector<8x1xf32> to vector<8x128xf32>
    %16 = arith.mulf %4, %15 : vector<8x128xf32>
    %c0_7 = arith.constant 0 : index
    %c0_8 = arith.constant 0 : index
    %17 = vector.load %arg3[%c0_7, %c0_8] : memref<1x128xbf16, #tpu.memory_space<vmem>>, vector<1x128xbf16>
    %18 = arith.extf %17 : vector<1x128xbf16> to vector<1x128xf32>
    %19 = vector.broadcast %18 : vector<1x128xf32> to vector<8x128xf32>
    %20 = arith.mulf %16, %19 : vector<8x128xf32>
    %21 = arith.truncf %20 : vector<8x128xf32> to vector<8x128xbf16>
    %c0_9 = arith.constant 0 : index
    %c0_10 = arith.constant 0 : index
    %22 = vector.load %arg4[%c0_9, %c0_10] : memref<8x128xbf16, #tpu.memory_space<vmem>>, vector<8x128xbf16>
    tpu.vector_store %arg4[%c0_9, %c0_10], %21 {strides = array<i32>} : memref<8x128xbf16, #tpu.memory_space<vmem>>, vector<8x128xbf16>,
    return
  }
  func.func @transform_0(%arg0: i32) -> (i32, i32) {
    %c0_i32 = arith.constant 0 : i32
    %c0_i32_0 = arith.constant 0 : i32
    return %arg0, %c0_i32 : i32, i32
  }
  func.func @transform_1(%arg0: i32) -> (i32, i32) {
    %c0_i32 = arith.constant 0 : i32
    %c0_i32_0 = arith.constant 0 : i32
    return %arg0, %c0_i32 : i32, i32
  }
  func.func @transform_2(%arg0: i32) -> (i32, i32) {
    %c0_i32 = arith.constant 0 : i32
    %c0_i32_0 = arith.constant 0 : i32
    %c0_i32_1 = arith.constant 0 : i32
    return %c0_i32, %c0_i32_0 : i32, i32
  }
  func.func @transform_3(%arg0: i32) -> (i32, i32) {
    %c0_i32 = arith.constant 0 : i32
    %c0_i32_0 = arith.constant 0 : i32
    return %arg0, %c0_i32 : i32, i32
  }
  func.func @transform_4(%arg0: i32) -> (i32, i32) {
    %c0_i32 = arith.constant 0 : i32
    %c0_i32_0 = arith.constant 0 : i32
    return %arg0, %c0_i32 : i32, i32
  }
}

module attributes {stable_mosaic.version = 11 : i64} {
  func.func @kernel(%arg0: i32, %arg1: i32, %arg2: memref<12xi32, #tpu.memory_space<smem>>, %arg3: memref<1xi32, #tpu.memory_space<smem>>, %arg4: memref<8x128xbf16, #tpu.memory_space<vmem>>, %arg5: memref<8x1xf32, #tpu.memory_space<vmem>>, %arg6: memref<1x128x128xbf16, #tpu.memory_space<vmem>>, %arg7: memref<1x128x128xbf16, #tpu.memory_space<vmem>>, %arg8: memref<1x128x128xbf16, #tpu.memory_space<vmem>>, %arg9: memref<8x128xbf16, #tpu.memory_space<vmem>>, %arg10: memref<8x128xf32, #tpu.memory_space<vmem>>) attributes {dimension_semantics = [#tpu.dimension_semantics<parallel>, #tpu.dimension_semantics<arbitrary>], iteration_bounds = array<i64: 12, 1>, scalar_prefetch = 2 : i64, scratch_operands = 1 : i64, tpu.core_type = #tpu.core_type<tc>, window_params = [{transform_indices = @transform_0, window_bounds = array<i64: 8, 128>}, {transform_indices = @transform_1, window_bounds = array<i64: 8, 1>}, {transform_indices = @transform_2, window_bounds = array<i64: 1, 128, 128>}, {transform_indices = @transform_3, window_bounds = array<i64: 1, 128, 128>}, {transform_indices = @transform_4, window_bounds = array<i64: 1, 128, 128>}, {transform_indices = @transform_5, window_bounds = array<i64: 8, 128>}]} {
    %c0_i32 = arith.constant 0 : i32
    %0 = arith.cmpi eq, %arg1, %c0_i32 : i32
    %1 = arith.extui %0 : i1 to i32
    %c0_i32_0 = arith.constant 0 : i32
    %2 = arith.cmpi ne, %1, %c0_i32_0 : i32
    scf.if %2 {
      %cst = arith.constant 0.000000e+00 : f32
      %10 = vector.broadcast %cst : f32 to vector<8x128xf32>
      %c0_4 = arith.constant 0 : index
      %c0_5 = arith.constant 0 : index
      %11 = vector.load %arg10[%c0_4, %c0_5] : memref<8x128xf32, #tpu.memory_space<vmem>>, vector<8x128xf32>
      tpu.vector_store %arg10[%c0_4, %c0_5], %10 {strides = array<i32>} : memref<8x128xf32, #tpu.memory_space<vmem>>, vector<8x128xf32>,
    } else {
    }
    %c0 = arith.constant 0 : index
    %3 = memref.load %arg3[%c0] : memref<1xi32, #tpu.memory_space<smem>>
    %4 = arith.cmpi slt, %arg0, %3 : i32
    %5 = arith.extui %4 : i1 to i32
    %c0_i32_1 = arith.constant 0 : i32
    %6 = arith.cmpi ne, %5, %c0_i32_1 : i32
    scf.if %6 {
      %c0_4 = arith.constant 0 : index
      %c0_5 = arith.constant 0 : index
      %10 = vector.load %arg4[%c0_4, %c0_5] : memref<8x128xbf16, #tpu.memory_space<vmem>>, vector<8x128xbf16>
      %c0_6 = arith.constant 0 : index
      %c0_7 = arith.constant 0 : index
      %c0_8 = arith.constant 0 : index
      %11 = vector.load %arg6[%c0_6, %c0_7, %c0_8] : memref<1x128x128xbf16, #tpu.memory_space<vmem>>, vector<1x128x128xbf16>
      %12 = vector.shape_cast %11 : vector<1x128x128xbf16> to vector<128x128xbf16>
      %cst = arith.constant dense<0.000000e+00> : vector<8x128xf32>
      %13 = tpu.matmul %10, %12, %cst {dimension_numbers = #tpu.dot_dimension_numbers<[1], [0], [0], [1], [0, 0, 1, 1], [], []>} : vector<8x128xbf16>, vector<128x128xbf16>, vector<8x128xf32> -> vector<8x128xf32>
      %c0_9 = arith.constant 0 : index
      %c0_10 = arith.constant 0 : index
      %c0_11 = arith.constant 0 : index
      %14 = vector.load %arg7[%c0_9, %c0_10, %c0_11] : memref<1x128x128xbf16, #tpu.memory_space<vmem>>, vector<1x128x128xbf16>
      %15 = vector.shape_cast %14 : vector<1x128x128xbf16> to vector<128x128xbf16>
      %cst_12 = arith.constant dense<0.000000e+00> : vector<8x128xf32>
      %16 = tpu.matmul %10, %15, %cst_12 {dimension_numbers = #tpu.dot_dimension_numbers<[1], [0], [0], [1], [0, 0, 1, 1], [], []>} : vector<8x128xbf16>, vector<128x128xbf16>, vector<8x128xf32> -> vector<8x128xf32>
      %17 = arith.negf %13 : vector<8x128xf32>
      %18 = math.exp %17 : vector<8x128xf32>
      %cst_13 = arith.constant 1.000000e+00 : f32
      %19 = vector.broadcast %cst_13 : f32 to vector<8x128xf32>
      %20 = arith.addf %19, %18 : vector<8x128xf32>
      %21 = arith.divf %19, %20 : vector<8x128xf32>
      %22 = arith.mulf %13, %21 : vector<8x128xf32>
      %23 = arith.mulf %22, %16 : vector<8x128xf32>
      %24 = arith.truncf %23 : vector<8x128xf32> to vector<8x128xbf16>
      %c0_14 = arith.constant 0 : index
      %c0_15 = arith.constant 0 : index
      %25 = vector.load %arg10[%c0_14, %c0_15] : memref<8x128xf32, #tpu.memory_space<vmem>>, vector<8x128xf32>
      %c0_16 = arith.constant 0 : index
      %c0_17 = arith.constant 0 : index
      %c0_18 = arith.constant 0 : index
      %26 = vector.load %arg8[%c0_16, %c0_17, %c0_18] : memref<1x128x128xbf16, #tpu.memory_space<vmem>>, vector<1x128x128xbf16>
      %27 = vector.shape_cast %26 : vector<1x128x128xbf16> to vector<128x128xbf16>
      %cst_19 = arith.constant dense<0.000000e+00> : vector<8x128xf32>
      %28 = tpu.matmul %24, %27, %cst_19 {dimension_numbers = #tpu.dot_dimension_numbers<[1], [0], [0], [1], [0, 0, 1, 1], [], []>} : vector<8x128xbf16>, vector<128x128xbf16>, vector<8x128xf32> -> vector<8x128xf32>
      %29 = arith.addf %25, %28 : vector<8x128xf32>
      %c0_20 = arith.constant 0 : index
      %c0_21 = arith.constant 0 : index
      %30 = vector.load %arg10[%c0_20, %c0_21] : memref<8x128xf32, #tpu.memory_space<vmem>>, vector<8x128xf32>
      tpu.vector_store %arg10[%c0_20, %c0_21], %29 {strides = array<i32>} : memref<8x128xf32, #tpu.memory_space<vmem>>, vector<8x128xf32>,
    } else {
    }
    %c0_i32_2 = arith.constant 0 : i32
    %7 = arith.cmpi eq, %arg1, %c0_i32_2 : i32
    %8 = arith.extui %7 : i1 to i32
    %c0_i32_3 = arith.constant 0 : i32
    %9 = arith.cmpi ne, %8, %c0_i32_3 : i32
    scf.if %9 {
      %c0_4 = arith.constant 0 : index
      %c0_5 = arith.constant 0 : index
      %10 = vector.load %arg10[%c0_4, %c0_5] : memref<8x128xf32, #tpu.memory_space<vmem>>, vector<8x128xf32>
      %c0_6 = arith.constant 0 : index
      %c0_7 = arith.constant 0 : index
      %11 = vector.load %arg5[%c0_6, %c0_7] : memref<8x1xf32, #tpu.memory_space<vmem>>, vector<8x1xf32>
      %12 = vector.broadcast %11 : vector<8x1xf32> to vector<8x128xf32>
      %13 = arith.mulf %10, %12 : vector<8x128xf32>
      %14 = arith.truncf %13 : vector<8x128xf32> to vector<8x128xbf16>
      %c0_8 = arith.constant 0 : index
      %c0_9 = arith.constant 0 : index
      %15 = vector.load %arg9[%c0_8, %c0_9] : memref<8x128xbf16, #tpu.memory_space<vmem>>, vector<8x128xbf16>
      tpu.vector_store %arg9[%c0_8, %c0_9], %14 {strides = array<i32>} : memref<8x128xbf16, #tpu.memory_space<vmem>>, vector<8x128xbf16>,
    } else {
    }
    return
  }
  func.func @transform_0(%arg0: i32, %arg1: i32, %arg2: memref<12xi32, #tpu.memory_space<smem>>, %arg3: memref<1xi32, #tpu.memory_space<smem>>) -> (i32, i32) {
    %c0_i32 = arith.constant 0 : i32
    %c0_i32_0 = arith.constant 0 : i32
    return %arg0, %c0_i32 : i32, i32
  }
  func.func @transform_1(%arg0: i32, %arg1: i32, %arg2: memref<12xi32, #tpu.memory_space<smem>>, %arg3: memref<1xi32, #tpu.memory_space<smem>>) -> (i32, i32) {
    %c0_i32 = arith.constant 0 : i32
    %c0_i32_0 = arith.constant 0 : i32
    return %arg0, %c0_i32 : i32, i32
  }
  func.func @transform_2(%arg0: i32, %arg1: i32, %arg2: memref<12xi32, #tpu.memory_space<smem>>, %arg3: memref<1xi32, #tpu.memory_space<smem>>) -> (i32, i32, i32) {
    %0 = arith.index_cast %arg0 : i32 to index
    %1 = memref.load %arg2[%0] : memref<12xi32, #tpu.memory_space<smem>>
    %c0_i32 = arith.constant 0 : i32
    %c0_i32_0 = arith.constant 0 : i32
    return %1, %c0_i32, %arg1 : i32, i32, i32
  }
  func.func @transform_3(%arg0: i32, %arg1: i32, %arg2: memref<12xi32, #tpu.memory_space<smem>>, %arg3: memref<1xi32, #tpu.memory_space<smem>>) -> (i32, i32, i32) {
    %0 = arith.index_cast %arg0 : i32 to index
    %1 = memref.load %arg2[%0] : memref<12xi32, #tpu.memory_space<smem>>
    %c0_i32 = arith.constant 0 : i32
    %c0_i32_0 = arith.constant 0 : i32
    return %1, %c0_i32, %arg1 : i32, i32, i32
  }
  func.func @transform_4(%arg0: i32, %arg1: i32, %arg2: memref<12xi32, #tpu.memory_space<smem>>, %arg3: memref<1xi32, #tpu.memory_space<smem>>) -> (i32, i32, i32) {
    %0 = arith.index_cast %arg0 : i32 to index
    %1 = memref.load %arg2[%0] : memref<12xi32, #tpu.memory_space<smem>>
    %c0_i32 = arith.constant 0 : i32
    %c0_i32_0 = arith.constant 0 : i32
    return %1, %arg1, %c0_i32 : i32, i32, i32
  }
  func.func @transform_5(%arg0: i32, %arg1: i32, %arg2: memref<12xi32, #tpu.memory_space<smem>>, %arg3: memref<1xi32, #tpu.memory_space<smem>>) -> (i32, i32) {
    %c0_i32 = arith.constant 0 : i32
    %c0_i32_0 = arith.constant 0 : i32
    return %arg0, %c0_i32 : i32, i32
  }
}

</mosaic_0001>

<llo_original>
// kernel: custom-call.4
$region0: #{custom-call.4}
  %s0 = inlined_call_operand.vmem [shape: u32[12], index: 0, kind: output, shape index: {}]

// kernel: custom-call
$region0: #{custom-call}
  #allocation0 [shape = 'u32[8,128]{1,0}', space=vmem, size = 0x1000, scoped, tag = 'scratch']
  #allocation1 [shape = 'u32[8,128]{1,0}', space=vmem, size = 0x1000, scoped, tag = 'scratch']
  #allocation2 [shape = 'u32[8,128]{1,0}', space=vmem, size = 0x1000, scoped, tag = 'scratch']
  #allocation3 [shape = 'u32[8,128]{1,0}', space=vmem, size = 0x1000, scoped, tag = 'scratch']
  #allocation4 [shape = 'u32[8,128]{1,0}', space=vmem, size = 0x1000, scoped, tag = 'scratch']
  #allocation5 [shape = 'u32[8,128]{1,0}', space=vmem, size = 0x1000, scoped, tag = 'scratch']
  #allocation6 [shape = 'u32[8,128]{1,0}', space=vmem, size = 0x1000, scoped, tag = 'scratch']
  %s0 = inlined_call_operand.vmem [shape: f32[8,2], index: 0, kind: input, shape index: {}]
  %s1 = inlined_call_operand.hbm [shape: f32[8,1], index: 1, kind: output, shape index: {0}]
  %s2 = inlined_call_operand.vmem [shape: s32[8,1], index: 2, kind: output, shape index: {1}]
  %3 = xla_tuple %s1, %s2
  %4 = xla_tuple 2147483648, 2147483647
  $region1: #{custom-call} parent=0
    #allocation7 [shape = 'u8[4096]{0}', space=vmem, size = 0x1000, scoped, tag = 'operand span for operand 1']
    #allocation8 [shape = 'u8[512]{0}', space=vmem, size = 0x400, scoped, tag = 'packed  for operand 1']
    #allocation9 [shape = 's32[1]{0}', space=sflag, size = 0x4, scoped, tag = 'scoped memory for custom-call']
    #allocation10 [shape = 'u8[4096]{0}', space=vmem, size = 0x1000, scoped, tag = 'operand span for operand 2']
    #allocation11 [shape = 'u8[512]{0}', space=vmem, size = 0x400, scoped, tag = 'packed  for operand 2']
    #allocation12 [shape = 'f32[1,128]{1,0:T(8,128)}', space=vmem, size = 0x1000, scoped, tag = 'scoped memory for custom-call']
    #allocation13 [shape = 'f32[1,128]{1,0:T(8,128)}', space=vmem, size = 0x1000, scoped, tag = 'scoped memory for custom-call']
    #allocation14 [shape = 's32[1,128]{1,0:T(8,128)}', space=vmem, size = 0x1000, scoped, tag = 'scoped memory for custom-call']
    #allocation15 [shape = 's32[1,128]{1,0:T(8,128)}', space=vmem, size = 0x1000, scoped, tag = 'scoped memory for custom-call']
    %5 = vsyncpa [#allocation9], 0
    %6 = xla_tuple [#allocation7], [#allocation10]
    %7 = vst [vmem:[#allocation12] sm:$0xff] 2147483648
    %8 = vst [vmem:[#allocation14] sm:$0xff] 2147483647
    %9 = xla_tuple [#allocation12], [#allocation14]
    %10 = xla_tuple [#allocation13], [#allocation15]
    $region2: #{custom-call} parent=1
      #allocation16 [shape = 'u8[4096]{0}', space=vmem, size = 0x1000, scoped, tag = 'operand span for operand 0']
      #allocation17 [shape = 's32[1024]{0}', space=vmem, size = 0x1000, scoped, tag = 'scoped memory for custom-call']
      // Predicated region
      $region3: #{custom-call} parent=2 // pred_check
        _
      $region4: #{custom-call} parent=2 // pred_check_branch
        %12 = sbr.rel (0) target = $region6
      $region5: #{custom-call} parent=2 // pred_region
        // Predicated region
        $region7: #{custom-call} parent=5 // pred_check
          _
        $region8: #{custom-call} parent=5 // pred_check_branch
          %14 = sbr.rel (0) target = $region10
        $region9: #{custom-call} parent=5 // pred_region
          // Predicated region
          $region11: #{custom-call} parent=9 // pred_check
            _
          $region12: #{custom-call} parent=9 // pred_check_branch
            %16 = sbr.rel target = $region14
          $region13: #{custom-call} parent=9 // pred_region
            // Predicated region
            $region26: #{custom-call} parent=13 // pred_check
              _
            $region27: #{custom-call} parent=13 // pred_check_branch
              %32 = sbr.rel (0) target = $region29
            $region28: #{custom-call} parent=13 // pred_region
              %s34 = ssub.s32 4, 1
              loop: start=0, step=1, limit=1
              $region30: #{custom-call} parent=28 // loop_pre_header
                _
              $region31: #{custom-call} parent=28 // loop_header
                %s36 = sphi 0, %s40
                %p37 = scmp.ge.s32.totalorder %s36, 1
                %s41 = sphi %s0, %s0
                %s42 = sphi [#allocation16], [#allocation16]
              $region32: #{custom-call} parent=28 // loop_header_branch
                %39 = sbr.rel (%p37) target = $region36
              $region33: #{custom-call} parent=28 // loop_body
                %v43 = vld [vmem:[%s41] sm:%s34]
                %44 = vst [vmem:[%s42] sm:%s34] %v43
              $region34: #{custom-call} parent=28 // loop_footer
                %s40 = sadd.s32 1, %s36
              $region35: #{custom-call} parent=28 // loop_footer_branch
                %35 = sbr.rel target = $region31
              $region36: #{custom-call} parent=28 // loop_exit
                _
            $region29: #{custom-call} parent=13 // pred_fallthru
              _
          $region14: #{custom-call} parent=9 // pred_fallthru
            _
          // Predicated region
          $region15: #{custom-call} parent=9 // pred_check
            _
          $region16: #{custom-call} parent=9 // pred_check_branch
            %18 = sbr.rel (0) target = $region18
          $region17: #{custom-call} parent=9 // pred_region
            %s20 = ssub.s32 4, 1
            loop: start=0, step=1, limit=1
            $region19: #{custom-call} parent=17 // loop_pre_header
              _
            $region20: #{custom-call} parent=17 // loop_header
              %s22 = sphi 0, %s26
              %p23 = scmp.ge.s32.totalorder %s22, 1
              %s27 = sphi %s0, %s0
              %s28 = sphi [#allocation16], [#allocation16]
            $region21: #{custom-call} parent=17 // loop_header_branch
              %25 = sbr.rel (%p23) target = $region25
            $region22: #{custom-call} parent=17 // loop_body
              %v29 = vld [vmem:[%s27] sm:%s20]
              %30 = vst [vmem:[%s28] sm:%s20] %v29
            $region23: #{custom-call} parent=17 // loop_footer
              %s26 = sadd.s32 1, %s22
            $region24: #{custom-call} parent=17 // loop_footer_branch
              %21 = sbr.rel target = $region20
            $region25: #{custom-call} parent=17 // loop_exit
              _
          $region18: #{custom-call} parent=9 // pred_fallthru
            _
        $region10: #{custom-call} parent=5 // pred_fallthru
          _
        %45 = vnop
      $region6: #{custom-call} parent=2 // pred_fallthru
        _
      // Predicated region
      $region37: #{custom-call} parent=2 // pred_check
        _
      $region38: #{custom-call} parent=2 // pred_check_branch
        %47 = sbr.rel (0) target = $region40
      $region39: #{custom-call} parent=2 // pred_region
        _
      $region40: #{custom-call} parent=2 // pred_fallthru
        _
      %v48 = vlaneseq
      %v49 = vshrl.u32 %v48, 7
      %v51 = vld [vmem:[#allocation16] sm:$0xff]
      %vm52 = vcmp.lt.s32.totalorder %v51, 0
      %v53 = vsub.s32 2147483647, %v51
      %v54 = vsel %vm52, %v53, %v51
      %vm56 = vcmp.lt.s32.totalorder %v49, 2
      %v57 = vsel %vm56, %v54, 2147483648
      %58 = vst [vmem:[#allocation16] sm:$0xff] %v57
      %v59 = vlaneseq
      %v60 = vshrl.u32 %v59, 7
      %63 = vst [vmem:[#allocation17] sm:$0xff] %v60
      %64 = xla_tuple [#allocation16], [#allocation17]
      %65 = vst [vmem:[#allocation13] sm:$0xff] 2147483648
      %66 = vst [vmem:[#allocation15] sm:$0xff] 2147483647
      %67 = xla_tuple [#allocation13], [#allocation15]
      loop: start=0, step=1, limit=1
      $region41: #{custom-call} parent=2 // loop_pre_header
        _
      $region42: #{custom-call} parent=2 // loop_header
        %s69 = sphi 0, %s73
        %p70 = scmp.ge.s32.totalorder %s69, 1
      $region43: #{custom-call} parent=2 // loop_header_branch
        %72 = sbr.rel (%p70) target = $region47
      $region44: #{custom-call} parent=2 // loop_body
        %v74 = vld [vmem:[#allocation16] sm:$0xff]
        %v75 = vld [vmem:[#allocation17] sm:$0xff]
        %76 = xla_tuple %v74, %v75
        %v77 = vrot.slane %v74, 1
        %v78 = vrot.slane %v75, 1
        %79 = xla_tuple %v77, %v78
        %vm80 = vcmp.gt.s32.totalorder %v77, %v74
        %vm81 = vcmp.eq.s32.totalorder %v77, %v74
        %vm82 = vcmp.lt.s32.totalorder %v78, %v75
        %vm83 = vmand %vm81, %vm82
        %vm84 = vmor %vm80, %vm83
        %v85 = vsel %vm84, %v77, %v74
        %v86 = vsel %vm84, %v78, %v75
        %87 = xla_tuple %v85, %v86
        %v88 = vrot.slane %v85, 1
        %v89 = vrot.slane %v86, 1
        %90 = xla_tuple %v88, %v89
        %vm91 = vcmp.gt.s32.totalorder %v88, %v85
        %vm92 = vcmp.eq.s32.totalorder %v88, %v85
        %vm93 = vcmp.lt.s32.totalorder %v89, %v86
        %vm94 = vmand %vm92, %vm93
        %vm95 = vmor %vm91, %vm94
        %v96 = vsel %vm95, %v88, %v85
        %v97 = vsel %vm95, %v89, %v86
        %98 = xla_tuple %v96, %v97
        %v99 = vrot.slane %v96, 1
        %v100 = vrot.slane %v97, 1
        %101 = xla_tuple %v99, %v100
        %vm102 = vcmp.gt.s32.totalorder %v99, %v96
        %vm103 = vcmp.eq.s32.totalorder %v99, %v96
        %vm104 = vcmp.lt.s32.totalorder %v100, %v97
        %vm105 = vmand %vm103, %vm104
        %vm106 = vmor %vm102, %vm105
        %v107 = vsel %vm106, %v99, %v96
        %v108 = vsel %vm106, %v100, %v97
        %109 = xla_tuple %v107, %v108
        %v110 = vrot.slane %v107, 1
        %v111 = vrot.slane %v108, 1
        %112 = xla_tuple %v110, %v111
        %vm113 = vcmp.gt.s32.totalorder %v110, %v107
        %vm114 = vcmp.eq.s32.totalorder %v110, %v107
        %vm115 = vcmp.lt.s32.totalorder %v111, %v108
        %vm116 = vmand %vm114, %vm115
        %vm117 = vmor %vm113, %vm116
        %v118 = vsel %vm117, %v110, %v107
        %v119 = vsel %vm117, %v111, %v108
        %120 = xla_tuple %v118, %v119
        %v121 = vrot.slane %v118, 1
        %v122 = vrot.slane %v119, 1
        %123 = xla_tuple %v121, %v122
        %vm124 = vcmp.gt.s32.totalorder %v121, %v118
        %vm125 = vcmp.eq.s32.totalorder %v121, %v118
        %vm126 = vcmp.lt.s32.totalorder %v122, %v119
        %vm127 = vmand %vm125, %vm126
        %vm128 = vmor %vm124, %vm127
        %v129 = vsel %vm128, %v121, %v118
        %v130 = vsel %vm128, %v122, %v119
        %131 = xla_tuple %v129, %v130
        %v132 = vrot.slane %v129, 1
        %v133 = vrot.slane %v130, 1
        %134 = xla_tuple %v132, %v133
        %vm135 = vcmp.gt.s32.totalorder %v132, %v129
        %vm136 = vcmp.eq.s32.totalorder %v132, %v129
        %vm137 = vcmp.lt.s32.totalorder %v133, %v130
        %vm138 = vmand %vm136, %vm137
        %vm139 = vmor %vm135, %vm138
        %v140 = vsel %vm139, %v132, %v129
        %v141 = vsel %vm139, %v133, %v130
        %142 = xla_tuple %v140, %v141
        %v143 = vrot.slane %v140, 1
        %v144 = vrot.slane %v141, 1
        %145 = xla_tuple %v143, %v144
        %vm146 = vcmp.gt.s32.totalorder %v143, %v140
        %vm147 = vcmp.eq.s32.totalorder %v143, %v140
        %vm148 = vcmp.lt.s32.totalorder %v144, %v141
        %vm149 = vmand %vm147, %vm148
        %vm150 = vmor %vm146, %vm149
        %v151 = vsel %vm150, %v143, %v140
        %v152 = vsel %vm150, %v144, %v141
        %153 = xla_tuple %v151, %v152
        %s154 = scalar_lea.vmem [#allocation13], %s69
        %155 = vst [vmem:[%s154] sm:$0x1] %v151
        %s156 = scalar_lea.vmem [#allocation15], %s69
        %157 = vst [vmem:[%s156] sm:$0x1] %v152
        %158 = xla_tuple %155, %157
        %159 = vxpose.xlu0.b32.start [1/16] %v152, 128
        %160 = vxpose.xlu0.b32.cont [2/16] 0.0, 128
        %161 = vxpose.xlu0.b32.cont [3/16] 0.0, 128
        %162 = vxpose.xlu0.b32.cont [4/16] 0.0, 128
        %163 = vxpose.xlu0.b32.cont [5/16] 0.0, 128
        %164 = vxpose.xlu0.b32.cont [6/16] 0.0, 128
        %165 = vxpose.xlu0.b32.cont [7/16] 0.0, 128
        %166 = vxpose.xlu0.b32.cont [8/16] 0.0, 128
        %167 = vxpose.xlu0.b32.cont [9/16] 0.0, 128
        %168 = vxpose.xlu0.b32.cont [10/16] 0.0, 128
        %169 = vxpose.xlu0.b32.cont [11/16] 0.0, 128
        %170 = vxpose.xlu0.b32.cont [12/16] 0.0, 128
        %171 = vxpose.xlu0.b32.cont [13/16] 0.0, 128
        %172 = vxpose.xlu0.b32.cont [14/16] 0.0, 128
        %173 = vxpose.xlu0.b32.cont [15/16] 0.0, 128
        %174 = vxpose.xlu0.b32.end [16/16] 0.0, 128
        %v175 = vpop.trf.xlu0
        %v176 = vpop.trf.xlu0
        %v177 = vpop.trf.xlu0
        %v178 = vpop.trf.xlu0
        %v179 = vpop.trf.xlu0
        %v180 = vpop.trf.xlu0
        %v181 = vpop.trf.xlu0
        %v182 = vpop.trf.xlu0
        %v183 = vpop.trf.xlu0
        %v184 = vpop.trf.xlu0
        %v185 = vpop.trf.xlu0
        %v186 = vpop.trf.xlu0
        %v187 = vpop.trf.xlu0
        %v188 = vpop.trf.xlu0
        %v189 = vpop.trf.xlu0
        %v190 = vpop.trf.xlu0
        %s191 = vtos %v175
        %s192 = sshrl.u32 %s191, 3
        %p193 = scmp.lt.s32.totalorder %s191, 0
        %s194 = ssub.s32 0, %s191
        %s195 = scalar_select %p193, %s194, %s191
        %s196 = sand.u32 %s195, 7
        %s197 = ssub.s32 0, %s196
        %s198 = scalar_select %p193, %s197, %s196
        %v199 = vlaneseq
        %s200 = smul.u32 %s198, 128
        %v201 = vstv %s200
        %vm203 = vcmp.eq.s32.totalorder %v199, %v201
        %s204 = smul.addr %s192, 8
        %s205 = scalar_lea.vmem [#allocation16], %s204
        %206 = vst.msk [vmem:[%s205] sm:$0xff] %vm203, 2147483648
        %s207 = smul.addr %s192, 8
        %s208 = scalar_lea.vmem [#allocation17], %s207
        %209 = vst.msk [vmem:[%s208] sm:$0xff] %vm203, 2147483647
        %210 = xla_tuple %206, %209
        %v211 = vrot.slane %v175, 1
        %s212 = vtos %v211
        %s213 = sshrl.u32 %s212, 3
        %p214 = scmp.lt.s32.totalorder %s212, 0
        %s215 = ssub.s32 0, %s212
        %s216 = scalar_select %p214, %s215, %s212
        %s217 = sand.u32 %s216, 7
        %s218 = ssub.s32 0, %s217
        %s219 = scalar_select %p214, %s218, %s217
        %v220 = vlaneseq
        %s221 = smul.u32 %s219, 128
        %v222 = vstv %s221
        %v223 = vadd.s32 %v222, 1
        %vm224 = vcmp.eq.s32.totalorder %v220, %v223
        %s225 = smul.addr %s213, 8
        %s226 = scalar_lea.vmem [#allocation16], %s225
        %227 = vst.msk [vmem:[%s226] sm:$0xff] %vm224, 2147483648
        %s228 = smul.addr %s213, 8
        %s229 = scalar_lea.vmem [#allocation17], %s228
        %230 = vst.msk [vmem:[%s229] sm:$0xff] %vm224, 2147483647
        %231 = xla_tuple %227, %230
        %v232 = vrot.slane %v211, 1
        %s233 = vtos %v232
        %s234 = sshrl.u32 %s233, 3
        %p235 = scmp.lt.s32.totalorder %s233, 0
        %s236 = ssub.s32 0, %s233
        %s237 = scalar_select %p235, %s236, %s233
        %s238 = sand.u32 %s237, 7
        %s239 = ssub.s32 0, %s238
        %s240 = scalar_select %p235, %s239, %s238
        %v241 = vlaneseq
        %s242 = smul.u32 %s240, 128
        %v243 = vstv %s242
        %v244 = vadd.s32 %v243, 2
        %vm245 = vcmp.eq.s32.totalorder %v241, %v244
        %s246 = smul.addr %s234, 8
        %s247 = scalar_lea.vmem [#allocation16], %s246
        %248 = vst.msk [vmem:[%s247] sm:$0xff] %vm245, 2147483648
        %s249 = smul.addr %s234, 8
        %s250 = scalar_lea.vmem [#allocation17], %s249
        %251 = vst.msk [vmem:[%s250] sm:$0xff] %vm245, 2147483647
        %252 = xla_tuple %248, %251
        %v253 = vrot.slane %v232, 1
        %s254 = vtos %v253
        %s255 = sshrl.u32 %s254, 3
        %p256 = scmp.lt.s32.totalorder %s254, 0
        %s257 = ssub.s32 0, %s254
        %s258 = scalar_select %p256, %s257, %s254
        %s259 = sand.u32 %s258, 7
        %s260 = ssub.s32 0, %s259
        %s261 = scalar_select %p256, %s260, %s259
        %v262 = vlaneseq
        %s263 = smul.u32 %s261, 128
        %v264 = vstv %s263
        %v265 = vadd.s32 %v264, 3
        %vm266 = vcmp.eq.s32.totalorder %v262, %v265
        %s267 = smul.addr %s255, 8
        %s268 = scalar_lea.vmem [#allocation16], %s267
        %269 = vst.msk [vmem:[%s268] sm:$0xff] %vm266, 2147483648
        %s270 = smul.addr %s255, 8
        %s271 = scalar_lea.vmem [#allocation17], %s270
        %272 = vst.msk [vmem:[%s271] sm:$0xff] %vm266, 2147483647
        %273 = xla_tuple %269, %272
        %v274 = vrot.slane %v253, 1
        %s275 = vtos %v274
        %s276 = sshrl.u32 %s275, 3
        %p277 = scmp.lt.s32.totalorder %s275, 0
        %s278 = ssub.s32 0, %s275
        %s279 = scalar_select %p277, %s278, %s275
        %s280 = sand.u32 %s279, 7
        %s281 = ssub.s32 0, %s280
        %s282 = scalar_select %p277, %s281, %s280
        %v283 = vlaneseq
        %s284 = smul.u32 %s282, 128
        %v285 = vstv %s284
        %v286 = vadd.s32 %v285, 4
        %vm287 = vcmp.eq.s32.totalorder %v283, %v286
        %s288 = smul.addr %s276, 8
        %s289 = scalar_lea.vmem [#allocation16], %s288
        %290 = vst.msk [vmem:[%s289] sm:$0xff] %vm287, 2147483648
        %s291 = smul.addr %s276, 8
        %s292 = scalar_lea.vmem [#allocation17], %s291
        %293 = vst.msk [vmem:[%s292] sm:$0xff] %vm287, 2147483647
        %294 = xla_tuple %290, %293
        %v295 = vrot.slane %v274, 1
        %s296 = vtos %v295
        %s297 = sshrl.u32 %s296, 3
        %p298 = scmp.lt.s32.totalorder %s296, 0
        %s299 = ssub.s32 0, %s296
        %s300 = scalar_select %p298, %s299, %s296
        %s301 = sand.u32 %s300, 7
        %s302 = ssub.s32 0, %s301
        %s303 = scalar_select %p298, %s302, %s301
        %v304 = vlaneseq
        %s305 = smul.u32 %s303, 128
        %v306 = vstv %s305
        %v307 = vadd.s32 %v306, 5
        %vm308 = vcmp.eq.s32.totalorder %v304, %v307
        %s309 = smul.addr %s297, 8
        %s310 = scalar_lea.vmem [#allocation16], %s309
        %311 = vst.msk [vmem:[%s310] sm:$0xff] %vm308, 2147483648
        %s312 = smul.addr %s297, 8
        %s313 = scalar_lea.vmem [#allocation17], %s312
        %314 = vst.msk [vmem:[%s313] sm:$0xff] %vm308, 2147483647
        %315 = xla_tuple %311, %314
        %v316 = vrot.slane %v295, 1
        %s317 = vtos %v316
        %s318 = sshrl.u32 %s317, 3
        %p319 = scmp.lt.s32.totalorder %s317, 0
        %s320 = ssub.s32 0, %s317
        %s321 = scalar_select %p319, %s320, %s317
        %s322 = sand.u32 %s321, 7
        %s323 = ssub.s32 0, %s322
        %s324 = scalar_select %p319, %s323, %s322
        %v325 = vlaneseq
        %s326 = smul.u32 %s324, 128
        %v327 = vstv %s326
        %v328 = vadd.s32 %v327, 6
        %vm329 = vcmp.eq.s32.totalorder %v325, %v328
        %s330 = smul.addr %s318, 8
        %s331 = scalar_lea.vmem [#allocation16], %s330
        %332 = vst.msk [vmem:[%s331] sm:$0xff] %vm329, 2147483648
        %s333 = smul.addr %s318, 8
        %s334 = scalar_lea.vmem [#allocation17], %s333
        %335 = vst.msk [vmem:[%s334] sm:$0xff] %vm329, 2147483647
        %336 = xla_tuple %332, %335
        %v337 = vrot.slane %v316, 1
        %s338 = vtos %v337
        %s339 = sshrl.u32 %s338, 3
        %p340 = scmp.lt.s32.totalorder %s338, 0
        %s341 = ssub.s32 0, %s338
        %s342 = scalar_select %p340, %s341, %s338
        %s343 = sand.u32 %s342, 7
        %s344 = ssub.s32 0, %s343
        %s345 = scalar_select %p340, %s344, %s343
        %v346 = vlaneseq
        %s347 = smul.u32 %s345, 128
        %v348 = vstv %s347
        %v349 = vadd.s32 %v348, 7
        %vm350 = vcmp.eq.s32.totalorder %v346, %v349
        %s351 = smul.addr %s339, 8
        %s352 = scalar_lea.vmem [#allocation16], %s351
        %353 = vst.msk [vmem:[%s352] sm:$0xff] %vm350, 2147483648
        %s354 = smul.addr %s339, 8
        %s355 = scalar_lea.vmem [#allocation17], %s354
        %356 = vst.msk [vmem:[%s355] sm:$0xff] %vm350, 2147483647
        %357 = xla_tuple %353, %356
        %v358 = vrot.slane %v337, 1
        %s359 = vtos %v176
        %s360 = sshrl.u32 %s359, 3
        %p361 = scmp.lt.s32.totalorder %s359, 0
        %s362 = ssub.s32 0, %s359
        %s363 = scalar_select %p361, %s362, %s359
        %s364 = sand.u32 %s363, 7
        %s365 = ssub.s32 0, %s364
        %s366 = scalar_select %p361, %s365, %s364
        %v367 = vlaneseq
        %s368 = smul.u32 %s366, 128
        %v369 = vstv %s368
        %v370 = vadd.s32 %v369, 8
        %vm371 = vcmp.eq.s32.totalorder %v367, %v370
        %s372 = smul.addr %s360, 8
        %s373 = scalar_lea.vmem [#allocation16], %s372
        %374 = vst.msk [vmem:[%s373] sm:$0xff] %vm371, 2147483648
        %s375 = smul.addr %s360, 8
        %s376 = scalar_lea.vmem [#allocation17], %s375
        %377 = vst.msk [vmem:[%s376] sm:$0xff] %vm371, 2147483647
        %378 = xla_tuple %374, %377
        %v379 = vrot.slane %v176, 1
        %s380 = vtos %v379
        %s381 = sshrl.u32 %s380, 3
        %p382 = scmp.lt.s32.totalorder %s380, 0
        %s383 = ssub.s32 0, %s380
        %s384 = scalar_select %p382, %s383, %s380
        %s385 = sand.u32 %s384, 7
        %s386 = ssub.s32 0, %s385
        %s387 = scalar_select %p382, %s386, %s385
        %v388 = vlaneseq
        %s389 = smul.u32 %s387, 128
        %v390 = vstv %s389
        %v391 = vadd.s32 %v390, 9
        %vm392 = vcmp.eq.s32.totalorder %v388, %v391
        %s393 = smul.addr %s381, 8
        %s394 = scalar_lea.vmem [#allocation16], %s393
        %395 = vst.msk [vmem:[%s394] sm:$0xff] %vm392, 2147483648
        %s396 = smul.addr %s381, 8
        %s397 = scalar_lea.vmem [#allocation17], %s396
        %398 = vst.msk [vmem:[%s397] sm:$0xff] %vm392, 2147483647
        %399 = xla_tuple %395, %398
        %v400 = vrot.slane %v379, 1
        %s401 = vtos %v400
        %s402 = sshrl.u32 %s401, 3
        %p403 = scmp.lt.s32.totalorder %s401, 0
        %s404 = ssub.s32 0, %s401
        %s405 = scalar_select %p403, %s404, %s401
        %s406 = sand.u32 %s405, 7
        %s407 = ssub.s32 0, %s406
        %s408 = scalar_select %p403, %s407, %s406
        %v409 = vlaneseq
        %s410 = smul.u32 %s408, 128
        %v411 = vstv %s410
        %v412 = vadd.s32 %v411, 10
        %vm413 = vcmp.eq.s32.totalorder %v409, %v412
        %s414 = smul.addr %s402, 8
        %s415 = scalar_lea.vmem [#allocation16], %s414
        %416 = vst.msk [vmem:[%s415] sm:$0xff] %vm413, 2147483648
        %s417 = smul.addr %s402, 8
        %s418 = scalar_lea.vmem [#allocation17], %s417
        %419 = vst.msk [vmem:[%s418] sm:$0xff] %vm413, 2147483647
        %420 = xla_tuple %416, %419
        %v421 = vrot.slane %v400, 1
        %s422 = vtos %v421
        %s423 = sshrl.u32 %s422, 3
        %p424 = scmp.lt.s32.totalorder %s422, 0
        %s425 = ssub.s32 0, %s422
        %s426 = scalar_select %p424, %s425, %s422
        %s427 = sand.u32 %s426, 7
        %s428 = ssub.s32 0, %s427
        %s429 = scalar_select %p424, %s428, %s427
        %v430 = vlaneseq
        %s431 = smul.u32 %s429, 128
        %v432 = vstv %s431
        %v433 = vadd.s32 %v432, 11
        %vm434 = vcmp.eq.s32.totalorder %v430, %v433
        %s435 = smul.addr %s423, 8
        %s436 = scalar_lea.vmem [#allocation16], %s435
        %437 = vst.msk [vmem:[%s436] sm:$0xff] %vm434, 2147483648
        %s438 = smul.addr %s423, 8
        %s439 = scalar_lea.vmem [#allocation17], %s438
        %440 = vst.msk [vmem:[%s439] sm:$0xff] %vm434, 2147483647
        %441 = xla_tuple %437, %440
        %v442 = vrot.slane %v421, 1
        %s443 = vtos %v442
        %s444 = sshrl.u32 %s443, 3
        %p445 = scmp.lt.s32.totalorder %s443, 0
        %s446 = ssub.s32 0, %s443
        %s447 = scalar_select %p445, %s446, %s443
        %s448 = sand.u32 %s447, 7
        %s449 = ssub.s32 0, %s448
        %s450 = scalar_select %p445, %s449, %s448
        %v451 = vlaneseq
        %s452 = smul.u32 %s450, 128
        %v453 = vstv %s452
        %v454 = vadd.s32 %v453, 12
        %vm455 = vcmp.eq.s32.totalorder %v451, %v454
        %s456 = smul.addr %s444, 8
        %s457 = scalar_lea.vmem [#allocation16], %s456
        %458 = vst.msk [vmem:[%s457] sm:$0xff] %vm455, 2147483648
        %s459 = smul.addr %s444, 8
        %s460 = scalar_lea.vmem [#allocation17], %s459
        %461 = vst.msk [vmem:[%s460] sm:$0xff] %vm455, 2147483647
        %462 = xla_tuple %458, %461
        %v463 = vrot.slane %v442, 1
        %s464 = vtos %v463
        %s465 = sshrl.u32 %s464, 3
        %p466 = scmp.lt.s32.totalorder %s464, 0
        %s467 = ssub.s32 0, %s464
        %s468 = scalar_select %p466, %s467, %s464
        %s469 = sand.u32 %s468, 7
        %s470 = ssub.s32 0, %s469
        %s471 = scalar_select %p466, %s470, %s469
        %v472 = vlaneseq
        %s473 = smul.u32 %s471, 128
        %v474 = vstv %s473
        %v475 = vadd.s32 %v474, 13
        %vm476 = vcmp.eq.s32.totalorder %v472, %v475
        %s477 = smul.addr %s465, 8
        %s478 = scalar_lea.vmem [#allocation16], %s477
        %479 = vst.msk [vmem:[%s478] sm:$0xff] %vm476, 2147483648
        %s480 = smul.addr %s465, 8
        %s481 = scalar_lea.vmem [#allocation17], %s480
        %482 = vst.msk [vmem:[%s481] sm:$0xff] %vm476, 2147483647
        %483 = xla_tuple %479, %482
        %v484 = vrot.slane %v463, 1
        %s485 = vtos %v484
        %s486 = sshrl.u32 %s485, 3
        %p487 = scmp.lt.s32.totalorder %s485, 0
        %s488 = ssub.s32 0, %s485
        %s489 = scalar_select %p487, %s488, %s485
        %s490 = sand.u32 %s489, 7
        %s491 = ssub.s32 0, %s490
        %s492 = scalar_select %p487, %s491, %s490
        %v493 = vlaneseq
        %s494 = smul.u32 %s492, 128
        %v495 = vstv %s494
        %v496 = vadd.s32 %v495, 14
        %vm497 = vcmp.eq.s32.totalorder %v493, %v496
        %s498 = smul.addr %s486, 8
        %s499 = scalar_lea.vmem [#allocation16], %s498
        %500 = vst.msk [vmem:[%s499] sm:$0xff] %vm497, 2147483648
        %s501 = smul.addr %s486, 8
        %s502 = scalar_lea.vmem [#allocation17], %s501
        %503 = vst.msk [vmem:[%s502] sm:$0xff] %vm497, 2147483647
        %504 = xla_tuple %500, %503
        %v505 = vrot.slane %v484, 1
        %s506 = vtos %v505
        %s507 = sshrl.u32 %s506, 3
        %p508 = scmp.lt.s32.totalorder %s506, 0
        %s509 = ssub.s32 0, %s506
        %s510 = scalar_select %p508, %s509, %s506
        %s511 = sand.u32 %s510, 7
        %s512 = ssub.s32 0, %s511
        %s513 = scalar_select %p508, %s512, %s511
        %v514 = vlaneseq
        %s515 = smul.u32 %s513, 128
        %v516 = vstv %s515
        %v517 = vadd.s32 %v516, 15
        %vm518 = vcmp.eq.s32.totalorder %v514, %v517
        %s519 = smul.addr %s507, 8
        %s520 = scalar_lea.vmem [#allocation16], %s519
        %521 = vst.msk [vmem:[%s520] sm:$0xff] %vm518, 2147483648
        %s522 = smul.addr %s507, 8
        %s523 = scalar_lea.vmem [#allocation17], %s522
        %524 = vst.msk [vmem:[%s523] sm:$0xff] %vm518, 2147483647
        %525 = xla_tuple %521, %524
        %v526 = vrot.slane %v505, 1
        %s527 = vtos %v177
        %s528 = sshrl.u32 %s527, 3
        %p529 = scmp.lt.s32.totalorder %s527, 0
        %s530 = ssub.s32 0, %s527
        %s531 = scalar_select %p529, %s530, %s527
        %s532 = sand.u32 %s531, 7
        %s533 = ssub.s32 0, %s532
        %s534 = scalar_select %p529, %s533, %s532
        %v535 = vlaneseq
        %s536 = smul.u32 %s534, 128
        %v537 = vstv %s536
        %v538 = vadd.s32 %v537, 16
        %vm539 = vcmp.eq.s32.totalorder %v535, %v538
        %s540 = smul.addr %s528, 8
        %s541 = scalar_lea.vmem [#allocation16], %s540
        %542 = vst.msk [vmem:[%s541] sm:$0xff] %vm539, 2147483648
        %s543 = smul.addr %s528, 8
        %s544 = scalar_lea.vmem [#allocation17], %s543
        %545 = vst.msk [vmem:[%s544] sm:$0xff] %vm539, 2147483647
        %546 = xla_tuple %542, %545
        %v547 = vrot.slane %v177, 1
        %s548 = vtos %v547
        %s549 = sshrl.u32 %s548, 3
        %p550 = scmp.lt.s32.totalorder %s548, 0
        %s551 = ssub.s32 0, %s548
        %s552 = scalar_select %p550, %s551, %s548
        %s553 = sand.u32 %s552, 7
        %s554 = ssub.s32 0, %s553
        %s555 = scalar_select %p550, %s554, %s553
        %v556 = vlaneseq
        %s557 = smul.u32 %s555, 128
        %v558 = vstv %s557
        %v559 = vadd.s32 %v558, 17
        %vm560 = vcmp.eq.s32.totalorder %v556, %v559
        %s561 = smul.addr %s549, 8
        %s562 = scalar_lea.vmem [#allocation16], %s561
        %563 = vst.msk [vmem:[%s562] sm:$0xff] %vm560, 2147483648
        %s564 = smul.addr %s549, 8
        %s565 = scalar_lea.vmem [#allocation17], %s564
        %566 = vst.msk [vmem:[%s565] sm:$0xff] %vm560, 2147483647
        %567 = xla_tuple %563, %566
        %v568 = vrot.slane %v547, 1
        %s569 = vtos %v568
        %s570 = sshrl.u32 %s569, 3
        %p571 = scmp.lt.s32.totalorder %s569, 0
        %s572 = ssub.s32 0, %s569
        %s573 = scalar_select %p571, %s572, %s569
        %s574 = sand.u32 %s573, 7
        %s575 = ssub.s32 0, %s574
        %s576 = scalar_select %p571, %s575, %s574
        %v577 = vlaneseq
        %s578 = smul.u32 %s576, 128
        %v579 = vstv %s578
        %v580 = vadd.s32 %v579, 18
        %vm581 = vcmp.eq.s32.totalorder %v577, %v580
        %s582 = smul.addr %s570, 8
        %s583 = scalar_lea.vmem [#allocation16], %s582
        %584 = vst.msk [vmem:[%s583] sm:$0xff] %vm581, 2147483648
        %s585 = smul.addr %s570, 8
        %s586 = scalar_lea.vmem [#allocation17], %s585
        %587 = vst.msk [vmem:[%s586] sm:$0xff] %vm581, 2147483647
        %588 = xla_tuple %584, %587
        %v589 = vrot.slane %v568, 1
        %s590 = vtos %v589
        %s591 = sshrl.u32 %s590, 3
        %p592 = scmp.lt.s32.totalorder %s590, 0
        %s593 = ssub.s32 0, %s590
        %s594 = scalar_select %p592, %s593, %s590
        %s595 = sand.u32 %s594, 7
        %s596 = ssub.s32 0, %s595
        %s597 = scalar_select %p592, %s596, %s595
        %v598 = vlaneseq
        %s599 = smul.u32 %s597, 128
        %v600 = vstv %s599
        %v601 = vadd.s32 %v600, 19
        %vm602 = vcmp.eq.s32.totalorder %v598, %v601
        %s603 = smul.addr %s591, 8
        %s604 = scalar_lea.vmem [#allocation16], %s603
        %605 = vst.msk [vmem:[%s604] sm:$0xff] %vm602, 2147483648
        %s606 = smul.addr %s591, 8
        %s607 = scalar_lea.vmem [#allocation17], %s606
        %608 = vst.msk [vmem:[%s607] sm:$0xff] %vm602, 2147483647
        %609 = xla_tuple %605, %608
        %v610 = vrot.slane %v589, 1
        %s611 = vtos %v610
        %s612 = sshrl.u32 %s611, 3
        %p613 = scmp.lt.s32.totalorder %s611, 0
        %s614 = ssub.s32 0, %s611
        %s615 = scalar_select %p613, %s614, %s611
        %s616 = sand.u32 %s615, 7
        %s617 = ssub.s32 0, %s616
        %s618 = scalar_select %p613, %s617, %s616
        %v619 = vlaneseq
        %s620 = smul.u32 %s618, 128
        %v621 = vstv %s620
        %v622 = vadd.s32 %v621, 20
        %vm623 = vcmp.eq.s32.totalorder %v619, %v622
        %s624 = smul.addr %s612, 8
        %s625 = scalar_lea.vmem [#allocation16], %s624
        %626 = vst.msk [vmem:[%s625] sm:$0xff] %vm623, 2147483648
        %s627 = smul.addr %s612, 8
        %s628 = scalar_lea.vmem [#allocation17], %s627
        %629 = vst.msk [vmem:[%s628] sm:$0xff] %vm623, 2147483647
        %630 = xla_tuple %626, %629
        %v631 = vrot.slane %v610, 1
        %s632 = vtos %v631
        %s633 = sshrl.u32 %s632, 3
        %p634 = scmp.lt.s32.totalorder %s632, 0
        %s635 = ssub.s32 0, %s632
        %s636 = scalar_select %p634, %s635, %s632
        %s637 = sand.u32 %s636, 7
        %s638 = ssub.s32 0, %s637
        %s639 = scalar_select %p634, %s638, %s637
        %v640 = vlaneseq
        %s641 = smul.u32 %s639, 128
        %v642 = vstv %s641
        %v643 = vadd.s32 %v642, 21
        %vm644 = vcmp.eq.s32.totalorder %v640, %v643
        %s645 = smul.addr %s633, 8
        %s646 = scalar_lea.vmem [#allocation16], %s645
        %647 = vst.msk [vmem:[%s646] sm:$0xff] %vm644, 2147483648
        %s648 = smul.addr %s633, 8
        %s649 = scalar_lea.vmem [#allocation17], %s648
        %650 = vst.msk [vmem:[%s649] sm:$0xff] %vm644, 2147483647
        %651 = xla_tuple %647, %650
        %v652 = vrot.slane %v631, 1
        %s653 = vtos %v652
        %s654 = sshrl.u32 %s653, 3
        %p655 = scmp.lt.s32.totalorder %s653, 0
        %s656 = ssub.s32 0, %s653
        %s657 = scalar_select %p655, %s656, %s653
        %s658 = sand.u32 %s657, 7
        %s659 = ssub.s32 0, %s658
        %s660 = scalar_select %p655, %s659, %s658
        %v661 = vlaneseq
        %s662 = smul.u32 %s660, 128
        %v663 = vstv %s662
        %v664 = vadd.s32 %v663, 22
        %vm665 = vcmp.eq.s32.totalorder %v661, %v664
        %s666 = smul.addr %s654, 8
        %s667 = scalar_lea.vmem [#allocation16], %s666
        %668 = vst.msk [vmem:[%s667] sm:$0xff] %vm665, 2147483648
        %s669 = smul.addr %s654, 8
        %s670 = scalar_lea.vmem [#allocation17], %s669
        %671 = vst.msk [vmem:[%s670] sm:$0xff] %vm665, 2147483647
        %672 = xla_tuple %668, %671
        %v673 = vrot.slane %v652, 1
        %s674 = vtos %v673
        %s675 = sshrl.u32 %s674, 3
        %p676 = scmp.lt.s32.totalorder %s674, 0
        %s677 = ssub.s32 0, %s674
        %s678 = scalar_select %p676, %s677, %s674
        %s679 = sand.u32 %s678, 7
        %s680 = ssub.s32 0, %s679
        %s681 = scalar_select %p676, %s680, %s679
        %v682 = vlaneseq
        %s683 = smul.u32 %s681, 128
        %v684 = vstv %s683
        %v685 = vadd.s32 %v684, 23
        %vm686 = vcmp.eq.s32.totalorder %v682, %v685
        %s687 = smul.addr %s675, 8
        %s688 = scalar_lea.vmem [#allocation16], %s687
        %689 = vst.msk [vmem:[%s688] sm:$0xff] %vm686, 2147483648
        %s690 = smul.addr %s675, 8
        %s691 = scalar_lea.vmem [#allocation17], %s690
        %692 = vst.msk [vmem:[%s691] sm:$0xff] %vm686, 2147483647
        %693 = xla_tuple %689, %692
        %v694 = vrot.slane %v673, 1
        %s695 = vtos %v178
        %s696 = sshrl.u32 %s695, 3
        %p697 = scmp.lt.s32.totalorder %s695, 0
        %s698 = ssub.s32 0, %s695
        %s699 = scalar_select %p697, %s698, %s695
        %s700 = sand.u32 %s699, 7
        %s701 = ssub.s32 0, %s700
        %s702 = scalar_select %p697, %s701, %s700
        %v703 = vlaneseq
        %s704 = smul.u32 %s702, 128
        %v705 = vstv %s704
        %v706 = vadd.s32 %v705, 24
        %vm707 = vcmp.eq.s32.totalorder %v703, %v706
        %s708 = smul.addr %s696, 8
        %s709 = scalar_lea.vmem [#allocation16], %s708
        %710 = vst.msk [vmem:[%s709] sm:$0xff] %vm707, 2147483648
        %s711 = smul.addr %s696, 8
        %s712 = scalar_lea.vmem [#allocation17], %s711
        %713 = vst.msk [vmem:[%s712] sm:$0xff] %vm707, 2147483647
        %714 = xla_tuple %710, %713
        %v715 = vrot.slane %v178, 1
        %s716 = vtos %v715
        %s717 = sshrl.u32 %s716, 3
        %p718 = scmp.lt.s32.totalorder %s716, 0
        %s719 = ssub.s32 0, %s716
        %s720 = scalar_select %p718, %s719, %s716
        %s721 = sand.u32 %s720, 7
        %s722 = ssub.s32 0, %s721
        %s723 = scalar_select %p718, %s722, %s721
        %v724 = vlaneseq
        %s725 = smul.u32 %s723, 128
        %v726 = vstv %s725
        %v727 = vadd.s32 %v726, 25
        %vm728 = vcmp.eq.s32.totalorder %v724, %v727
        %s729 = smul.addr %s717, 8
        %s730 = scalar_lea.vmem [#allocation16], %s729
        %731 = vst.msk [vmem:[%s730] sm:$0xff] %vm728, 2147483648
        %s732 = smul.addr %s717, 8
        %s733 = scalar_lea.vmem [#allocation17], %s732
        %734 = vst.msk [vmem:[%s733] sm:$0xff] %vm728, 2147483647
        %735 = xla_tuple %731, %734
        %v736 = vrot.slane %v715, 1
        %s737 = vtos %v736
        %s738 = sshrl.u32 %s737, 3
        %p739 = scmp.lt.s32.totalorder %s737, 0
        %s740 = ssub.s32 0, %s737
        %s741 = scalar_select %p739, %s740, %s737
        %s742 = sand.u32 %s741, 7
        %s743 = ssub.s32 0, %s742
        %s744 = scalar_select %p739, %s743, %s742
        %v745 = vlaneseq
        %s746 = smul.u32 %s744, 128
        %v747 = vstv %s746
        %v748 = vadd.s32 %v747, 26
        %vm749 = vcmp.eq.s32.totalorder %v745, %v748
        %s750 = smul.addr %s738, 8
        %s751 = scalar_lea.vmem [#allocation16], %s750
        %752 = vst.msk [vmem:[%s751] sm:$0xff] %vm749, 2147483648
        %s753 = smul.addr %s738, 8
        %s754 = scalar_lea.vmem [#allocation17], %s753
        %755 = vst.msk [vmem:[%s754] sm:$0xff] %vm749, 2147483647
        %756 = xla_tuple %752, %755
        %v757 = vrot.slane %v736, 1
        %s758 = vtos %v757
        %s759 = sshrl.u32 %s758, 3
        %p760 = scmp.lt.s32.totalorder %s758, 0
        %s761 = ssub.s32 0, %s758
        %s762 = scalar_select %p760, %s761, %s758
        %s763 = sand.u32 %s762, 7
        %s764 = ssub.s32 0, %s763
        %s765 = scalar_select %p760, %s764, %s763
        %v766 = vlaneseq
        %s767 = smul.u32 %s765, 128
        %v768 = vstv %s767
        %v769 = vadd.s32 %v768, 27
        %vm770 = vcmp.eq.s32.totalorder %v766, %v769
        %s771 = smul.addr %s759, 8
        %s772 = scalar_lea.vmem [#allocation16], %s771
        %773 = vst.msk [vmem:[%s772] sm:$0xff] %vm770, 2147483648
        %s774 = smul.addr %s759, 8
        %s775 = scalar_lea.vmem [#allocation17], %s774
        %776 = vst.msk [vmem:[%s775] sm:$0xff] %vm770, 2147483647
        %777 = xla_tuple %773, %776
        %v778 = vrot.slane %v757, 1
        %s779 = vtos %v778
        %s780 = sshrl.u32 %s779, 3
        %p781 = scmp.lt.s32.totalorder %s779, 0
        %s782 = ssub.s32 0, %s779
        %s783 = scalar_select %p781, %s782, %s779
        %s784 = sand.u32 %s783, 7
        %s785 = ssub.s32 0, %s784
        %s786 = scalar_select %p781, %s785, %s784
        %v787 = vlaneseq
        %s788 = smul.u32 %s786, 128
        %v789 = vstv %s788
        %v790 = vadd.s32 %v789, 28
        %vm791 = vcmp.eq.s32.totalorder %v787, %v790
        %s792 = smul.addr %s780, 8
        %s793 = scalar_lea.vmem [#allocation16], %s792
        %794 = vst.msk [vmem:[%s793] sm:$0xff] %vm791, 2147483648
        %s795 = smul.addr %s780, 8
        %s796 = scalar_lea.vmem [#allocation17], %s795
        %797 = vst.msk [vmem:[%s796] sm:$0xff] %vm791, 2147483647
        %798 = xla_tuple %794, %797
        %v799 = vrot.slane %v778, 1
        %s800 = vtos %v799
        %s801 = sshrl.u32 %s800, 3
        %p802 = scmp.lt.s32.totalorder %s800, 0
        %s803 = ssub.s32 0, %s800
        %s804 = scalar_select %p802, %s803, %s800
        %s805 = sand.u32 %s804, 7
        %s806 = ssub.s32 0, %s805
        %s807 = scalar_select %p802, %s806, %s805
        %v808 = vlaneseq
        %s809 = smul.u32 %s807, 128
        %v810 = vstv %s809
        %v811 = vadd.s32 %v810, 29
        %vm812 = vcmp.eq.s32.totalorder %v808, %v811
        %s813 = smul.addr %s801, 8
        %s814 = scalar_lea.vmem [#allocation16], %s813
        %815 = vst.msk [vmem:[%s814] sm:$0xff] %vm812, 2147483648
        %s816 = smul.addr %s801, 8
        %s817 = scalar_lea.vmem [#allocation17], %s816
        %818 = vst.msk [vmem:[%s817] sm:$0xff] %vm812, 2147483647
        %819 = xla_tuple %815, %818
        %v820 = vrot.slane %v799, 1
        %s821 = vtos %v820
        %s822 = sshrl.u32 %s821, 3
        %p823 = scmp.lt.s32.totalorder %s821, 0
        %s824 = ssub.s32 0, %s821
        %s825 = scalar_select %p823, %s824, %s821
        %s826 = sand.u32 %s825, 7
        %s827 = ssub.s32 0, %s826
        %s828 = scalar_select %p823, %s827, %s826
        %v829 = vlaneseq
        %s830 = smul.u32 %s828, 128
        %v831 = vstv %s830
        %v832 = vadd.s32 %v831, 30
        %vm833 = vcmp.eq.s32.totalorder %v829, %v832
        %s834 = smul.addr %s822, 8
        %s835 = scalar_lea.vmem [#allocation16], %s834
        %836 = vst.msk [vmem:[%s835] sm:$0xff] %vm833, 2147483648
        %s837 = smul.addr %s822, 8
        %s838 = scalar_lea.vmem [#allocation17], %s837
        %839 = vst.msk [vmem:[%s838] sm:$0xff] %vm833, 2147483647
        %840 = xla_tuple %836, %839
        %v841 = vrot.slane %v820, 1
        %s842 = vtos %v841
        %s843 = sshrl.u32 %s842, 3
        %p844 = scmp.lt.s32.totalorder %s842, 0
        %s845 = ssub.s32 0, %s842
        %s846 = scalar_select %p844, %s845, %s842
        %s847 = sand.u32 %s846, 7
        %s848 = ssub.s32 0, %s847
        %s849 = scalar_select %p844, %s848, %s847
        %v850 = vlaneseq
        %s851 = smul.u32 %s849, 128
        %v852 = vstv %s851
        %v853 = vadd.s32 %v852, 31
        %vm854 = vcmp.eq.s32.totalorder %v850, %v853
        %s855 = smul.addr %s843, 8
        %s856 = scalar_lea.vmem [#allocation16], %s855
        %857 = vst.msk [vmem:[%s856] sm:$0xff] %vm854, 2147483648
        %s858 = smul.addr %s843, 8
        %s859 = scalar_lea.vmem [#allocation17], %s858
        %860 = vst.msk [vmem:[%s859] sm:$0xff] %vm854, 2147483647
        %861 = xla_tuple %857, %860
        %v862 = vrot.slane %v841, 1
        %s863 = vtos %v179
        %s864 = sshrl.u32 %s863, 3
        %p865 = scmp.lt.s32.totalorder %s863, 0
        %s866 = ssub.s32 0, %s863
        %s867 = scalar_select %p865, %s866, %s863
        %s868 = sand.u32 %s867, 7
        %s869 = ssub.s32 0, %s868
        %s870 = scalar_select %p865, %s869, %s868
        %v871 = vlaneseq
        %s872 = smul.u32 %s870, 128
        %v873 = vstv %s872
        %v874 = vadd.s32 %v873, 32
        %vm875 = vcmp.eq.s32.totalorder %v871, %v874
        %s876 = smul.addr %s864, 8
        %s877 = scalar_lea.vmem [#allocation16], %s876
        %878 = vst.msk [vmem:[%s877] sm:$0xff] %vm875, 2147483648
        %s879 = smul.addr %s864, 8
        %s880 = scalar_lea.vmem [#allocation17], %s879
        %881 = vst.msk [vmem:[%s880] sm:$0xff] %vm875, 2147483647
        %882 = xla_tuple %878, %881
        %v883 = vrot.slane %v179, 1
        %s884 = vtos %v883
        %s885 = sshrl.u32 %s884, 3
        %p886 = scmp.lt.s32.totalorder %s884, 0
        %s887 = ssub.s32 0, %s884
        %s888 = scalar_select %p886, %s887, %s884
        %s889 = sand.u32 %s888, 7
        %s890 = ssub.s32 0, %s889
        %s891 = scalar_select %p886, %s890, %s889
        %v892 = vlaneseq
        %s893 = smul.u32 %s891, 128
        %v894 = vstv %s893
        %v895 = vadd.s32 %v894, 33
        %vm896 = vcmp.eq.s32.totalorder %v892, %v895
        %s897 = smul.addr %s885, 8
        %s898 = scalar_lea.vmem [#allocation16], %s897
        %899 = vst.msk [vmem:[%s898] sm:$0xff] %vm896, 2147483648
        %s900 = smul.addr %s885, 8
        %s901 = scalar_lea.vmem [#allocation17], %s900
        %902 = vst.msk [vmem:[%s901] sm:$0xff] %vm896, 2147483647
        %903 = xla_tuple %899, %902
        %v904 = vrot.slane %v883, 1
        %s905 = vtos %v904
        %s906 = sshrl.u32 %s905, 3
        %p907 = scmp.lt.s32.totalorder %s905, 0
        %s908 = ssub.s32 0, %s905
        %s909 = scalar_select %p907, %s908, %s905
        %s910 = sand.u32 %s909, 7
        %s911 = ssub.s32 0, %s910
        %s912 = scalar_select %p907, %s911, %s910
        %v913 = vlaneseq
        %s914 = smul.u32 %s912, 128
        %v915 = vstv %s914
        %v916 = vadd.s32 %v915, 34
        %vm917 = vcmp.eq.s32.totalorder %v913, %v916
        %s918 = smul.addr %s906, 8
        %s919 = scalar_lea.vmem [#allocation16], %s918
        %920 = vst.msk [vmem:[%s919] sm:$0xff] %vm917, 2147483648
        %s921 = smul.addr %s906, 8
        %s922 = scalar_lea.vmem [#allocation17], %s921
        %923 = vst.msk [vmem:[%s922] sm:$0xff] %vm917, 2147483647
        %924 = xla_tuple %920, %923
        %v925 = vrot.slane %v904, 1
        %s926 = vtos %v925
        %s927 = sshrl.u32 %s926, 3
        %p928 = scmp.lt.s32.totalorder %s926, 0
        %s929 = ssub.s32 0, %s926
        %s930 = scalar_select %p928, %s929, %s926
        %s931 = sand.u32 %s930, 7
        %s932 = ssub.s32 0, %s931
        %s933 = scalar_select %p928, %s932, %s931
        %v934 = vlaneseq
        %s935 = smul.u32 %s933, 128
        %v936 = vstv %s935
        %v937 = vadd.s32 %v936, 35
        %vm938 = vcmp.eq.s32.totalorder %v934, %v937
        %s939 = smul.addr %s927, 8
        %s940 = scalar_lea.vmem [#allocation16], %s939
        %941 = vst.msk [vmem:[%s940] sm:$0xff] %vm938, 2147483648
        %s942 = smul.addr %s927, 8
        %s943 = scalar_lea.vmem [#allocation17], %s942
        %944 = vst.msk [vmem:[%s943] sm:$0xff] %vm938, 2147483647
        %945 = xla_tuple %941, %944
        %v946 = vrot.slane %v925, 1
        %s947 = vtos %v946
        %s948 = sshrl.u32 %s947, 3
        %p949 = scmp.lt.s32.totalorder %s947, 0
        %s950 = ssub.s32 0, %s947
        %s951 = scalar_select %p949, %s950, %s947
        %s952 = sand.u32 %s951, 7
        %s953 = ssub.s32 0, %s952
        %s954 = scalar_select %p949, %s953, %s952
        %v955 = vlaneseq
        %s956 = smul.u32 %s954, 128
        %v957 = vstv %s956
        %v958 = vadd.s32 %v957, 36
        %vm959 = vcmp.eq.s32.totalorder %v955, %v958
        %s960 = smul.addr %s948, 8
        %s961 = scalar_lea.vmem [#allocation16], %s960
        %962 = vst.msk [vmem:[%s961] sm:$0xff] %vm959, 2147483648
        %s963 = smul.addr %s948, 8
        %s964 = scalar_lea.vmem [#allocation17], %s963
        %965 = vst.msk [vmem:[%s964] sm:$0xff] %vm959, 2147483647
        %966 = xla_tuple %962, %965
        %v967 = vrot.slane %v946, 1
        %s968 = vtos %v967
        %s969 = sshrl.u32 %s968, 3
        %p970 = scmp.lt.s32.totalorder %s968, 0
        %s971 = ssub.s32 0, %s968
        %s972 = scalar_select %p970, %s971, %s968
        %s973 = sand.u32 %s972, 7
        %s974 = ssub.s32 0, %s973
        %s975 = scalar_select %p970, %s974, %s973
        %v976 = vlaneseq
        %s977 = smul.u32 %s975, 128
        %v978 = vstv %s977
        %v979 = vadd.s32 %v978, 37
        %vm980 = vcmp.eq.s32.totalorder %v976, %v979
        %s981 = smul.addr %s969, 8
        %s982 = scalar_lea.vmem [#allocation16], %s981
        %983 = vst.msk [vmem:[%s982] sm:$0xff] %vm980, 2147483648
        %s984 = smul.addr %s969, 8
        %s985 = scalar_lea.vmem [#allocation17], %s984
        %986 = vst.msk [vmem:[%s985] sm:$0xff] %vm980, 2147483647
        %987 = xla_tuple %983, %986
        %v988 = vrot.slane %v967, 1
        %s989 = vtos %v988
        %s990 = sshrl.u32 %s989, 3
        %p991 = scmp.lt.s32.totalorder %s989, 0
        %s992 = ssub.s32 0, %s989
        %s993 = scalar_select %p991, %s992, %s989
        %s994 = sand.u32 %s993, 7
        %s995 = ssub.s32 0, %s994
        %s996 = scalar_select %p991, %s995, %s994
        %v997 = vlaneseq
        %s998 = smul.u32 %s996, 128
        %v999 = vstv %s998
        %v1000 = vadd.s32 %v999, 38
        %vm1001 = vcmp.eq.s32.totalorder %v997, %v1000
        %s1002 = smul.addr %s990, 8
        %s1003 = scalar_lea.vmem [#allocation16], %s1002
        %1004 = vst.msk [vmem:[%s1003] sm:$0xff] %vm1001, 2147483648
        %s1005 = smul.addr %s990, 8
        %s1006 = scalar_lea.vmem [#allocation17], %s1005
        %1007 = vst.msk [vmem:[%s1006] sm:$0xff] %vm1001, 2147483647
        %1008 = xla_tuple %1004, %1007
        %v1009 = vrot.slane %v988, 1
        %s1010 = vtos %v1009
        %s1011 = sshrl.u32 %s1010, 3
        %p1012 = scmp.lt.s32.totalorder %s1010, 0
        %s1013 = ssub.s32 0, %s1010
        %s1014 = scalar_select %p1012, %s1013, %s1010
        %s1015 = sand.u32 %s1014, 7
        %s1016 = ssub.s32 0, %s1015
        %s1017 = scalar_select %p1012, %s1016, %s1015
        %v1018 = vlaneseq
        %s1019 = smul.u32 %s1017, 128
        %v1020 = vstv %s1019
        %v1021 = vadd.s32 %v1020, 39
        %vm1022 = vcmp.eq.s32.totalorder %v1018, %v1021
        %s1023 = smul.addr %s1011, 8
        %s1024 = scalar_lea.vmem [#allocation16], %s1023
        %1025 = vst.msk [vmem:[%s1024] sm:$0xff] %vm1022, 2147483648
        %s1026 = smul.addr %s1011, 8
        %s1027 = scalar_lea.vmem [#allocation17], %s1026
        %1028 = vst.msk [vmem:[%s1027] sm:$0xff] %vm1022, 2147483647
        %1029 = xla_tuple %1025, %1028
        %v1030 = vrot.slane %v1009, 1
        %s1031 = vtos %v180
        %s1032 = sshrl.u32 %s1031, 3
        %p1033 = scmp.lt.s32.totalorder %s1031, 0
        %s1034 = ssub.s32 0, %s1031
        %s1035 = scalar_select %p1033, %s1034, %s1031
        %s1036 = sand.u32 %s1035, 7
        %s1037 = ssub.s32 0, %s1036
        %s1038 = scalar_select %p1033, %s1037, %s1036
        %v1039 = vlaneseq
        %s1040 = smul.u32 %s1038, 128
        %v1041 = vstv %s1040
        %v1042 = vadd.s32 %v1041, 40
        %vm1043 = vcmp.eq.s32.totalorder %v1039, %v1042
        %s1044 = smul.addr %s1032, 8
        %s1045 = scalar_lea.vmem [#allocation16], %s1044
        %1046 = vst.msk [vmem:[%s1045] sm:$0xff] %vm1043, 2147483648
        %s1047 = smul.addr %s1032, 8
        %s1048 = scalar_lea.vmem [#allocation17], %s1047
        %1049 = vst.msk [vmem:[%s1048] sm:$0xff] %vm1043, 2147483647
        %1050 = xla_tuple %1046, %1049
        %v1051 = vrot.slane %v180, 1
        %s1052 = vtos %v1051
        %s1053 = sshrl.u32 %s1052, 3
        %p1054 = scmp.lt.s32.totalorder %s1052, 0
        %s1055 = ssub.s32 0, %s1052
        %s1056 = scalar_select %p1054, %s1055, %s1052
        %s1057 = sand.u32 %s1056, 7
        %s1058 = ssub.s32 0, %s1057
        %s1059 = scalar_select %p1054, %s1058, %s1057
        %v1060 = vlaneseq
        %s1061 = smul.u32 %s1059, 128
        %v1062 = vstv %s1061
        %v1063 = vadd.s32 %v1062, 41
        %vm1064 = vcmp.eq.s32.totalorder %v1060, %v1063
        %s1065 = smul.addr %s1053, 8
        %s1066 = scalar_lea.vmem [#allocation16], %s1065
        %1067 = vst.msk [vmem:[%s1066] sm:$0xff] %vm1064, 2147483648
        %s1068 = smul.addr %s1053, 8
        %s1069 = scalar_lea.vmem [#allocation17], %s1068
        %1070 = vst.msk [vmem:[%s1069] sm:$0xff] %vm1064, 2147483647
        %1071 = xla_tuple %1067, %1070
        %v1072 = vrot.slane %v1051, 1
        %s1073 = vtos %v1072
        %s1074 = sshrl.u32 %s1073, 3
        %p1075 = scmp.lt.s32.totalorder %s1073, 0
        %s1076 = ssub.s32 0, %s1073
        %s1077 = scalar_select %p1075, %s1076, %s1073
        %s1078 = sand.u32 %s1077, 7
        %s1079 = ssub.s32 0, %s1078
        %s1080 = scalar_select %p1075, %s1079, %s1078
        %v1081 = vlaneseq
        %s1082 = smul.u32 %s1080, 128
        %v1083 = vstv %s1082
        %v1084 = vadd.s32 %v1083, 42
        %vm1085 = vcmp.eq.s32.totalorder %v1081, %v1084
        %s1086 = smul.addr %s1074, 8
        %s1087 = scalar_lea.vmem [#allocation16], %s1086
        %1088 = vst.msk [vmem:[%s1087] sm:$0xff] %vm1085, 2147483648
        %s1089 = smul.addr %s1074, 8
        %s1090 = scalar_lea.vmem [#allocation17], %s1089
        %1091 = vst.msk [vmem:[%s1090] sm:$0xff] %vm1085, 2147483647
        %1092 = xla_tuple %1088, %1091
        %v1093 = vrot.slane %v1072, 1
        %s1094 = vtos %v1093
        %s1095 = sshrl.u32 %s1094, 3
        %p1096 = scmp.lt.s32.totalorder %s1094, 0
        %s1097 = ssub.s32 0, %s1094
        %s1098 = scalar_select %p1096, %s1097, %s1094
        %s1099 = sand.u32 %s1098, 7
        %s1100 = ssub.s32 0, %s1099
        %s1101 = scalar_select %p1096, %s1100, %s1099
        %v1102 = vlaneseq
        %s1103 = smul.u32 %s1101, 128
        %v1104 = vstv %s1103
        %v1105 = vadd.s32 %v1104, 43
        %vm1106 = vcmp.eq.s32.totalorder %v1102, %v1105
        %s1107 = smul.addr %s1095, 8
        %s1108 = scalar_lea.vmem [#allocation16], %s1107
        %1109 = vst.msk [vmem:[%s1108] sm:$0xff] %vm1106, 2147483648
        %s1110 = smul.addr %s1095, 8
        %s1111 = scalar_lea.vmem [#allocation17], %s1110
        %1112 = vst.msk [vmem:[%s1111] sm:$0xff] %vm1106, 2147483647
        %1113 = xla_tuple %1109, %1112
        %v1114 = vrot.slane %v1093, 1
        %s1115 = vtos %v1114
        %s1116 = sshrl.u32 %s1115, 3
        %p1117 = scmp.lt.s32.totalorder %s1115, 0
        %s1118 = ssub.s32 0, %s1115
        %s1119 = scalar_select %p1117, %s1118, %s1115
        %s1120 = sand.u32 %s1119, 7
        %s1121 = ssub.s32 0, %s1120
        %s1122 = scalar_select %p1117, %s1121, %s1120
        %v1123 = vlaneseq
        %s1124 = smul.u32 %s1122, 128
        %v1125 = vstv %s1124
        %v1126 = vadd.s32 %v1125, 44
        %vm1127 = vcmp.eq.s32.totalorder %v1123, %v1126
        %s1128 = smul.addr %s1116, 8
        %s1129 = scalar_lea.vmem [#allocation16], %s1128
        %1130 = vst.msk [vmem:[%s1129] sm:$0xff] %vm1127, 2147483648
        %s1131 = smul.addr %s1116, 8
        %s1132 = scalar_lea.vmem [#allocation17], %s1131
        %1133 = vst.msk [vmem:[%s1132] sm:$0xff] %vm1127, 2147483647
        %1134 = xla_tuple %1130, %1133
        %v1135 = vrot.slane %v1114, 1
        %s1136 = vtos %v1135
        %s1137 = sshrl.u32 %s1136, 3
        %p1138 = scmp.lt.s32.totalorder %s1136, 0
        %s1139 = ssub.s32 0, %s1136
        %s1140 = scalar_select %p1138, %s1139, %s1136
        %s1141 = sand.u32 %s1140, 7
        %s1142 = ssub.s32 0, %s1141
        %s1143 = scalar_select %p1138, %s1142, %s1141
        %v1144 = vlaneseq
        %s1145 = smul.u32 %s1143, 128
        %v1146 = vstv %s1145
        %v1147 = vadd.s32 %v1146, 45
        %vm1148 = vcmp.eq.s32.totalorder %v1144, %v1147
        %s1149 = smul.addr %s1137, 8
        %s1150 = scalar_lea.vmem [#allocation16], %s1149
        %1151 = vst.msk [vmem:[%s1150] sm:$0xff] %vm1148, 2147483648
        %s1152 = smul.addr %s1137, 8
        %s1153 = scalar_lea.vmem [#allocation17], %s1152
        %1154 = vst.msk [vmem:[%s1153] sm:$0xff] %vm1148, 2147483647
        %1155 = xla_tuple %1151, %1154
        %v1156 = vrot.slane %v1135, 1
        %s1157 = vtos %v1156
        %s1158 = sshrl.u32 %s1157, 3
        %p1159 = scmp.lt.s32.totalorder %s1157, 0
        %s1160 = ssub.s32 0, %s1157
        %s1161 = scalar_select %p1159, %s1160, %s1157
        %s1162 = sand.u32 %s1161, 7
        %s1163 = ssub.s32 0, %s1162
        %s1164 = scalar_select %p1159, %s1163, %s1162
        %v1165 = vlaneseq
        %s1166 = smul.u32 %s1164, 128
        %v1167 = vstv %s1166
        %v1168 = vadd.s32 %v1167, 46
        %vm1169 = vcmp.eq.s32.totalorder %v1165, %v1168
        %s1170 = smul.addr %s1158, 8
        %s1171 = scalar_lea.vmem [#allocation16], %s1170
        %1172 = vst.msk [vmem:[%s1171] sm:$0xff] %vm1169, 2147483648
        %s1173 = smul.addr %s1158, 8
        %s1174 = scalar_lea.vmem [#allocation17], %s1173
        %1175 = vst.msk [vmem:[%s1174] sm:$0xff] %vm1169, 2147483647
        %1176 = xla_tuple %1172, %1175
        %v1177 = vrot.slane %v1156, 1
        %s1178 = vtos %v1177
        %s1179 = sshrl.u32 %s1178, 3
        %p1180 = scmp.lt.s32.totalorder %s1178, 0
        %s1181 = ssub.s32 0, %s1178
        %s1182 = scalar_select %p1180, %s1181, %s1178
        %s1183 = sand.u32 %s1182, 7
        %s1184 = ssub.s32 0, %s1183
        %s1185 = scalar_select %p1180, %s1184, %s1183
        %v1186 = vlaneseq
        %s1187 = smul.u32 %s1185, 128
        %v1188 = vstv %s1187
        %v1189 = vadd.s32 %v1188, 47
        %vm1190 = vcmp.eq.s32.totalorder %v1186, %v1189
        %s1191 = smul.addr %s1179, 8
        %s1192 = scalar_lea.vmem [#allocation16], %s1191
        %1193 = vst.msk [vmem:[%s1192] sm:$0xff] %vm1190, 2147483648
        %s1194 = smul.addr %s1179, 8
        %s1195 = scalar_lea.vmem [#allocation17], %s1194
        %1196 = vst.msk [vmem:[%s1195] sm:$0xff] %vm1190, 2147483647
        %1197 = xla_tuple %1193, %1196
        %v1198 = vrot.slane %v1177, 1
        %s1199 = vtos %v181
        %s1200 = sshrl.u32 %s1199, 3
        %p1201 = scmp.lt.s32.totalorder %s1199, 0
        %s1202 = ssub.s32 0, %s1199
        %s1203 = scalar_select %p1201, %s1202, %s1199
        %s1204 = sand.u32 %s1203, 7
        %s1205 = ssub.s32 0, %s1204
        %s1206 = scalar_select %p1201, %s1205, %s1204
        %v1207 = vlaneseq
        %s1208 = smul.u32 %s1206, 128
        %v1209 = vstv %s1208
        %v1210 = vadd.s32 %v1209, 48
        %vm1211 = vcmp.eq.s32.totalorder %v1207, %v1210
        %s1212 = smul.addr %s1200, 8
        %s1213 = scalar_lea.vmem [#allocation16], %s1212
        %1214 = vst.msk [vmem:[%s1213] sm:$0xff] %vm1211, 2147483648
        %s1215 = smul.addr %s1200, 8
        %s1216 = scalar_lea.vmem [#allocation17], %s1215
        %1217 = vst.msk [vmem:[%s1216] sm:$0xff] %vm1211, 2147483647
        %1218 = xla_tuple %1214, %1217
        %v1219 = vrot.slane %v181, 1
        %s1220 = vtos %v1219
        %s1221 = sshrl.u32 %s1220, 3
        %p1222 = scmp.lt.s32.totalorder %s1220, 0
        %s1223 = ssub.s32 0, %s1220
        %s1224 = scalar_select %p1222, %s1223, %s1220
        %s1225 = sand.u32 %s1224, 7
        %s1226 = ssub.s32 0, %s1225
        %s1227 = scalar_select %p1222, %s1226, %s1225
        %v1228 = vlaneseq
        %s1229 = smul.u32 %s1227, 128
        %v1230 = vstv %s1229
        %v1231 = vadd.s32 %v1230, 49
        %vm1232 = vcmp.eq.s32.totalorder %v1228, %v1231
        %s1233 = smul.addr %s1221, 8
        %s1234 = scalar_lea.vmem [#allocation16], %s1233
        %1235 = vst.msk [vmem:[%s1234] sm:$0xff] %vm1232, 2147483648
        %s1236 = smul.addr %s1221, 8
        %s1237 = scalar_lea.vmem [#allocation17], %s1236
        %1238 = vst.msk [vmem:[%s1237] sm:$0xff] %vm1232, 2147483647
        %1239 = xla_tuple %1235, %1238
        %v1240 = vrot.slane %v1219, 1
        %s1241 = vtos %v1240
        %s1242 = sshrl.u32 %s1241, 3
        %p1243 = scmp.lt.s32.totalorder %s1241, 0
        %s1244 = ssub.s32 0, %s1241
        %s1245 = scalar_select %p1243, %s1244, %s1241
        %s1246 = sand.u32 %s1245, 7
        %s1247 = ssub.s32 0, %s1246
        %s1248 = scalar_select %p1243, %s1247, %s1246
        %v1249 = vlaneseq
        %s1250 = smul.u32 %s1248, 128
        %v1251 = vstv %s1250
        %v1252 = vadd.s32 %v1251, 50
        %vm1253 = vcmp.eq.s32.totalorder %v1249, %v1252
        %s1254 = smul.addr %s1242, 8
        %s1255 = scalar_lea.vmem [#allocation16], %s1254
        %1256 = vst.msk [vmem:[%s1255] sm:$0xff] %vm1253, 2147483648
        %s1257 = smul.addr %s1242, 8
        %s1258 = scalar_lea.vmem [#allocation17], %s1257
        %1259 = vst.msk [vmem:[%s1258] sm:$0xff] %vm1253, 2147483647
        %1260 = xla_tuple %1256, %1259
        %v1261 = vrot.slane %v1240, 1
        %s1262 = vtos %v1261
        %s1263 = sshrl.u32 %s1262, 3
        %p1264 = scmp.lt.s32.totalorder %s1262, 0
        %s1265 = ssub.s32 0, %s1262
        %s1266 = scalar_select %p1264, %s1265, %s1262
        %s1267 = sand.u32 %s1266, 7
        %s1268 = ssub.s32 0, %s1267
        %s1269 = scalar_select %p1264, %s1268, %s1267
        %v1270 = vlaneseq
        %s1271 = smul.u32 %s1269, 128
        %v1272 = vstv %s1271
        %v1273 = vadd.s32 %v1272, 51
        %vm1274 = vcmp.eq.s32.totalorder %v1270, %v1273
        %s1275 = smul.addr %s1263, 8
        %s1276 = scalar_lea.vmem [#allocation16], %s1275
        %1277 = vst.msk [vmem:[%s1276] sm:$0xff] %vm1274, 2147483648
        %s1278 = smul.addr %s1263, 8
        %s1279 = scalar_lea.vmem [#allocation17], %s1278
        %1280 = vst.msk [vmem:[%s1279] sm:$0xff] %vm1274, 2147483647
        %1281 = xla_tuple %1277, %1280
        %v1282 = vrot.slane %v1261, 1
        %s1283 = vtos %v1282
        %s1284 = sshrl.u32 %s1283, 3
        %p1285 = scmp.lt.s32.totalorder %s1283, 0
        %s1286 = ssub.s32 0, %s1283
        %s1287 = scalar_select %p1285, %s1286, %s1283
        %s1288 = sand.u32 %s1287, 7
        %s1289 = ssub.s32 0, %s1288
        %s1290 = scalar_select %p1285, %s1289, %s1288
        %v1291 = vlaneseq
        %s1292 = smul.u32 %s1290, 128
        %v1293 = vstv %s1292
        %v1294 = vadd.s32 %v1293, 52
        %vm1295 = vcmp.eq.s32.totalorder %v1291, %v1294
        %s1296 = smul.addr %s1284, 8
        %s1297 = scalar_lea.vmem [#allocation16], %s1296
        %1298 = vst.msk [vmem:[%s1297] sm:$0xff] %vm1295, 2147483648
        %s1299 = smul.addr %s1284, 8
        %s1300 = scalar_lea.vmem [#allocation17], %s1299
        %1301 = vst.msk [vmem:[%s1300] sm:$0xff] %vm1295, 2147483647
        %1302 = xla_tuple %1298, %1301
        %v1303 = vrot.slane %v1282, 1
        %s1304 = vtos %v1303
        %s1305 = sshrl.u32 %s1304, 3
        %p1306 = scmp.lt.s32.totalorder %s1304, 0
        %s1307 = ssub.s32 0, %s1304
        %s1308 = scalar_select %p1306, %s1307, %s1304
        %s1309 = sand.u32 %s1308, 7
        %s1310 = ssub.s32 0, %s1309
        %s1311 = scalar_select %p1306, %s1310, %s1309
        %v1312 = vlaneseq
        %s1313 = smul.u32 %s1311, 128
        %v1314 = vstv %s1313
        %v1315 = vadd.s32 %v1314, 53
        %vm1316 = vcmp.eq.s32.totalorder %v1312, %v1315
        %s1317 = smul.addr %s1305, 8
        %s1318 = scalar_lea.vmem [#allocation16], %s1317
        %1319 = vst.msk [vmem:[%s1318] sm:$0xff] %vm1316, 2147483648
        %s1320 = smul.addr %s1305, 8
        %s1321 = scalar_lea.vmem [#allocation17], %s1320
        %1322 = vst.msk [vmem:[%s1321] sm:$0xff] %vm1316, 2147483647
        %1323 = xla_tuple %1319, %1322
        %v1324 = vrot.slane %v1303, 1
        %s1325 = vtos %v1324
        %s1326 = sshrl.u32 %s1325, 3
        %p1327 = scmp.lt.s32.totalorder %s1325, 0
        %s1328 = ssub.s32 0, %s1325
        %s1329 = scalar_select %p1327, %s1328, %s1325
        %s1330 = sand.u32 %s1329, 7
        %s1331 = ssub.s32 0, %s1330
        %s1332 = scalar_select %p1327, %s1331, %s1330
        %v1333 = vlaneseq
        %s1334 = smul.u32 %s1332, 128
        %v1335 = vstv %s1334
        %v1336 = vadd.s32 %v1335, 54
        %vm1337 = vcmp.eq.s32.totalorder %v1333, %v1336
        %s1338 = smul.addr %s1326, 8
        %s1339 = scalar_lea.vmem [#allocation16], %s1338
        %1340 = vst.msk [vmem:[%s1339] sm:$0xff] %vm1337, 2147483648
        %s1341 = smul.addr %s1326, 8
        %s1342 = scalar_lea.vmem [#allocation17], %s1341
        %1343 = vst.msk [vmem:[%s1342] sm:$0xff] %vm1337, 2147483647
        %1344 = xla_tuple %1340, %1343
        %v1345 = vrot.slane %v1324, 1
        %s1346 = vtos %v1345
        %s1347 = sshrl.u32 %s1346, 3
        %p1348 = scmp.lt.s32.totalorder %s1346, 0
        %s1349 = ssub.s32 0, %s1346
        %s1350 = scalar_select %p1348, %s1349, %s1346
        %s1351 = sand.u32 %s1350, 7
        %s1352 = ssub.s32 0, %s1351
        %s1353 = scalar_select %p1348, %s1352, %s1351
        %v1354 = vlaneseq
        %s1355 = smul.u32 %s1353, 128
        %v1356 = vstv %s1355
        %v1357 = vadd.s32 %v1356, 55
        %vm1358 = vcmp.eq.s32.totalorder %v1354, %v1357
        %s1359 = smul.addr %s1347, 8
        %s1360 = scalar_lea.vmem [#allocation16], %s1359
        %1361 = vst.msk [vmem:[%s1360] sm:$0xff] %vm1358, 2147483648
        %s1362 = smul.addr %s1347, 8
        %s1363 = scalar_lea.vmem [#allocation17], %s1362
        %1364 = vst.msk [vmem:[%s1363] sm:$0xff] %vm1358, 2147483647
        %1365 = xla_tuple %1361, %1364
        %v1366 = vrot.slane %v1345, 1
        %s1367 = vtos %v182
        %s1368 = sshrl.u32 %s1367, 3
        %p1369 = scmp.lt.s32.totalorder %s1367, 0
        %s1370 = ssub.s32 0, %s1367
        %s1371 = scalar_select %p1369, %s1370, %s1367
        %s1372 = sand.u32 %s1371, 7
        %s1373 = ssub.s32 0, %s1372
        %s1374 = scalar_select %p1369, %s1373, %s1372
        %v1375 = vlaneseq
        %s1376 = smul.u32 %s1374, 128
        %v1377 = vstv %s1376
        %v1378 = vadd.s32 %v1377, 56
        %vm1379 = vcmp.eq.s32.totalorder %v1375, %v1378
        %s1380 = smul.addr %s1368, 8
        %s1381 = scalar_lea.vmem [#allocation16], %s1380
        %1382 = vst.msk [vmem:[%s1381] sm:$0xff] %vm1379, 2147483648
        %s1383 = smul.addr %s1368, 8
        %s1384 = scalar_lea.vmem [#allocation17], %s1383
        %1385 = vst.msk [vmem:[%s1384] sm:$0xff] %vm1379, 2147483647
        %1386 = xla_tuple %1382, %1385
        %v1387 = vrot.slane %v182, 1
        %s1388 = vtos %v1387
        %s1389 = sshrl.u32 %s1388, 3
        %p1390 = scmp.lt.s32.totalorder %s1388, 0
        %s1391 = ssub.s32 0, %s1388
        %s1392 = scalar_select %p1390, %s1391, %s1388
        %s1393 = sand.u32 %s1392, 7
        %s1394 = ssub.s32 0, %s1393
        %s1395 = scalar_select %p1390, %s1394, %s1393
        %v1396 = vlaneseq
        %s1397 = smul.u32 %s1395, 128
        %v1398 = vstv %s1397
        %v1399 = vadd.s32 %v1398, 57
        %vm1400 = vcmp.eq.s32.totalorder %v1396, %v1399
        %s1401 = smul.addr %s1389, 8
        %s1402 = scalar_lea.vmem [#allocation16], %s1401
        %1403 = vst.msk [vmem:[%s1402] sm:$0xff] %vm1400, 2147483648
        %s1404 = smul.addr %s1389, 8
        %s1405 = scalar_lea.vmem [#allocation17], %s1404
        %1406 = vst.msk [vmem:[%s1405] sm:$0xff] %vm1400, 2147483647
        %1407 = xla_tuple %1403, %1406
        %v1408 = vrot.slane %v1387, 1
        %s1409 = vtos %v1408
        %s1410 = sshrl.u32 %s1409, 3
        %p1411 = scmp.lt.s32.totalorder %s1409, 0
        %s1412 = ssub.s32 0, %s1409
        %s1413 = scalar_select %p1411, %s1412, %s1409
        %s1414 = sand.u32 %s1413, 7
        %s1415 = ssub.s32 0, %s1414
        %s1416 = scalar_select %p1411, %s1415, %s1414
        %v1417 = vlaneseq
        %s1418 = smul.u32 %s1416, 128
        %v1419 = vstv %s1418
        %v1420 = vadd.s32 %v1419, 58
        %vm1421 = vcmp.eq.s32.totalorder %v1417, %v1420
        %s1422 = smul.addr %s1410, 8
        %s1423 = scalar_lea.vmem [#allocation16], %s1422
        %1424 = vst.msk [vmem:[%s1423] sm:$0xff] %vm1421, 2147483648
        %s1425 = smul.addr %s1410, 8
        %s1426 = scalar_lea.vmem [#allocation17], %s1425
        %1427 = vst.msk [vmem:[%s1426] sm:$0xff] %vm1421, 2147483647
        %1428 = xla_tuple %1424, %1427
        %v1429 = vrot.slane %v1408, 1
        %s1430 = vtos %v1429
        %s1431 = sshrl.u32 %s1430, 3
        %p1432 = scmp.lt.s32.totalorder %s1430, 0
        %s1433 = ssub.s32 0, %s1430
        %s1434 = scalar_select %p1432, %s1433, %s1430
        %s1435 = sand.u32 %s1434, 7
        %s1436 = ssub.s32 0, %s1435
        %s1437 = scalar_select %p1432, %s1436, %s1435
        %v1438 = vlaneseq
        %s1439 = smul.u32 %s1437, 128
        %v1440 = vstv %s1439
        %v1441 = vadd.s32 %v1440, 59
        %vm1442 = vcmp.eq.s32.totalorder %v1438, %v1441
        %s1443 = smul.addr %s1431, 8
        %s1444 = scalar_lea.vmem [#allocation16], %s1443
        %1445 = vst.msk [vmem:[%s1444] sm:$0xff] %vm1442, 2147483648
        %s1446 = smul.addr %s1431, 8
        %s1447 = scalar_lea.vmem [#allocation17], %s1446
        %1448 = vst.msk [vmem:[%s1447] sm:$0xff] %vm1442, 2147483647
        %1449 = xla_tuple %1445, %1448
        %v1450 = vrot.slane %v1429, 1
        %s1451 = vtos %v1450
        %s1452 = sshrl.u32 %s1451, 3
        %p1453 = scmp.lt.s32.totalorder %s1451, 0
        %s1454 = ssub.s32 0, %s1451
        %s1455 = scalar_select %p1453, %s1454, %s1451
        %s1456 = sand.u32 %s1455, 7
        %s1457 = ssub.s32 0, %s1456
        %s1458 = scalar_select %p1453, %s1457, %s1456
        %v1459 = vlaneseq
        %s1460 = smul.u32 %s1458, 128
        %v1461 = vstv %s1460
        %v1462 = vadd.s32 %v1461, 60
        %vm1463 = vcmp.eq.s32.totalorder %v1459, %v1462
        %s1464 = smul.addr %s1452, 8
        %s1465 = scalar_lea.vmem [#allocation16], %s1464
        %1466 = vst.msk [vmem:[%s1465] sm:$0xff] %vm1463, 2147483648
        %s1467 = smul.addr %s1452, 8
        %s1468 = scalar_lea.vmem [#allocation17], %s1467
        %1469 = vst.msk [vmem:[%s1468] sm:$0xff] %vm1463, 2147483647
        %1470 = xla_tuple %1466, %1469
        %v1471 = vrot.slane %v1450, 1
        %s1472 = vtos %v1471
        %s1473 = sshrl.u32 %s1472, 3
        %p1474 = scmp.lt.s32.totalorder %s1472, 0
        %s1475 = ssub.s32 0, %s1472
        %s1476 = scalar_select %p1474, %s1475, %s1472
        %s1477 = sand.u32 %s1476, 7
        %s1478 = ssub.s32 0, %s1477
        %s1479 = scalar_select %p1474, %s1478, %s1477
        %v1480 = vlaneseq
        %s1481 = smul.u32 %s1479, 128
        %v1482 = vstv %s1481
        %v1483 = vadd.s32 %v1482, 61
        %vm1484 = vcmp.eq.s32.totalorder %v1480, %v1483
        %s1485 = smul.addr %s1473, 8
        %s1486 = scalar_lea.vmem [#allocation16], %s1485
        %1487 = vst.msk [vmem:[%s1486] sm:$0xff] %vm1484, 2147483648
        %s1488 = smul.addr %s1473, 8
        %s1489 = scalar_lea.vmem [#allocation17], %s1488
        %1490 = vst.msk [vmem:[%s1489] sm:$0xff] %vm1484, 2147483647
        %1491 = xla_tuple %1487, %1490
        %v1492 = vrot.slane %v1471, 1
        %s1493 = vtos %v1492
        %s1494 = sshrl.u32 %s1493, 3
        %p1495 = scmp.lt.s32.totalorder %s1493, 0
        %s1496 = ssub.s32 0, %s1493
        %s1497 = scalar_select %p1495, %s1496, %s1493
        %s1498 = sand.u32 %s1497, 7
        %s1499 = ssub.s32 0, %s1498
        %s1500 = scalar_select %p1495, %s1499, %s1498
        %v1501 = vlaneseq
        %s1502 = smul.u32 %s1500, 128
        %v1503 = vstv %s1502
        %v1504 = vadd.s32 %v1503, 62
        %vm1505 = vcmp.eq.s32.totalorder %v1501, %v1504
        %s1506 = smul.addr %s1494, 8
        %s1507 = scalar_lea.vmem [#allocation16], %s1506
        %1508 = vst.msk [vmem:[%s1507] sm:$0xff] %vm1505, 2147483648
        %s1509 = smul.addr %s1494, 8
        %s1510 = scalar_lea.vmem [#allocation17], %s1509
        %1511 = vst.msk [vmem:[%s1510] sm:$0xff] %vm1505, 2147483647
        %1512 = xla_tuple %1508, %1511
        %v1513 = vrot.slane %v1492, 1
        %s1514 = vtos %v1513
        %s1515 = sshrl.u32 %s1514, 3
        %p1516 = scmp.lt.s32.totalorder %s1514, 0
        %s1517 = ssub.s32 0, %s1514
        %s1518 = scalar_select %p1516, %s1517, %s1514
        %s1519 = sand.u32 %s1518, 7
        %s1520 = ssub.s32 0, %s1519
        %s1521 = scalar_select %p1516, %s1520, %s1519
        %v1522 = vlaneseq
        %s1523 = smul.u32 %s1521, 128
        %v1524 = vstv %s1523
        %v1525 = vadd.s32 %v1524, 63
        %vm1526 = vcmp.eq.s32.totalorder %v1522, %v1525
        %s1527 = smul.addr %s1515, 8
        %s1528 = scalar_lea.vmem [#allocation16], %s1527
        %1529 = vst.msk [vmem:[%s1528] sm:$0xff] %vm1526, 2147483648
        %s1530 = smul.addr %s1515, 8
        %s1531 = scalar_lea.vmem [#allocation17], %s1530
        %1532 = vst.msk [vmem:[%s1531] sm:$0xff] %vm1526, 2147483647
        %1533 = xla_tuple %1529, %1532
        %v1534 = vrot.slane %v1513, 1
        %s1535 = vtos %v183
        %s1536 = sshrl.u32 %s1535, 3
        %p1537 = scmp.lt.s32.totalorder %s1535, 0
        %s1538 = ssub.s32 0, %s1535
        %s1539 = scalar_select %p1537, %s1538, %s1535
        %s1540 = sand.u32 %s1539, 7
        %s1541 = ssub.s32 0, %s1540
        %s1542 = scalar_select %p1537, %s1541, %s1540
        %v1543 = vlaneseq
        %s1544 = smul.u32 %s1542, 128
        %v1545 = vstv %s1544
        %v1546 = vadd.s32 %v1545, 64
        %vm1547 = vcmp.eq.s32.totalorder %v1543, %v1546
        %s1548 = smul.addr %s1536, 8
        %s1549 = scalar_lea.vmem [#allocation16], %s1548
        %1550 = vst.msk [vmem:[%s1549] sm:$0xff] %vm1547, 2147483648
        %s1551 = smul.addr %s1536, 8
        %s1552 = scalar_lea.vmem [#allocation17], %s1551
        %1553 = vst.msk [vmem:[%s1552] sm:$0xff] %vm1547, 2147483647
        %1554 = xla_tuple %1550, %1553
        %v1555 = vrot.slane %v183, 1
        %s1556 = vtos %v1555
        %s1557 = sshrl.u32 %s1556, 3
        %p1558 = scmp.lt.s32.totalorder %s1556, 0
        %s1559 = ssub.s32 0, %s1556
        %s1560 = scalar_select %p1558, %s1559, %s1556
        %s1561 = sand.u32 %s1560, 7
        %s1562 = ssub.s32 0, %s1561
        %s1563 = scalar_select %p1558, %s1562, %s1561
        %v1564 = vlaneseq
        %s1565 = smul.u32 %s1563, 128
        %v1566 = vstv %s1565
        %v1567 = vadd.s32 %v1566, 65
        %vm1568 = vcmp.eq.s32.totalorder %v1564, %v1567
        %s1569 = smul.addr %s1557, 8
        %s1570 = scalar_lea.vmem [#allocation16], %s1569
        %1571 = vst.msk [vmem:[%s1570] sm:$0xff] %vm1568, 2147483648
        %s1572 = smul.addr %s1557, 8
        %s1573 = scalar_lea.vmem [#allocation17], %s1572
        %1574 = vst.msk [vmem:[%s1573] sm:$0xff] %vm1568, 2147483647
        %1575 = xla_tuple %1571, %1574
        %v1576 = vrot.slane %v1555, 1
        %s1577 = vtos %v1576
        %s1578 = sshrl.u32 %s1577, 3
        %p1579 = scmp.lt.s32.totalorder %s1577, 0
        %s1580 = ssub.s32 0, %s1577
        %s1581 = scalar_select %p1579, %s1580, %s1577
        %s1582 = sand.u32 %s1581, 7
        %s1583 = ssub.s32 0, %s1582
        %s1584 = scalar_select %p1579, %s1583, %s1582
        %v1585 = vlaneseq
        %s1586 = smul.u32 %s1584, 128
        %v1587 = vstv %s1586
        %v1588 = vadd.s32 %v1587, 66
        %vm1589 = vcmp.eq.s32.totalorder %v1585, %v1588
        %s1590 = smul.addr %s1578, 8
        %s1591 = scalar_lea.vmem [#allocation16], %s1590
        %1592 = vst.msk [vmem:[%s1591] sm:$0xff] %vm1589, 2147483648
        %s1593 = smul.addr %s1578, 8
        %s1594 = scalar_lea.vmem [#allocation17], %s1593
        %1595 = vst.msk [vmem:[%s1594] sm:$0xff] %vm1589, 2147483647
        %1596 = xla_tuple %1592, %1595
        %v1597 = vrot.slane %v1576, 1
        %s1598 = vtos %v1597
        %s1599 = sshrl.u32 %s1598, 3
        %p1600 = scmp.lt.s32.totalorder %s1598, 0
        %s1601 = ssub.s32 0, %s1598
        %s1602 = scalar_select %p1600, %s1601, %s1598
        %s1603 = sand.u32 %s1602, 7
        %s1604 = ssub.s32 0, %s1603
        %s1605 = scalar_select %p1600, %s1604, %s1603
        %v1606 = vlaneseq
        %s1607 = smul.u32 %s1605, 128
        %v1608 = vstv %s1607
        %v1609 = vadd.s32 %v1608, 67
        %vm1610 = vcmp.eq.s32.totalorder %v1606, %v1609
        %s1611 = smul.addr %s1599, 8
        %s1612 = scalar_lea.vmem [#allocation16], %s1611
        %1613 = vst.msk [vmem:[%s1612] sm:$0xff] %vm1610, 2147483648
        %s1614 = smul.addr %s1599, 8
        %s1615 = scalar_lea.vmem [#allocation17], %s1614
        %1616 = vst.msk [vmem:[%s1615] sm:$0xff] %vm1610, 2147483647
        %1617 = xla_tuple %1613, %1616
        %v1618 = vrot.slane %v1597, 1
        %s1619 = vtos %v1618
        %s1620 = sshrl.u32 %s1619, 3
        %p1621 = scmp.lt.s32.totalorder %s1619, 0
        %s1622 = ssub.s32 0, %s1619
        %s1623 = scalar_select %p1621, %s1622, %s1619
        %s1624 = sand.u32 %s1623, 7
        %s1625 = ssub.s32 0, %s1624
        %s1626 = scalar_select %p1621, %s1625, %s1624
        %v1627 = vlaneseq
        %s1628 = smul.u32 %s1626, 128
        %v1629 = vstv %s1628
        %v1630 = vadd.s32 %v1629, 68
        %vm1631 = vcmp.eq.s32.totalorder %v1627, %v1630
        %s1632 = smul.addr %s1620, 8
        %s1633 = scalar_lea.vmem [#allocation16], %s1632
        %1634 = vst.msk [vmem:[%s1633] sm:$0xff] %vm1631, 2147483648
        %s1635 = smul.addr %s1620, 8
        %s1636 = scalar_lea.vmem [#allocation17], %s1635
        %1637 = vst.msk [vmem:[%s1636] sm:$0xff] %vm1631, 2147483647
        %1638 = xla_tuple %1634, %1637
        %v1639 = vrot.slane %v1618, 1
        %s1640 = vtos %v1639
        %s1641 = sshrl.u32 %s1640, 3
        %p1642 = scmp.lt.s32.totalorder %s1640, 0
        %s1643 = ssub.s32 0, %s1640
        %s1644 = scalar_select %p1642, %s1643, %s1640
        %s1645 = sand.u32 %s1644, 7
        %s1646 = ssub.s32 0, %s1645
        %s1647 = scalar_select %p1642, %s1646, %s1645
        %v1648 = vlaneseq
        %s1649 = smul.u32 %s1647, 128
        %v1650 = vstv %s1649
        %v1651 = vadd.s32 %v1650, 69
        %vm1652 = vcmp.eq.s32.totalorder %v1648, %v1651
        %s1653 = smul.addr %s1641, 8
        %s1654 = scalar_lea.vmem [#allocation16], %s1653
        %1655 = vst.msk [vmem:[%s1654] sm:$0xff] %vm1652, 2147483648
        %s1656 = smul.addr %s1641, 8
        %s1657 = scalar_lea.vmem [#allocation17], %s1656
        %1658 = vst.msk [vmem:[%s1657] sm:$0xff] %vm1652, 2147483647
        %1659 = xla_tuple %1655, %1658
        %v1660 = vrot.slane %v1639, 1
        %s1661 = vtos %v1660
        %s1662 = sshrl.u32 %s1661, 3
        %p1663 = scmp.lt.s32.totalorder %s1661, 0
        %s1664 = ssub.s32 0, %s1661
        %s1665 = scalar_select %p1663, %s1664, %s1661
        %s1666 = sand.u32 %s1665, 7
        %s1667 = ssub.s32 0, %s1666
        %s1668 = scalar_select %p1663, %s1667, %s1666
        %v1669 = vlaneseq
        %s1670 = smul.u32 %s1668, 128
        %v1671 = vstv %s1670
        %v1672 = vadd.s32 %v1671, 70
        %vm1673 = vcmp.eq.s32.totalorder %v1669, %v1672
        %s1674 = smul.addr %s1662, 8
        %s1675 = scalar_lea.vmem [#allocation16], %s1674
        %1676 = vst.msk [vmem:[%s1675] sm:$0xff] %vm1673, 2147483648
        %s1677 = smul.addr %s1662, 8
        %s1678 = scalar_lea.vmem [#allocation17], %s1677
        %1679 = vst.msk [vmem:[%s1678] sm:$0xff] %vm1673, 2147483647
        %1680 = xla_tuple %1676, %1679
        %v1681 = vrot.slane %v1660, 1
        %s1682 = vtos %v1681
        %s1683 = sshrl.u32 %s1682, 3
        %p1684 = scmp.lt.s32.totalorder %s1682, 0
        %s1685 = ssub.s32 0, %s1682
        %s1686 = scalar_select %p1684, %s1685, %s1682
        %s1687 = sand.u32 %s1686, 7
        %s1688 = ssub.s32 0, %s1687
        %s1689 = scalar_select %p1684, %s1688, %s1687
        %v1690 = vlaneseq
        %s1691 = smul.u32 %s1689, 128
        %v1692 = vstv %s1691
        %v1693 = vadd.s32 %v1692, 71
        %vm1694 = vcmp.eq.s32.totalorder %v1690, %v1693
        %s1695 = smul.addr %s1683, 8
        %s1696 = scalar_lea.vmem [#allocation16], %s1695
        %1697 = vst.msk [vmem:[%s1696] sm:$0xff] %vm1694, 2147483648
        %s1698 = smul.addr %s1683, 8
        %s1699 = scalar_lea.vmem [#allocation17], %s1698
        %1700 = vst.msk [vmem:[%s1699] sm:$0xff] %vm1694, 2147483647
        %1701 = xla_tuple %1697, %1700
        %v1702 = vrot.slane %v1681, 1
        %s1703 = vtos %v184
        %s1704 = sshrl.u32 %s1703, 3
        %p1705 = scmp.lt.s32.totalorder %s1703, 0
        %s1706 = ssub.s32 0, %s1703
        %s1707 = scalar_select %p1705, %s1706, %s1703
        %s1708 = sand.u32 %s1707, 7
        %s1709 = ssub.s32 0, %s1708
        %s1710 = scalar_select %p1705, %s1709, %s1708
        %v1711 = vlaneseq
        %s1712 = smul.u32 %s1710, 128
        %v1713 = vstv %s1712
        %v1714 = vadd.s32 %v1713, 72
        %vm1715 = vcmp.eq.s32.totalorder %v1711, %v1714
        %s1716 = smul.addr %s1704, 8
        %s1717 = scalar_lea.vmem [#allocation16], %s1716
        %1718 = vst.msk [vmem:[%s1717] sm:$0xff] %vm1715, 2147483648
        %s1719 = smul.addr %s1704, 8
        %s1720 = scalar_lea.vmem [#allocation17], %s1719
        %1721 = vst.msk [vmem:[%s1720] sm:$0xff] %vm1715, 2147483647
        %1722 = xla_tuple %1718, %1721
        %v1723 = vrot.slane %v184, 1
        %s1724 = vtos %v1723
        %s1725 = sshrl.u32 %s1724, 3
        %p1726 = scmp.lt.s32.totalorder %s1724, 0
        %s1727 = ssub.s32 0, %s1724
        %s1728 = scalar_select %p1726, %s1727, %s1724
        %s1729 = sand.u32 %s1728, 7
        %s1730 = ssub.s32 0, %s1729
        %s1731 = scalar_select %p1726, %s1730, %s1729
        %v1732 = vlaneseq
        %s1733 = smul.u32 %s1731, 128
        %v1734 = vstv %s1733
        %v1735 = vadd.s32 %v1734, 73
        %vm1736 = vcmp.eq.s32.totalorder %v1732, %v1735
        %s1737 = smul.addr %s1725, 8
        %s1738 = scalar_lea.vmem [#allocation16], %s1737
        %1739 = vst.msk [vmem:[%s1738] sm:$0xff] %vm1736, 2147483648
        %s1740 = smul.addr %s1725, 8
        %s1741 = scalar_lea.vmem [#allocation17], %s1740
        %1742 = vst.msk [vmem:[%s1741] sm:$0xff] %vm1736, 2147483647
        %1743 = xla_tuple %1739, %1742
        %v1744 = vrot.slane %v1723, 1
        %s1745 = vtos %v1744
        %s1746 = sshrl.u32 %s1745, 3
        %p1747 = scmp.lt.s32.totalorder %s1745, 0
        %s1748 = ssub.s32 0, %s1745
        %s1749 = scalar_select %p1747, %s1748, %s1745
        %s1750 = sand.u32 %s1749, 7
        %s1751 = ssub.s32 0, %s1750
        %s1752 = scalar_select %p1747, %s1751, %s1750
        %v1753 = vlaneseq
        %s1754 = smul.u32 %s1752, 128
        %v1755 = vstv %s1754
        %v1756 = vadd.s32 %v1755, 74
        %vm1757 = vcmp.eq.s32.totalorder %v1753, %v1756
        %s1758 = smul.addr %s1746, 8
        %s1759 = scalar_lea.vmem [#allocation16], %s1758
        %1760 = vst.msk [vmem:[%s1759] sm:$0xff] %vm1757, 2147483648
        %s1761 = smul.addr %s1746, 8
        %s1762 = scalar_lea.vmem [#allocation17], %s1761
        %1763 = vst.msk [vmem:[%s1762] sm:$0xff] %vm1757, 2147483647
        %1764 = xla_tuple %1760, %1763
        %v1765 = vrot.slane %v1744, 1
        %s1766 = vtos %v1765
        %s1767 = sshrl.u32 %s1766, 3
        %p1768 = scmp.lt.s32.totalorder %s1766, 0
        %s1769 = ssub.s32 0, %s1766
        %s1770 = scalar_select %p1768, %s1769, %s1766
        %s1771 = sand.u32 %s1770, 7
        %s1772 = ssub.s32 0, %s1771
        %s1773 = scalar_select %p1768, %s1772, %s1771
        %v1774 = vlaneseq
        %s1775 = smul.u32 %s1773, 128
        %v1776 = vstv %s1775
        %v1777 = vadd.s32 %v1776, 75
        %vm1778 = vcmp.eq.s32.totalorder %v1774, %v1777
        %s1779 = smul.addr %s1767, 8
        %s1780 = scalar_lea.vmem [#allocation16], %s1779
        %1781 = vst.msk [vmem:[%s1780] sm:$0xff] %vm1778, 2147483648
        %s1782 = smul.addr %s1767, 8
        %s1783 = scalar_lea.vmem [#allocation17], %s1782
        %1784 = vst.msk [vmem:[%s1783] sm:$0xff] %vm1778, 2147483647
        %1785 = xla_tuple %1781, %1784
        %v1786 = vrot.slane %v1765, 1
        %s1787 = vtos %v1786
        %s1788 = sshrl.u32 %s1787, 3
        %p1789 = scmp.lt.s32.totalorder %s1787, 0
        %s1790 = ssub.s32 0, %s1787
        %s1791 = scalar_select %p1789, %s1790, %s1787
        %s1792 = sand.u32 %s1791, 7
        %s1793 = ssub.s32 0, %s1792
        %s1794 = scalar_select %p1789, %s1793, %s1792
        %v1795 = vlaneseq
        %s1796 = smul.u32 %s1794, 128
        %v1797 = vstv %s1796
        %v1798 = vadd.s32 %v1797, 76
        %vm1799 = vcmp.eq.s32.totalorder %v1795, %v1798
        %s1800 = smul.addr %s1788, 8
        %s1801 = scalar_lea.vmem [#allocation16], %s1800
        %1802 = vst.msk [vmem:[%s1801] sm:$0xff] %vm1799, 2147483648
        %s1803 = smul.addr %s1788, 8
        %s1804 = scalar_lea.vmem [#allocation17], %s1803
        %1805 = vst.msk [vmem:[%s1804] sm:$0xff] %vm1799, 2147483647
        %1806 = xla_tuple %1802, %1805
        %v1807 = vrot.slane %v1786, 1
        %s1808 = vtos %v1807
        %s1809 = sshrl.u32 %s1808, 3
        %p1810 = scmp.lt.s32.totalorder %s1808, 0
        %s1811 = ssub.s32 0, %s1808
        %s1812 = scalar_select %p1810, %s1811, %s1808
        %s1813 = sand.u32 %s1812, 7
        %s1814 = ssub.s32 0, %s1813
        %s1815 = scalar_select %p1810, %s1814, %s1813
        %v1816 = vlaneseq
        %s1817 = smul.u32 %s1815, 128
        %v1818 = vstv %s1817
        %v1819 = vadd.s32 %v1818, 77
        %vm1820 = vcmp.eq.s32.totalorder %v1816, %v1819
        %s1821 = smul.addr %s1809, 8
        %s1822 = scalar_lea.vmem [#allocation16], %s1821
        %1823 = vst.msk [vmem:[%s1822] sm:$0xff] %vm1820, 2147483648
        %s1824 = smul.addr %s1809, 8
        %s1825 = scalar_lea.vmem [#allocation17], %s1824
        %1826 = vst.msk [vmem:[%s1825] sm:$0xff] %vm1820, 2147483647
        %1827 = xla_tuple %1823, %1826
        %v1828 = vrot.slane %v1807, 1
        %s1829 = vtos %v1828
        %s1830 = sshrl.u32 %s1829, 3
        %p1831 = scmp.lt.s32.totalorder %s1829, 0
        %s1832 = ssub.s32 0, %s1829
        %s1833 = scalar_select %p1831, %s1832, %s1829
        %s1834 = sand.u32 %s1833, 7
        %s1835 = ssub.s32 0, %s1834
        %s1836 = scalar_select %p1831, %s1835, %s1834
        %v1837 = vlaneseq
        %s1838 = smul.u32 %s1836, 128
        %v1839 = vstv %s1838
        %v1840 = vadd.s32 %v1839, 78
        %vm1841 = vcmp.eq.s32.totalorder %v1837, %v1840
        %s1842 = smul.addr %s1830, 8
        %s1843 = scalar_lea.vmem [#allocation16], %s1842
        %1844 = vst.msk [vmem:[%s1843] sm:$0xff] %vm1841, 2147483648
        %s1845 = smul.addr %s1830, 8
        %s1846 = scalar_lea.vmem [#allocation17], %s1845
        %1847 = vst.msk [vmem:[%s1846] sm:$0xff] %vm1841, 2147483647
        %1848 = xla_tuple %1844, %1847
        %v1849 = vrot.slane %v1828, 1
        %s1850 = vtos %v1849
        %s1851 = sshrl.u32 %s1850, 3
        %p1852 = scmp.lt.s32.totalorder %s1850, 0
        %s1853 = ssub.s32 0, %s1850
        %s1854 = scalar_select %p1852, %s1853, %s1850
        %s1855 = sand.u32 %s1854, 7
        %s1856 = ssub.s32 0, %s1855
        %s1857 = scalar_select %p1852, %s1856, %s1855
        %v1858 = vlaneseq
        %s1859 = smul.u32 %s1857, 128
        %v1860 = vstv %s1859
        %v1861 = vadd.s32 %v1860, 79
        %vm1862 = vcmp.eq.s32.totalorder %v1858, %v1861
        %s1863 = smul.addr %s1851, 8
        %s1864 = scalar_lea.vmem [#allocation16], %s1863
        %1865 = vst.msk [vmem:[%s1864] sm:$0xff] %vm1862, 2147483648
        %s1866 = smul.addr %s1851, 8
        %s1867 = scalar_lea.vmem [#allocation17], %s1866
        %1868 = vst.msk [vmem:[%s1867] sm:$0xff] %vm1862, 2147483647
        %1869 = xla_tuple %1865, %1868
        %v1870 = vrot.slane %v1849, 1
        %s1871 = vtos %v185
        %s1872 = sshrl.u32 %s1871, 3
        %p1873 = scmp.lt.s32.totalorder %s1871, 0
        %s1874 = ssub.s32 0, %s1871
        %s1875 = scalar_select %p1873, %s1874, %s1871
        %s1876 = sand.u32 %s1875, 7
        %s1877 = ssub.s32 0, %s1876
        %s1878 = scalar_select %p1873, %s1877, %s1876
        %v1879 = vlaneseq
        %s1880 = smul.u32 %s1878, 128
        %v1881 = vstv %s1880
        %v1882 = vadd.s32 %v1881, 80
        %vm1883 = vcmp.eq.s32.totalorder %v1879, %v1882
        %s1884 = smul.addr %s1872, 8
        %s1885 = scalar_lea.vmem [#allocation16], %s1884
        %1886 = vst.msk [vmem:[%s1885] sm:$0xff] %vm1883, 2147483648
        %s1887 = smul.addr %s1872, 8
        %s1888 = scalar_lea.vmem [#allocation17], %s1887
        %1889 = vst.msk [vmem:[%s1888] sm:$0xff] %vm1883, 2147483647
        %1890 = xla_tuple %1886, %1889
        %v1891 = vrot.slane %v185, 1
        %s1892 = vtos %v1891
        %s1893 = sshrl.u32 %s1892, 3
        %p1894 = scmp.lt.s32.totalorder %s1892, 0
        %s1895 = ssub.s32 0, %s1892
        %s1896 = scalar_select %p1894, %s1895, %s1892
        %s1897 = sand.u32 %s1896, 7
        %s1898 = ssub.s32 0, %s1897
        %s1899 = scalar_select %p1894, %s1898, %s1897
        %v1900 = vlaneseq
        %s1901 = smul.u32 %s1899, 128
        %v1902 = vstv %s1901
        %v1903 = vadd.s32 %v1902, 81
        %vm1904 = vcmp.eq.s32.totalorder %v1900, %v1903
        %s1905 = smul.addr %s1893, 8
        %s1906 = scalar_lea.vmem [#allocation16], %s1905
        %1907 = vst.msk [vmem:[%s1906] sm:$0xff] %vm1904, 2147483648
        %s1908 = smul.addr %s1893, 8
        %s1909 = scalar_lea.vmem [#allocation17], %s1908
        %1910 = vst.msk [vmem:[%s1909] sm:$0xff] %vm1904, 2147483647
        %1911 = xla_tuple %1907, %1910
        %v1912 = vrot.slane %v1891, 1
        %s1913 = vtos %v1912
        %s1914 = sshrl.u32 %s1913, 3
        %p1915 = scmp.lt.s32.totalorder %s1913, 0
        %s1916 = ssub.s32 0, %s1913
        %s1917 = scalar_select %p1915, %s1916, %s1913
        %s1918 = sand.u32 %s1917, 7
        %s1919 = ssub.s32 0, %s1918
        %s1920 = scalar_select %p1915, %s1919, %s1918
        %v1921 = vlaneseq
        %s1922 = smul.u32 %s1920, 128
        %v1923 = vstv %s1922
        %v1924 = vadd.s32 %v1923, 82
        %vm1925 = vcmp.eq.s32.totalorder %v1921, %v1924
        %s1926 = smul.addr %s1914, 8
        %s1927 = scalar_lea.vmem [#allocation16], %s1926
        %1928 = vst.msk [vmem:[%s1927] sm:$0xff] %vm1925, 2147483648
        %s1929 = smul.addr %s1914, 8
        %s1930 = scalar_lea.vmem [#allocation17], %s1929
        %1931 = vst.msk [vmem:[%s1930] sm:$0xff] %vm1925, 2147483647
        %1932 = xla_tuple %1928, %1931
        %v1933 = vrot.slane %v1912, 1
        %s1934 = vtos %v1933
        %s1935 = sshrl.u32 %s1934, 3
        %p1936 = scmp.lt.s32.totalorder %s1934, 0
        %s1937 = ssub.s32 0, %s1934
        %s1938 = scalar_select %p1936, %s1937, %s1934
        %s1939 = sand.u32 %s1938, 7
        %s1940 = ssub.s32 0, %s1939
        %s1941 = scalar_select %p1936, %s1940, %s1939
        %v1942 = vlaneseq
        %s1943 = smul.u32 %s1941, 128
        %v1944 = vstv %s1943
        %v1945 = vadd.s32 %v1944, 83
        %vm1946 = vcmp.eq.s32.totalorder %v1942, %v1945
        %s1947 = smul.addr %s1935, 8
        %s1948 = scalar_lea.vmem [#allocation16], %s1947
        %1949 = vst.msk [vmem:[%s1948] sm:$0xff] %vm1946, 2147483648
        %s1950 = smul.addr %s1935, 8
        %s1951 = scalar_lea.vmem [#allocation17], %s1950
        %1952 = vst.msk [vmem:[%s1951] sm:$0xff] %vm1946, 2147483647
        %1953 = xla_tuple %1949, %1952
        %v1954 = vrot.slane %v1933, 1
        %s1955 = vtos %v1954
        %s1956 = sshrl.u32 %s1955, 3
        %p1957 = scmp.lt.s32.totalorder %s1955, 0
        %s1958 = ssub.s32 0, %s1955
        %s1959 = scalar_select %p1957, %s1958, %s1955
        %s1960 = sand.u32 %s1959, 7
        %s1961 = ssub.s32 0, %s1960
        %s1962 = scalar_select %p1957, %s1961, %s1960
        %v1963 = vlaneseq
        %s1964 = smul.u32 %s1962, 128
        %v1965 = vstv %s1964
        %v1966 = vadd.s32 %v1965, 84
        %vm1967 = vcmp.eq.s32.totalorder %v1963, %v1966
        %s1968 = smul.addr %s1956, 8
        %s1969 = scalar_lea.vmem [#allocation16], %s1968
        %1970 = vst.msk [vmem:[%s1969] sm:$0xff] %vm1967, 2147483648
        %s1971 = smul.addr %s1956, 8
        %s1972 = scalar_lea.vmem [#allocation17], %s1971
        %1973 = vst.msk [vmem:[%s1972] sm:$0xff] %vm1967, 2147483647
        %1974 = xla_tuple %1970, %1973
        %v1975 = vrot.slane %v1954, 1
        %s1976 = vtos %v1975
        %s1977 = sshrl.u32 %s1976, 3
        %p1978 = scmp.lt.s32.totalorder %s1976, 0
        %s1979 = ssub.s32 0, %s1976
        %s1980 = scalar_select %p1978, %s1979, %s1976
        %s1981 = sand.u32 %s1980, 7
        %s1982 = ssub.s32 0, %s1981
        %s1983 = scalar_select %p1978, %s1982, %s1981
        %v1984 = vlaneseq
        %s1985 = smul.u32 %s1983, 128
        %v1986 = vstv %s1985
        %v1987 = vadd.s32 %v1986, 85
        %vm1988 = vcmp.eq.s32.totalorder %v1984, %v1987
        %s1989 = smul.addr %s1977, 8
        %s1990 = scalar_lea.vmem [#allocation16], %s1989
        %1991 = vst.msk [vmem:[%s1990] sm:$0xff] %vm1988, 2147483648
        %s1992 = smul.addr %s1977, 8
        %s1993 = scalar_lea.vmem [#allocation17], %s1992
        %1994 = vst.msk [vmem:[%s1993] sm:$0xff] %vm1988, 2147483647
        %1995 = xla_tuple %1991, %1994
        %v1996 = vrot.slane %v1975, 1
        %s1997 = vtos %v1996
        %s1998 = sshrl.u32 %s1997, 3
        %p1999 = scmp.lt.s32.totalorder %s1997, 0
        %s2000 = ssub.s32 0, %s1997
        %s2001 = scalar_select %p1999, %s2000, %s1997
        %s2002 = sand.u32 %s2001, 7
        %s2003 = ssub.s32 0, %s2002
        %s2004 = scalar_select %p1999, %s2003, %s2002
        %v2005 = vlaneseq
        %s2006 = smul.u32 %s2004, 128
        %v2007 = vstv %s2006
        %v2008 = vadd.s32 %v2007, 86
        %vm2009 = vcmp.eq.s32.totalorder %v2005, %v2008
        %s2010 = smul.addr %s1998, 8
        %s2011 = scalar_lea.vmem [#allocation16], %s2010
        %2012 = vst.msk [vmem:[%s2011] sm:$0xff] %vm2009, 2147483648
        %s2013 = smul.addr %s1998, 8
        %s2014 = scalar_lea.vmem [#allocation17], %s2013
        %2015 = vst.msk [vmem:[%s2014] sm:$0xff] %vm2009, 2147483647
        %2016 = xla_tuple %2012, %2015
        %v2017 = vrot.slane %v1996, 1
        %s2018 = vtos %v2017
        %s2019 = sshrl.u32 %s2018, 3
        %p2020 = scmp.lt.s32.totalorder %s2018, 0
        %s2021 = ssub.s32 0, %s2018
        %s2022 = scalar_select %p2020, %s2021, %s2018
        %s2023 = sand.u32 %s2022, 7
        %s2024 = ssub.s32 0, %s2023
        %s2025 = scalar_select %p2020, %s2024, %s2023
        %v2026 = vlaneseq
        %s2027 = smul.u32 %s2025, 128
        %v2028 = vstv %s2027
        %v2029 = vadd.s32 %v2028, 87
        %vm2030 = vcmp.eq.s32.totalorder %v2026, %v2029
        %s2031 = smul.addr %s2019, 8
        %s2032 = scalar_lea.vmem [#allocation16], %s2031
        %2033 = vst.msk [vmem:[%s2032] sm:$0xff] %vm2030, 2147483648
        %s2034 = smul.addr %s2019, 8
        %s2035 = scalar_lea.vmem [#allocation17], %s2034
        %2036 = vst.msk [vmem:[%s2035] sm:$0xff] %vm2030, 2147483647
        %2037 = xla_tuple %2033, %2036
        %v2038 = vrot.slane %v2017, 1
        %s2039 = vtos %v186
        %s2040 = sshrl.u32 %s2039, 3
        %p2041 = scmp.lt.s32.totalorder %s2039, 0
        %s2042 = ssub.s32 0, %s2039
        %s2043 = scalar_select %p2041, %s2042, %s2039
        %s2044 = sand.u32 %s2043, 7
        %s2045 = ssub.s32 0, %s2044
        %s2046 = scalar_select %p2041, %s2045, %s2044
        %v2047 = vlaneseq
        %s2048 = smul.u32 %s2046, 128
        %v2049 = vstv %s2048
        %v2050 = vadd.s32 %v2049, 88
        %vm2051 = vcmp.eq.s32.totalorder %v2047, %v2050
        %s2052 = smul.addr %s2040, 8
        %s2053 = scalar_lea.vmem [#allocation16], %s2052
        %2054 = vst.msk [vmem:[%s2053] sm:$0xff] %vm2051, 2147483648
        %s2055 = smul.addr %s2040, 8
        %s2056 = scalar_lea.vmem [#allocation17], %s2055
        %2057 = vst.msk [vmem:[%s2056] sm:$0xff] %vm2051, 2147483647
        %2058 = xla_tuple %2054, %2057
        %v2059 = vrot.slane %v186, 1
        %s2060 = vtos %v2059
        %s2061 = sshrl.u32 %s2060, 3
        %p2062 = scmp.lt.s32.totalorder %s2060, 0
        %s2063 = ssub.s32 0, %s2060
        %s2064 = scalar_select %p2062, %s2063, %s2060
        %s2065 = sand.u32 %s2064, 7
        %s2066 = ssub.s32 0, %s2065
        %s2067 = scalar_select %p2062, %s2066, %s2065
        %v2068 = vlaneseq
        %s2069 = smul.u32 %s2067, 128
        %v2070 = vstv %s2069
        %v2071 = vadd.s32 %v2070, 89
        %vm2072 = vcmp.eq.s32.totalorder %v2068, %v2071
        %s2073 = smul.addr %s2061, 8
        %s2074 = scalar_lea.vmem [#allocation16], %s2073
        %2075 = vst.msk [vmem:[%s2074] sm:$0xff] %vm2072, 2147483648
        %s2076 = smul.addr %s2061, 8
        %s2077 = scalar_lea.vmem [#allocation17], %s2076
        %2078 = vst.msk [vmem:[%s2077] sm:$0xff] %vm2072, 2147483647
        %2079 = xla_tuple %2075, %2078
        %v2080 = vrot.slane %v2059, 1
        %s2081 = vtos %v2080
        %s2082 = sshrl.u32 %s2081, 3
        %p2083 = scmp.lt.s32.totalorder %s2081, 0
        %s2084 = ssub.s32 0, %s2081
        %s2085 = scalar_select %p2083, %s2084, %s2081
        %s2086 = sand.u32 %s2085, 7
        %s2087 = ssub.s32 0, %s2086
        %s2088 = scalar_select %p2083, %s2087, %s2086
        %v2089 = vlaneseq
        %s2090 = smul.u32 %s2088, 128
        %v2091 = vstv %s2090
        %v2092 = vadd.s32 %v2091, 90
        %vm2093 = vcmp.eq.s32.totalorder %v2089, %v2092
        %s2094 = smul.addr %s2082, 8
        %s2095 = scalar_lea.vmem [#allocation16], %s2094
        %2096 = vst.msk [vmem:[%s2095] sm:$0xff] %vm2093, 2147483648
        %s2097 = smul.addr %s2082, 8
        %s2098 = scalar_lea.vmem [#allocation17], %s2097
        %2099 = vst.msk [vmem:[%s2098] sm:$0xff] %vm2093, 2147483647
        %2100 = xla_tuple %2096, %2099
        %v2101 = vrot.slane %v2080, 1
        %s2102 = vtos %v2101
        %s2103 = sshrl.u32 %s2102, 3
        %p2104 = scmp.lt.s32.totalorder %s2102, 0
        %s2105 = ssub.s32 0, %s2102
        %s2106 = scalar_select %p2104, %s2105, %s2102
        %s2107 = sand.u32 %s2106, 7
        %s2108 = ssub.s32 0, %s2107
        %s2109 = scalar_select %p2104, %s2108, %s2107
        %v2110 = vlaneseq
        %s2111 = smul.u32 %s2109, 128
        %v2112 = vstv %s2111
        %v2113 = vadd.s32 %v2112, 91
        %vm2114 = vcmp.eq.s32.totalorder %v2110, %v2113
        %s2115 = smul.addr %s2103, 8
        %s2116 = scalar_lea.vmem [#allocation16], %s2115
        %2117 = vst.msk [vmem:[%s2116] sm:$0xff] %vm2114, 2147483648
        %s2118 = smul.addr %s2103, 8
        %s2119 = scalar_lea.vmem [#allocation17], %s2118
        %2120 = vst.msk [vmem:[%s2119] sm:$0xff] %vm2114, 2147483647
        %2121 = xla_tuple %2117, %2120
        %v2122 = vrot.slane %v2101, 1
        %s2123 = vtos %v2122
        %s2124 = sshrl.u32 %s2123, 3
        %p2125 = scmp.lt.s32.totalorder %s2123, 0
        %s2126 = ssub.s32 0, %s2123
        %s2127 = scalar_select %p2125, %s2126, %s2123
        %s2128 = sand.u32 %s2127, 7
        %s2129 = ssub.s32 0, %s2128
        %s2130 = scalar_select %p2125, %s2129, %s2128
        %v2131 = vlaneseq
        %s2132 = smul.u32 %s2130, 128
        %v2133 = vstv %s2132
        %v2134 = vadd.s32 %v2133, 92
        %vm2135 = vcmp.eq.s32.totalorder %v2131, %v2134
        %s2136 = smul.addr %s2124, 8
        %s2137 = scalar_lea.vmem [#allocation16], %s2136
        %2138 = vst.msk [vmem:[%s2137] sm:$0xff] %vm2135, 2147483648
        %s2139 = smul.addr %s2124, 8
        %s2140 = scalar_lea.vmem [#allocation17], %s2139
        %2141 = vst.msk [vmem:[%s2140] sm:$0xff] %vm2135, 2147483647
        %2142 = xla_tuple %2138, %2141
        %v2143 = vrot.slane %v2122, 1
        %s2144 = vtos %v2143
        %s2145 = sshrl.u32 %s2144, 3
        %p2146 = scmp.lt.s32.totalorder %s2144, 0
        %s2147 = ssub.s32 0, %s2144
        %s2148 = scalar_select %p2146, %s2147, %s2144
        %s2149 = sand.u32 %s2148, 7
        %s2150 = ssub.s32 0, %s2149
        %s2151 = scalar_select %p2146, %s2150, %s2149
        %v2152 = vlaneseq
        %s2153 = smul.u32 %s2151, 128
        %v2154 = vstv %s2153
        %v2155 = vadd.s32 %v2154, 93
        %vm2156 = vcmp.eq.s32.totalorder %v2152, %v2155
        %s2157 = smul.addr %s2145, 8
        %s2158 = scalar_lea.vmem [#allocation16], %s2157
        %2159 = vst.msk [vmem:[%s2158] sm:$0xff] %vm2156, 2147483648
        %s2160 = smul.addr %s2145, 8
        %s2161 = scalar_lea.vmem [#allocation17], %s2160
        %2162 = vst.msk [vmem:[%s2161] sm:$0xff] %vm2156, 2147483647
        %2163 = xla_tuple %2159, %2162
        %v2164 = vrot.slane %v2143, 1
        %s2165 = vtos %v2164
        %s2166 = sshrl.u32 %s2165, 3
        %p2167 = scmp.lt.s32.totalorder %s2165, 0
        %s2168 = ssub.s32 0, %s2165
        %s2169 = scalar_select %p2167, %s2168, %s2165
        %s2170 = sand.u32 %s2169, 7
        %s2171 = ssub.s32 0, %s2170
        %s2172 = scalar_select %p2167, %s2171, %s2170
        %v2173 = vlaneseq
        %s2174 = smul.u32 %s2172, 128
        %v2175 = vstv %s2174
        %v2176 = vadd.s32 %v2175, 94
        %vm2177 = vcmp.eq.s32.totalorder %v2173, %v2176
        %s2178 = smul.addr %s2166, 8
        %s2179 = scalar_lea.vmem [#allocation16], %s2178
        %2180 = vst.msk [vmem:[%s2179] sm:$0xff] %vm2177, 2147483648
        %s2181 = smul.addr %s2166, 8
        %s2182 = scalar_lea.vmem [#allocation17], %s2181
        %2183 = vst.msk [vmem:[%s2182] sm:$0xff] %vm2177, 2147483647
        %2184 = xla_tuple %2180, %2183
        %v2185 = vrot.slane %v2164, 1
        %s2186 = vtos %v2185
        %s2187 = sshrl.u32 %s2186, 3
        %p2188 = scmp.lt.s32.totalorder %s2186, 0
        %s2189 = ssub.s32 0, %s2186
        %s2190 = scalar_select %p2188, %s2189, %s2186
        %s2191 = sand.u32 %s2190, 7
        %s2192 = ssub.s32 0, %s2191
        %s2193 = scalar_select %p2188, %s2192, %s2191
        %v2194 = vlaneseq
        %s2195 = smul.u32 %s2193, 128
        %v2196 = vstv %s2195
        %v2197 = vadd.s32 %v2196, 95
        %vm2198 = vcmp.eq.s32.totalorder %v2194, %v2197
        %s2199 = smul.addr %s2187, 8
        %s2200 = scalar_lea.vmem [#allocation16], %s2199
        %2201 = vst.msk [vmem:[%s2200] sm:$0xff] %vm2198, 2147483648
        %s2202 = smul.addr %s2187, 8
        %s2203 = scalar_lea.vmem [#allocation17], %s2202
        %2204 = vst.msk [vmem:[%s2203] sm:$0xff] %vm2198, 2147483647
        %2205 = xla_tuple %2201, %2204
        %v2206 = vrot.slane %v2185, 1
        %s2207 = vtos %v187
        %s2208 = sshrl.u32 %s2207, 3
        %p2209 = scmp.lt.s32.totalorder %s2207, 0
        %s2210 = ssub.s32 0, %s2207
        %s2211 = scalar_select %p2209, %s2210, %s2207
        %s2212 = sand.u32 %s2211, 7
        %s2213 = ssub.s32 0, %s2212
        %s2214 = scalar_select %p2209, %s2213, %s2212
        %v2215 = vlaneseq
        %s2216 = smul.u32 %s2214, 128
        %v2217 = vstv %s2216
        %v2218 = vadd.s32 %v2217, 96
        %vm2219 = vcmp.eq.s32.totalorder %v2215, %v2218
        %s2220 = smul.addr %s2208, 8
        %s2221 = scalar_lea.vmem [#allocation16], %s2220
        %2222 = vst.msk [vmem:[%s2221] sm:$0xff] %vm2219, 2147483648
        %s2223 = smul.addr %s2208, 8
        %s2224 = scalar_lea.vmem [#allocation17], %s2223
        %2225 = vst.msk [vmem:[%s2224] sm:$0xff] %vm2219, 2147483647
        %2226 = xla_tuple %2222, %2225
        %v2227 = vrot.slane %v187, 1
        %s2228 = vtos %v2227
        %s2229 = sshrl.u32 %s2228, 3
        %p2230 = scmp.lt.s32.totalorder %s2228, 0
        %s2231 = ssub.s32 0, %s2228
        %s2232 = scalar_select %p2230, %s2231, %s2228
        %s2233 = sand.u32 %s2232, 7
        %s2234 = ssub.s32 0, %s2233
        %s2235 = scalar_select %p2230, %s2234, %s2233
        %v2236 = vlaneseq
        %s2237 = smul.u32 %s2235, 128
        %v2238 = vstv %s2237
        %v2239 = vadd.s32 %v2238, 97
        %vm2240 = vcmp.eq.s32.totalorder %v2236, %v2239
        %s2241 = smul.addr %s2229, 8
        %s2242 = scalar_lea.vmem [#allocation16], %s2241
        %2243 = vst.msk [vmem:[%s2242] sm:$0xff] %vm2240, 2147483648
        %s2244 = smul.addr %s2229, 8
        %s2245 = scalar_lea.vmem [#allocation17], %s2244
        %2246 = vst.msk [vmem:[%s2245] sm:$0xff] %vm2240, 2147483647
        %2247 = xla_tuple %2243, %2246
        %v2248 = vrot.slane %v2227, 1
        %s2249 = vtos %v2248
        %s2250 = sshrl.u32 %s2249, 3
        %p2251 = scmp.lt.s32.totalorder %s2249, 0
        %s2252 = ssub.s32 0, %s2249
        %s2253 = scalar_select %p2251, %s2252, %s2249
        %s2254 = sand.u32 %s2253, 7
        %s2255 = ssub.s32 0, %s2254
        %s2256 = scalar_select %p2251, %s2255, %s2254
        %v2257 = vlaneseq
        %s2258 = smul.u32 %s2256, 128
        %v2259 = vstv %s2258
        %v2260 = vadd.s32 %v2259, 98
        %vm2261 = vcmp.eq.s32.totalorder %v2257, %v2260
        %s2262 = smul.addr %s2250, 8
        %s2263 = scalar_lea.vmem [#allocation16], %s2262
        %2264 = vst.msk [vmem:[%s2263] sm:$0xff] %vm2261, 2147483648
        %s2265 = smul.addr %s2250, 8
        %s2266 = scalar_lea.vmem [#allocation17], %s2265
        %2267 = vst.msk [vmem:[%s2266] sm:$0xff] %vm2261, 2147483647
        %2268 = xla_tuple %2264, %2267
        %v2269 = vrot.slane %v2248, 1
        %s2270 = vtos %v2269
        %s2271 = sshrl.u32 %s2270, 3
        %p2272 = scmp.lt.s32.totalorder %s2270, 0
        %s2273 = ssub.s32 0, %s2270
        %s2274 = scalar_select %p2272, %s2273, %s2270
        %s2275 = sand.u32 %s2274, 7
        %s2276 = ssub.s32 0, %s2275
        %s2277 = scalar_select %p2272, %s2276, %s2275
        %v2278 = vlaneseq
        %s2279 = smul.u32 %s2277, 128
        %v2280 = vstv %s2279
        %v2281 = vadd.s32 %v2280, 99
        %vm2282 = vcmp.eq.s32.totalorder %v2278, %v2281
        %s2283 = smul.addr %s2271, 8
        %s2284 = scalar_lea.vmem [#allocation16], %s2283
        %2285 = vst.msk [vmem:[%s2284] sm:$0xff] %vm2282, 2147483648
        %s2286 = smul.addr %s2271, 8
        %s2287 = scalar_lea.vmem [#allocation17], %s2286
        %2288 = vst.msk [vmem:[%s2287] sm:$0xff] %vm2282, 2147483647
        %2289 = xla_tuple %2285, %2288
        %v2290 = vrot.slane %v2269, 1
        %s2291 = vtos %v2290
        %s2292 = sshrl.u32 %s2291, 3
        %p2293 = scmp.lt.s32.totalorder %s2291, 0
        %s2294 = ssub.s32 0, %s2291
        %s2295 = scalar_select %p2293, %s2294, %s2291
        %s2296 = sand.u32 %s2295, 7
        %s2297 = ssub.s32 0, %s2296
        %s2298 = scalar_select %p2293, %s2297, %s2296
        %v2299 = vlaneseq
        %s2300 = smul.u32 %s2298, 128
        %v2301 = vstv %s2300
        %v2302 = vadd.s32 %v2301, 100
        %vm2303 = vcmp.eq.s32.totalorder %v2299, %v2302
        %s2304 = smul.addr %s2292, 8
        %s2305 = scalar_lea.vmem [#allocation16], %s2304
        %2306 = vst.msk [vmem:[%s2305] sm:$0xff] %vm2303, 2147483648
        %s2307 = smul.addr %s2292, 8
        %s2308 = scalar_lea.vmem [#allocation17], %s2307
        %2309 = vst.msk [vmem:[%s2308] sm:$0xff] %vm2303, 2147483647
        %2310 = xla_tuple %2306, %2309
        %v2311 = vrot.slane %v2290, 1
        %s2312 = vtos %v2311
        %s2313 = sshrl.u32 %s2312, 3
        %p2314 = scmp.lt.s32.totalorder %s2312, 0
        %s2315 = ssub.s32 0, %s2312
        %s2316 = scalar_select %p2314, %s2315, %s2312
        %s2317 = sand.u32 %s2316, 7
        %s2318 = ssub.s32 0, %s2317
        %s2319 = scalar_select %p2314, %s2318, %s2317
        %v2320 = vlaneseq
        %s2321 = smul.u32 %s2319, 128
        %v2322 = vstv %s2321
        %v2323 = vadd.s32 %v2322, 101
        %vm2324 = vcmp.eq.s32.totalorder %v2320, %v2323
        %s2325 = smul.addr %s2313, 8
        %s2326 = scalar_lea.vmem [#allocation16], %s2325
        %2327 = vst.msk [vmem:[%s2326] sm:$0xff] %vm2324, 2147483648
        %s2328 = smul.addr %s2313, 8
        %s2329 = scalar_lea.vmem [#allocation17], %s2328
        %2330 = vst.msk [vmem:[%s2329] sm:$0xff] %vm2324, 2147483647
        %2331 = xla_tuple %2327, %2330
        %v2332 = vrot.slane %v2311, 1
        %s2333 = vtos %v2332
        %s2334 = sshrl.u32 %s2333, 3
        %p2335 = scmp.lt.s32.totalorder %s2333, 0
        %s2336 = ssub.s32 0, %s2333
        %s2337 = scalar_select %p2335, %s2336, %s2333
        %s2338 = sand.u32 %s2337, 7
        %s2339 = ssub.s32 0, %s2338
        %s2340 = scalar_select %p2335, %s2339, %s2338
        %v2341 = vlaneseq
        %s2342 = smul.u32 %s2340, 128
        %v2343 = vstv %s2342
        %v2344 = vadd.s32 %v2343, 102
        %vm2345 = vcmp.eq.s32.totalorder %v2341, %v2344
        %s2346 = smul.addr %s2334, 8
        %s2347 = scalar_lea.vmem [#allocation16], %s2346
        %2348 = vst.msk [vmem:[%s2347] sm:$0xff] %vm2345, 2147483648
        %s2349 = smul.addr %s2334, 8
        %s2350 = scalar_lea.vmem [#allocation17], %s2349
        %2351 = vst.msk [vmem:[%s2350] sm:$0xff] %vm2345, 2147483647
        %2352 = xla_tuple %2348, %2351
        %v2353 = vrot.slane %v2332, 1
        %s2354 = vtos %v2353
        %s2355 = sshrl.u32 %s2354, 3
        %p2356 = scmp.lt.s32.totalorder %s2354, 0
        %s2357 = ssub.s32 0, %s2354
        %s2358 = scalar_select %p2356, %s2357, %s2354
        %s2359 = sand.u32 %s2358, 7
        %s2360 = ssub.s32 0, %s2359
        %s2361 = scalar_select %p2356, %s2360, %s2359
        %v2362 = vlaneseq
        %s2363 = smul.u32 %s2361, 128
        %v2364 = vstv %s2363
        %v2365 = vadd.s32 %v2364, 103
        %vm2366 = vcmp.eq.s32.totalorder %v2362, %v2365
        %s2367 = smul.addr %s2355, 8
        %s2368 = scalar_lea.vmem [#allocation16], %s2367
        %2369 = vst.msk [vmem:[%s2368] sm:$0xff] %vm2366, 2147483648
        %s2370 = smul.addr %s2355, 8
        %s2371 = scalar_lea.vmem [#allocation17], %s2370
        %2372 = vst.msk [vmem:[%s2371] sm:$0xff] %vm2366, 2147483647
        %2373 = xla_tuple %2369, %2372
        %v2374 = vrot.slane %v2353, 1
        %s2375 = vtos %v188
        %s2376 = sshrl.u32 %s2375, 3
        %p2377 = scmp.lt.s32.totalorder %s2375, 0
        %s2378 = ssub.s32 0, %s2375
        %s2379 = scalar_select %p2377, %s2378, %s2375
        %s2380 = sand.u32 %s2379, 7
        %s2381 = ssub.s32 0, %s2380
        %s2382 = scalar_select %p2377, %s2381, %s2380
        %v2383 = vlaneseq
        %s2384 = smul.u32 %s2382, 128
        %v2385 = vstv %s2384
        %v2386 = vadd.s32 %v2385, 104
        %vm2387 = vcmp.eq.s32.totalorder %v2383, %v2386
        %s2388 = smul.addr %s2376, 8
        %s2389 = scalar_lea.vmem [#allocation16], %s2388
        %2390 = vst.msk [vmem:[%s2389] sm:$0xff] %vm2387, 2147483648
        %s2391 = smul.addr %s2376, 8
        %s2392 = scalar_lea.vmem [#allocation17], %s2391
        %2393 = vst.msk [vmem:[%s2392] sm:$0xff] %vm2387, 2147483647
        %2394 = xla_tuple %2390, %2393
        %v2395 = vrot.slane %v188, 1
        %s2396 = vtos %v2395
        %s2397 = sshrl.u32 %s2396, 3
        %p2398 = scmp.lt.s32.totalorder %s2396, 0
        %s2399 = ssub.s32 0, %s2396
        %s2400 = scalar_select %p2398, %s2399, %s2396
        %s2401 = sand.u32 %s2400, 7
        %s2402 = ssub.s32 0, %s2401
        %s2403 = scalar_select %p2398, %s2402, %s2401
        %v2404 = vlaneseq
        %s2405 = smul.u32 %s2403, 128
        %v2406 = vstv %s2405
        %v2407 = vadd.s32 %v2406, 105
        %vm2408 = vcmp.eq.s32.totalorder %v2404, %v2407
        %s2409 = smul.addr %s2397, 8
        %s2410 = scalar_lea.vmem [#allocation16], %s2409
        %2411 = vst.msk [vmem:[%s2410] sm:$0xff] %vm2408, 2147483648
        %s2412 = smul.addr %s2397, 8
        %s2413 = scalar_lea.vmem [#allocation17], %s2412
        %2414 = vst.msk [vmem:[%s2413] sm:$0xff] %vm2408, 2147483647
        %2415 = xla_tuple %2411, %2414
        %v2416 = vrot.slane %v2395, 1
        %s2417 = vtos %v2416
        %s2418 = sshrl.u32 %s2417, 3
        %p2419 = scmp.lt.s32.totalorder %s2417, 0
        %s2420 = ssub.s32 0, %s2417
        %s2421 = scalar_select %p2419, %s2420, %s2417
        %s2422 = sand.u32 %s2421, 7
        %s2423 = ssub.s32 0, %s2422
        %s2424 = scalar_select %p2419, %s2423, %s2422
        %v2425 = vlaneseq
        %s2426 = smul.u32 %s2424, 128
        %v2427 = vstv %s2426
        %v2428 = vadd.s32 %v2427, 106
        %vm2429 = vcmp.eq.s32.totalorder %v2425, %v2428
        %s2430 = smul.addr %s2418, 8
        %s2431 = scalar_lea.vmem [#allocation16], %s2430
        %2432 = vst.msk [vmem:[%s2431] sm:$0xff] %vm2429, 2147483648
        %s2433 = smul.addr %s2418, 8
        %s2434 = scalar_lea.vmem [#allocation17], %s2433
        %2435 = vst.msk [vmem:[%s2434] sm:$0xff] %vm2429, 2147483647
        %2436 = xla_tuple %2432, %2435
        %v2437 = vrot.slane %v2416, 1
        %s2438 = vtos %v2437
        %s2439 = sshrl.u32 %s2438, 3
        %p2440 = scmp.lt.s32.totalorder %s2438, 0
        %s2441 = ssub.s32 0, %s2438
        %s2442 = scalar_select %p2440, %s2441, %s2438
        %s2443 = sand.u32 %s2442, 7
        %s2444 = ssub.s32 0, %s2443
        %s2445 = scalar_select %p2440, %s2444, %s2443
        %v2446 = vlaneseq
        %s2447 = smul.u32 %s2445, 128
        %v2448 = vstv %s2447
        %v2449 = vadd.s32 %v2448, 107
        %vm2450 = vcmp.eq.s32.totalorder %v2446, %v2449
        %s2451 = smul.addr %s2439, 8
        %s2452 = scalar_lea.vmem [#allocation16], %s2451
        %2453 = vst.msk [vmem:[%s2452] sm:$0xff] %vm2450, 2147483648
        %s2454 = smul.addr %s2439, 8
        %s2455 = scalar_lea.vmem [#allocation17], %s2454
        %2456 = vst.msk [vmem:[%s2455] sm:$0xff] %vm2450, 2147483647
        %2457 = xla_tuple %2453, %2456
        %v2458 = vrot.slane %v2437, 1
        %s2459 = vtos %v2458
        %s2460 = sshrl.u32 %s2459, 3
        %p2461 = scmp.lt.s32.totalorder %s2459, 0
        %s2462 = ssub.s32 0, %s2459
        %s2463 = scalar_select %p2461, %s2462, %s2459
        %s2464 = sand.u32 %s2463, 7
        %s2465 = ssub.s32 0, %s2464
        %s2466 = scalar_select %p2461, %s2465, %s2464
        %v2467 = vlaneseq
        %s2468 = smul.u32 %s2466, 128
        %v2469 = vstv %s2468
        %v2470 = vadd.s32 %v2469, 108
        %vm2471 = vcmp.eq.s32.totalorder %v2467, %v2470
        %s2472 = smul.addr %s2460, 8
        %s2473 = scalar_lea.vmem [#allocation16], %s2472
        %2474 = vst.msk [vmem:[%s2473] sm:$0xff] %vm2471, 2147483648
        %s2475 = smul.addr %s2460, 8
        %s2476 = scalar_lea.vmem [#allocation17], %s2475
        %2477 = vst.msk [vmem:[%s2476] sm:$0xff] %vm2471, 2147483647
        %2478 = xla_tuple %2474, %2477
        %v2479 = vrot.slane %v2458, 1
        %s2480 = vtos %v2479
        %s2481 = sshrl.u32 %s2480, 3
        %p2482 = scmp.lt.s32.totalorder %s2480, 0
        %s2483 = ssub.s32 0, %s2480
        %s2484 = scalar_select %p2482, %s2483, %s2480
        %s2485 = sand.u32 %s2484, 7
        %s2486 = ssub.s32 0, %s2485
        %s2487 = scalar_select %p2482, %s2486, %s2485
        %v2488 = vlaneseq
        %s2489 = smul.u32 %s2487, 128
        %v2490 = vstv %s2489
        %v2491 = vadd.s32 %v2490, 109
        %vm2492 = vcmp.eq.s32.totalorder %v2488, %v2491
        %s2493 = smul.addr %s2481, 8
        %s2494 = scalar_lea.vmem [#allocation16], %s2493
        %2495 = vst.msk [vmem:[%s2494] sm:$0xff] %vm2492, 2147483648
        %s2496 = smul.addr %s2481, 8
        %s2497 = scalar_lea.vmem [#allocation17], %s2496
        %2498 = vst.msk [vmem:[%s2497] sm:$0xff] %vm2492, 2147483647
        %2499 = xla_tuple %2495, %2498
        %v2500 = vrot.slane %v2479, 1
        %s2501 = vtos %v2500
        %s2502 = sshrl.u32 %s2501, 3
        %p2503 = scmp.lt.s32.totalorder %s2501, 0
        %s2504 = ssub.s32 0, %s2501
        %s2505 = scalar_select %p2503, %s2504, %s2501
        %s2506 = sand.u32 %s2505, 7
        %s2507 = ssub.s32 0, %s2506
        %s2508 = scalar_select %p2503, %s2507, %s2506
        %v2509 = vlaneseq
        %s2510 = smul.u32 %s2508, 128
        %v2511 = vstv %s2510
        %v2512 = vadd.s32 %v2511, 110
        %vm2513 = vcmp.eq.s32.totalorder %v2509, %v2512
        %s2514 = smul.addr %s2502, 8
        %s2515 = scalar_lea.vmem [#allocation16], %s2514
        %2516 = vst.msk [vmem:[%s2515] sm:$0xff] %vm2513, 2147483648
        %s2517 = smul.addr %s2502, 8
        %s2518 = scalar_lea.vmem [#allocation17], %s2517
        %2519 = vst.msk [vmem:[%s2518] sm:$0xff] %vm2513, 2147483647
        %2520 = xla_tuple %2516, %2519
        %v2521 = vrot.slane %v2500, 1
        %s2522 = vtos %v2521
        %s2523 = sshrl.u32 %s2522, 3
        %p2524 = scmp.lt.s32.totalorder %s2522, 0
        %s2525 = ssub.s32 0, %s2522
        %s2526 = scalar_select %p2524, %s2525, %s2522
        %s2527 = sand.u32 %s2526, 7
        %s2528 = ssub.s32 0, %s2527
        %s2529 = scalar_select %p2524, %s2528, %s2527
        %v2530 = vlaneseq
        %s2531 = smul.u32 %s2529, 128
        %v2532 = vstv %s2531
        %v2533 = vadd.s32 %v2532, 111
        %vm2534 = vcmp.eq.s32.totalorder %v2530, %v2533
        %s2535 = smul.addr %s2523, 8
        %s2536 = scalar_lea.vmem [#allocation16], %s2535
        %2537 = vst.msk [vmem:[%s2536] sm:$0xff] %vm2534, 2147483648
        %s2538 = smul.addr %s2523, 8
        %s2539 = scalar_lea.vmem [#allocation17], %s2538
        %2540 = vst.msk [vmem:[%s2539] sm:$0xff] %vm2534, 2147483647
        %2541 = xla_tuple %2537, %2540
        %v2542 = vrot.slane %v2521, 1
        %s2543 = vtos %v189
        %s2544 = sshrl.u32 %s2543, 3
        %p2545 = scmp.lt.s32.totalorder %s2543, 0
        %s2546 = ssub.s32 0, %s2543
        %s2547 = scalar_select %p2545, %s2546, %s2543
        %s2548 = sand.u32 %s2547, 7
        %s2549 = ssub.s32 0, %s2548
        %s2550 = scalar_select %p2545, %s2549, %s2548
        %v2551 = vlaneseq
        %s2552 = smul.u32 %s2550, 128
        %v2553 = vstv %s2552
        %v2554 = vadd.s32 %v2553, 112
        %vm2555 = vcmp.eq.s32.totalorder %v2551, %v2554
        %s2556 = smul.addr %s2544, 8
        %s2557 = scalar_lea.vmem [#allocation16], %s2556
        %2558 = vst.msk [vmem:[%s2557] sm:$0xff] %vm2555, 2147483648
        %s2559 = smul.addr %s2544, 8
        %s2560 = scalar_lea.vmem [#allocation17], %s2559
        %2561 = vst.msk [vmem:[%s2560] sm:$0xff] %vm2555, 2147483647
        %2562 = xla_tuple %2558, %2561
        %v2563 = vrot.slane %v189, 1
        %s2564 = vtos %v2563
        %s2565 = sshrl.u32 %s2564, 3
        %p2566 = scmp.lt.s32.totalorder %s2564, 0
        %s2567 = ssub.s32 0, %s2564
        %s2568 = scalar_select %p2566, %s2567, %s2564
        %s2569 = sand.u32 %s2568, 7
        %s2570 = ssub.s32 0, %s2569
        %s2571 = scalar_select %p2566, %s2570, %s2569
        %v2572 = vlaneseq
        %s2573 = smul.u32 %s2571, 128
        %v2574 = vstv %s2573
        %v2575 = vadd.s32 %v2574, 113
        %vm2576 = vcmp.eq.s32.totalorder %v2572, %v2575
        %s2577 = smul.addr %s2565, 8
        %s2578 = scalar_lea.vmem [#allocation16], %s2577
        %2579 = vst.msk [vmem:[%s2578] sm:$0xff] %vm2576, 2147483648
        %s2580 = smul.addr %s2565, 8
        %s2581 = scalar_lea.vmem [#allocation17], %s2580
        %2582 = vst.msk [vmem:[%s2581] sm:$0xff] %vm2576, 2147483647
        %2583 = xla_tuple %2579, %2582
        %v2584 = vrot.slane %v2563, 1
        %s2585 = vtos %v2584
        %s2586 = sshrl.u32 %s2585, 3
        %p2587 = scmp.lt.s32.totalorder %s2585, 0
        %s2588 = ssub.s32 0, %s2585
        %s2589 = scalar_select %p2587, %s2588, %s2585
        %s2590 = sand.u32 %s2589, 7
        %s2591 = ssub.s32 0, %s2590
        %s2592 = scalar_select %p2587, %s2591, %s2590
        %v2593 = vlaneseq
        %s2594 = smul.u32 %s2592, 128
        %v2595 = vstv %s2594
        %v2596 = vadd.s32 %v2595, 114
        %vm2597 = vcmp.eq.s32.totalorder %v2593, %v2596
        %s2598 = smul.addr %s2586, 8
        %s2599 = scalar_lea.vmem [#allocation16], %s2598
        %2600 = vst.msk [vmem:[%s2599] sm:$0xff] %vm2597, 2147483648
        %s2601 = smul.addr %s2586, 8
        %s2602 = scalar_lea.vmem [#allocation17], %s2601
        %2603 = vst.msk [vmem:[%s2602] sm:$0xff] %vm2597, 2147483647
        %2604 = xla_tuple %2600, %2603
        %v2605 = vrot.slane %v2584, 1
        %s2606 = vtos %v2605
        %s2607 = sshrl.u32 %s2606, 3
        %p2608 = scmp.lt.s32.totalorder %s2606, 0
        %s2609 = ssub.s32 0, %s2606
        %s2610 = scalar_select %p2608, %s2609, %s2606
        %s2611 = sand.u32 %s2610, 7
        %s2612 = ssub.s32 0, %s2611
        %s2613 = scalar_select %p2608, %s2612, %s2611
        %v2614 = vlaneseq
        %s2615 = smul.u32 %s2613, 128
        %v2616 = vstv %s2615
        %v2617 = vadd.s32 %v2616, 115
        %vm2618 = vcmp.eq.s32.totalorder %v2614, %v2617
        %s2619 = smul.addr %s2607, 8
        %s2620 = scalar_lea.vmem [#allocation16], %s2619
        %2621 = vst.msk [vmem:[%s2620] sm:$0xff] %vm2618, 2147483648
        %s2622 = smul.addr %s2607, 8
        %s2623 = scalar_lea.vmem [#allocation17], %s2622
        %2624 = vst.msk [vmem:[%s2623] sm:$0xff] %vm2618, 2147483647
        %2625 = xla_tuple %2621, %2624
        %v2626 = vrot.slane %v2605, 1
        %s2627 = vtos %v2626
        %s2628 = sshrl.u32 %s2627, 3
        %p2629 = scmp.lt.s32.totalorder %s2627, 0
        %s2630 = ssub.s32 0, %s2627
        %s2631 = scalar_select %p2629, %s2630, %s2627
        %s2632 = sand.u32 %s2631, 7
        %s2633 = ssub.s32 0, %s2632
        %s2634 = scalar_select %p2629, %s2633, %s2632
        %v2635 = vlaneseq
        %s2636 = smul.u32 %s2634, 128
        %v2637 = vstv %s2636
        %v2638 = vadd.s32 %v2637, 116
        %vm2639 = vcmp.eq.s32.totalorder %v2635, %v2638
        %s2640 = smul.addr %s2628, 8
        %s2641 = scalar_lea.vmem [#allocation16], %s2640
        %2642 = vst.msk [vmem:[%s2641] sm:$0xff] %vm2639, 2147483648
        %s2643 = smul.addr %s2628, 8
        %s2644 = scalar_lea.vmem [#allocation17], %s2643
        %2645 = vst.msk [vmem:[%s2644] sm:$0xff] %vm2639, 2147483647
        %2646 = xla_tuple %2642, %2645
        %v2647 = vrot.slane %v2626, 1
        %s2648 = vtos %v2647
        %s2649 = sshrl.u32 %s2648, 3
        %p2650 = scmp.lt.s32.totalorder %s2648, 0
        %s2651 = ssub.s32 0, %s2648
        %s2652 = scalar_select %p2650, %s2651, %s2648
        %s2653 = sand.u32 %s2652, 7
        %s2654 = ssub.s32 0, %s2653
        %s2655 = scalar_select %p2650, %s2654, %s2653
        %v2656 = vlaneseq
        %s2657 = smul.u32 %s2655, 128
        %v2658 = vstv %s2657
        %v2659 = vadd.s32 %v2658, 117
        %vm2660 = vcmp.eq.s32.totalorder %v2656, %v2659
        %s2661 = smul.addr %s2649, 8
        %s2662 = scalar_lea.vmem [#allocation16], %s2661
        %2663 = vst.msk [vmem:[%s2662] sm:$0xff] %vm2660, 2147483648
        %s2664 = smul.addr %s2649, 8
        %s2665 = scalar_lea.vmem [#allocation17], %s2664
        %2666 = vst.msk [vmem:[%s2665] sm:$0xff] %vm2660, 2147483647
        %2667 = xla_tuple %2663, %2666
        %v2668 = vrot.slane %v2647, 1
        %s2669 = vtos %v2668
        %s2670 = sshrl.u32 %s2669, 3
        %p2671 = scmp.lt.s32.totalorder %s2669, 0
        %s2672 = ssub.s32 0, %s2669
        %s2673 = scalar_select %p2671, %s2672, %s2669
        %s2674 = sand.u32 %s2673, 7
        %s2675 = ssub.s32 0, %s2674
        %s2676 = scalar_select %p2671, %s2675, %s2674
        %v2677 = vlaneseq
        %s2678 = smul.u32 %s2676, 128
        %v2679 = vstv %s2678
        %v2680 = vadd.s32 %v2679, 118
        %vm2681 = vcmp.eq.s32.totalorder %v2677, %v2680
        %s2682 = smul.addr %s2670, 8
        %s2683 = scalar_lea.vmem [#allocation16], %s2682
        %2684 = vst.msk [vmem:[%s2683] sm:$0xff] %vm2681, 2147483648
        %s2685 = smul.addr %s2670, 8
        %s2686 = scalar_lea.vmem [#allocation17], %s2685
        %2687 = vst.msk [vmem:[%s2686] sm:$0xff] %vm2681, 2147483647
        %2688 = xla_tuple %2684, %2687
        %v2689 = vrot.slane %v2668, 1
        %s2690 = vtos %v2689
        %s2691 = sshrl.u32 %s2690, 3
        %p2692 = scmp.lt.s32.totalorder %s2690, 0
        %s2693 = ssub.s32 0, %s2690
        %s2694 = scalar_select %p2692, %s2693, %s2690
        %s2695 = sand.u32 %s2694, 7
        %s2696 = ssub.s32 0, %s2695
        %s2697 = scalar_select %p2692, %s2696, %s2695
        %v2698 = vlaneseq
        %s2699 = smul.u32 %s2697, 128
        %v2700 = vstv %s2699
        %v2701 = vadd.s32 %v2700, 119
        %vm2702 = vcmp.eq.s32.totalorder %v2698, %v2701
        %s2703 = smul.addr %s2691, 8
        %s2704 = scalar_lea.vmem [#allocation16], %s2703
        %2705 = vst.msk [vmem:[%s2704] sm:$0xff] %vm2702, 2147483648
        %s2706 = smul.addr %s2691, 8
        %s2707 = scalar_lea.vmem [#allocation17], %s2706
        %2708 = vst.msk [vmem:[%s2707] sm:$0xff] %vm2702, 2147483647
        %2709 = xla_tuple %2705, %2708
        %v2710 = vrot.slane %v2689, 1
        %s2711 = vtos %v190
        %s2712 = sshrl.u32 %s2711, 3
        %p2713 = scmp.lt.s32.totalorder %s2711, 0
        %s2714 = ssub.s32 0, %s2711
        %s2715 = scalar_select %p2713, %s2714, %s2711
        %s2716 = sand.u32 %s2715, 7
        %s2717 = ssub.s32 0, %s2716
        %s2718 = scalar_select %p2713, %s2717, %s2716
        %v2719 = vlaneseq
        %s2720 = smul.u32 %s2718, 128
        %v2721 = vstv %s2720
        %v2722 = vadd.s32 %v2721, 120
        %vm2723 = vcmp.eq.s32.totalorder %v2719, %v2722
        %s2724 = smul.addr %s2712, 8
        %s2725 = scalar_lea.vmem [#allocation16], %s2724
        %2726 = vst.msk [vmem:[%s2725] sm:$0xff] %vm2723, 2147483648
        %s2727 = smul.addr %s2712, 8
        %s2728 = scalar_lea.vmem [#allocation17], %s2727
        %2729 = vst.msk [vmem:[%s2728] sm:$0xff] %vm2723, 2147483647
        %2730 = xla_tuple %2726, %2729
        %v2731 = vrot.slane %v190, 1
        %s2732 = vtos %v2731
        %s2733 = sshrl.u32 %s2732, 3
        %p2734 = scmp.lt.s32.totalorder %s2732, 0
        %s2735 = ssub.s32 0, %s2732
        %s2736 = scalar_select %p2734, %s2735, %s2732
        %s2737 = sand.u32 %s2736, 7
        %s2738 = ssub.s32 0, %s2737
        %s2739 = scalar_select %p2734, %s2738, %s2737
        %v2740 = vlaneseq
        %s2741 = smul.u32 %s2739, 128
        %v2742 = vstv %s2741
        %v2743 = vadd.s32 %v2742, 121
        %vm2744 = vcmp.eq.s32.totalorder %v2740, %v2743
        %s2745 = smul.addr %s2733, 8
        %s2746 = scalar_lea.vmem [#allocation16], %s2745
        %2747 = vst.msk [vmem:[%s2746] sm:$0xff] %vm2744, 2147483648
        %s2748 = smul.addr %s2733, 8
        %s2749 = scalar_lea.vmem [#allocation17], %s2748
        %2750 = vst.msk [vmem:[%s2749] sm:$0xff] %vm2744, 2147483647
        %2751 = xla_tuple %2747, %2750
        %v2752 = vrot.slane %v2731, 1
        %s2753 = vtos %v2752
        %s2754 = sshrl.u32 %s2753, 3
        %p2755 = scmp.lt.s32.totalorder %s2753, 0
        %s2756 = ssub.s32 0, %s2753
        %s2757 = scalar_select %p2755, %s2756, %s2753
        %s2758 = sand.u32 %s2757, 7
        %s2759 = ssub.s32 0, %s2758
        %s2760 = scalar_select %p2755, %s2759, %s2758
        %v2761 = vlaneseq
        %s2762 = smul.u32 %s2760, 128
        %v2763 = vstv %s2762
        %v2764 = vadd.s32 %v2763, 122
        %vm2765 = vcmp.eq.s32.totalorder %v2761, %v2764
        %s2766 = smul.addr %s2754, 8
        %s2767 = scalar_lea.vmem [#allocation16], %s2766
        %2768 = vst.msk [vmem:[%s2767] sm:$0xff] %vm2765, 2147483648
        %s2769 = smul.addr %s2754, 8
        %s2770 = scalar_lea.vmem [#allocation17], %s2769
        %2771 = vst.msk [vmem:[%s2770] sm:$0xff] %vm2765, 2147483647
        %2772 = xla_tuple %2768, %2771
        %v2773 = vrot.slane %v2752, 1
        %s2774 = vtos %v2773
        %s2775 = sshrl.u32 %s2774, 3
        %p2776 = scmp.lt.s32.totalorder %s2774, 0
        %s2777 = ssub.s32 0, %s2774
        %s2778 = scalar_select %p2776, %s2777, %s2774
        %s2779 = sand.u32 %s2778, 7
        %s2780 = ssub.s32 0, %s2779
        %s2781 = scalar_select %p2776, %s2780, %s2779
        %v2782 = vlaneseq
        %s2783 = smul.u32 %s2781, 128
        %v2784 = vstv %s2783
        %v2785 = vadd.s32 %v2784, 123
        %vm2786 = vcmp.eq.s32.totalorder %v2782, %v2785
        %s2787 = smul.addr %s2775, 8
        %s2788 = scalar_lea.vmem [#allocation16], %s2787
        %2789 = vst.msk [vmem:[%s2788] sm:$0xff] %vm2786, 2147483648
        %s2790 = smul.addr %s2775, 8
        %s2791 = scalar_lea.vmem [#allocation17], %s2790
        %2792 = vst.msk [vmem:[%s2791] sm:$0xff] %vm2786, 2147483647
        %2793 = xla_tuple %2789, %2792
        %v2794 = vrot.slane %v2773, 1
        %s2795 = vtos %v2794
        %s2796 = sshrl.u32 %s2795, 3
        %p2797 = scmp.lt.s32.totalorder %s2795, 0
        %s2798 = ssub.s32 0, %s2795
        %s2799 = scalar_select %p2797, %s2798, %s2795
        %s2800 = sand.u32 %s2799, 7
        %s2801 = ssub.s32 0, %s2800
        %s2802 = scalar_select %p2797, %s2801, %s2800
        %v2803 = vlaneseq
        %s2804 = smul.u32 %s2802, 128
        %v2805 = vstv %s2804
        %v2806 = vadd.s32 %v2805, 124
        %vm2807 = vcmp.eq.s32.totalorder %v2803, %v2806
        %s2808 = smul.addr %s2796, 8
        %s2809 = scalar_lea.vmem [#allocation16], %s2808
        %2810 = vst.msk [vmem:[%s2809] sm:$0xff] %vm2807, 2147483648
        %s2811 = smul.addr %s2796, 8
        %s2812 = scalar_lea.vmem [#allocation17], %s2811
        %2813 = vst.msk [vmem:[%s2812] sm:$0xff] %vm2807, 2147483647
        %2814 = xla_tuple %2810, %2813
        %v2815 = vrot.slane %v2794, 1
        %s2816 = vtos %v2815
        %s2817 = sshrl.u32 %s2816, 3
        %p2818 = scmp.lt.s32.totalorder %s2816, 0
        %s2819 = ssub.s32 0, %s2816
        %s2820 = scalar_select %p2818, %s2819, %s2816
        %s2821 = sand.u32 %s2820, 7
        %s2822 = ssub.s32 0, %s2821
        %s2823 = scalar_select %p2818, %s2822, %s2821
        %v2824 = vlaneseq
        %s2825 = smul.u32 %s2823, 128
        %v2826 = vstv %s2825
        %v2827 = vadd.s32 %v2826, 125
        %vm2828 = vcmp.eq.s32.totalorder %v2824, %v2827
        %s2829 = smul.addr %s2817, 8
        %s2830 = scalar_lea.vmem [#allocation16], %s2829
        %2831 = vst.msk [vmem:[%s2830] sm:$0xff] %vm2828, 2147483648
        %s2832 = smul.addr %s2817, 8
        %s2833 = scalar_lea.vmem [#allocation17], %s2832
        %2834 = vst.msk [vmem:[%s2833] sm:$0xff] %vm2828, 2147483647
        %2835 = xla_tuple %2831, %2834
        %v2836 = vrot.slane %v2815, 1
        %s2837 = vtos %v2836
        %s2838 = sshrl.u32 %s2837, 3
        %p2839 = scmp.lt.s32.totalorder %s2837, 0
        %s2840 = ssub.s32 0, %s2837
        %s2841 = scalar_select %p2839, %s2840, %s2837
        %s2842 = sand.u32 %s2841, 7
        %s2843 = ssub.s32 0, %s2842
        %s2844 = scalar_select %p2839, %s2843, %s2842
        %v2845 = vlaneseq
        %s2846 = smul.u32 %s2844, 128
        %v2847 = vstv %s2846
        %v2848 = vadd.s32 %v2847, 126
        %vm2849 = vcmp.eq.s32.totalorder %v2845, %v2848
        %s2850 = smul.addr %s2838, 8
        %s2851 = scalar_lea.vmem [#allocation16], %s2850
        %2852 = vst.msk [vmem:[%s2851] sm:$0xff] %vm2849, 2147483648
        %s2853 = smul.addr %s2838, 8
        %s2854 = scalar_lea.vmem [#allocation17], %s2853
        %2855 = vst.msk [vmem:[%s2854] sm:$0xff] %vm2849, 2147483647
        %2856 = xla_tuple %2852, %2855
        %v2857 = vrot.slane %v2836, 1
        %s2858 = vtos %v2857
        %s2859 = sshrl.u32 %s2858, 3
        %p2860 = scmp.lt.s32.totalorder %s2858, 0
        %s2861 = ssub.s32 0, %s2858
        %s2862 = scalar_select %p2860, %s2861, %s2858
        %s2863 = sand.u32 %s2862, 7
        %s2864 = ssub.s32 0, %s2863
        %s2865 = scalar_select %p2860, %s2864, %s2863
        %v2866 = vlaneseq
        %s2867 = smul.u32 %s2865, 128
        %v2868 = vstv %s2867
        %v2869 = vadd.s32 %v2868, 127
        %vm2870 = vcmp.eq.s32.totalorder %v2866, %v2869
        %s2871 = smul.addr %s2859, 8
        %s2872 = scalar_lea.vmem [#allocation16], %s2871
        %2873 = vst.msk [vmem:[%s2872] sm:$0xff] %vm2870, 2147483648
        %s2874 = smul.addr %s2859, 8
        %s2875 = scalar_lea.vmem [#allocation17], %s2874
        %2876 = vst.msk [vmem:[%s2875] sm:$0xff] %vm2870, 2147483647
        %2877 = xla_tuple %2873, %2876
        %v2878 = vrot.slane %v2857, 1
      $region45: #{custom-call} parent=2 // loop_footer
        %s73 = sadd.s32 1, %s69
      $region46: #{custom-call} parent=2 // loop_footer_branch
        %68 = sbr.rel target = $region42
      $region47: #{custom-call} parent=2 // loop_exit
        _
      %s2879 = scalar_lea.vmem [#allocation13], 7
      %v2880 = vld [vmem:[%s2879] ss:$-1 sm:$0xff]
      %s2881 = scalar_lea.vmem [#allocation13], 7
      %v2882 = vld [vmem:[%s2881] ss:$-1 sm:$0xff]
      %2883 = vst [vmem:[#allocation13] sm:$0xff] %v2882
      %2884 = vst [vmem:[#allocation13] sm:$0xff] %v2880
      %s2885 = scalar_lea.vmem [#allocation15], 7
      %v2886 = vld [vmem:[%s2885] ss:$-1 sm:$0xff]
      %s2887 = scalar_lea.vmem [#allocation15], 7
      %v2888 = vld [vmem:[%s2887] ss:$-1 sm:$0xff]
      %2889 = vst [vmem:[#allocation15] sm:$0xff] %v2888
      %2890 = vst [vmem:[#allocation15] sm:$0xff] %v2886
      %2891 = xla_tuple %2884, %2890
      %v2892 = vld [vmem:[#allocation12] sm:$0xff]
      %v2893 = vld [vmem:[#allocation14] sm:$0xff]
      %2894 = xla_tuple %v2892, %v2893
      %v2895 = vld [vmem:[#allocation13] sm:$0xff]
      %v2896 = vld [vmem:[#allocation15] sm:$0xff]
      %2897 = xla_tuple %v2895, %v2896
      %vm2898 = vcmp.gt.s32.totalorder %v2892, %v2895
      %vm2899 = vcmp.eq.s32.totalorder %v2892, %v2895
      %vm2900 = vcmp.lt.s32.totalorder %v2893, %v2896
      %vm2901 = vmand %vm2899, %vm2900
      %vm2902 = vmor %vm2898, %vm2901
      %v2903 = vsel %vm2902, %v2892, %v2895
      %2904 = vst [vmem:[#allocation12] sm:$0xff] %v2903
      %v2905 = vsel %vm2902, %v2895, %v2892
      %2906 = vst [vmem:[#allocation13] sm:$0xff] %v2905
      %v2907 = vsel %vm2902, %v2893, %v2896
      %2908 = vst [vmem:[#allocation14] sm:$0xff] %v2907
      %v2909 = vsel %vm2902, %v2896, %v2893
      %2910 = vst [vmem:[#allocation15] sm:$0xff] %v2909
      %2911 = xla_tuple %2906, %2910
      %2912 = xla_tuple [#allocation12], [#allocation14]
      %v2913 = vld [vmem:[#allocation12] sm:$0xff]
      %v2914 = vld [vmem:[#allocation14] sm:$0xff]
      %2915 = xla_tuple %v2913, %v2914
      %v2917 = vunpack.c.l.s4 839939668
      %v2918 = vunpack.c.0.s8 %v2917
      %v2919 = vperm.slane %v2913, %v2918
      %v2921 = vunpack.c.l.s4 839939668
      %v2922 = vunpack.c.0.s8 %v2921
      %v2923 = vperm.slane %v2914, %v2922
      %2924 = xla_tuple %v2919, %v2923
      %vm2925 = vcmp.gt.s32.totalorder %v2913, %v2919
      %vm2926 = vcmp.eq.s32.totalorder %v2913, %v2919
      %vm2927 = vcmp.lt.s32.totalorder %v2914, %v2923
      %vm2928 = vmand %vm2926, %vm2927
      %vm2929 = vmor %vm2925, %vm2928
      %v2930 = vlaneseq
      %v2931 = vshrl.u32 %v2930, 7
      %v2932 = vand.u32 %v2931, 4
      %vm2933 = vcmp.ne.s32.totalorder %v2932, 0
      %vm2934 = vmxor %vm2929, %vm2933
      %v2935 = vsel %vm2934, %v2913, %v2919
      %v2936 = vsel %vm2934, %v2914, %v2923
      %2937 = xla_tuple %v2935, %v2936
      %v2939 = vunpack.c.l.s4 1417023538
      %v2940 = vunpack.c.0.s8 %v2939
      %v2941 = vperm.slane %v2935, %v2940
      %v2943 = vunpack.c.l.s4 1417023538
      %v2944 = vunpack.c.0.s8 %v2943
      %v2945 = vperm.slane %v2936, %v2944
      %2946 = xla_tuple %v2941, %v2945
      %vm2947 = vcmp.gt.s32.totalorder %v2935, %v2941
      %vm2948 = vcmp.eq.s32.totalorder %v2935, %v2941
      %vm2949 = vcmp.lt.s32.totalorder %v2936, %v2945
      %vm2950 = vmand %vm2948, %vm2949
      %vm2951 = vmor %vm2947, %vm2950
      %v2952 = vlaneseq
      %v2953 = vshrl.u32 %v2952, 7
      %v2954 = vand.u32 %v2953, 2
      %vm2955 = vcmp.ne.s32.totalorder %v2954, 0
      %vm2956 = vmxor %vm2951, %vm2955
      %v2957 = vsel %vm2956, %v2935, %v2941
      %v2958 = vsel %vm2956, %v2936, %v2945
      %2959 = xla_tuple %v2957, %v2958
      %v2961 = vunpack.c.l.s4 1732584193
      %v2962 = vunpack.c.0.s8 %v2961
      %v2963 = vperm.slane %v2957, %v2962
      %v2965 = vunpack.c.l.s4 1732584193
      %v2966 = vunpack.c.0.s8 %v2965
      %v2967 = vperm.slane %v2958, %v2966
      %2968 = xla_tuple %v2963, %v2967
      %vm2969 = vcmp.gt.s32.totalorder %v2957, %v2963
      %vm2970 = vcmp.eq.s32.totalorder %v2957, %v2963
      %vm2971 = vcmp.lt.s32.totalorder %v2958, %v2967
      %vm2972 = vmand %vm2970, %vm2971
      %vm2973 = vmor %vm2969, %vm2972
      %v2974 = vlaneseq
      %v2975 = vshrl.u32 %v2974, 7
      %v2976 = vand.u32 %v2975, 1
      %vm2977 = vcmp.ne.s32.totalorder %v2976, 0
      %vm2978 = vmxor %vm2973, %vm2977
      %v2979 = vsel %vm2978, %v2957, %v2963
      %v2980 = vsel %vm2978, %v2958, %v2967
      %2981 = xla_tuple %v2979, %v2980
      %2982 = vst [vmem:[#allocation12] sm:$0xff] %v2979
      %2983 = vst [vmem:[#allocation14] sm:$0xff] %v2980
      %2984 = xla_tuple %2982, %2983
      %v2985 = vld [vmem:[#allocation12] sm:$0xff]
      %v2986 = vld [vmem:[#allocation14] sm:$0xff]
      %2987 = xla_tuple %v2985, %v2986
      %v2989 = vunpack.c.l.s4 839939668
      %v2990 = vunpack.c.0.s8 %v2989
      %v2991 = vperm.slane %v2985, %v2990
      %v2993 = vunpack.c.l.s4 839939668
      %v2994 = vunpack.c.0.s8 %v2993
      %v2995 = vperm.slane %v2986, %v2994
      %2996 = xla_tuple %v2991, %v2995
      %vm2997 = vcmp.gt.s32.totalorder %v2985, %v2991
      %vm2998 = vcmp.eq.s32.totalorder %v2985, %v2991
      %vm2999 = vcmp.lt.s32.totalorder %v2986, %v2995
      %vm3000 = vmand %vm2998, %vm2999
      %vm3001 = vmor %vm2997, %vm3000
      %v3002 = vlaneseq
      %v3003 = vshrl.u32 %v3002, 7
      %v3004 = vand.u32 %v3003, 4
      %vm3005 = vcmp.ne.s32.totalorder %v3004, 0
      %vm3006 = vmxor %vm3001, %vm3005
      %v3007 = vsel %vm3006, %v2985, %v2991
      %v3008 = vsel %vm3006, %v2986, %v2995
      %3009 = xla_tuple %v3007, %v3008
      %v3011 = vunpack.c.l.s4 1417023538
      %v3012 = vunpack.c.0.s8 %v3011
      %v3013 = vperm.slane %v3007, %v3012
      %v3015 = vunpack.c.l.s4 1417023538
      %v3016 = vunpack.c.0.s8 %v3015
      %v3017 = vperm.slane %v3008, %v3016
      %3018 = xla_tuple %v3013, %v3017
      %vm3019 = vcmp.gt.s32.totalorder %v3007, %v3013
      %vm3020 = vcmp.eq.s32.totalorder %v3007, %v3013
      %vm3021 = vcmp.lt.s32.totalorder %v3008, %v3017
      %vm3022 = vmand %vm3020, %vm3021
      %vm3023 = vmor %vm3019, %vm3022
      %v3024 = vlaneseq
      %v3025 = vshrl.u32 %v3024, 7
      %v3026 = vand.u32 %v3025, 2
      %vm3027 = vcmp.ne.s32.totalorder %v3026, 0
      %vm3028 = vmxor %vm3023, %vm3027
      %v3029 = vsel %vm3028, %v3007, %v3013
      %v3030 = vsel %vm3028, %v3008, %v3017
      %3031 = xla_tuple %v3029, %v3030
      %v3033 = vunpack.c.l.s4 1732584193
      %v3034 = vunpack.c.0.s8 %v3033
      %v3035 = vperm.slane %v3029, %v3034
      %v3037 = vunpack.c.l.s4 1732584193
      %v3038 = vunpack.c.0.s8 %v3037
      %v3039 = vperm.slane %v3030, %v3038
      %3040 = xla_tuple %v3035, %v3039
      %vm3041 = vcmp.gt.s32.totalorder %v3029, %v3035
      %vm3042 = vcmp.eq.s32.totalorder %v3029, %v3035
      %vm3043 = vcmp.lt.s32.totalorder %v3030, %v3039
      %vm3044 = vmand %vm3042, %vm3043
      %vm3045 = vmor %vm3041, %vm3044
      %v3046 = vlaneseq
      %v3047 = vshrl.u32 %v3046, 7
      %v3048 = vand.u32 %v3047, 1
      %vm3049 = vcmp.ne.s32.totalorder %v3048, 0
      %vm3050 = vmxor %vm3045, %vm3049
      %v3051 = vsel %vm3050, %v3029, %v3035
      %v3052 = vsel %vm3050, %v3030, %v3039
      %3053 = xla_tuple %v3051, %v3052
      %3054 = vst [vmem:[#allocation12] sm:$0xff] %v3051
      %3055 = vst [vmem:[#allocation14] sm:$0xff] %v3052
      %3056 = xla_tuple %3054, %3055
      %3057 = xla_tuple [#allocation13], [#allocation15]
      %v3058 = vld [vmem:[#allocation13] sm:$0xff]
      %v3059 = vld [vmem:[#allocation15] sm:$0xff]
      %3060 = xla_tuple %v3058, %v3059
      %v3062 = vunpack.c.l.s4 839939668
      %v3063 = vunpack.c.0.s8 %v3062
      %v3064 = vperm.slane %v3058, %v3063
      %v3066 = vunpack.c.l.s4 839939668
      %v3067 = vunpack.c.0.s8 %v3066
      %v3068 = vperm.slane %v3059, %v3067
      %3069 = xla_tuple %v3064, %v3068
      %vm3070 = vcmp.gt.s32.totalorder %v3058, %v3064
      %vm3071 = vcmp.eq.s32.totalorder %v3058, %v3064
      %vm3072 = vcmp.lt.s32.totalorder %v3059, %v3068
      %vm3073 = vmand %vm3071, %vm3072
      %vm3074 = vmor %vm3070, %vm3073
      %v3075 = vlaneseq
      %v3076 = vshrl.u32 %v3075, 7
      %v3077 = vand.u32 %v3076, 4
      %vm3078 = vcmp.ne.s32.totalorder %v3077, 0
      %vm3079 = vmxor %vm3074, %vm3078
      %v3080 = vsel %vm3079, %v3058, %v3064
      %v3081 = vsel %vm3079, %v3059, %v3068
      %3082 = xla_tuple %v3080, %v3081
      %v3084 = vunpack.c.l.s4 1417023538
      %v3085 = vunpack.c.0.s8 %v3084
      %v3086 = vperm.slane %v3080, %v3085
      %v3088 = vunpack.c.l.s4 1417023538
      %v3089 = vunpack.c.0.s8 %v3088
      %v3090 = vperm.slane %v3081, %v3089
      %3091 = xla_tuple %v3086, %v3090
      %vm3092 = vcmp.gt.s32.totalorder %v3080, %v3086
      %vm3093 = vcmp.eq.s32.totalorder %v3080, %v3086
      %vm3094 = vcmp.lt.s32.totalorder %v3081, %v3090
      %vm3095 = vmand %vm3093, %vm3094
      %vm3096 = vmor %vm3092, %vm3095
      %v3097 = vlaneseq
      %v3098 = vshrl.u32 %v3097, 7
      %v3099 = vand.u32 %v3098, 2
      %vm3100 = vcmp.ne.s32.totalorder %v3099, 0
      %vm3101 = vmxor %vm3096, %vm3100
      %v3102 = vsel %vm3101, %v3080, %v3086
      %v3103 = vsel %vm3101, %v3081, %v3090
      %3104 = xla_tuple %v3102, %v3103
      %v3106 = vunpack.c.l.s4 1732584193
      %v3107 = vunpack.c.0.s8 %v3106
      %v3108 = vperm.slane %v3102, %v3107
      %v3110 = vunpack.c.l.s4 1732584193
      %v3111 = vunpack.c.0.s8 %v3110
      %v3112 = vperm.slane %v3103, %v3111
      %3113 = xla_tuple %v3108, %v3112
      %vm3114 = vcmp.gt.s32.totalorder %v3102, %v3108
      %vm3115 = vcmp.eq.s32.totalorder %v3102, %v3108
      %vm3116 = vcmp.lt.s32.totalorder %v3103, %v3112
      %vm3117 = vmand %vm3115, %vm3116
      %vm3118 = vmor %vm3114, %vm3117
      %v3119 = vlaneseq
      %v3120 = vshrl.u32 %v3119, 7
      %v3121 = vand.u32 %v3120, 1
      %vm3122 = vcmp.ne.s32.totalorder %v3121, 0
      %vm3123 = vmxor %vm3118, %vm3122
      %v3124 = vsel %vm3123, %v3102, %v3108
      %v3125 = vsel %vm3123, %v3103, %v3112
      %3126 = xla_tuple %v3124, %v3125
      %3127 = vst [vmem:[#allocation13] sm:$0xff] %v3124
      %3128 = vst [vmem:[#allocation15] sm:$0xff] %v3125
      %3129 = xla_tuple %3127, %3128
      %v3130 = vld [vmem:[#allocation13] sm:$0xff]
      %v3131 = vld [vmem:[#allocation15] sm:$0xff]
      %3132 = xla_tuple %v3130, %v3131
      %v3134 = vunpack.c.l.s4 839939668
      %v3135 = vunpack.c.0.s8 %v3134
      %v3136 = vperm.slane %v3130, %v3135
      %v3138 = vunpack.c.l.s4 839939668
      %v3139 = vunpack.c.0.s8 %v3138
      %v3140 = vperm.slane %v3131, %v3139
      %3141 = xla_tuple %v3136, %v3140
      %vm3142 = vcmp.gt.s32.totalorder %v3130, %v3136
      %vm3143 = vcmp.eq.s32.totalorder %v3130, %v3136
      %vm3144 = vcmp.lt.s32.totalorder %v3131, %v3140
      %vm3145 = vmand %vm3143, %vm3144
      %vm3146 = vmor %vm3142, %vm3145
      %v3147 = vlaneseq
      %v3148 = vshrl.u32 %v3147, 7
      %v3149 = vand.u32 %v3148, 4
      %vm3150 = vcmp.ne.s32.totalorder %v3149, 0
      %vm3151 = vmxor %vm3146, %vm3150
      %v3152 = vsel %vm3151, %v3130, %v3136
      %v3153 = vsel %vm3151, %v3131, %v3140
      %3154 = xla_tuple %v3152, %v3153
      %v3156 = vunpack.c.l.s4 1417023538
      %v3157 = vunpack.c.0.s8 %v3156
      %v3158 = vperm.slane %v3152, %v3157
      %v3160 = vunpack.c.l.s4 1417023538
      %v3161 = vunpack.c.0.s8 %v3160
      %v3162 = vperm.slane %v3153, %v3161
      %3163 = xla_tuple %v3158, %v3162
      %vm3164 = vcmp.gt.s32.totalorder %v3152, %v3158
      %vm3165 = vcmp.eq.s32.totalorder %v3152, %v3158
      %vm3166 = vcmp.lt.s32.totalorder %v3153, %v3162
      %vm3167 = vmand %vm3165, %vm3166
      %vm3168 = vmor %vm3164, %vm3167
      %v3169 = vlaneseq
      %v3170 = vshrl.u32 %v3169, 7
      %v3171 = vand.u32 %v3170, 2
      %vm3172 = vcmp.ne.s32.totalorder %v3171, 0
      %vm3173 = vmxor %vm3168, %vm3172
      %v3174 = vsel %vm3173, %v3152, %v3158
      %v3175 = vsel %vm3173, %v3153, %v3162
      %3176 = xla_tuple %v3174, %v3175
      %v3178 = vunpack.c.l.s4 1732584193
      %v3179 = vunpack.c.0.s8 %v3178
      %v3180 = vperm.slane %v3174, %v3179
      %v3182 = vunpack.c.l.s4 1732584193
      %v3183 = vunpack.c.0.s8 %v3182
      %v3184 = vperm.slane %v3175, %v3183
      %3185 = xla_tuple %v3180, %v3184
      %vm3186 = vcmp.gt.s32.totalorder %v3174, %v3180
      %vm3187 = vcmp.eq.s32.totalorder %v3174, %v3180
      %vm3188 = vcmp.lt.s32.totalorder %v3175, %v3184
      %vm3189 = vmand %vm3187, %vm3188
      %vm3190 = vmor %vm3186, %vm3189
      %v3191 = vlaneseq
      %v3192 = vshrl.u32 %v3191, 7
      %v3193 = vand.u32 %v3192, 1
      %vm3194 = vcmp.ne.s32.totalorder %v3193, 0
      %vm3195 = vmxor %vm3190, %vm3194
      %v3196 = vsel %vm3195, %v3174, %v3180
      %v3197 = vsel %vm3195, %v3175, %v3184
      %3198 = xla_tuple %v3196, %v3197
      %3199 = vst [vmem:[#allocation13] sm:$0xff] %v3196
      %3200 = vst [vmem:[#allocation15] sm:$0xff] %v3197
      %3201 = xla_tuple %3199, %3200
    %v3202 = vld [vmem:[#allocation12] sm:$0xff]
    %vm3203 = vcmp.lt.s32.totalorder %v3202, 0
    %v3204 = vsub.s32 2147483647, %v3202
    %v3205 = vsel %vm3203, %v3204, %v3202
    %3206 = vst [vmem:[#allocation12] sm:$0xff] %v3205
    %v3207 = vld [vmem:[#allocation12] sm:$0xff]
    %3208 = vst [vmem:[#allocation7] sm:$0xff] %v3207
    %v3209 = vld [vmem:[#allocation14] sm:$0xff]
    %3210 = vst [vmem:[#allocation10] sm:$0xff] %v3209
    %s3212 = ssub.s32 2, 1
    %v3213 = vld [vmem:[#allocation7] sm:%s3212]
    %s3215 = ssub.s32 2, 1
    %3216 = vst [vmem:[#allocation8] sm:%s3215] %v3213
    %s3218 = ssub.s32 2, 1
    %v3219 = vld [vmem:[#allocation10] sm:%s3218]
    %s3221 = ssub.s32 2, 1
    %3222 = vst [vmem:[#allocation11] sm:%s3221] %v3219
    %3224 = vsyncadd [#allocation9], 0
    %s3226 = sshll.u32 [#allocation8], 4
    %s3227 = int_to_ptr.vmem [resolvable:$true] %s3226
    %s3228 = sshll.u32 %s1, 4
    %s3229 = int_to_ptr.hbm [resolvable:$true] %s3228
    %3231 = dma.vmem_to_hbm [thread:$0]  %s3227, 16, %s3229, [#allocation9]
    // Predicated region
    $region48: #{custom-call} parent=1 // pred_check
      _
    $region49: #{custom-call} parent=1 // pred_check_branch
      %3233 = sbr.rel (0) target = $region51
    $region50: #{custom-call} parent=1 // pred_region
      // Predicated region
      $region52: #{custom-call} parent=50 // pred_check
        _
      $region53: #{custom-call} parent=50 // pred_check_branch
        %3235 = sbr.rel target = $region55
      $region54: #{custom-call} parent=50 // pred_region
        // Predicated region
        $region67: #{custom-call} parent=54 // pred_check
          _
        $region68: #{custom-call} parent=54 // pred_check_branch
          %3251 = sbr.rel (0) target = $region70
        $region69: #{custom-call} parent=54 // pred_region
          %s3253 = ssub.s32 2, 1
          loop: start=0, step=1, limit=1
          $region71: #{custom-call} parent=69 // loop_pre_header
            _
          $region72: #{custom-call} parent=69 // loop_header
            %s3255 = sphi 0, %s3259
            %p3256 = scmp.ge.s32.totalorder %s3255, 1
            %s3260 = sphi [#allocation11], [#allocation11]
            %s3261 = sphi %s2, %s2
          $region73: #{custom-call} parent=69 // loop_header_branch
            %3258 = sbr.rel (%p3256) target = $region77
          $region74: #{custom-call} parent=69 // loop_body
            %v3262 = vld [vmem:[%s3260] sm:%s3253]
            %3263 = vst [vmem:[%s3261] sm:%s3253] %v3262
          $region75: #{custom-call} parent=69 // loop_footer
            %s3259 = sadd.s32 1, %s3255
          $region76: #{custom-call} parent=69 // loop_footer_branch
            %3254 = sbr.rel target = $region72
          $region77: #{custom-call} parent=69 // loop_exit
            _
        $region70: #{custom-call} parent=54 // pred_fallthru
          _
      $region55: #{custom-call} parent=50 // pred_fallthru
        _
      // Predicated region
      $region56: #{custom-call} parent=50 // pred_check
        _
      $region57: #{custom-call} parent=50 // pred_check_branch
        %3237 = sbr.rel (0) target = $region59
      $region58: #{custom-call} parent=50 // pred_region
        %s3239 = ssub.s32 2, 1
        loop: start=0, step=1, limit=1
        $region60: #{custom-call} parent=58 // loop_pre_header
          _
        $region61: #{custom-call} parent=58 // loop_header
          %s3241 = sphi 0, %s3245
          %p3242 = scmp.ge.s32.totalorder %s3241, 1
          %s3246 = sphi [#allocation11], [#allocation11]
          %s3247 = sphi %s2, %s2
        $region62: #{custom-call} parent=58 // loop_header_branch
          %3244 = sbr.rel (%p3242) target = $region66
        $region63: #{custom-call} parent=58 // loop_body
          %v3248 = vld [vmem:[%s3246] sm:%s3239]
          %3249 = vst [vmem:[%s3247] sm:%s3239] %v3248
        $region64: #{custom-call} parent=58 // loop_footer
          %s3245 = sadd.s32 1, %s3241
        $region65: #{custom-call} parent=58 // loop_footer_branch
          %3240 = sbr.rel target = $region61
        $region66: #{custom-call} parent=58 // loop_exit
          _
      $region59: #{custom-call} parent=50 // pred_fallthru
        _
    $region51: #{custom-call} parent=1 // pred_fallthru
      _
    %3264 = vnop
    %3266 = dma.done [#allocation9], 16
    %3267 = vsyncpa [#allocation9], 1

// kernel: decoder_layer_forward.8
$region0: #{decoder_layer_forward.8}
  #allocation0 [shape = 'u32[]', space=smem, size = 0x4, offset = 0x4, fixed_abs, tag = 'smem constant byte address 0x4 - core index']
  #allocation1 [shape = 'u32[72,128]{1,0:T(1,128)}', space=vmem, size = 0x9000, scoped, tag = 'internal scratch']
  %s0 = inlined_call_operand.vmem [shape: bf16[8,128], index: 0, kind: input, shape index: {}]
  %s1 = inlined_call_operand.vmem [shape: bf16[8,128], index: 1, kind: input, shape index: {}]
  %s2 = inlined_call_operand.vmem [shape: bf16[1,128], index: 2, kind: input, shape index: {}]
  %s3 = inlined_call_operand.vmem [shape: bf16[8,128], index: 3, kind: output, shape index: {0}]
  %s4 = inlined_call_operand.vmem [shape: bf16[8,128], index: 4, kind: output, shape index: {1}]
  %5 = xla_tuple %s3, %s4
  %s6 = sld [smem:[#allocation0]]
  $region30: #{decoder_layer_forward.8} parent=0
    _
  %s8 = ssub.s32 1, %s6
  %s9 = scalar_select 0, %s8, %s6
  // Predicated region
  $region2: #{decoder_layer_forward.8} parent=0 // pred_check
    _
  $region3: #{decoder_layer_forward.8} parent=0 // pred_check_branch
    %11 = sbr.rel (0) target = $region5
  $region4: #{decoder_layer_forward.8} parent=0 // pred_region
    _
  $region5: #{decoder_layer_forward.8} parent=0 // pred_fallthru
    _
  // Predicated region
  $region6: #{decoder_layer_forward.8} parent=0 // pred_check
    _
  $region7: #{decoder_layer_forward.8} parent=0 // pred_check_branch
    %13 = sbr.rel (0) target = $region9
  $region8: #{decoder_layer_forward.8} parent=0 // pred_region
    _
  $region9: #{decoder_layer_forward.8} parent=0 // pred_fallthru
    _
  // Predicated region
  $region10: #{decoder_layer_forward.8} parent=0 // pred_check
    _
  $region11: #{decoder_layer_forward.8} parent=0 // pred_check_branch
    %15 = sbr.rel (0) target = $region13
  $region12: #{decoder_layer_forward.8} parent=0 // pred_region
    _
  $region13: #{decoder_layer_forward.8} parent=0 // pred_fallthru
    _
  %v16 = vld [vmem:[%s0] sm:$0xf]
  %v17 = vunpack.c.l.bf16 %v16
  %v18 = vld [vmem:[%s1] sm:$0xf]
  %v19 = vunpack.c.l.bf16 %v18
  %v20 = vadd.f32 %v17, %v19
  %v21 = vpack.c.bf16 %v20, %v20
  %22 = vst [vmem:[%s4] sm:$0xf] %v21
  %v23 = vmul.f32 %v20, %v20
  %24 = vadd.xlane.f32.xlu0 %v23
  %v25 = vpop.xlane.xlu0 %24
  %v26 = vrcp.pop 128.0
  %v27 = vmul.f32 128.0, %v26
  %v28 = vsub.f32 1.0, %v27
  %v29 = vmul.f32 %v26, %v28
  %v30 = vadd.f32 %v26, %v29
  %vm31 = vweird.f32 %v26
  %v32 = vsel %vm31, %v26, %v30
  %v33 = vmul.f32 %v25, %v32
  %v34 = vadd.f32 %v33, 1e-06
  %v35 = vrsqrt.pop %v34
  %v36 = vmul.f32 %v35, %v34
  %v37 = vmul.f32 %v36, %v35
  %v38 = vmul.f32 0.5, %v37
  %v39 = vsub.f32 1.5, %v38
  %v40 = vmul.f32 %v35, %v39
  %vm41 = vweird.f32 %v34
  %vm42 = vweird.f32 %v35
  %vm43 = vmor %vm41, %vm42
  %v44 = vsel %vm43, %v35, %v40
  %v45 = vmul.f32 %v20, %v44
  %v46 = vld [vmem:[%s2] sm:$0x1]
  %v47 = vunpack.c.l.bf16 %v46
  %v48 = vperm.slane %v47, 0
  %v49 = vmul.f32 %v45, %v48
  %v50 = vpack.c.bf16 %v49, %v49
  %51 = vst [vmem:[%s3] sm:$0xf] %v50
  // Predicated region
  $region14: #{decoder_layer_forward.8} parent=0 // pred_check
    _
  $region15: #{decoder_layer_forward.8} parent=0 // pred_check_branch
    %53 = sbr.rel (0) target = $region17
  $region16: #{decoder_layer_forward.8} parent=0 // pred_region
    _
  $region17: #{decoder_layer_forward.8} parent=0 // pred_fallthru
    _
  // Predicated region
  $region18: #{decoder_layer_forward.8} parent=0 // pred_check
    _
  $region19: #{decoder_layer_forward.8} parent=0 // pred_check_branch
    %55 = sbr.rel (0) target = $region21
  $region20: #{decoder_layer_forward.8} parent=0 // pred_region
    _
  $region21: #{decoder_layer_forward.8} parent=0 // pred_fallthru
    _
  // Predicated region
  $region22: #{decoder_layer_forward.8} parent=0 // pred_check
    _
  $region23: #{decoder_layer_forward.8} parent=0 // pred_check_branch
    %57 = sbr.rel (0) target = $region25
  $region24: #{decoder_layer_forward.8} parent=0 // pred_region
    _
  $region25: #{decoder_layer_forward.8} parent=0 // pred_fallthru
    _
  // Predicated region
  $region26: #{decoder_layer_forward.8} parent=0 // pred_check
    _
  $region27: #{decoder_layer_forward.8} parent=0 // pred_check_branch
    %59 = sbr.rel (0) target = $region29
  $region28: #{decoder_layer_forward.8} parent=0 // pred_region
    _
  $region29: #{decoder_layer_forward.8} parent=0 // pred_fallthru
    _

// kernel: decoder_layer_forward.9
$region0: #{decoder_layer_forward.9}
  #allocation0 [shape = 'u32[]', space=smem, size = 0x4, offset = 0x4, fixed_abs, tag = 'smem constant byte address 0x4 - core index']
  #allocation1 [shape = 'u32[72,128]{1,0:T(1,128)}', space=vmem, size = 0x9000, scoped, tag = 'internal scratch']
  #allocation2 [shape = 'f32[8,256]{1,0:T(8,128)}', space=vmem, size = 0x2000, scoped, tag = 'scratch operand']
  %s0 = inlined_call_operand.vmem [shape: bf16[8,128], index: 0, kind: input, shape index: {}]
  %s1 = inlined_call_operand.hbm [shape: bf16[128,256], index: 1, kind: input, shape index: {}]
  %s2 = inlined_call_operand.vmem [shape: bf16[8,256], index: 2, kind: output, shape index: {}]
  %s3 = sld [smem:[#allocation0]]
  $region30: #{decoder_layer_forward.9} parent=0
    _
  %s5 = ssub.s32 1, %s3
  %s6 = scalar_select 0, %s5, %s3
  $region1: #{decoder_layer_forward.9} parent=0
    #allocation3 [shape = 'u8[65536]{0}', space=vmem, size = 0x10000, scoped, tag = 'input window, operand 1, single buffered']
    #allocation4 [shape = 's32[1]{0}', space=sflag, size = 0x4, scoped, tag = 'scoped memory for decoder_layer_forward.9']
    %7 = vsyncpa [#allocation4], 0
    // Predicated region
    $region2: #{decoder_layer_forward.9} parent=1 // pred_check
      _
    $region3: #{decoder_layer_forward.9} parent=1 // pred_check_branch
      %9 = sbr.rel (0) target = $region5
    $region4: #{decoder_layer_forward.9} parent=1 // pred_region
      _
    $region5: #{decoder_layer_forward.9} parent=1 // pred_fallthru
      _
    // Predicated region
    $region6: #{decoder_layer_forward.9} parent=1 // pred_check
      _
    $region7: #{decoder_layer_forward.9} parent=1 // pred_check_branch
      %11 = sbr.rel (0) target = $region9
    $region8: #{decoder_layer_forward.9} parent=1 // pred_region
      %13 = vsyncadd [#allocation4], 0
      %s14 = sshll.u32 %s1, 4
      %s15 = int_to_ptr.hbm [resolvable:$true] %s14
      %s16 = sshll.u32 [#allocation3], 4
      %s17 = int_to_ptr.vmem [resolvable:$true] %s16
      %22 = dma.hbm_to_vmem [thread:$0]  %s15, 2048, %s17, [#allocation4], 128, 128, 8
    $region9: #{decoder_layer_forward.9} parent=1 // pred_fallthru
      _
    // Predicated region
    $region10: #{decoder_layer_forward.9} parent=1 // pred_check
      _
    $region11: #{decoder_layer_forward.9} parent=1 // pred_check_branch
      %24 = sbr.rel (0) target = $region13
    $region12: #{decoder_layer_forward.9} parent=1 // pred_region
      %26 = dma.done [#allocation4], 2048
    $region13: #{decoder_layer_forward.9} parent=1 // pred_fallthru
      _
    %p27 = scmp.eq.s32.totalorder 0, 0
    // Predicated region
    $region14: #{decoder_layer_forward.9} parent=1 // pred_check
      %p28 = pneg %p27
    $region15: #{decoder_layer_forward.9} parent=1 // pred_check_branch
      %30 = sbr.rel (%p28) target = $region17
    $region16: #{decoder_layer_forward.9} parent=1 // pred_region
      %31 = vst [vmem:[#allocation2] sm:$0xff] 0.0
      %32 = vst [vmem:[#allocation2 + $0x8] sm:$0xff] 0.0
    $region17: #{decoder_layer_forward.9} parent=1 // pred_fallthru
      _
    %v33 = vld [vmem:[#allocation2] sm:$0xff]
    %v34 = vld [vmem:[#allocation2 + $0x8] sm:$0xff]
    %v35 = vld [vmem:[%s0] sm:$0xf]
    %v36 = vld [vmem:[#allocation3] sm:$0xff]
    %v37 = vld [vmem:[#allocation3 + $0x8] sm:$0xff]
    %v38 = vld [vmem:[#allocation3 + $0x10] sm:$0xff]
    %v39 = vld [vmem:[#allocation3 + $0x18] sm:$0xff]
    %v40 = vld [vmem:[#allocation3 + $0x20] sm:$0xff]
    %v41 = vld [vmem:[#allocation3 + $0x28] sm:$0xff]
    %v42 = vld [vmem:[#allocation3 + $0x30] sm:$0xff]
    %v43 = vld [vmem:[#allocation3 + $0x38] sm:$0xff]
    %v44 = vld [vmem:[#allocation3 + $0x40] sm:$0xff]
    %v45 = vld [vmem:[#allocation3 + $0x48] sm:$0xff]
    %v46 = vld [vmem:[#allocation3 + $0x50] sm:$0xff]
    %v47 = vld [vmem:[#allocation3 + $0x58] sm:$0xff]
    %v48 = vld [vmem:[#allocation3 + $0x60] sm:$0xff]
    %v49 = vld [vmem:[#allocation3 + $0x68] sm:$0xff]
    %v50 = vld [vmem:[#allocation3 + $0x70] sm:$0xff]
    %v51 = vld [vmem:[#allocation3 + $0x78] sm:$0xff]
    %v68 = vunpack.c.l.b16 %v36
    %v69 = vunpack.c.h.b16 %v36
    %v70 = vunpack.c.l.b16 %v37
    %v71 = vunpack.c.h.b16 %v37
    %v72 = vunpack.c.l.b16 %v38
    %v73 = vunpack.c.h.b16 %v38
    %v74 = vunpack.c.l.b16 %v39
    %v75 = vunpack.c.h.b16 %v39
    %v76 = vunpack.c.l.b16 %v40
    %v77 = vunpack.c.h.b16 %v40
    %v78 = vunpack.c.l.b16 %v41
    %v79 = vunpack.c.h.b16 %v41
    %v80 = vunpack.c.l.b16 %v42
    %v81 = vunpack.c.h.b16 %v42
    %v82 = vunpack.c.l.b16 %v43
    %v83 = vunpack.c.h.b16 %v43
    %v84 = vunpack.c.l.b16 %v44
    %v85 = vunpack.c.h.b16 %v44
    %v86 = vunpack.c.l.b16 %v45
    %v87 = vunpack.c.h.b16 %v45
    %v88 = vunpack.c.l.b16 %v46
    %v89 = vunpack.c.h.b16 %v46
    %v90 = vunpack.c.l.b16 %v47
    %v91 = vunpack.c.h.b16 %v47
    %v92 = vunpack.c.l.b16 %v48
    %v93 = vunpack.c.h.b16 %v48
    %v94 = vunpack.c.l.b16 %v49
    %v95 = vunpack.c.h.b16 %v49
    %v96 = vunpack.c.l.b16 %v50
    %v97 = vunpack.c.h.b16 %v50
    %v98 = vunpack.c.l.b16 %v51
    %v99 = vunpack.c.h.b16 %v51
    %v100 = vpack.c.b16 %v70, %v68
    %v101 = vpack.c.b16 %v71, %v69
    %v102 = vpack.c.b16 %v74, %v72
    %v103 = vpack.c.b16 %v75, %v73
    %v104 = vpack.c.b16 %v78, %v76
    %v105 = vpack.c.b16 %v79, %v77
    %v106 = vpack.c.b16 %v82, %v80
    %v107 = vpack.c.b16 %v83, %v81
    %v108 = vpack.c.b16 %v86, %v84
    %v109 = vpack.c.b16 %v87, %v85
    %v110 = vpack.c.b16 %v90, %v88
    %v111 = vpack.c.b16 %v91, %v89
    %v112 = vpack.c.b16 %v94, %v92
    %v113 = vpack.c.b16 %v95, %v93
    %v114 = vpack.c.b16 %v98, %v96
    %v115 = vpack.c.b16 %v99, %v97
    %132 = vmatpush.bf16.msra.mxu0 %v114
    %133 = vmatpush.bf16.msra.mxu0 %v112
    %134 = vmatpush.bf16.msra.mxu0 %v110
    %135 = vmatpush.bf16.msra.mxu0 %v108
    %136 = vmatpush.bf16.msra.mxu0 %v106
    %137 = vmatpush.bf16.msra.mxu0 %v104
    %138 = vmatpush.bf16.msra.mxu0 %v102
    %139 = vmatpush.bf16.msra.mxu0 %v100
    %140 = vmatmul.bf16.gmra.mxu0 %v35
    %v141 = vpop.f32.mrf.mxu0
    %v142 = vadd.f32 0.0, %v141
    %v143 = vpop.f32.mrf.mxu0
    %144 = vdwg.mxu0
    %145 = vmatpush.bf16.msra.mxu0 %v115
    %146 = vmatpush.bf16.msra.mxu0 %v113
    %147 = vmatpush.bf16.msra.mxu0 %v111
    %148 = vmatpush.bf16.msra.mxu0 %v109
    %149 = vmatpush.bf16.msra.mxu0 %v107
    %150 = vmatpush.bf16.msra.mxu0 %v105
    %151 = vmatpush.bf16.msra.mxu0 %v103
    %152 = vmatpush.bf16.msra.mxu0 %v101
    %153 = vmatmul.bf16.gmra.mxu0 %v35
    %v154 = vpop.f32.mrf.mxu0
    %v155 = vadd.f32 0.0, %v154
    %v156 = vpop.f32.mrf.mxu0
    %157 = vdwg.mxu0
    %v158 = vadd.f32 %v33, %v142
    %v159 = vadd.f32 %v34, %v155
    %160 = vst [vmem:[#allocation2] sm:$0xff] %v158
    %161 = vst [vmem:[#allocation2 + $0x8] sm:$0xff] %v159
    // Predicated region
    $region18: #{decoder_layer_forward.9} parent=1 // pred_check
      %p162 = pneg %p27
    $region19: #{decoder_layer_forward.9} parent=1 // pred_check_branch
      %164 = sbr.rel (%p162) target = $region21
    $region20: #{decoder_layer_forward.9} parent=1 // pred_region
      %v165 = vld [vmem:[#allocation2] sm:$0xff]
      %v166 = vld [vmem:[#allocation2 + $0x8] sm:$0xff]
      %v167 = vpack.c.bf16 %v166, %v165
      %168 = vst [vmem:[%s2] sm:$0xff] %v167
    $region21: #{decoder_layer_forward.9} parent=1 // pred_fallthru
      _
    // Predicated region
    $region22: #{decoder_layer_forward.9} parent=1 // pred_check
      _
    $region23: #{decoder_layer_forward.9} parent=1 // pred_check_branch
      %170 = sbr.rel (0) target = $region25
    $region24: #{decoder_layer_forward.9} parent=1 // pred_region
      _
    $region25: #{decoder_layer_forward.9} parent=1 // pred_fallthru
      _
    // Predicated region
    $region26: #{decoder_layer_forward.9} parent=1 // pred_check
      _
    $region27: #{decoder_layer_forward.9} parent=1 // pred_check_branch
      %172 = sbr.rel (0) target = $region29
    $region28: #{decoder_layer_forward.9} parent=1 // pred_region
      _
    $region29: #{decoder_layer_forward.9} parent=1 // pred_fallthru
      _
    %173 = vsyncpa [#allocation4], 1

// kernel: decoder_layer_forward.14
$region0: #{decoder_layer_forward.14}
  #allocation0 [shape = 'u32[]', space=smem, size = 0x4, offset = 0x4, fixed_abs, tag = 'smem constant byte address 0x4 - core index']
  #allocation1 [shape = 'u32[72,128]{1,0:T(1,128)}', space=vmem, size = 0x9000, scoped, tag = 'internal scratch']
  #allocation2 [shape = 'f32[8,128]{1,0:T(8,128)}', space=vmem, size = 0x1000, scoped, tag = 'scratch operand']
  %s0 = inlined_call_operand.vmem [shape: bf16[8,128], index: 0, kind: input, shape index: {}]
  %s1 = inlined_call_operand.hbm [shape: bf16[128,128], index: 1, kind: input, shape index: {}]
  %s2 = inlined_call_operand.vmem [shape: bf16[8,128], index: 2, kind: output, shape index: {}]
  %s3 = sld [smem:[#allocation0]]
  $region30: #{decoder_layer_forward.14} parent=0
    _
  %s5 = ssub.s32 1, %s3
  %s6 = scalar_select 0, %s5, %s3
  $region1: #{decoder_layer_forward.14} parent=0
    #allocation3 [shape = 'u8[32768]{0}', space=vmem, size = 0x8000, scoped, tag = 'input window, operand 1, single buffered']
    #allocation4 [shape = 's32[1]{0}', space=sflag, size = 0x4, scoped, tag = 'scoped memory for decoder_layer_forward.14']
    %7 = vsyncpa [#allocation4], 0
    // Predicated region
    $region2: #{decoder_layer_forward.14} parent=1 // pred_check
      _
    $region3: #{decoder_layer_forward.14} parent=1 // pred_check_branch
      %9 = sbr.rel (0) target = $region5
    $region4: #{decoder_layer_forward.14} parent=1 // pred_region
      _
    $region5: #{decoder_layer_forward.14} parent=1 // pred_fallthru
      _
    // Predicated region
    $region6: #{decoder_layer_forward.14} parent=1 // pred_check
      _
    $region7: #{decoder_layer_forward.14} parent=1 // pred_check_branch
      %11 = sbr.rel (0) target = $region9
    $region8: #{decoder_layer_forward.14} parent=1 // pred_region
      %13 = vsyncadd [#allocation4], 0
      %s14 = sshll.u32 %s1, 4
      %s15 = int_to_ptr.hbm [resolvable:$true] %s14
      %s16 = sshll.u32 [#allocation3], 4
      %s17 = int_to_ptr.vmem [resolvable:$true] %s16
      %22 = dma.hbm_to_vmem [thread:$0]  %s15, 1024, %s17, [#allocation4], 64, 64, 4
    $region9: #{decoder_layer_forward.14} parent=1 // pred_fallthru
      _
    // Predicated region
    $region10: #{decoder_layer_forward.14} parent=1 // pred_check
      _
    $region11: #{decoder_layer_forward.14} parent=1 // pred_check_branch
      %24 = sbr.rel (0) target = $region13
    $region12: #{decoder_layer_forward.14} parent=1 // pred_region
      %26 = dma.done [#allocation4], 1024
    $region13: #{decoder_layer_forward.14} parent=1 // pred_fallthru
      _
    %p27 = scmp.eq.s32.totalorder 0, 0
    // Predicated region
    $region14: #{decoder_layer_forward.14} parent=1 // pred_check
      %p28 = pneg %p27
    $region15: #{decoder_layer_forward.14} parent=1 // pred_check_branch
      %30 = sbr.rel (%p28) target = $region17
    $region16: #{decoder_layer_forward.14} parent=1 // pred_region
      %31 = vst [vmem:[#allocation2] sm:$0xff] 0.0
    $region17: #{decoder_layer_forward.14} parent=1 // pred_fallthru
      _
    %v32 = vld [vmem:[#allocation2] sm:$0xff]
    %v33 = vld [vmem:[%s0] sm:$0xf]
    %v34 = vld [vmem:[#allocation3] sm:$0xf]
    %v35 = vld [vmem:[#allocation3 + $0x4] sm:$0xf]
    %v36 = vld [vmem:[#allocation3 + $0x8] sm:$0xf]
    %v37 = vld [vmem:[#allocation3 + $0xc] sm:$0xf]
    %v38 = vld [vmem:[#allocation3 + $0x10] sm:$0xf]
    %v39 = vld [vmem:[#allocation3 + $0x14] sm:$0xf]
    %v40 = vld [vmem:[#allocation3 + $0x18] sm:$0xf]
    %v41 = vld [vmem:[#allocation3 + $0x1c] sm:$0xf]
    %v42 = vld [vmem:[#allocation3 + $0x20] sm:$0xf]
    %v43 = vld [vmem:[#allocation3 + $0x24] sm:$0xf]
    %v44 = vld [vmem:[#allocation3 + $0x28] sm:$0xf]
    %v45 = vld [vmem:[#allocation3 + $0x2c] sm:$0xf]
    %v46 = vld [vmem:[#allocation3 + $0x30] sm:$0xf]
    %v47 = vld [vmem:[#allocation3 + $0x34] sm:$0xf]
    %v48 = vld [vmem:[#allocation3 + $0x38] sm:$0xf]
    %v49 = vld [vmem:[#allocation3 + $0x3c] sm:$0xf]
    %v66 = vunpack.c.l.b16 %v34
    %v67 = vunpack.c.l.b16 %v35
    %v68 = vunpack.c.l.b16 %v36
    %v69 = vunpack.c.l.b16 %v37
    %v70 = vunpack.c.l.b16 %v38
    %v71 = vunpack.c.l.b16 %v39
    %v72 = vunpack.c.l.b16 %v40
    %v73 = vunpack.c.l.b16 %v41
    %v74 = vunpack.c.l.b16 %v42
    %v75 = vunpack.c.l.b16 %v43
    %v76 = vunpack.c.l.b16 %v44
    %v77 = vunpack.c.l.b16 %v45
    %v78 = vunpack.c.l.b16 %v46
    %v79 = vunpack.c.l.b16 %v47
    %v80 = vunpack.c.l.b16 %v48
    %v81 = vunpack.c.l.b16 %v49
    %v82 = vpack.c.b16 %v67, %v66
    %v83 = vpack.c.b16 %v69, %v68
    %v84 = vpack.c.b16 %v71, %v70
    %v85 = vpack.c.b16 %v73, %v72
    %v86 = vpack.c.b16 %v75, %v74
    %v87 = vpack.c.b16 %v77, %v76
    %v88 = vpack.c.b16 %v79, %v78
    %v89 = vpack.c.b16 %v81, %v80
    %98 = vmatpush.bf16.msra.mxu0 %v89
    %99 = vmatpush.bf16.msra.mxu0 %v88
    %100 = vmatpush.bf16.msra.mxu0 %v87
    %101 = vmatpush.bf16.msra.mxu0 %v86
    %102 = vmatpush.bf16.msra.mxu0 %v85
    %103 = vmatpush.bf16.msra.mxu0 %v84
    %104 = vmatpush.bf16.msra.mxu0 %v83
    %105 = vmatpush.bf16.msra.mxu0 %v82
    %106 = vmatmul.bf16.gmra.mxu0 %v33
    %v107 = vpop.f32.mrf.mxu0
    %v108 = vadd.f32 0.0, %v107
    %v109 = vpop.f32.mrf.mxu0
    %110 = vdwg.mxu0
    %v111 = vadd.f32 %v32, %v108
    %112 = vst [vmem:[#allocation2] sm:$0xff] %v111
    // Predicated region
    $region18: #{decoder_layer_forward.14} parent=1 // pred_check
      %p113 = pneg %p27
    $region19: #{decoder_layer_forward.14} parent=1 // pred_check_branch
      %115 = sbr.rel (%p113) target = $region21
    $region20: #{decoder_layer_forward.14} parent=1 // pred_region
      %v116 = vld [vmem:[#allocation2] sm:$0xff]
      %v117 = vpack.c.bf16 %v116, %v116
      %118 = vst [vmem:[%s2] sm:$0xf] %v117
    $region21: #{decoder_layer_forward.14} parent=1 // pred_fallthru
      _
    // Predicated region
    $region22: #{decoder_layer_forward.14} parent=1 // pred_check
      _
    $region23: #{decoder_layer_forward.14} parent=1 // pred_check_branch
      %120 = sbr.rel (0) target = $region25
    $region24: #{decoder_layer_forward.14} parent=1 // pred_region
      _
    $region25: #{decoder_layer_forward.14} parent=1 // pred_fallthru
      _
    // Predicated region
    $region26: #{decoder_layer_forward.14} parent=1 // pred_check
      _
    $region27: #{decoder_layer_forward.14} parent=1 // pred_check_branch
      %122 = sbr.rel (0) target = $region29
    $region28: #{decoder_layer_forward.14} parent=1 // pred_region
      _
    $region29: #{decoder_layer_forward.14} parent=1 // pred_fallthru
      _
    %123 = vsyncpa [#allocation4], 1

// kernel: decoder_layer_forward.10
$region0: #{decoder_layer_forward.10}
  #allocation0 [shape = 'u32[]', space=smem, size = 0x4, offset = 0x4, fixed_abs, tag = 'smem constant byte address 0x4 - core index']
  #allocation1 [shape = 'u32[72,128]{1,0:T(1,128)}', space=vmem, size = 0x9000, scoped, tag = 'internal scratch']
  %s0 = inlined_call_operand.vmem [shape: bf16[8,256], index: 0, kind: input, shape index: {}]
  %s1 = inlined_call_operand.vmem [shape: f32[8,16], index: 1, kind: input, shape index: {}]
  %s2 = inlined_call_operand.vmem [shape: f32[8,16], index: 2, kind: input, shape index: {}]
  %s3 = inlined_call_operand.vmem [shape: bf16[4,8,32], index: 3, kind: output, shape index: {0}]
  %s4 = inlined_call_operand.vmem [shape: bf16[2,8,32], index: 4, kind: output, shape index: {1}]
  %s5 = inlined_call_operand.vmem [shape: bf16[2,8,32], index: 5, kind: output, shape index: {2}]
  %6 = xla_tuple %s3, %s4, %s5
  %s7 = sld [smem:[#allocation0]]
  $region38: #{decoder_layer_forward.10} parent=0
    _
  %s9 = ssub.s32 1, %s7
  %s10 = scalar_select 0, %s9, %s7
  // Predicated region
  $region2: #{decoder_layer_forward.10} parent=0 // pred_check
    _
  $region3: #{decoder_layer_forward.10} parent=0 // pred_check_branch
    %12 = sbr.rel (0) target = $region5
  $region4: #{decoder_layer_forward.10} parent=0 // pred_region
    _
  $region5: #{decoder_layer_forward.10} parent=0 // pred_fallthru
    _
  // Predicated region
  $region6: #{decoder_layer_forward.10} parent=0 // pred_check
    _
  $region7: #{decoder_layer_forward.10} parent=0 // pred_check_branch
    %14 = sbr.rel (0) target = $region9
  $region8: #{decoder_layer_forward.10} parent=0 // pred_region
    _
  $region9: #{decoder_layer_forward.10} parent=0 // pred_fallthru
    _
  // Predicated region
  $region10: #{decoder_layer_forward.10} parent=0 // pred_check
    _
  $region11: #{decoder_layer_forward.10} parent=0 // pred_check_branch
    %16 = sbr.rel (0) target = $region13
  $region12: #{decoder_layer_forward.10} parent=0 // pred_region
    _
  $region13: #{decoder_layer_forward.10} parent=0 // pred_fallthru
    _
  %v17 = vld [vmem:[%s1] sm:$0xff]
  %v18 = vld [vmem:[%s2] sm:$0xff]
  %v19 = vld [vmem:[%s0] sm:$0xf]
  %v20 = vunpack.c.l.bf16 %v19
  %v21 = vmul.f32 %v20, %v17
  %23 = vrot.lane.b32.xlu0 %v18, 16
  %v24 = vpop.permute.xlu0 %23
  %v26 = vmul.f32 %v20, %v24
  %28 = vrot.lane.b32.xlu0 %v26, 112
  %v29 = vpop.permute.xlu0 %28
  %v31 = vsub.f32 %v21, %v29
  %33 = vrot.lane.b32.xlu0 %v17, 16
  %v34 = vpop.permute.xlu0 %33
  %v36 = vmul.f32 %v20, %v34
  %v37 = vmul.f32 %v20, %v18
  %39 = vrot.lane.b32.xlu0 %v37, 16
  %v40 = vpop.permute.xlu0 %39
  %v42 = vadd.f32 %v36, %v40
  %vm43 = vcmask 130048
  %v44 = vsel %vm43, %v31, %v42
  %v45 = vpack.c.bf16 %v44, %v44
  %vm46 = vcmask 257024
  %47 = vst.msk [vmem:[%s3] sm:$0xf] %vm46, %v45
  %v48 = vld [vmem:[%s0] sm:$0xf]
  %v49 = vunpack.c.l.bf16 %v48
  %50 = vrot.lane.b32.xlu0 %v17, 32
  %v51 = vpop.permute.xlu0 %50
  %v53 = vmul.f32 %v49, %v51
  %54 = vrot.lane.b32.xlu0 %v18, 48
  %v55 = vpop.permute.xlu0 %54
  %v57 = vmul.f32 %v49, %v55
  %59 = vrot.lane.b32.xlu0 %v57, 112
  %v60 = vpop.permute.xlu0 %59
  %v62 = vsub.f32 %v53, %v60
  %63 = vrot.lane.b32.xlu0 %v17, 48
  %v64 = vpop.permute.xlu0 %63
  %v66 = vmul.f32 %v49, %v64
  %67 = vrot.lane.b32.xlu0 %v18, 32
  %v68 = vpop.permute.xlu0 %67
  %v70 = vmul.f32 %v49, %v68
  %72 = vrot.lane.b32.xlu0 %v70, 16
  %v73 = vpop.permute.xlu0 %72
  %v75 = vadd.f32 %v66, %v73
  %77 = vrot.lane.b32.xlu0 %v62, 96
  %v78 = vpop.permute.xlu0 %77
  %81 = vrot.lane.b32.xlu0 %v75, 96
  %v82 = vpop.permute.xlu0 %81
  %v84 = vsel %vm43, %v78, %v82
  %v85 = vpack.c.bf16 %v84, %v84
  %s86 = scalar_lea.vmem %s3, 4
  %87 = vst.msk [vmem:[%s86] sm:$0xf] %vm46, %v85
  %v88 = vld [vmem:[%s0] sm:$0xf]
  %v89 = vunpack.c.l.bf16 %v88
  %90 = vrot.lane.b32.xlu0 %v17, 64
  %v91 = vpop.permute.xlu0 %90
  %v93 = vmul.f32 %v89, %v91
  %94 = vrot.lane.b32.xlu0 %v18, 80
  %v95 = vpop.permute.xlu0 %94
  %v97 = vmul.f32 %v89, %v95
  %99 = vrot.lane.b32.xlu0 %v97, 112
  %v100 = vpop.permute.xlu0 %99
  %v102 = vsub.f32 %v93, %v100
  %103 = vrot.lane.b32.xlu0 %v17, 80
  %v104 = vpop.permute.xlu0 %103
  %v106 = vmul.f32 %v89, %v104
  %107 = vrot.lane.b32.xlu0 %v18, 64
  %v108 = vpop.permute.xlu0 %107
  %v110 = vmul.f32 %v89, %v108
  %112 = vrot.lane.b32.xlu0 %v110, 16
  %v113 = vpop.permute.xlu0 %112
  %v115 = vadd.f32 %v106, %v113
  %117 = vrot.lane.b32.xlu0 %v102, 64
  %v118 = vpop.permute.xlu0 %117
  %121 = vrot.lane.b32.xlu0 %v115, 64
  %v122 = vpop.permute.xlu0 %121
  %v124 = vsel %vm43, %v118, %v122
  %v125 = vpack.c.bf16 %v124, %v124
  %s126 = scalar_lea.vmem %s3, 8
  %127 = vst.msk [vmem:[%s126] sm:$0xf] %vm46, %v125
  %v128 = vld [vmem:[%s0] sm:$0xf]
  %v129 = vunpack.c.l.bf16 %v128
  %130 = vrot.lane.b32.xlu0 %v17, 96
  %v131 = vpop.permute.xlu0 %130
  %v133 = vmul.f32 %v129, %v131
  %134 = vrot.lane.b32.xlu0 %v18, 112
  %v135 = vpop.permute.xlu0 %134
  %v137 = vmul.f32 %v129, %v135
  %139 = vrot.lane.b32.xlu0 %v137, 112
  %v140 = vpop.permute.xlu0 %139
  %v142 = vsub.f32 %v133, %v140
  %143 = vrot.lane.b32.xlu0 %v17, 112
  %v144 = vpop.permute.xlu0 %143
  %v146 = vmul.f32 %v129, %v144
  %147 = vrot.lane.b32.xlu0 %v18, 96
  %v148 = vpop.permute.xlu0 %147
  %v150 = vmul.f32 %v129, %v148
  %152 = vrot.lane.b32.xlu0 %v150, 16
  %v153 = vpop.permute.xlu0 %152
  %v155 = vadd.f32 %v146, %v153
  %157 = vrot.lane.b32.xlu0 %v142, 32
  %v158 = vpop.permute.xlu0 %157
  %161 = vrot.lane.b32.xlu0 %v155, 32
  %v162 = vpop.permute.xlu0 %161
  %v164 = vsel %vm43, %v158, %v162
  %v165 = vpack.c.bf16 %v164, %v164
  %s166 = scalar_lea.vmem %s3, 12
  %167 = vst.msk [vmem:[%s166] sm:$0xf] %vm46, %v165
  %v168 = vld [vmem:[%s0 + $0x4] sm:$0xf]
  %v169 = vunpack.c.l.bf16 %v168
  %v170 = vmul.f32 %v169, %v17
  %v171 = vmul.f32 %v169, %v24
  %173 = vrot.lane.b32.xlu0 %v171, 112
  %v174 = vpop.permute.xlu0 %173
  %v176 = vsub.f32 %v170, %v174
  %v177 = vmul.f32 %v169, %v34
  %v178 = vmul.f32 %v169, %v18
  %180 = vrot.lane.b32.xlu0 %v178, 16
  %v181 = vpop.permute.xlu0 %180
  %v183 = vadd.f32 %v177, %v181
  %v184 = vsel %vm43, %v176, %v183
  %v185 = vpack.c.bf16 %v184, %v184
  %186 = vst.msk [vmem:[%s4] sm:$0xf] %vm46, %v185
  %v187 = vld [vmem:[%s0 + $0x4] sm:$0xf]
  %v188 = vunpack.c.l.bf16 %v187
  %v189 = vmul.f32 %v188, %v51
  %v190 = vmul.f32 %v188, %v55
  %192 = vrot.lane.b32.xlu0 %v190, 112
  %v193 = vpop.permute.xlu0 %192
  %v195 = vsub.f32 %v189, %v193
  %v196 = vmul.f32 %v188, %v64
  %v197 = vmul.f32 %v188, %v68
  %199 = vrot.lane.b32.xlu0 %v197, 16
  %v200 = vpop.permute.xlu0 %199
  %v202 = vadd.f32 %v196, %v200
  %204 = vrot.lane.b32.xlu0 %v195, 96
  %v205 = vpop.permute.xlu0 %204
  %208 = vrot.lane.b32.xlu0 %v202, 96
  %v209 = vpop.permute.xlu0 %208
  %v211 = vsel %vm43, %v205, %v209
  %v212 = vpack.c.bf16 %v211, %v211
  %s213 = scalar_lea.vmem %s4, 4
  %214 = vst.msk [vmem:[%s213] sm:$0xf] %vm46, %v212
  %v215 = vld [vmem:[%s0 + $0x4] sm:$0xf]
  %217 = vrot.lane.b32.xlu0 %v215, 64
  %v218 = vpop.permute.xlu0 %217
  %220 = vst.msk [vmem:[%s5] sm:$0xf] %vm46, %v218
  %v221 = vld [vmem:[%s0 + $0x4] sm:$0xf]
  %223 = vrot.lane.b32.xlu0 %v221, 32
  %v224 = vpop.permute.xlu0 %223
  %s226 = scalar_lea.vmem %s5, 4
  %227 = vst.msk [vmem:[%s226] sm:$0xf] %vm46, %v224
  // Predicated region
  $region14: #{decoder_layer_forward.10} parent=0 // pred_check
    _
  $region15: #{decoder_layer_forward.10} parent=0 // pred_check_branch
    %229 = sbr.rel (0) target = $region17
  $region16: #{decoder_layer_forward.10} parent=0 // pred_region
    _
  $region17: #{decoder_layer_forward.10} parent=0 // pred_fallthru
    _
  // Predicated region
  $region18: #{decoder_layer_forward.10} parent=0 // pred_check
    _
  $region19: #{decoder_layer_forward.10} parent=0 // pred_check_branch
    %231 = sbr.rel (0) target = $region21
  $region20: #{decoder_layer_forward.10} parent=0 // pred_region
    _
  $region21: #{decoder_layer_forward.10} parent=0 // pred_fallthru
    _
  // Predicated region
  $region22: #{decoder_layer_forward.10} parent=0 // pred_check
    _
  $region23: #{decoder_layer_forward.10} parent=0 // pred_check_branch
    %233 = sbr.rel (0) target = $region25
  $region24: #{decoder_layer_forward.10} parent=0 // pred_region
    _
  $region25: #{decoder_layer_forward.10} parent=0 // pred_fallthru
    _
  // Predicated region
  $region26: #{decoder_layer_forward.10} parent=0 // pred_check
    _
  $region27: #{decoder_layer_forward.10} parent=0 // pred_check_branch
    %235 = sbr.rel (0) target = $region29
  $region28: #{decoder_layer_forward.10} parent=0 // pred_region
    _
  $region29: #{decoder_layer_forward.10} parent=0 // pred_fallthru
    _
  // Predicated region
  $region30: #{decoder_layer_forward.10} parent=0 // pred_check
    _
  $region31: #{decoder_layer_forward.10} parent=0 // pred_check_branch
    %237 = sbr.rel (0) target = $region33
  $region32: #{decoder_layer_forward.10} parent=0 // pred_region
    _
  $region33: #{decoder_layer_forward.10} parent=0 // pred_fallthru
    _
  // Predicated region
  $region34: #{decoder_layer_forward.10} parent=0 // pred_check
    _
  $region35: #{decoder_layer_forward.10} parent=0 // pred_check_branch
    %239 = sbr.rel (0) target = $region37
  $region36: #{decoder_layer_forward.10} parent=0 // pred_region
    _
  $region37: #{decoder_layer_forward.10} parent=0 // pred_fallthru
    _

// kernel: decoder_layer_forward.12
$region0: #{decoder_layer_forward.12}
  #allocation0 [shape = 'u32[]', space=smem, size = 0x4, offset = 0x4, fixed_abs, tag = 'smem constant byte address 0x4 - core index']
  #allocation1 [shape = 'u32[72,128]{1,0:T(1,128)}', space=vmem, size = 0x9000, scoped, tag = 'internal scratch']
  #allocation2 [shape = 'f32[8,128]{1,0:T(8,128)}', space=vmem, size = 0x1000, scoped, tag = 'scratch operand']
  %s0 = inlined_call_operand.vmem [shape: bf16[8,128], index: 0, kind: input, shape index: {}]
  %s1 = inlined_call_operand.vmem [shape: bf16[128,128], index: 1, kind: input, shape index: {}]
  %s2 = inlined_call_operand.vmem [shape: bf16[8,128], index: 2, kind: output, shape index: {}]
  %s3 = sld [smem:[#allocation0]]
  $region26: #{decoder_layer_forward.12} parent=0
    _
  %s5 = ssub.s32 1, %s3
  %s6 = scalar_select 0, %s5, %s3
  // Predicated region
  $region2: #{decoder_layer_forward.12} parent=0 // pred_check
    _
  $region3: #{decoder_layer_forward.12} parent=0 // pred_check_branch
    %8 = sbr.rel (0) target = $region5
  $region4: #{decoder_layer_forward.12} parent=0 // pred_region
    _
  $region5: #{decoder_layer_forward.12} parent=0 // pred_fallthru
    _
  // Predicated region
  $region6: #{decoder_layer_forward.12} parent=0 // pred_check
    _
  $region7: #{decoder_layer_forward.12} parent=0 // pred_check_branch
    %10 = sbr.rel (0) target = $region9
  $region8: #{decoder_layer_forward.12} parent=0 // pred_region
    _
  $region9: #{decoder_layer_forward.12} parent=0 // pred_fallthru
    _
  %p11 = scmp.eq.s32.totalorder 0, 0
  // Predicated region
  $region10: #{decoder_layer_forward.12} parent=0 // pred_check
    %p12 = pneg %p11
  $region11: #{decoder_layer_forward.12} parent=0 // pred_check_branch
    %14 = sbr.rel (%p12) target = $region13
  $region12: #{decoder_layer_forward.12} parent=0 // pred_region
    %15 = vst [vmem:[#allocation2] sm:$0xff] 0.0
  $region13: #{decoder_layer_forward.12} parent=0 // pred_fallthru
    _
  %v16 = vld [vmem:[#allocation2] sm:$0xff]
  %v17 = vld [vmem:[%s0] sm:$0xf]
  %v18 = vld [vmem:[%s1] sm:$0xf]
  %v19 = vld [vmem:[%s1 + $0x4] sm:$0xf]
  %v20 = vld [vmem:[%s1 + $0x8] sm:$0xf]
  %v21 = vld [vmem:[%s1 + $0xc] sm:$0xf]
  %v22 = vld [vmem:[%s1 + $0x10] sm:$0xf]
  %v23 = vld [vmem:[%s1 + $0x14] sm:$0xf]
  %v24 = vld [vmem:[%s1 + $0x18] sm:$0xf]
  %v25 = vld [vmem:[%s1 + $0x1c] sm:$0xf]
  %v26 = vld [vmem:[%s1 + $0x20] sm:$0xf]
  %v27 = vld [vmem:[%s1 + $0x24] sm:$0xf]
  %v28 = vld [vmem:[%s1 + $0x28] sm:$0xf]
  %v29 = vld [vmem:[%s1 + $0x2c] sm:$0xf]
  %v30 = vld [vmem:[%s1 + $0x30] sm:$0xf]
  %v31 = vld [vmem:[%s1 + $0x34] sm:$0xf]
  %v32 = vld [vmem:[%s1 + $0x38] sm:$0xf]
  %v33 = vld [vmem:[%s1 + $0x3c] sm:$0xf]
  %v50 = vunpack.c.l.b16 %v18
  %v51 = vunpack.c.l.b16 %v19
  %v52 = vunpack.c.l.b16 %v20
  %v53 = vunpack.c.l.b16 %v21
  %v54 = vunpack.c.l.b16 %v22
  %v55 = vunpack.c.l.b16 %v23
  %v56 = vunpack.c.l.b16 %v24
  %v57 = vunpack.c.l.b16 %v25
  %v58 = vunpack.c.l.b16 %v26
  %v59 = vunpack.c.l.b16 %v27
  %v60 = vunpack.c.l.b16 %v28
  %v61 = vunpack.c.l.b16 %v29
  %v62 = vunpack.c.l.b16 %v30
  %v63 = vunpack.c.l.b16 %v31
  %v64 = vunpack.c.l.b16 %v32
  %v65 = vunpack.c.l.b16 %v33
  %v66 = vpack.c.b16 %v51, %v50
  %v67 = vpack.c.b16 %v53, %v52
  %v68 = vpack.c.b16 %v55, %v54
  %v69 = vpack.c.b16 %v57, %v56
  %v70 = vpack.c.b16 %v59, %v58
  %v71 = vpack.c.b16 %v61, %v60
  %v72 = vpack.c.b16 %v63, %v62
  %v73 = vpack.c.b16 %v65, %v64
  %82 = vmatpush.bf16.msra.mxu0 %v73
  %83 = vmatpush.bf16.msra.mxu0 %v72
  %84 = vmatpush.bf16.msra.mxu0 %v71
  %85 = vmatpush.bf16.msra.mxu0 %v70
  %86 = vmatpush.bf16.msra.mxu0 %v69
  %87 = vmatpush.bf16.msra.mxu0 %v68
  %88 = vmatpush.bf16.msra.mxu0 %v67
  %89 = vmatpush.bf16.msra.mxu0 %v66
  %90 = vmatmul.bf16.gmra.mxu0 %v17
  %v91 = vpop.f32.mrf.mxu0
  %v92 = vadd.f32 0.0, %v91
  %v93 = vpop.f32.mrf.mxu0
  %94 = vdwg.mxu0
  %v95 = vadd.f32 %v16, %v92
  %96 = vst [vmem:[#allocation2] sm:$0xff] %v95
  // Predicated region
  $region14: #{decoder_layer_forward.12} parent=0 // pred_check
    %p97 = pneg %p11
  $region15: #{decoder_layer_forward.12} parent=0 // pred_check_branch
    %99 = sbr.rel (%p97) target = $region17
  $region16: #{decoder_layer_forward.12} parent=0 // pred_region
    %v100 = vld [vmem:[#allocation2] sm:$0xff]
    %v101 = vpack.c.bf16 %v100, %v100
    %102 = vst [vmem:[%s2] sm:$0xf] %v101
  $region17: #{decoder_layer_forward.12} parent=0 // pred_fallthru
    _
  // Predicated region
  $region18: #{decoder_layer_forward.12} parent=0 // pred_check
    _
  $region19: #{decoder_layer_forward.12} parent=0 // pred_check_branch
    %104 = sbr.rel (0) target = $region21
  $region20: #{decoder_layer_forward.12} parent=0 // pred_region
    _
  $region21: #{decoder_layer_forward.12} parent=0 // pred_fallthru
    _
  // Predicated region
  $region22: #{decoder_layer_forward.12} parent=0 // pred_check
    _
  $region23: #{decoder_layer_forward.12} parent=0 // pred_check_branch
    %106 = sbr.rel (0) target = $region25
  $region24: #{decoder_layer_forward.12} parent=0 // pred_region
    _
  $region25: #{decoder_layer_forward.12} parent=0 // pred_fallthru
    _

// kernel: decoder_layer_forward.13
$region0: #{decoder_layer_forward.13}
  #allocation0 [shape = 'u32[]', space=smem, size = 0x4, offset = 0x4, fixed_abs, tag = 'smem constant byte address 0x4 - core index']
  #allocation1 [shape = 'u32[72,128]{1,0:T(1,128)}', space=vmem, size = 0x9000, scoped, tag = 'internal scratch']
  %s0 = inlined_call_operand.vmem [shape: bf16[8,128], index: 0, kind: input, shape index: {}]
  %s1 = inlined_call_operand.vmem [shape: bf16[8,128], index: 1, kind: input, shape index: {}]
  %s2 = inlined_call_operand.vmem [shape: bf16[1,128], index: 2, kind: input, shape index: {}]
  %s3 = inlined_call_operand.vmem [shape: bf16[8,128], index: 3, kind: output, shape index: {0}]
  %s4 = inlined_call_operand.hbm [shape: bf16[8,128], index: 4, kind: output, shape index: {1}]
  %5 = xla_tuple %s3, %s4
  %s6 = sld [smem:[#allocation0]]
  $region30: #{decoder_layer_forward.13} parent=0
    _
  %s8 = ssub.s32 1, %s6
  %s9 = scalar_select 0, %s8, %s6
  $region1: #{decoder_layer_forward.13} parent=0
    #allocation2 [shape = 'u8[2048]{0}', space=vmem, size = 0x800, scoped, tag = 'output window, operand 1, single buffered']
    #allocation3 [shape = 's32[1]{0}', space=sflag, size = 0x4, scoped, tag = 'scoped memory for decoder_layer_forward.13']
    %10 = vsyncpa [#allocation3], 0
    // Predicated region
    $region2: #{decoder_layer_forward.13} parent=1 // pred_check
      _
    $region3: #{decoder_layer_forward.13} parent=1 // pred_check_branch
      %12 = sbr.rel (0) target = $region5
    $region4: #{decoder_layer_forward.13} parent=1 // pred_region
      _
    $region5: #{decoder_layer_forward.13} parent=1 // pred_fallthru
      _
    // Predicated region
    $region6: #{decoder_layer_forward.13} parent=1 // pred_check
      _
    $region7: #{decoder_layer_forward.13} parent=1 // pred_check_branch
      %14 = sbr.rel (0) target = $region9
    $region8: #{decoder_layer_forward.13} parent=1 // pred_region
      _
    $region9: #{decoder_layer_forward.13} parent=1 // pred_fallthru
      _
    // Predicated region
    $region10: #{decoder_layer_forward.13} parent=1 // pred_check
      _
    $region11: #{decoder_layer_forward.13} parent=1 // pred_check_branch
      %16 = sbr.rel (0) target = $region13
    $region12: #{decoder_layer_forward.13} parent=1 // pred_region
      _
    $region13: #{decoder_layer_forward.13} parent=1 // pred_fallthru
      _
    %v17 = vld [vmem:[%s0] sm:$0xf]
    %v18 = vunpack.c.l.bf16 %v17
    %v19 = vld [vmem:[%s1] sm:$0xf]
    %v20 = vunpack.c.l.bf16 %v19
    %v21 = vadd.f32 %v18, %v20
    %v22 = vpack.c.bf16 %v21, %v21
    %23 = vst [vmem:[#allocation2] sm:$0xf] %v22
    %v24 = vmul.f32 %v21, %v21
    %25 = vadd.xlane.f32.xlu0 %v24
    %v26 = vpop.xlane.xlu0 %25
    %v27 = vrcp.pop 128.0
    %v28 = vmul.f32 128.0, %v27
    %v29 = vsub.f32 1.0, %v28
    %v30 = vmul.f32 %v27, %v29
    %v31 = vadd.f32 %v27, %v30
    %vm32 = vweird.f32 %v27
    %v33 = vsel %vm32, %v27, %v31
    %v34 = vmul.f32 %v26, %v33
    %v35 = vadd.f32 %v34, 1e-06
    %v36 = vrsqrt.pop %v35
    %v37 = vmul.f32 %v36, %v35
    %v38 = vmul.f32 %v37, %v36
    %v39 = vmul.f32 0.5, %v38
    %v40 = vsub.f32 1.5, %v39
    %v41 = vmul.f32 %v36, %v40
    %vm42 = vweird.f32 %v35
    %vm43 = vweird.f32 %v36
    %vm44 = vmor %vm42, %vm43
    %v45 = vsel %vm44, %v36, %v41
    %v46 = vmul.f32 %v21, %v45
    %v47 = vld [vmem:[%s2] sm:$0x1]
    %v48 = vunpack.c.l.bf16 %v47
    %v49 = vperm.slane %v48, 0
    %v50 = vmul.f32 %v46, %v49
    %v51 = vpack.c.bf16 %v50, %v50
    %52 = vst [vmem:[%s3] sm:$0xf] %v51
    // Predicated region
    $region14: #{decoder_layer_forward.13} parent=1 // pred_check
      _
    $region15: #{decoder_layer_forward.13} parent=1 // pred_check_branch
      %54 = sbr.rel (0) target = $region17
    $region16: #{decoder_layer_forward.13} parent=1 // pred_region
      _
    $region17: #{decoder_layer_forward.13} parent=1 // pred_fallthru
      _
    // Predicated region
    $region18: #{decoder_layer_forward.13} parent=1 // pred_check
      _
    $region19: #{decoder_layer_forward.13} parent=1 // pred_check_branch
      %56 = sbr.rel (0) target = $region21
    $region20: #{decoder_layer_forward.13} parent=1 // pred_region
      %58 = vsyncadd [#allocation3], 0
      %s60 = sshll.u32 [#allocation2], 4
      %s61 = int_to_ptr.vmem [resolvable:$true] %s60
      %s62 = sshll.u32 %s4, 4
      %s63 = int_to_ptr.hbm [resolvable:$true] %s62
      %65 = dma.vmem_to_hbm [thread:$0]  %s61, 64, %s63, [#allocation3]
    $region21: #{decoder_layer_forward.13} parent=1 // pred_fallthru
      _
    // Predicated region
    $region22: #{decoder_layer_forward.13} parent=1 // pred_check
      _
    $region23: #{decoder_layer_forward.13} parent=1 // pred_check_branch
      %67 = sbr.rel (0) target = $region25
    $region24: #{decoder_layer_forward.13} parent=1 // pred_region
      _
    $region25: #{decoder_layer_forward.13} parent=1 // pred_fallthru
      _
    // Predicated region
    $region26: #{decoder_layer_forward.13} parent=1 // pred_check
      _
    $region27: #{decoder_layer_forward.13} parent=1 // pred_check_branch
      %69 = sbr.rel (0) target = $region29
    $region28: #{decoder_layer_forward.13} parent=1 // pred_region
      %71 = dma.done [#allocation3], 64
    $region29: #{decoder_layer_forward.13} parent=1 // pred_fallthru
      _
    %72 = vsyncpa [#allocation3], 1

// kernel: decoder_layer_forward.11
$region0: #{decoder_layer_forward.11}
  #allocation0 [shape = 'u32[]', space=smem, size = 0x4, offset = 0x4, fixed_abs, tag = 'smem constant byte address 0x4 - core index']
  #allocation1 [shape = 'u32[72,128]{1,0:T(1,128)}', space=vmem, size = 0x9000, scoped, tag = 'internal scratch']
  #allocation2 [shape = 'f32[16,1]{1,0:T(8,128)}', space=vmem, size = 0x2000, scoped, tag = 'scratch operand']
  #allocation3 [shape = 'f32[16,1]{1,0:T(8,128)}', space=vmem, size = 0x2000, scoped, tag = 'scratch operand']
  #allocation4 [shape = 'f32[16,32]{1,0:T(8,128)}', space=vmem, size = 0x2000, scoped, tag = 'scratch operand']
  %s0 = inlined_call_operand.vmem [shape: bf16[4,8,32], index: 0, kind: input, shape index: {}]
  %s1 = inlined_call_operand.vmem [shape: bf16[2,8,32], index: 1, kind: input, shape index: {}]
  %s2 = inlined_call_operand.vmem [shape: bf16[2,8,32], index: 2, kind: input, shape index: {}]
  %s3 = inlined_call_operand.vmem [shape: bf16[4,8,32], index: 3, kind: output, shape index: {}]
  %s4 = sld [smem:[#allocation0]]
  $region57: #{decoder_layer_forward.11} parent=0
    _
  %s6 = ssub.s32 1, %s4
  %s7 = scalar_select 0, %s6, %s4
  loop: start=0, step=1, limit=4
  $region2: #{decoder_layer_forward.11} parent=0 // loop_pre_header
    _
  $region3: #{decoder_layer_forward.11} parent=0 // loop_header
    %s9 = sphi 0, %s13
    %p10 = scmp.ge.s32.totalorder %s9, 4
    %s16 = sphi 0, %s35
    %s17 = sphi 0, %s31
    %s18 = sphi 0, %s27
    %s19 = sphi 0, %s16
    %s20 = sphi 0, %s17
    %s21 = sphi 0, %s18
    %s22 = sphi 0, %s19
    %s23 = sphi 0, %s20
    %s24 = sphi 0, %s21
    %s40 = sphi 0, %s42
    %s43 = sphi 0, %s40
    %s44 = sphi 0, %s43
    %s60 = sphi 0, %s44
    %s72 = sphi 0, %s74
    %s75 = sphi 0, %s72
    %s76 = sphi 0, %s75
    %s92 = sphi 0, %s76
    %s104 = sphi 0, %s106
    %s107 = sphi 0, %s104
    %s108 = sphi 0, %s107
    %s124 = sphi 0, %s108
    %s132 = sphi 0, %s134
    %s135 = sphi 0, %s132
    %s136 = sphi 0, %s135
    %s152 = sphi 0, %s136
  $region4: #{decoder_layer_forward.11} parent=0 // loop_header_branch
    %12 = sbr.rel (%p10) target = $region8
  $region5: #{decoder_layer_forward.11} parent=0 // loop_body
    %s14 = ssub.s32 %s9, 1
    %s15 = ssub.s32 %s9, 2
    %s25 = sadd.s32 1, %s18
    %p26 = scmp.ge.s32.totalorder %s25, 1
    %s27 = scalar_select %p26, 0, %s25
    %s28 = sadd.s32 1, %s17
    %s29 = scalar_select %p26, %s28, %s17
    %p30 = scmp.ge.s32.totalorder %s29, 1
    %s31 = scalar_select %p30, 0, %s29
    %s32 = sadd.s32 1, %s16
    %s33 = scalar_select %p30, %s32, %s16
    %p34 = scmp.ge.s32.totalorder %s33, 2
    %s35 = scalar_select %p34, 0, %s33
    %s36 = ssub.s32 %s16, %s35
    %s37 = ssub.s32 %s17, %s31
    %s38 = sor.u32 %s36, %s37
    %p39 = scmp.eq.s32.totalorder %s38, 0
    %s41 = sadd.s32 %s40, 1
    %s42 = scalar_select %p39, %s40, %s41
    %p45 = pneg %p39
    %p46 = scmp.eq.s32.totalorder %s9, 1
    %p47 = por %p45, %p46
    %p48 = scmp.ne.s32.totalorder %s40, %s43
    %p49 = scmp.eq.s32.totalorder %s9, 0
    %p50 = por %p48, %p49
    %p51 = scmp.ne.s32.totalorder %s40, %s43
    %p52 = scmp.eq.s32.totalorder %s14, 1
    %p53 = por %p51, %p52
    %p54 = scmp.ne.s32.totalorder %s43, %s44
    %p55 = scmp.eq.s32.totalorder %s14, 0
    %p56 = por %p54, %p55
    %p57 = scmp.ne.s32.totalorder %s43, %s44
    %p58 = scmp.eq.s32.totalorder %s15, 1
    %p59 = por %p57, %p58
    %p61 = scmp.ne.s32.totalorder %s44, %s60
    %p62 = scmp.eq.s32.totalorder %s15, 0
    %p63 = por %p61, %p62
    %p64 = scmp.lt.s32.totalorder %s17, %s18
    %s65 = scalar_select %p64, %s17, %s18
    %p66 = scmp.lt.s32.totalorder %s31, %s27
    %s67 = scalar_select %p66, %s31, %s27
    %s68 = ssub.s32 %s16, %s35
    %s69 = ssub.s32 %s65, %s67
    %s70 = sor.u32 %s68, %s69
    %p71 = scmp.eq.s32.totalorder %s70, 0
    %s73 = sadd.s32 %s72, 1
    %s74 = scalar_select %p71, %s72, %s73
    %p77 = pneg %p71
    %p78 = scmp.eq.s32.totalorder %s9, 1
    %p79 = por %p77, %p78
    %p80 = scmp.ne.s32.totalorder %s72, %s75
    %p81 = scmp.eq.s32.totalorder %s9, 0
    %p82 = por %p80, %p81
    %p83 = scmp.ne.s32.totalorder %s72, %s75
    %p84 = scmp.eq.s32.totalorder %s14, 1
    %p85 = por %p83, %p84
    %p86 = scmp.ne.s32.totalorder %s75, %s76
    %p87 = scmp.eq.s32.totalorder %s14, 0
    %p88 = por %p86, %p87
    %p89 = scmp.ne.s32.totalorder %s75, %s76
    %p90 = scmp.eq.s32.totalorder %s15, 1
    %p91 = por %p89, %p90
    %p93 = scmp.ne.s32.totalorder %s76, %s92
    %p94 = scmp.eq.s32.totalorder %s15, 0
    %p95 = por %p93, %p94
    %p96 = scmp.lt.s32.totalorder %s17, %s18
    %s97 = scalar_select %p96, %s17, %s18
    %p98 = scmp.lt.s32.totalorder %s31, %s27
    %s99 = scalar_select %p98, %s31, %s27
    %s100 = ssub.s32 %s16, %s35
    %s101 = ssub.s32 %s97, %s99
    %s102 = sor.u32 %s100, %s101
    %p103 = scmp.eq.s32.totalorder %s102, 0
    %s105 = sadd.s32 %s104, 1
    %s106 = scalar_select %p103, %s104, %s105
    %p109 = pneg %p103
    %p110 = scmp.eq.s32.totalorder %s9, 1
    %p111 = por %p109, %p110
    %p112 = scmp.ne.s32.totalorder %s104, %s107
    %p113 = scmp.eq.s32.totalorder %s9, 0
    %p114 = por %p112, %p113
    %p115 = scmp.ne.s32.totalorder %s104, %s107
    %p116 = scmp.eq.s32.totalorder %s14, 1
    %p117 = por %p115, %p116
    %p118 = scmp.ne.s32.totalorder %s107, %s108
    %p119 = scmp.eq.s32.totalorder %s14, 0
    %p120 = por %p118, %p119
    %p121 = scmp.ne.s32.totalorder %s107, %s108
    %p122 = scmp.eq.s32.totalorder %s15, 1
    %p123 = por %p121, %p122
    %p125 = scmp.ne.s32.totalorder %s108, %s124
    %p126 = scmp.eq.s32.totalorder %s15, 0
    %p127 = por %p125, %p126
    %s128 = ssub.s32 %s16, %s35
    %s129 = ssub.s32 %s17, %s31
    %s130 = sor.u32 %s128, %s129
    %p131 = scmp.eq.s32.totalorder %s130, 0
    %s133 = sadd.s32 %s132, 1
    %s134 = scalar_select %p131, %s132, %s133
    %p137 = pneg %p131
    %p138 = scmp.eq.s32.totalorder %s9, 1
    %p139 = por %p137, %p138
    %p140 = scmp.ne.s32.totalorder %s132, %s135
    %p141 = scmp.eq.s32.totalorder %s9, 0
    %p142 = por %p140, %p141
    %p143 = scmp.ne.s32.totalorder %s132, %s135
    %p144 = scmp.eq.s32.totalorder %s14, 1
    %p145 = por %p143, %p144
    %p146 = scmp.ne.s32.totalorder %s135, %s136
    %p147 = scmp.eq.s32.totalorder %s14, 0
    %p148 = por %p146, %p147
    %p149 = scmp.ne.s32.totalorder %s135, %s136
    %p150 = scmp.eq.s32.totalorder %s15, 1
    %p151 = por %p149, %p150
    %p153 = scmp.ne.s32.totalorder %s136, %s152
    %p154 = scmp.eq.s32.totalorder %s15, 0
    %p155 = por %p153, %p154
    %p156 = scmp.le.s32.totalorder 1, %s9
    %p157 = scmp.lt.s32.totalorder %s9, 3
    %p158 = pnand %p156, %p157
    %p159 = pneg %p158
    // Predicated region
    $region9: #{decoder_layer_forward.11} parent=5 // pred_check
      _
    $region10: #{decoder_layer_forward.11} parent=5 // pred_check_branch
      %161 = sbr.rel (%p158) target = $region12
    $region11: #{decoder_layer_forward.11} parent=5 // pred_region
      %s162 = ssub.s32 %s9, 1
    $region12: #{decoder_layer_forward.11} parent=5 // pred_fallthru
      _
    %p163 = scmp.lt.s32.totalorder %s9, 2
    // Predicated region
    $region13: #{decoder_layer_forward.11} parent=5 // pred_check
      %p164 = pneg %p163
    $region14: #{decoder_layer_forward.11} parent=5 // pred_check_branch
      %166 = sbr.rel (%p164) target = $region16
    $region15: #{decoder_layer_forward.11} parent=5 // pred_region
      // Predicated region
      $region17: #{decoder_layer_forward.11} parent=15 // pred_check
        %p167 = pneg %p50
      $region18: #{decoder_layer_forward.11} parent=15 // pred_check_branch
        %169 = sbr.rel (%p167) target = $region20
      $region19: #{decoder_layer_forward.11} parent=15 // pred_region
        %s170 = smul.u32 2, %s16
        %p171 = scmp.lt.s32.totalorder %s170, 3
        %s172 = scalar_select %p171, %s170, 3
        %p173 = scmp.lt.s32.totalorder %s17, 0
        %s174 = scalar_select %p173, %s17, 0
        %s175 = sadd.s32 %s174, %s172
        %s176 = smul.addr %s175, 4
        %s177 = scalar_lea.vmem %s0, %s176
        %s178 = smul.u32 2, %s16
      $region20: #{decoder_layer_forward.11} parent=15 // pred_fallthru
        _
      // Predicated region
      $region21: #{decoder_layer_forward.11} parent=15 // pred_check
        %p179 = pneg %p82
      $region22: #{decoder_layer_forward.11} parent=15 // pred_check_branch
        %181 = sbr.rel (%p179) target = $region24
      $region23: #{decoder_layer_forward.11} parent=15 // pred_region
        %p182 = scmp.lt.s32.totalorder %s17, %s18
        %s183 = scalar_select %p182, %s17, %s18
        %p184 = scmp.lt.s32.totalorder %s16, 1
        %s185 = scalar_select %p184, %s16, 1
        %p186 = scmp.lt.s32.totalorder %s183, 0
        %s187 = scalar_select %p186, %s183, 0
        %s188 = sadd.s32 %s187, %s185
        %s189 = smul.addr %s188, 4
        %s190 = scalar_lea.vmem %s1, %s189
        %p191 = scmp.lt.s32.totalorder %s17, %s18
        %s192 = scalar_select %p191, %s17, %s18
      $region24: #{decoder_layer_forward.11} parent=15 // pred_fallthru
        _
      // Predicated region
      $region25: #{decoder_layer_forward.11} parent=15 // pred_check
        %p193 = pneg %p114
      $region26: #{decoder_layer_forward.11} parent=15 // pred_check_branch
        %195 = sbr.rel (%p193) target = $region28
      $region27: #{decoder_layer_forward.11} parent=15 // pred_region
        %p196 = scmp.lt.s32.totalorder %s17, %s18
        %s197 = scalar_select %p196, %s17, %s18
        %p198 = scmp.lt.s32.totalorder %s16, 1
        %s199 = scalar_select %p198, %s16, 1
        %p200 = scmp.lt.s32.totalorder %s197, 0
        %s201 = scalar_select %p200, %s197, 0
        %s202 = sadd.s32 %s201, %s199
        %s203 = smul.addr %s202, 4
        %s204 = scalar_lea.vmem %s2, %s203
        %p205 = scmp.lt.s32.totalorder %s17, %s18
        %s206 = scalar_select %p205, %s17, %s18
      $region28: #{decoder_layer_forward.11} parent=15 // pred_fallthru
        _
    $region16: #{decoder_layer_forward.11} parent=5 // pred_fallthru
      _
    %p207 = scmp.le.s32.totalorder 1, %s9
    %p208 = scmp.lt.s32.totalorder %s9, 3
    %p209 = pnand %p207, %p208
    %p210 = pneg %p209
    // Predicated region
    $region29: #{decoder_layer_forward.11} parent=5 // pred_check
      _
    $region30: #{decoder_layer_forward.11} parent=5 // pred_check_branch
      %212 = sbr.rel (%p209) target = $region32
    $region31: #{decoder_layer_forward.11} parent=5 // pred_region
      %s213 = ssub.s32 %s9, 1
      %s214 = smul.u32 2, %s19
      %p215 = scmp.lt.s32.totalorder %s214, 3
      %s216 = scalar_select %p215, %s214, 3
      %p217 = scmp.lt.s32.totalorder %s20, 0
      %s218 = scalar_select %p217, %s20, 0
      %s219 = sadd.s32 %s218, %s216
      %s220 = smul.addr %s219, 4
      %s221 = scalar_lea.vmem %s0, %s220
      %p222 = pneg %p56
      %p223 = pneg %p53
      %p224 = scmp.lt.s32.totalorder %s20, %s21
      %s225 = scalar_select %p224, %s20, %s21
      %p226 = scmp.lt.s32.totalorder %s19, 1
      %s227 = scalar_select %p226, %s19, 1
      %p228 = scmp.lt.s32.totalorder %s225, 0
      %s229 = scalar_select %p228, %s225, 0
      %s230 = sadd.s32 %s229, %s227
      %s231 = smul.addr %s230, 4
      %s232 = scalar_lea.vmem %s1, %s231
      %p233 = pneg %p88
      %p234 = pneg %p85
      %p235 = scmp.lt.s32.totalorder %s20, %s21
      %s236 = scalar_select %p235, %s20, %s21
      %p237 = scmp.lt.s32.totalorder %s19, 1
      %s238 = scalar_select %p237, %s19, 1
      %p239 = scmp.lt.s32.totalorder %s236, 0
      %s240 = scalar_select %p239, %s236, 0
      %s241 = sadd.s32 %s240, %s238
      %s242 = smul.addr %s241, 4
      %s243 = scalar_lea.vmem %s2, %s242
      %p244 = pneg %p120
      %p245 = pneg %p117
      %p246 = pneg %p148
      %p247 = pneg %p145
      %s248 = smul.u32 2, %s19
      %p249 = scmp.lt.s32.totalorder %s248, 3
      %s250 = scalar_select %p249, %s248, 3
      %p251 = scmp.lt.s32.totalorder %s20, 0
      %s252 = scalar_select %p251, %s20, 0
      %s253 = sadd.s32 %s252, %s250
      %s254 = smul.addr %s253, 4
      %s255 = scalar_lea.vmem %s3, %s254
      %s256 = smul.u32 2, %s19
      %p257 = scmp.lt.s32.totalorder %s256, 3
      %s258 = scalar_select %p257, %s256, 3
      %p259 = scmp.lt.s32.totalorder %s20, 0
      %s260 = scalar_select %p259, %s20, 0
      %s261 = sadd.s32 %s260, %s258
      %s262 = smul.addr %s261, 4
      %s263 = scalar_lea.vmem %s0, %s262
      %s264 = smul.u32 2, %s19
      %p265 = scmp.lt.s32.totalorder %s20, %s21
      %s266 = scalar_select %p265, %s20, %s21
      %p267 = scmp.lt.s32.totalorder %s19, 1
      %s268 = scalar_select %p267, %s19, 1
      %p269 = scmp.lt.s32.totalorder %s266, 0
      %s270 = scalar_select %p269, %s266, 0
      %s271 = sadd.s32 %s270, %s268
      %s272 = smul.addr %s271, 4
      %s273 = scalar_lea.vmem %s1, %s272
      %p274 = scmp.lt.s32.totalorder %s20, %s21
      %s275 = scalar_select %p274, %s20, %s21
      %p276 = scmp.lt.s32.totalorder %s20, %s21
      %s277 = scalar_select %p276, %s20, %s21
      %p278 = scmp.lt.s32.totalorder %s19, 1
      %s279 = scalar_select %p278, %s19, 1
      %p280 = scmp.lt.s32.totalorder %s277, 0
      %s281 = scalar_select %p280, %s277, 0
      %s282 = sadd.s32 %s281, %s279
      %s283 = smul.addr %s282, 4
      %s284 = scalar_lea.vmem %s2, %s283
      %p285 = scmp.lt.s32.totalorder %s20, %s21
      %s286 = scalar_select %p285, %s20, %s21
      %s287 = smul.u32 2, %s19
      %p288 = scmp.lt.s32.totalorder %s287, 3
      %s289 = scalar_select %p288, %s287, 3
      %p290 = scmp.lt.s32.totalorder %s20, 0
      %s291 = scalar_select %p290, %s20, 0
      %s292 = sadd.s32 %s291, %s289
      %s293 = smul.addr %s292, 4
      %s294 = scalar_lea.vmem %s3, %s293
      %s295 = smul.u32 2, %s19
      %p297 = scmp.eq.s32.totalorder %s21, 0
      // Predicated region
      $region33: #{decoder_layer_forward.11} parent=31 // pred_check
        %p298 = pneg %p297
      $region34: #{decoder_layer_forward.11} parent=31 // pred_check_branch
        %300 = sbr.rel (%p298) target = $region36
      $region35: #{decoder_layer_forward.11} parent=31 // pred_region
        %vm301 = vcmask 7168
        %302 = vst.msk [vmem:[#allocation2] sm:$0xff] %vm301, -1e+30
        %303 = vst.msk [vmem:[#allocation2 + $0x8] sm:$0xff] %vm301, -1e+30
        %304 = vst.msk [vmem:[#allocation3] sm:$0xff] %vm301, 0.0
        %305 = vst.msk [vmem:[#allocation3 + $0x8] sm:$0xff] %vm301, 0.0
        %vm306 = vcmask 261120
        %307 = vst.msk [vmem:[#allocation4] sm:$0xff] %vm306, 0.0
        %308 = vst.msk [vmem:[#allocation4 + $0x8] sm:$0xff] %vm306, 0.0
      $region36: #{decoder_layer_forward.11} parent=31 // pred_fallthru
        _
      %p309 = scmp.le.s32.totalorder %s21, %s20
      // Predicated region
      $region37: #{decoder_layer_forward.11} parent=31 // pred_check
        %p310 = pneg %p309
      $region38: #{decoder_layer_forward.11} parent=31 // pred_check_branch
        %312 = sbr.rel (%p310) target = $region40
      $region39: #{decoder_layer_forward.11} parent=31 // pred_region
        %v313 = vld [vmem:[%s263] sm:$0xf]
        %v314 = vld [vmem:[%s263 + $0x4] sm:$0xf]
        %v315 = vld [vmem:[%s273] sm:$0xf]
        %v316 = vld [vmem:[%s284] sm:$0xf]
        %v319 = vunpack.c.l.b16 %v313
        %v320 = vunpack.c.l.b16 %v314
        %v321 = vpack.c.b16 %v320, %v319
        %vm322 = vcmask 261120
        %v324 = vsel %vm322, %v321, 0
        %v327 = vsel %vm322, %v315, 0
        %329 = vmatpush.bf16.xpose.msra.mxu0 0
        %330 = vmatpush.bf16.xpose.msra.mxu0 0
        %331 = vmatpush.bf16.xpose.msra.mxu0 0
        %332 = vmatpush.bf16.xpose.msra.mxu0 0
        %333 = vmatpush.bf16.xpose.msra.mxu0 0
        %334 = vmatpush.bf16.xpose.msra.mxu0 0
        %335 = vmatpush.bf16.xpose.msra.mxu0 0
        %336 = vmatpush.bf16.xpose.msra.mxu0 %v327
        %337 = vmatmul.bf16.gmra.mxu0 %v324
        %v338 = vpop.f32.mrf.mxu0
        %v339 = vadd.f32 0.0, %v338
        %v340 = vpop.f32.mrf.mxu0
        %v341 = vadd.f32 0.0, %v340
        %342 = vdwg.mxu0
        %v343 = vmul.f32 %v339, 0.17677669
        %v344 = vmul.f32 %v341, 0.17677669
        %v345 = vlaneseq
        %v346 = vshrl.u32 %v345, 7
        %v347 = vlaneseq
        %v348 = vand.u32 %v347, 127
        %s349 = smul.u32 %s21, 8
        %v350 = vstv %s349
        %v351 = vadd.s32 %v350, %v348
        %s352 = smul.u32 %s20, 8
        %v353 = vstv %s352
        %v354 = vadd.s32 %v353, %v346
        %vm355 = vcmp.le.s32.totalorder %v351, %v354
        %vm356 = vcmp.lt.s32.totalorder %v351, 8
        %vm357 = vmand %vm355, %vm356
        %v358 = vsel %vm357, 1, 0
        %vm359 = vcmp.eq.s32.totalorder %v358, 1
        %v360 = vsel %vm359, %v343, -1e+30
        %v361 = vsel %vm359, %v344, -1e+30
        %v362 = vld [vmem:[#allocation2] sm:$0xff]
        %v363 = vld [vmem:[#allocation2 + $0x8] sm:$0xff]
        %vm364 = vcmask 64512
        %v365 = vsel %vm364, %v360, -inf
        %366 = vmax.xlane.f32.xlu0 %v365
        %v367 = vpop.xlane.xlu0 %366
        %v368 = vsel %vm364, %v361, -inf
        %369 = vmax.xlane.f32.xlu0 %v368
        %v370 = vpop.xlane.xlu0 %369
        %v371 = vmax.f32 %v362, %v367
        %v372 = vmax.f32 %v363, %v370
        %v373 = vsub.f32 %v362, %v371
        %v374 = vsub.f32 %v363, %v372
        %v375 = vmul.f32 %v373, 1.442695
        %v376 = vpow.pop %v375
        %v377 = vmul.f32 %v374, 1.442695
        %v378 = vpow.pop %v377
        %380 = vset.pattern.permute.xlu0 0
        %381 = vperm.xlu0 %380, %v371
        %v382 = vpop.permute.xlu0 %381
        %385 = vset.pattern.permute.xlu0 0
        %386 = vperm.xlu0 %385, %v372
        %v387 = vpop.permute.xlu0 %386
        %v389 = vsub.f32 %v360, %v382
        %v390 = vsub.f32 %v361, %v387
        %v391 = vmul.f32 %v389, 1.442695
        %v392 = vpow.pop %v391
        %v393 = vmul.f32 %v390, 1.442695
        %v394 = vpow.pop %v393
        %v395 = vld [vmem:[#allocation3] sm:$0xff]
        %v396 = vld [vmem:[#allocation3 + $0x8] sm:$0xff]
        %v397 = vmul.f32 %v376, %v395
        %v398 = vmul.f32 %v378, %v396
        %v399 = vsel %vm364, %v392, 0.0
        %400 = vadd.xlane.f32.xlu0 %v399
        %v401 = vpop.xlane.xlu0 %400
        %v402 = vsel %vm364, %v394, 0.0
        %403 = vadd.xlane.f32.xlu0 %v402
        %v404 = vpop.xlane.xlu0 %403
        %v405 = vadd.f32 %v397, %v401
        %v406 = vadd.f32 %v398, %v404
        %vm407 = vcmask 7168
        %408 = vst.msk [vmem:[#allocation3] sm:$0xff] %vm407, %v405
        %409 = vst.msk [vmem:[#allocation3 + $0x8] sm:$0xff] %vm407, %v406
        %v410 = vld [vmem:[#allocation4] sm:$0xff]
        %v411 = vld [vmem:[#allocation4 + $0x8] sm:$0xff]
        %413 = vset.pattern.permute.xlu0 0
        %414 = vperm.xlu0 %413, %v376
        %v415 = vpop.permute.xlu0 %414
        %418 = vset.pattern.permute.xlu0 0
        %419 = vperm.xlu0 %418, %v378
        %v420 = vpop.permute.xlu0 %419
        %v422 = vmul.f32 %v415, %v410
        %v423 = vmul.f32 %v420, %v411
        %v424 = vpack.c.bf16 %v394, %v392
        %v426 = vsel %vm364, %v424, 0
        %vm428 = vcmask 1043456
        %v430 = vsel %vm428, %v316, 0
        %432 = vmatpush.bf16.msra.mxu0 0
        %433 = vmatpush.bf16.msra.mxu0 0
        %434 = vmatpush.bf16.msra.mxu0 0
        %435 = vmatpush.bf16.msra.mxu0 0
        %436 = vmatpush.bf16.msra.mxu0 0
        %437 = vmatpush.bf16.msra.mxu0 0
        %438 = vmatpush.bf16.msra.mxu0 0
        %439 = vmatpush.bf16.msra.mxu0 %v430
        %440 = vmatmul.bf16.gmra.mxu0 %v426
        %v441 = vpop.f32.mrf.mxu0
        %v442 = vadd.f32 0.0, %v441
        %v443 = vpop.f32.mrf.mxu0
        %v444 = vadd.f32 0.0, %v443
        %445 = vdwg.mxu0
        %v446 = vadd.f32 %v422, %v442
        %v447 = vadd.f32 %v423, %v444
        %448 = vst.msk [vmem:[#allocation4] sm:$0xff] %vm322, %v446
        %449 = vst.msk [vmem:[#allocation4 + $0x8] sm:$0xff] %vm322, %v447
        %450 = vst.msk [vmem:[#allocation2] sm:$0xff] %vm407, %v371
        %451 = vst.msk [vmem:[#allocation2 + $0x8] sm:$0xff] %vm407, %v372
      $region40: #{decoder_layer_forward.11} parent=31 // pred_fallthru
        _
      // Predicated region
      $region41: #{decoder_layer_forward.11} parent=31 // pred_check
        %p452 = pneg %p297
      $region42: #{decoder_layer_forward.11} parent=31 // pred_check_branch
        %454 = sbr.rel (%p452) target = $region44
      $region43: #{decoder_layer_forward.11} parent=31 // pred_region
        %v455 = vld [vmem:[#allocation4] sm:$0xff]
        %v456 = vld [vmem:[#allocation4 + $0x8] sm:$0xff]
        %v457 = vld [vmem:[#allocation3] sm:$0xff]
        %v458 = vld [vmem:[#allocation3 + $0x8] sm:$0xff]
        %v459 = vrcp.pop %v457
        %v460 = vrcp.pop %v458
        %462 = vset.pattern.permute.xlu0 0
        %463 = vperm.xlu0 %462, %v459
        %v464 = vpop.permute.xlu0 %463
        %467 = vset.pattern.permute.xlu0 0
        %468 = vperm.xlu0 %467, %v460
        %v469 = vpop.permute.xlu0 %468
        %v471 = vmul.f32 %v455, %v464
        %v472 = vmul.f32 %v456, %v469
        %v473 = vpack.c.bf16 %v471, %v471
        %v474 = vpack.c.bf16 %v472, %v472
        %vm475 = vcmask 257024
        %476 = vst.msk [vmem:[%s294] sm:$0xf] %vm475, %v473
        %477 = vst.msk [vmem:[%s294 + $0x4] sm:$0xf] %vm475, %v474
      $region44: #{decoder_layer_forward.11} parent=31 // pred_fallthru
        _
      %s478 = smul.u32 2, %s19
      %p479 = scmp.lt.s32.totalorder %s478, 3
      %s480 = scalar_select %p479, %s478, 3
      %p481 = scmp.lt.s32.totalorder %s20, 0
      %s482 = scalar_select %p481, %s20, 0
      %s483 = sadd.s32 %s482, %s480
      %s484 = smul.addr %s483, 4
      %s485 = scalar_lea.vmem %s3, %s484
      // Predicated region
      $region45: #{decoder_layer_forward.11} parent=31 // pred_check
        %p486 = pneg %p145
      $region46: #{decoder_layer_forward.11} parent=31 // pred_check_branch
        %488 = sbr.rel (%p486) target = $region48
      $region47: #{decoder_layer_forward.11} parent=31 // pred_region
        %s489 = smul.u32 2, %s19
      $region48: #{decoder_layer_forward.11} parent=31 // pred_fallthru
        _
    $region32: #{decoder_layer_forward.11} parent=5 // pred_fallthru
      _
    %p490 = scmp.le.s32.totalorder 2, %s9
    // Predicated region
    $region49: #{decoder_layer_forward.11} parent=5 // pred_check
      %p491 = pneg %p490
    $region50: #{decoder_layer_forward.11} parent=5 // pred_check_branch
      %493 = sbr.rel (%p491) target = $region52
    $region51: #{decoder_layer_forward.11} parent=5 // pred_region
      %s494 = ssub.s32 %s9, 2
      // Predicated region
      $region53: #{decoder_layer_forward.11} parent=51 // pred_check
        %p495 = pneg %p151
      $region54: #{decoder_layer_forward.11} parent=51 // pred_check_branch
        %497 = sbr.rel (%p495) target = $region56
      $region55: #{decoder_layer_forward.11} parent=51 // pred_region
        %s498 = smul.u32 2, %s22
        %p499 = scmp.lt.s32.totalorder %s498, 3
        %s500 = scalar_select %p499, %s498, 3
        %p501 = scmp.lt.s32.totalorder %s23, 0
        %s502 = scalar_select %p501, %s23, 0
        %s503 = sadd.s32 %s502, %s500
        %s504 = smul.addr %s503, 4
        %s505 = scalar_lea.vmem %s3, %s504
      $region56: #{decoder_layer_forward.11} parent=51 // pred_fallthru
        _
    $region52: #{decoder_layer_forward.11} parent=5 // pred_fallthru
      _
  $region6: #{decoder_layer_forward.11} parent=0 // loop_footer
    %s13 = sadd.s32 1, %s9
  $region7: #{decoder_layer_forward.11} parent=0 // loop_footer_branch
    %8 = sbr.rel target = $region3
  $region8: #{decoder_layer_forward.11} parent=0 // loop_exit
    _

// kernel: decoder_layer_forward.15
$region0: #{decoder_layer_forward.15}
  #allocation0 [shape = 'u32[]', space=smem, size = 0x4, offset = 0x4, fixed_abs, tag = 'smem constant byte address 0x4 - core index']
  #allocation1 [shape = 'u32[72,128]{1,0:T(1,128)}', space=vmem, size = 0x9000, scoped, tag = 'internal scratch']
  #allocation2 [shape = 'f32[8,128]{1,0:T(8,128)}', space=vmem, size = 0x1000, scoped, tag = 'scratch operand']
  #allocation3 [shape = 's32[1]{0}', space=sflag, size = 0x4, scoped, tag = 'scoped memory for decoder_layer_forward.15']
  #allocation4 [shape = 'u8[512]{0}', space=smem, size = 0x200, scoped, tag = 'prefetched SMEM operand 0']
  #allocation5 [shape = 's32[1]{0:T(128)S(6)}', space=smem, size = 0x200, scoped, tag = 'prefetched SMEM operand 1']
  %s0 = inlined_call_operand.vmem [shape: s32[12], index: 0, kind: input, shape index: {}]
  %s1 = inlined_call_operand.<no memory space> [shape: s32[1], index: 1, kind: input, shape index: {}]
  %s2 = inlined_call_operand.vmem [shape: bf16[96,128], index: 2, kind: input, shape index: {}]
  %s3 = inlined_call_operand.vmem [shape: f32[96,1], index: 3, kind: input, shape index: {}]
  %s4 = inlined_call_operand.vmem [shape: bf16[9,128,128], index: 4, kind: input, shape index: {}]
  %s5 = inlined_call_operand.vmem [shape: bf16[9,128,128], index: 5, kind: input, shape index: {}]
  %s6 = inlined_call_operand.vmem [shape: bf16[9,128,128], index: 6, kind: input, shape index: {}]
  %s7 = inlined_call_operand.vmem [shape: bf16[96,128], index: 7, kind: output, shape index: {}]
  %s8 = sld [smem:[#allocation0]]
  $region65: #{decoder_layer_forward.15} parent=0
    _
  %s10 = ssub.s32 1, %s8
  %s11 = scalar_select 0, %s10, %s8
  %s13 = sshll.u32 %s0, 4
  %s14 = int_to_ptr.vmem [resolvable:$true] %s13
  %16 = dma.vmem_to_smem %s14, 16, [#allocation4], [#allocation3]
  %17 = sst [smem:[#allocation5]] %s1
  %19 = dma.done [#allocation3], 16
  %20 = sfence
  loop: start=0, step=1, limit=14
  $region2: #{decoder_layer_forward.15} parent=0 // loop_pre_header
    _
  $region3: #{decoder_layer_forward.15} parent=0 // loop_header
    %s22 = sphi 0, %s26
    %p23 = scmp.ge.s32.totalorder %s22, 14
    %s29 = sphi 0, %s41
    %s30 = sphi 0, %s37
    %s31 = sphi 0, %s29
    %s32 = sphi 0, %s30
    %s33 = sphi 0, %s31
    %s34 = sphi 0, %s32
    %s44 = sphi 0, %s46
    %s47 = sphi 0, %s44
    %s48 = sphi 0, %s47
    %s64 = sphi 0, %s48
    %s70 = sphi 0, %s72
    %s73 = sphi 0, %s70
    %s74 = sphi 0, %s73
    %s90 = sphi 0, %s74
    %s100 = sphi 0, %s102
    %s103 = sphi 0, %s100
    %s104 = sphi 0, %s103
    %s120 = sphi 0, %s104
    %s130 = sphi 0, %s132
    %s133 = sphi 0, %s130
    %s134 = sphi 0, %s133
    %s150 = sphi 0, %s134
    %s160 = sphi 0, %s162
    %s163 = sphi 0, %s160
    %s164 = sphi 0, %s163
    %s180 = sphi 0, %s164
    %s186 = sphi 0, %s188
    %s189 = sphi 0, %s186
    %s190 = sphi 0, %s189
    %s206 = sphi 0, %s190
  $region4: #{decoder_layer_forward.15} parent=0 // loop_header_branch
    %25 = sbr.rel (%p23) target = $region8
  $region5: #{decoder_layer_forward.15} parent=0 // loop_body
    %s27 = ssub.s32 %s22, 1
    %s28 = ssub.s32 %s22, 2
    %s35 = sadd.s32 1, %s30
    %p36 = scmp.ge.s32.totalorder %s35, 1
    %s37 = scalar_select %p36, 0, %s35
    %s38 = sadd.s32 1, %s29
    %s39 = scalar_select %p36, %s38, %s29
    %p40 = scmp.ge.s32.totalorder %s39, 12
    %s41 = scalar_select %p40, 0, %s39
    %s42 = ssub.s32 %s29, %s41
    %p43 = scmp.eq.s32.totalorder %s42, 0
    %s45 = sadd.s32 %s44, 1
    %s46 = scalar_select %p43, %s44, %s45
    %p49 = pneg %p43
    %p50 = scmp.eq.s32.totalorder %s22, 11
    %p51 = por %p49, %p50
    %p52 = scmp.ne.s32.totalorder %s44, %s47
    %p53 = scmp.eq.s32.totalorder %s22, 0
    %p54 = por %p52, %p53
    %p55 = scmp.ne.s32.totalorder %s44, %s47
    %p56 = scmp.eq.s32.totalorder %s27, 11
    %p57 = por %p55, %p56
    %p58 = scmp.ne.s32.totalorder %s47, %s48
    %p59 = scmp.eq.s32.totalorder %s27, 0
    %p60 = por %p58, %p59
    %p61 = scmp.ne.s32.totalorder %s47, %s48
    %p62 = scmp.eq.s32.totalorder %s28, 11
    %p63 = por %p61, %p62
    %p65 = scmp.ne.s32.totalorder %s48, %s64
    %p66 = scmp.eq.s32.totalorder %s28, 0
    %p67 = por %p65, %p66
    %s68 = ssub.s32 %s29, %s41
    %p69 = scmp.eq.s32.totalorder %s68, 0
    %s71 = sadd.s32 %s70, 1
    %s72 = scalar_select %p69, %s70, %s71
    %p75 = pneg %p69
    %p76 = scmp.eq.s32.totalorder %s22, 11
    %p77 = por %p75, %p76
    %p78 = scmp.ne.s32.totalorder %s70, %s73
    %p79 = scmp.eq.s32.totalorder %s22, 0
    %p80 = por %p78, %p79
    %p81 = scmp.ne.s32.totalorder %s70, %s73
    %p82 = scmp.eq.s32.totalorder %s27, 11
    %p83 = por %p81, %p82
    %p84 = scmp.ne.s32.totalorder %s73, %s74
    %p85 = scmp.eq.s32.totalorder %s27, 0
    %p86 = por %p84, %p85
    %p87 = scmp.ne.s32.totalorder %s73, %s74
    %p88 = scmp.eq.s32.totalorder %s28, 11
    %p89 = por %p87, %p88
    %p91 = scmp.ne.s32.totalorder %s74, %s90
    %p92 = scmp.eq.s32.totalorder %s28, 0
    %p93 = por %p91, %p92
    %s94 = sld [smem:[#allocation4 + %s29]]
    %s95 = sld [smem:[#allocation4 + %s41]]
    %s96 = ssub.s32 %s94, %s95
    %s97 = ssub.s32 %s30, %s37
    %s98 = sor.u32 %s96, %s97
    %p99 = scmp.eq.s32.totalorder %s98, 0
    %s101 = sadd.s32 %s100, 1
    %s102 = scalar_select %p99, %s100, %s101
    %p105 = pneg %p99
    %p106 = scmp.eq.s32.totalorder %s22, 11
    %p107 = por %p105, %p106
    %p108 = scmp.ne.s32.totalorder %s100, %s103
    %p109 = scmp.eq.s32.totalorder %s22, 0
    %p110 = por %p108, %p109
    %p111 = scmp.ne.s32.totalorder %s100, %s103
    %p112 = scmp.eq.s32.totalorder %s27, 11
    %p113 = por %p111, %p112
    %p114 = scmp.ne.s32.totalorder %s103, %s104
    %p115 = scmp.eq.s32.totalorder %s27, 0
    %p116 = por %p114, %p115
    %p117 = scmp.ne.s32.totalorder %s103, %s104
    %p118 = scmp.eq.s32.totalorder %s28, 11
    %p119 = por %p117, %p118
    %p121 = scmp.ne.s32.totalorder %s104, %s120
    %p122 = scmp.eq.s32.totalorder %s28, 0
    %p123 = por %p121, %p122
    %s124 = sld [smem:[#allocation4 + %s29]]
    %s125 = sld [smem:[#allocation4 + %s41]]
    %s126 = ssub.s32 %s124, %s125
    %s127 = ssub.s32 %s30, %s37
    %s128 = sor.u32 %s126, %s127
    %p129 = scmp.eq.s32.totalorder %s128, 0
    %s131 = sadd.s32 %s130, 1
    %s132 = scalar_select %p129, %s130, %s131
    %p135 = pneg %p129
    %p136 = scmp.eq.s32.totalorder %s22, 11
    %p137 = por %p135, %p136
    %p138 = scmp.ne.s32.totalorder %s130, %s133
    %p139 = scmp.eq.s32.totalorder %s22, 0
    %p140 = por %p138, %p139
    %p141 = scmp.ne.s32.totalorder %s130, %s133
    %p142 = scmp.eq.s32.totalorder %s27, 11
    %p143 = por %p141, %p142
    %p144 = scmp.ne.s32.totalorder %s133, %s134
    %p145 = scmp.eq.s32.totalorder %s27, 0
    %p146 = por %p144, %p145
    %p147 = scmp.ne.s32.totalorder %s133, %s134
    %p148 = scmp.eq.s32.totalorder %s28, 11
    %p149 = por %p147, %p148
    %p151 = scmp.ne.s32.totalorder %s134, %s150
    %p152 = scmp.eq.s32.totalorder %s28, 0
    %p153 = por %p151, %p152
    %s154 = sld [smem:[#allocation4 + %s29]]
    %s155 = sld [smem:[#allocation4 + %s41]]
    %s156 = ssub.s32 %s154, %s155
    %s157 = ssub.s32 %s30, %s37
    %s158 = sor.u32 %s156, %s157
    %p159 = scmp.eq.s32.totalorder %s158, 0
    %s161 = sadd.s32 %s160, 1
    %s162 = scalar_select %p159, %s160, %s161
    %p165 = pneg %p159
    %p166 = scmp.eq.s32.totalorder %s22, 11
    %p167 = por %p165, %p166
    %p168 = scmp.ne.s32.totalorder %s160, %s163
    %p169 = scmp.eq.s32.totalorder %s22, 0
    %p170 = por %p168, %p169
    %p171 = scmp.ne.s32.totalorder %s160, %s163
    %p172 = scmp.eq.s32.totalorder %s27, 11
    %p173 = por %p171, %p172
    %p174 = scmp.ne.s32.totalorder %s163, %s164
    %p175 = scmp.eq.s32.totalorder %s27, 0
    %p176 = por %p174, %p175
    %p177 = scmp.ne.s32.totalorder %s163, %s164
    %p178 = scmp.eq.s32.totalorder %s28, 11
    %p179 = por %p177, %p178
    %p181 = scmp.ne.s32.totalorder %s164, %s180
    %p182 = scmp.eq.s32.totalorder %s28, 0
    %p183 = por %p181, %p182
    %s184 = ssub.s32 %s29, %s41
    %p185 = scmp.eq.s32.totalorder %s184, 0
    %s187 = sadd.s32 %s186, 1
    %s188 = scalar_select %p185, %s186, %s187
    %p191 = pneg %p185
    %p192 = scmp.eq.s32.totalorder %s22, 11
    %p193 = por %p191, %p192
    %p194 = scmp.ne.s32.totalorder %s186, %s189
    %p195 = scmp.eq.s32.totalorder %s22, 0
    %p196 = por %p194, %p195
    %p197 = scmp.ne.s32.totalorder %s186, %s189
    %p198 = scmp.eq.s32.totalorder %s27, 11
    %p199 = por %p197, %p198
    %p200 = scmp.ne.s32.totalorder %s189, %s190
    %p201 = scmp.eq.s32.totalorder %s27, 0
    %p202 = por %p200, %p201
    %p203 = scmp.ne.s32.totalorder %s189, %s190
    %p204 = scmp.eq.s32.totalorder %s28, 11
    %p205 = por %p203, %p204
    %p207 = scmp.ne.s32.totalorder %s190, %s206
    %p208 = scmp.eq.s32.totalorder %s28, 0
    %p209 = por %p207, %p208
    %p210 = scmp.le.s32.totalorder 1, %s22
    %p211 = scmp.lt.s32.totalorder %s22, 13
    %p212 = pnand %p210, %p211
    %p213 = pneg %p212
    // Predicated region
    $region9: #{decoder_layer_forward.15} parent=5 // pred_check
      _
    $region10: #{decoder_layer_forward.15} parent=5 // pred_check_branch
      %215 = sbr.rel (%p212) target = $region12
    $region11: #{decoder_layer_forward.15} parent=5 // pred_region
      %s216 = ssub.s32 %s22, 1
    $region12: #{decoder_layer_forward.15} parent=5 // pred_fallthru
      _
    %p217 = scmp.lt.s32.totalorder %s22, 12
    // Predicated region
    $region13: #{decoder_layer_forward.15} parent=5 // pred_check
      %p218 = pneg %p217
    $region14: #{decoder_layer_forward.15} parent=5 // pred_check_branch
      %220 = sbr.rel (%p218) target = $region16
    $region15: #{decoder_layer_forward.15} parent=5 // pred_region
      // Predicated region
      $region17: #{decoder_layer_forward.15} parent=15 // pred_check
        %p221 = pneg %p54
      $region18: #{decoder_layer_forward.15} parent=15 // pred_check_branch
        %223 = sbr.rel (%p221) target = $region20
      $region19: #{decoder_layer_forward.15} parent=15 // pred_region
        %p224 = scmp.lt.s32.totalorder %s29, 11
        %s225 = scalar_select %p224, %s29, 11
        %s226 = smul.addr %s225, 4
        %s227 = scalar_lea.vmem %s2, %s226
      $region20: #{decoder_layer_forward.15} parent=15 // pred_fallthru
        _
      // Predicated region
      $region21: #{decoder_layer_forward.15} parent=15 // pred_check
        %p228 = pneg %p80
      $region22: #{decoder_layer_forward.15} parent=15 // pred_check_branch
        %230 = sbr.rel (%p228) target = $region24
      $region23: #{decoder_layer_forward.15} parent=15 // pred_region
        %p231 = scmp.lt.s32.totalorder %s29, 11
        %s232 = scalar_select %p231, %s29, 11
        %s233 = smul.addr %s232, 8
        %s234 = scalar_lea.vmem %s3, %s233
      $region24: #{decoder_layer_forward.15} parent=15 // pred_fallthru
        _
      // Predicated region
      $region25: #{decoder_layer_forward.15} parent=15 // pred_check
        %p235 = pneg %p110
      $region26: #{decoder_layer_forward.15} parent=15 // pred_check_branch
        %237 = sbr.rel (%p235) target = $region28
      $region27: #{decoder_layer_forward.15} parent=15 // pred_region
        %s238 = sld [smem:[#allocation4 + %s29]]
        %p239 = scmp.lt.s32.totalorder %s238, 8
        %s240 = scalar_select %p239, %s238, 8
        %p241 = scmp.lt.s32.totalorder %s30, 0
        %s242 = scalar_select %p241, %s30, 0
        %s243 = smul.addr %s240, 16
        %s244 = sadd.s32 %s242, %s243
        %s245 = smul.addr %s244, 4
        %s246 = scalar_lea.vmem %s4, %s245
        %s247 = sld [smem:[#allocation4 + %s29]]
      $region28: #{decoder_layer_forward.15} parent=15 // pred_fallthru
        _
      // Predicated region
      $region29: #{decoder_layer_forward.15} parent=15 // pred_check
        %p248 = pneg %p140
      $region30: #{decoder_layer_forward.15} parent=15 // pred_check_branch
        %250 = sbr.rel (%p248) target = $region32
      $region31: #{decoder_layer_forward.15} parent=15 // pred_region
        %s251 = sld [smem:[#allocation4 + %s29]]
        %p252 = scmp.lt.s32.totalorder %s251, 8
        %s253 = scalar_select %p252, %s251, 8
        %p254 = scmp.lt.s32.totalorder %s30, 0
        %s255 = scalar_select %p254, %s30, 0
        %s256 = smul.addr %s253, 16
        %s257 = sadd.s32 %s255, %s256
        %s258 = smul.addr %s257, 4
        %s259 = scalar_lea.vmem %s5, %s258
        %s260 = sld [smem:[#allocation4 + %s29]]
      $region32: #{decoder_layer_forward.15} parent=15 // pred_fallthru
        _
      // Predicated region
      $region33: #{decoder_layer_forward.15} parent=15 // pred_check
        %p261 = pneg %p170
      $region34: #{decoder_layer_forward.15} parent=15 // pred_check_branch
        %263 = sbr.rel (%p261) target = $region36
      $region35: #{decoder_layer_forward.15} parent=15 // pred_region
        %s264 = sld [smem:[#allocation4 + %s29]]
        %s265 = smul.u32 16, %s30
        %p266 = scmp.lt.s32.totalorder %s264, 8
        %s267 = scalar_select %p266, %s264, 8
        %p268 = scmp.lt.s32.totalorder %s265, 15
        %s269 = scalar_select %p268, %s265, 15
        %s270 = smul.addr %s267, 16
        %s271 = sadd.s32 %s269, %s270
        %s272 = smul.addr %s271, 4
        %s273 = scalar_lea.vmem %s6, %s272
        %s274 = sld [smem:[#allocation4 + %s29]]
        %s275 = smul.u32 16, %s30
      $region36: #{decoder_layer_forward.15} parent=15 // pred_fallthru
        _
    $region16: #{decoder_layer_forward.15} parent=5 // pred_fallthru
      _
    %p276 = scmp.le.s32.totalorder 1, %s22
    %p277 = scmp.lt.s32.totalorder %s22, 13
    %p278 = pnand %p276, %p277
    %p279 = pneg %p278
    // Predicated region
    $region37: #{decoder_layer_forward.15} parent=5 // pred_check
      _
    $region38: #{decoder_layer_forward.15} parent=5 // pred_check_branch
      %281 = sbr.rel (%p278) target = $region40
    $region39: #{decoder_layer_forward.15} parent=5 // pred_region
      %s282 = ssub.s32 %s22, 1
      %p283 = scmp.lt.s32.totalorder %s31, 11
      %s284 = scalar_select %p283, %s31, 11
      %s285 = smul.addr %s284, 4
      %s286 = scalar_lea.vmem %s2, %s285
      %p287 = pneg %p60
      %p288 = pneg %p57
      %p289 = scmp.lt.s32.totalorder %s31, 11
      %s290 = scalar_select %p289, %s31, 11
      %s291 = smul.addr %s290, 8
      %s292 = scalar_lea.vmem %s3, %s291
      %p293 = pneg %p86
      %p294 = pneg %p83
      %s295 = sld [smem:[#allocation4 + %s31]]
      %p296 = scmp.lt.s32.totalorder %s295, 8
      %s297 = scalar_select %p296, %s295, 8
      %p298 = scmp.lt.s32.totalorder %s32, 0
      %s299 = scalar_select %p298, %s32, 0
      %s300 = smul.addr %s297, 16
      %s301 = sadd.s32 %s299, %s300
      %s302 = smul.addr %s301, 4
      %s303 = scalar_lea.vmem %s4, %s302
      %p304 = pneg %p116
      %p305 = pneg %p113
      %s306 = sld [smem:[#allocation4 + %s31]]
      %p307 = scmp.lt.s32.totalorder %s306, 8
      %s308 = scalar_select %p307, %s306, 8
      %p309 = scmp.lt.s32.totalorder %s32, 0
      %s310 = scalar_select %p309, %s32, 0
      %s311 = smul.addr %s308, 16
      %s312 = sadd.s32 %s310, %s311
      %s313 = smul.addr %s312, 4
      %s314 = scalar_lea.vmem %s5, %s313
      %p315 = pneg %p146
      %p316 = pneg %p143
      %s317 = sld [smem:[#allocation4 + %s31]]
      %s318 = smul.u32 16, %s32
      %p319 = scmp.lt.s32.totalorder %s317, 8
      %s320 = scalar_select %p319, %s317, 8
      %p321 = scmp.lt.s32.totalorder %s318, 15
      %s322 = scalar_select %p321, %s318, 15
      %s323 = smul.addr %s320, 16
      %s324 = sadd.s32 %s322, %s323
      %s325 = smul.addr %s324, 4
      %s326 = scalar_lea.vmem %s6, %s325
      %p327 = pneg %p176
      %p328 = pneg %p173
      %p329 = pneg %p202
      %p330 = pneg %p199
      %p331 = scmp.lt.s32.totalorder %s31, 11
      %s332 = scalar_select %p331, %s31, 11
      %s333 = smul.addr %s332, 4
      %s334 = scalar_lea.vmem %s7, %s333
      %p335 = scmp.lt.s32.totalorder %s31, 11
      %s336 = scalar_select %p335, %s31, 11
      %s337 = smul.addr %s336, 4
      %s338 = scalar_lea.vmem %s2, %s337
      %p339 = scmp.lt.s32.totalorder %s31, 11
      %s340 = scalar_select %p339, %s31, 11
      %s341 = smul.addr %s340, 8
      %s342 = scalar_lea.vmem %s3, %s341
      %s343 = sld [smem:[#allocation4 + %s31]]
      %p344 = scmp.lt.s32.totalorder %s343, 8
      %s345 = scalar_select %p344, %s343, 8
      %p346 = scmp.lt.s32.totalorder %s32, 0
      %s347 = scalar_select %p346, %s32, 0
      %s348 = smul.addr %s345, 16
      %s349 = sadd.s32 %s347, %s348
      %s350 = smul.addr %s349, 4
      %s351 = scalar_lea.vmem %s4, %s350
      %s352 = sld [smem:[#allocation4 + %s31]]
      %s353 = sld [smem:[#allocation4 + %s31]]
      %p354 = scmp.lt.s32.totalorder %s353, 8
      %s355 = scalar_select %p354, %s353, 8
      %p356 = scmp.lt.s32.totalorder %s32, 0
      %s357 = scalar_select %p356, %s32, 0
      %s358 = smul.addr %s355, 16
      %s359 = sadd.s32 %s357, %s358
      %s360 = smul.addr %s359, 4
      %s361 = scalar_lea.vmem %s5, %s360
      %s362 = sld [smem:[#allocation4 + %s31]]
      %s363 = sld [smem:[#allocation4 + %s31]]
      %s364 = smul.u32 16, %s32
      %p365 = scmp.lt.s32.totalorder %s363, 8
      %s366 = scalar_select %p365, %s363, 8
      %p367 = scmp.lt.s32.totalorder %s364, 15
      %s368 = scalar_select %p367, %s364, 15
      %s369 = smul.addr %s366, 16
      %s370 = sadd.s32 %s368, %s369
      %s371 = smul.addr %s370, 4
      %s372 = scalar_lea.vmem %s6, %s371
      %s373 = sld [smem:[#allocation4 + %s31]]
      %s374 = smul.u32 16, %s32
      %p375 = scmp.lt.s32.totalorder %s31, 11
      %s376 = scalar_select %p375, %s31, 11
      %s377 = smul.addr %s376, 4
      %s378 = scalar_lea.vmem %s7, %s377
      %p379 = scmp.eq.s32.totalorder %s32, 0
      // Predicated region
      $region41: #{decoder_layer_forward.15} parent=39 // pred_check
        %p380 = pneg %p379
      $region42: #{decoder_layer_forward.15} parent=39 // pred_check_branch
        %382 = sbr.rel (%p380) target = $region44
      $region43: #{decoder_layer_forward.15} parent=39 // pred_region
        %383 = vst [vmem:[#allocation2] sm:$0xff] 0.0
      $region44: #{decoder_layer_forward.15} parent=39 // pred_fallthru
        _
      %s384 = sld [smem:[#allocation5]]
      %p385 = scmp.lt.s32.totalorder %s31, %s384
      // Predicated region
      $region45: #{decoder_layer_forward.15} parent=39 // pred_check
        %p386 = pneg %p385
      $region46: #{decoder_layer_forward.15} parent=39 // pred_check_branch
        %388 = sbr.rel (%p386) target = $region48
      $region47: #{decoder_layer_forward.15} parent=39 // pred_region
        %v389 = vld [vmem:[%s338] sm:$0xf]
        %v390 = vld [vmem:[%s351] sm:$0xf]
        %v391 = vld [vmem:[%s351 + $0x4] sm:$0xf]
        %v392 = vld [vmem:[%s351 + $0x8] sm:$0xf]
        %v393 = vld [vmem:[%s351 + $0xc] sm:$0xf]
        %v394 = vld [vmem:[%s351 + $0x10] sm:$0xf]
        %v395 = vld [vmem:[%s351 + $0x14] sm:$0xf]
        %v396 = vld [vmem:[%s351 + $0x18] sm:$0xf]
        %v397 = vld [vmem:[%s351 + $0x1c] sm:$0xf]
        %v398 = vld [vmem:[%s351 + $0x20] sm:$0xf]
        %v399 = vld [vmem:[%s351 + $0x24] sm:$0xf]
        %v400 = vld [vmem:[%s351 + $0x28] sm:$0xf]
        %v401 = vld [vmem:[%s351 + $0x2c] sm:$0xf]
        %v402 = vld [vmem:[%s351 + $0x30] sm:$0xf]
        %v403 = vld [vmem:[%s351 + $0x34] sm:$0xf]
        %v404 = vld [vmem:[%s351 + $0x38] sm:$0xf]
        %v405 = vld [vmem:[%s351 + $0x3c] sm:$0xf]
        %v422 = vunpack.c.l.b16 %v390
        %v423 = vunpack.c.l.b16 %v391
        %v424 = vunpack.c.l.b16 %v392
        %v425 = vunpack.c.l.b16 %v393
        %v426 = vunpack.c.l.b16 %v394
        %v427 = vunpack.c.l.b16 %v395
        %v428 = vunpack.c.l.b16 %v396
        %v429 = vunpack.c.l.b16 %v397
        %v430 = vunpack.c.l.b16 %v398
        %v431 = vunpack.c.l.b16 %v399
        %v432 = vunpack.c.l.b16 %v400
        %v433 = vunpack.c.l.b16 %v401
        %v434 = vunpack.c.l.b16 %v402
        %v435 = vunpack.c.l.b16 %v403
        %v436 = vunpack.c.l.b16 %v404
        %v437 = vunpack.c.l.b16 %v405
        %v438 = vpack.c.b16 %v423, %v422
        %v439 = vpack.c.b16 %v425, %v424
        %v440 = vpack.c.b16 %v427, %v426
        %v441 = vpack.c.b16 %v429, %v428
        %v442 = vpack.c.b16 %v431, %v430
        %v443 = vpack.c.b16 %v433, %v432
        %v444 = vpack.c.b16 %v435, %v434
        %v445 = vpack.c.b16 %v437, %v436
        %454 = vmatpush.bf16.msra.mxu0 %v445
        %455 = vmatpush.bf16.msra.mxu0 %v444
        %456 = vmatpush.bf16.msra.mxu0 %v443
        %457 = vmatpush.bf16.msra.mxu0 %v442
        %458 = vmatpush.bf16.msra.mxu0 %v441
        %459 = vmatpush.bf16.msra.mxu0 %v440
        %460 = vmatpush.bf16.msra.mxu0 %v439
        %461 = vmatpush.bf16.msra.mxu0 %v438
        %462 = vmatmul.bf16.gmra.mxu0 %v389
        %v463 = vpop.f32.mrf.mxu0
        %v464 = vadd.f32 0.0, %v463
        %v465 = vpop.f32.mrf.mxu0
        %466 = vdwg.mxu0
        %v467 = vld [vmem:[%s361] sm:$0xf]
        %v468 = vld [vmem:[%s361 + $0x4] sm:$0xf]
        %v469 = vld [vmem:[%s361 + $0x8] sm:$0xf]
        %v470 = vld [vmem:[%s361 + $0xc] sm:$0xf]
        %v471 = vld [vmem:[%s361 + $0x10] sm:$0xf]
        %v472 = vld [vmem:[%s361 + $0x14] sm:$0xf]
        %v473 = vld [vmem:[%s361 + $0x18] sm:$0xf]
        %v474 = vld [vmem:[%s361 + $0x1c] sm:$0xf]
        %v475 = vld [vmem:[%s361 + $0x20] sm:$0xf]
        %v476 = vld [vmem:[%s361 + $0x24] sm:$0xf]
        %v477 = vld [vmem:[%s361 + $0x28] sm:$0xf]
        %v478 = vld [vmem:[%s361 + $0x2c] sm:$0xf]
        %v479 = vld [vmem:[%s361 + $0x30] sm:$0xf]
        %v480 = vld [vmem:[%s361 + $0x34] sm:$0xf]
        %v481 = vld [vmem:[%s361 + $0x38] sm:$0xf]
        %v482 = vld [vmem:[%s361 + $0x3c] sm:$0xf]
        %v499 = vunpack.c.l.b16 %v467
        %v500 = vunpack.c.l.b16 %v468
        %v501 = vunpack.c.l.b16 %v469
        %v502 = vunpack.c.l.b16 %v470
        %v503 = vunpack.c.l.b16 %v471
        %v504 = vunpack.c.l.b16 %v472
        %v505 = vunpack.c.l.b16 %v473
        %v506 = vunpack.c.l.b16 %v474
        %v507 = vunpack.c.l.b16 %v475
        %v508 = vunpack.c.l.b16 %v476
        %v509 = vunpack.c.l.b16 %v477
        %v510 = vunpack.c.l.b16 %v478
        %v511 = vunpack.c.l.b16 %v479
        %v512 = vunpack.c.l.b16 %v480
        %v513 = vunpack.c.l.b16 %v481
        %v514 = vunpack.c.l.b16 %v482
        %v515 = vpack.c.b16 %v500, %v499
        %v516 = vpack.c.b16 %v502, %v501
        %v517 = vpack.c.b16 %v504, %v503
        %v518 = vpack.c.b16 %v506, %v505
        %v519 = vpack.c.b16 %v508, %v507
        %v520 = vpack.c.b16 %v510, %v509
        %v521 = vpack.c.b16 %v512, %v511
        %v522 = vpack.c.b16 %v514, %v513
        %531 = vmatpush.bf16.msra.mxu0 %v522
        %532 = vmatpush.bf16.msra.mxu0 %v521
        %533 = vmatpush.bf16.msra.mxu0 %v520
        %534 = vmatpush.bf16.msra.mxu0 %v519
        %535 = vmatpush.bf16.msra.mxu0 %v518
        %536 = vmatpush.bf16.msra.mxu0 %v517
        %537 = vmatpush.bf16.msra.mxu0 %v516
        %538 = vmatpush.bf16.msra.mxu0 %v515
        %539 = vmatmul.bf16.gmra.mxu0 %v389
        %v540 = vpop.f32.mrf.mxu0
        %v541 = vadd.f32 0.0, %v540
        %v542 = vpop.f32.mrf.mxu0
        %543 = vdwg.mxu0
        %v544 = vxor.u32 %v464, 2147483648
        %v545 = vmul.f32 %v544, 1.442695
        %v546 = vpow.pop %v545
        %v547 = vadd.f32 %v546, 1.0
        %v548 = vrcp.pop %v547
        %v549 = vmul.f32 %v547, %v548
        %v550 = vsub.f32 1.0, %v549
        %v551 = vmul.f32 %v548, %v550
        %v552 = vadd.f32 %v548, %v551
        %vm553 = vweird.f32 %v547
        %vm554 = vweird.f32 %v548
        %vm555 = vmor %vm553, %vm554
        %v556 = vsel %vm555, %v548, %v552
        %v557 = vand.u32 2147483647, %v547
        %vm558 = vcmp.eq.f32.partialorder %v557, 8.507059e+37
        %v559 = vand.u32 %v547, 2147483648
        %v560 = vor.u32 1.1754944e-38, %v559
        %v561 = vsel %vm558, %v560, %v556
        %v562 = vmul.f32 1.0, %v561
        %v563 = vmul.f32 %v464, %v562
        %v564 = vmul.f32 %v563, %v541
        %v565 = vpack.c.bf16 %v564, %v564
        %v566 = vld [vmem:[#allocation2] sm:$0xff]
        %v567 = vld [vmem:[%s372] sm:$0xf]
        %v568 = vld [vmem:[%s372 + $0x4] sm:$0xf]
        %v569 = vld [vmem:[%s372 + $0x8] sm:$0xf]
        %v570 = vld [vmem:[%s372 + $0xc] sm:$0xf]
        %v571 = vld [vmem:[%s372 + $0x10] sm:$0xf]
        %v572 = vld [vmem:[%s372 + $0x14] sm:$0xf]
        %v573 = vld [vmem:[%s372 + $0x18] sm:$0xf]
        %v574 = vld [vmem:[%s372 + $0x1c] sm:$0xf]
        %v575 = vld [vmem:[%s372 + $0x20] sm:$0xf]
        %v576 = vld [vmem:[%s372 + $0x24] sm:$0xf]
        %v577 = vld [vmem:[%s372 + $0x28] sm:$0xf]
        %v578 = vld [vmem:[%s372 + $0x2c] sm:$0xf]
        %v579 = vld [vmem:[%s372 + $0x30] sm:$0xf]
        %v580 = vld [vmem:[%s372 + $0x34] sm:$0xf]
        %v581 = vld [vmem:[%s372 + $0x38] sm:$0xf]
        %v582 = vld [vmem:[%s372 + $0x3c] sm:$0xf]
        %v599 = vunpack.c.l.b16 %v567
        %v600 = vunpack.c.l.b16 %v568
        %v601 = vunpack.c.l.b16 %v569
        %v602 = vunpack.c.l.b16 %v570
        %v603 = vunpack.c.l.b16 %v571
        %v604 = vunpack.c.l.b16 %v572
        %v605 = vunpack.c.l.b16 %v573
        %v606 = vunpack.c.l.b16 %v574
        %v607 = vunpack.c.l.b16 %v575
        %v608 = vunpack.c.l.b16 %v576
        %v609 = vunpack.c.l.b16 %v577
        %v610 = vunpack.c.l.b16 %v578
        %v611 = vunpack.c.l.b16 %v579
        %v612 = vunpack.c.l.b16 %v580
        %v613 = vunpack.c.l.b16 %v581
        %v614 = vunpack.c.l.b16 %v582
        %v615 = vpack.c.b16 %v600, %v599
        %v616 = vpack.c.b16 %v602, %v601
        %v617 = vpack.c.b16 %v604, %v603
        %v618 = vpack.c.b16 %v606, %v605
        %v619 = vpack.c.b16 %v608, %v607
        %v620 = vpack.c.b16 %v610, %v609
        %v621 = vpack.c.b16 %v612, %v611
        %v622 = vpack.c.b16 %v614, %v613
        %631 = vmatpush.bf16.msra.mxu0 %v622
        %632 = vmatpush.bf16.msra.mxu0 %v621
        %633 = vmatpush.bf16.msra.mxu0 %v620
        %634 = vmatpush.bf16.msra.mxu0 %v619
        %635 = vmatpush.bf16.msra.mxu0 %v618
        %636 = vmatpush.bf16.msra.mxu0 %v617
        %637 = vmatpush.bf16.msra.mxu0 %v616
        %638 = vmatpush.bf16.msra.mxu0 %v615
        %639 = vmatmul.bf16.gmra.mxu0 %v565
        %v640 = vpop.f32.mrf.mxu0
        %v641 = vadd.f32 0.0, %v640
        %v642 = vpop.f32.mrf.mxu0
        %643 = vdwg.mxu0
        %v644 = vadd.f32 %v566, %v641
        %645 = vst [vmem:[#allocation2] sm:$0xff] %v644
      $region48: #{decoder_layer_forward.15} parent=39 // pred_fallthru
        _
      // Predicated region
      $region49: #{decoder_layer_forward.15} parent=39 // pred_check
        %p646 = pneg %p379
      $region50: #{decoder_layer_forward.15} parent=39 // pred_check_branch
        %648 = sbr.rel (%p646) target = $region52
      $region51: #{decoder_layer_forward.15} parent=39 // pred_region
        %v649 = vld [vmem:[#allocation2] sm:$0xff]
        %v650 = vld [vmem:[%s342] sm:$0xff]
        %652 = vset.pattern.permute.xlu0 0
        %653 = vperm.xlu0 %652, %v650
        %v654 = vpop.permute.xlu0 %653
        %v656 = vmul.f32 %v649, %v654
        %v657 = vpack.c.bf16 %v656, %v656
        %658 = vst [vmem:[%s378] sm:$0xf] %v657
      $region52: #{decoder_layer_forward.15} parent=39 // pred_fallthru
        _
      %p659 = scmp.lt.s32.totalorder %s31, 11
      %s660 = scalar_select %p659, %s31, 11
      %s661 = smul.addr %s660, 4
      %s662 = scalar_lea.vmem %s7, %s661
      // Predicated region
      $region53: #{decoder_layer_forward.15} parent=39 // pred_check
        %p663 = pneg %p199
      $region54: #{decoder_layer_forward.15} parent=39 // pred_check_branch
        %665 = sbr.rel (%p663) target = $region56
      $region55: #{decoder_layer_forward.15} parent=39 // pred_region
        _
      $region56: #{decoder_layer_forward.15} parent=39 // pred_fallthru
        _
    $region40: #{decoder_layer_forward.15} parent=5 // pred_fallthru
      _
    %p666 = scmp.le.s32.totalorder 2, %s22
    // Predicated region
    $region57: #{decoder_layer_forward.15} parent=5 // pred_check
      %p667 = pneg %p666
    $region58: #{decoder_layer_forward.15} parent=5 // pred_check_branch
      %669 = sbr.rel (%p667) target = $region60
    $region59: #{decoder_layer_forward.15} parent=5 // pred_region
      %s670 = ssub.s32 %s22, 2
      // Predicated region
      $region61: #{decoder_layer_forward.15} parent=59 // pred_check
        %p671 = pneg %p205
      $region62: #{decoder_layer_forward.15} parent=59 // pred_check_branch
        %673 = sbr.rel (%p671) target = $region64
      $region63: #{decoder_layer_forward.15} parent=59 // pred_region
        %p674 = scmp.lt.s32.totalorder %s33, 11
        %s675 = scalar_select %p674, %s33, 11
        %s676 = smul.addr %s675, 4
        %s677 = scalar_lea.vmem %s7, %s676
      $region64: #{decoder_layer_forward.15} parent=59 // pred_fallthru
        _
    $region60: #{decoder_layer_forward.15} parent=5 // pred_fallthru
      _
  $region6: #{decoder_layer_forward.15} parent=0 // loop_footer
    %s26 = sadd.s32 1, %s22
  $region7: #{decoder_layer_forward.15} parent=0 // loop_footer_branch
    %21 = sbr.rel target = $region3
  $region8: #{decoder_layer_forward.15} parent=0 // loop_exit
    _

</llo_original>
